<compile_context>
chip_gen: v7x
topology: tpu7x:2x2x1
jax: 0.10.0
libtpu: 0.0.40
codegen_flags: <defaults>
</compile_context>

<pallas_src>
import jax
import jax.numpy as jnp
from jax import lax
from jax.experimental import pallas as pl
from jax.experimental.pallas import tpu as pltpu

VOCAB = 64          # vocab_size
EMBED = 16          # embedding_dim
CONTEXT = 8         # context_size
HIDDEN = 128        # linear1 output width (fixed by the module)
VOCAB_PAD = 128     # logits padded to a full 128-lane vreg
NEG_INF = -1e30     # mask for padded logit columns

MAX_TILE_B = 1024   # max batch rows per grid step (VMEM is a non-issue at this size)


def _round_up(x, m):
    return (x + m - 1) // m * m


def _num_tensorcores():
    """Dual-TensorCore (megacore) chips get balanced batch halves; 1 otherwise."""
    try:
        kind = jax.devices()[0].device_kind.lower()
    except Exception:
        return 1
    return 2 if any(t in kind for t in ("v7", "v4", "v5p")) else 1


def _choose_tiling(batch, n_cores):
    """Pick (tile_b, n_tiles) minimizing padded rows and balancing cores."""
    n_tiles = pl.cdiv(batch, MAX_TILE_B)
    if n_cores > 1 and batch >= 2 * 8:          # enough rows to split across cores
        n_tiles = _round_up(max(n_tiles, n_cores), n_cores)
    tile_b = _round_up(pl.cdiv(batch, n_tiles), 8)   # >= 8 rows (f32 sublane)
    return tile_b, n_tiles


def ngram_kernel(ids_ref, m_ref, b1_ref, w2_ref, b2_ref, out_ref):
    """One batch tile: multi-hot build (VPU) -> fused embed+linear1 (one K=512
    MXU contraction) -> ReLU -> linear2 (128-lane padded) -> log_softmax."""
    tile_b = ids_ref.shape[0]
    ids = ids_ref[...]                                               # (tile_b, CONTEXT) int32

    # Multi-hot over the flattened (position, vocab) axis: one 1 per context
    # position at column c*VOCAB + ids[:, c].
    flat_iota = lax.broadcasted_iota(jnp.int32, (tile_b, CONTEXT * VOCAB), 1)
    oh = jnp.zeros((tile_b, CONTEXT * VOCAB), jnp.float32)
    for c in range(CONTEXT):                                         # static unroll, 8 VPU compares
        key = ids[:, c:c + 1] + jnp.int32(c * VOCAB)                 # (tile_b, 1)
        oh = oh + (key == flat_iota).astype(jnp.float32)

    # Fused embedding gather + linear1: single (tile_b,512) x (512,128) matmul.
    h = jnp.dot(oh, m_ref[...], preferred_element_type=jnp.float32) + b1_ref[...]
    h = jnp.maximum(h, 0.0)

    # linear2 -> padded logits. Padded W2 columns are zero and padded bias
    # entries are NEG_INF, so padded columns never contribute to the softmax.
    logits = jnp.dot(h, w2_ref[...], preferred_element_type=jnp.float32) + b2_ref[...]

    # log_softmax over dim=1 (numerically stable).
    m = jnp.max(logits, axis=-1, keepdims=True)
    s = logits - m
    lse = jnp.log(jnp.sum(jnp.exp(s), axis=-1, keepdims=True))
    out_ref[...] = (s - lse).astype(out_ref.dtype)


def prepare_params(emb_table, w1, b1, w2, b2):
    """One-time layout prep (done once, NOT per forward call)."""
    emb_table = jnp.asarray(emb_table, jnp.float32)                  # (VOCAB, EMBED)
    # PyTorch Linear stores (out, in); pre-transpose and split per context position.
    w1_pos = jnp.asarray(w1, jnp.float32).T.reshape(CONTEXT, EMBED, HIDDEN)
    # Fold the embedding table into linear1: M[c*VOCAB + v, :] = emb[v] @ W1_c.
    m_fused = jnp.einsum("ve,ceh->cvh", emb_table, w1_pos).reshape(CONTEXT * VOCAB, HIDDEN)
    b1_row = jnp.asarray(b1, jnp.float32).reshape(1, HIDDEN)
    # (VOCAB, HIDDEN) -> (HIDDEN, VOCAB_PAD) with zero-padded columns.
    w2_pad = jnp.zeros((HIDDEN, VOCAB_PAD), jnp.float32)
    w2_pad = w2_pad.at[:, :VOCAB].set(jnp.asarray(w2, jnp.float32).T)
    # Padded bias columns get NEG_INF so the padded logits are masked out.
    b2_pad = jnp.full((1, VOCAB_PAD), NEG_INF, jnp.float32)
    b2_pad = b2_pad.at[0, :VOCAB].set(jnp.asarray(b2, jnp.float32))
    return m_fused, b1_row, w2_pad, b2_pad


def ngram_forward(ids, params, *, full_output=False):
    """Batched NGramLanguageModeler forward.

    ids        : (B, CONTEXT) int32 token ids, or (CONTEXT,) for a single context
    params     : output of prepare_params
    full_output: if True, return the raw (b_pad, 128) padded kernel output
                 (rows >= B are pad rows, cols >= VOCAB are masked) and skip
                 the extra HBM copy the trimming slice would cost.
    returns    : (B, VOCAB) f32 log-probs ((1, VOCAB) for a single context,
                 matching the PyTorch module's forward()) unless full_output.
    """
    m_fused, b1_row, w2_pad, b2_pad = params
    ids = jnp.asarray(ids, jnp.int32)
    if ids.ndim == 1:
        ids = ids[None, :]
    B = ids.shape[0]

    tile_b, n_tiles = _choose_tiling(B, _num_tensorcores())
    b_pad = tile_b * n_tiles
    if b_pad != B:
        ids = jnp.pad(ids, ((0, b_pad - B), (0, 0)))   # pad with token 0, sliced off below

    out = pl.pallas_call(
        ngram_kernel,
        out_shape=jax.ShapeDtypeStruct((b_pad, VOCAB_PAD), jnp.float32),
        grid=(n_tiles,),
        in_specs=[
            pl.BlockSpec((tile_b, CONTEXT), lambda i: (i, 0)),             # ids: tiled over batch
            pl.BlockSpec((CONTEXT * VOCAB, HIDDEN), lambda i: (0, 0)),     # fused emb@W1 (resident)
            pl.BlockSpec((1, HIDDEN), lambda i: (0, 0)),                   # b1
            pl.BlockSpec((HIDDEN, VOCAB_PAD), lambda i: (0, 0)),           # W2 padded (resident)
            pl.BlockSpec((1, VOCAB_PAD), lambda i: (0, 0)),                # b2 padded
        ],
        out_specs=pl.BlockSpec((tile_b, VOCAB_PAD), lambda i: (i, 0)),
        compiler_params=pltpu.CompilerParams(
            dimension_semantics=("parallel",),   # shard balanced batch tiles across dual-TC chips
        ),
    )(ids, m_fused, b1_row, w2_pad, b2_pad)

    if full_output:
        return out
    return out[:B, :VOCAB]


def _reference(ids, emb_table, w1, b1, w2, b2):
    """Pure-JAX reference with the exact PyTorch-module math."""
    ids = jnp.asarray(ids, jnp.int32)
    if ids.ndim == 1:
        ids = ids[None, :]
    x = emb_table[ids].reshape(ids.shape[0], -1)
    h = jnp.maximum(x @ w1.T + b1, 0.0)
    logits = h @ w2.T + b2
    return jax.nn.log_softmax(logits, axis=-1)


if __name__ == "__main__":
    key = jax.random.PRNGKey(0)
    k_emb, k_w1, k_b1, k_w2, k_b2, k_in = jax.random.split(key, 6)

    # Deterministic parameter init (matching PyTorch init shapes / scales).
    emb_table = jax.random.normal(k_emb, (VOCAB, EMBED), dtype=jnp.float32)

    fan_in1 = CONTEXT * EMBED
    lim1 = 1.0 / (fan_in1 ** 0.5)
    w1 = jax.random.uniform(k_w1, (HIDDEN, fan_in1), jnp.float32, -lim1, lim1)
    b1 = jax.random.uniform(k_b1, (HIDDEN,), jnp.float32, -lim1, lim1)

    lim2 = 1.0 / (HIDDEN ** 0.5)
    w2 = jax.random.uniform(k_w2, (VOCAB, HIDDEN), jnp.float32, -lim2, lim2)
    b2 = jax.random.uniform(k_b2, (VOCAB,), jnp.float32, -lim2, lim2)

    params = prepare_params(emb_table, w1, b1, w2, b2)

    # Batched contexts (B chosen so core-aware tiling is exercised: 1x384 or 2x192).
    B = 384
    ids = jax.random.randint(k_in, (B, CONTEXT), 0, VOCAB, dtype=jnp.int32)

    # --- batched forward ---
    log_probs = ngram_forward(ids, params)
    log_probs = jax.block_until_ready(log_probs)
    assert log_probs.shape == (B, VOCAB)

    ref = _reference(ids, emb_table, w1, b1, w2, b2)
    assert jnp.allclose(log_probs, ref, atol=1e-4, rtol=1e-4)
    # sanity: log_softmax rows sum to 1 in prob space (padded cols already sliced off)
    assert jnp.allclose(jnp.sum(jnp.exp(log_probs), axis=-1), 1.0, atol=1e-5)

    # --- padded fast path (no post-call slice) ---
    padded = ngram_forward(ids, params, full_output=True)
    padded = jax.block_until_ready(padded)
    assert padded.shape[1] == VOCAB_PAD and padded.shape[0] >= B
    assert jnp.allclose(padded[:B, :VOCAB], ref, atol=1e-4, rtol=1e-4)

    # --- single-context path (exactly the PyTorch module's forward signature) ---
    single = ngram_forward(ids[0], params)
    single = jax.block_until_ready(single)
    assert single.shape == (1, VOCAB)
    assert jnp.allclose(single, ref[0:1], atol=1e-4, rtol=1e-4)

    print("KERNEL_OK")
</pallas_src>

<mosaic_0001>
module attributes {stable_mosaic.version = 11 : i64} {
  func.func @ngram_kernel(%arg0: i32, %arg1: memref<384x8xi32, #tpu.memory_space<vmem>>, %arg2: memref<512x128xf32, #tpu.memory_space<vmem>>, %arg3: memref<1x128xf32, #tpu.memory_space<vmem>>, %arg4: memref<128x128xf32, #tpu.memory_space<vmem>>, %arg5: memref<1x128xf32, #tpu.memory_space<vmem>>, %arg6: memref<384x128xf32, #tpu.memory_space<vmem>>) attributes {dimension_semantics = [#tpu.dimension_semantics<parallel>], iteration_bounds = array<i64: 1>, scalar_prefetch = 0 : i64, scratch_operands = 0 : i64, tpu.core_type = #tpu.core_type<tc>, window_params = [{transform_indices = @transform_0, window_bounds = array<i64: 384, 8>}, {pipeline_mode = #tpu.pipeline_mode<synchronous>, transform_indices = @transform_1, window_bounds = array<i64: 512, 128>}, {pipeline_mode = #tpu.pipeline_mode<synchronous>, transform_indices = @transform_2, window_bounds = array<i64: 1, 128>}, {pipeline_mode = #tpu.pipeline_mode<synchronous>, transform_indices = @transform_3, window_bounds = array<i64: 128, 128>}, {pipeline_mode = #tpu.pipeline_mode<synchronous>, transform_indices = @transform_4, window_bounds = array<i64: 1, 128>}, {transform_indices = @transform_5, window_bounds = array<i64: 384, 128>}]} {
    %c0 = arith.constant 0 : index
    %c0_0 = arith.constant 0 : index
    %0 = vector.load %arg1[%c0, %c0_0] : memref<384x8xi32, #tpu.memory_space<vmem>>, vector<384x8xi32>
    %1 = tpu.iota {dimensions = array<i32: 1>} : vector<384x512xi32>
    %cst = arith.constant 0.000000e+00 : f32
    %2 = vector.broadcast %cst : f32 to vector<384x512xf32>
    %3 = vector.extract_strided_slice %0 {offsets = [0, 0], sizes = [384, 1], strides = [1, 1]} : vector<384x8xi32> to vector<384x1xi32>
    %c0_i32 = arith.constant 0 : i32
    %4 = vector.broadcast %c0_i32 : i32 to vector<384x1xi32>
    %5 = arith.addi %3, %4 : vector<384x1xi32>
    %6 = vector.broadcast %5 : vector<384x1xi32> to vector<384x512xi32>
    %7 = arith.cmpi eq, %6, %1 : vector<384x512xi32>
    %8 = arith.extui %7 : vector<384x512xi1> to vector<384x512xi32>
    %9 = arith.sitofp %8 : vector<384x512xi32> to vector<384x512xf32>
    %10 = arith.addf %2, %9 : vector<384x512xf32>
    %11 = vector.extract_strided_slice %0 {offsets = [0, 1], sizes = [384, 1], strides = [1, 1]} : vector<384x8xi32> to vector<384x1xi32>
    %c64_i32 = arith.constant 64 : i32
    %12 = vector.broadcast %c64_i32 : i32 to vector<384x1xi32>
    %13 = arith.addi %11, %12 : vector<384x1xi32>
    %14 = vector.broadcast %13 : vector<384x1xi32> to vector<384x512xi32>
    %15 = arith.cmpi eq, %14, %1 : vector<384x512xi32>
    %16 = arith.extui %15 : vector<384x512xi1> to vector<384x512xi32>
    %17 = arith.sitofp %16 : vector<384x512xi32> to vector<384x512xf32>
    %18 = arith.addf %10, %17 : vector<384x512xf32>
    %19 = vector.extract_strided_slice %0 {offsets = [0, 2], sizes = [384, 1], strides = [1, 1]} : vector<384x8xi32> to vector<384x1xi32>
    %c128_i32 = arith.constant 128 : i32
    %20 = vector.broadcast %c128_i32 : i32 to vector<384x1xi32>
    %21 = arith.addi %19, %20 : vector<384x1xi32>
    %22 = vector.broadcast %21 : vector<384x1xi32> to vector<384x512xi32>
    %23 = arith.cmpi eq, %22, %1 : vector<384x512xi32>
    %24 = arith.extui %23 : vector<384x512xi1> to vector<384x512xi32>
    %25 = arith.sitofp %24 : vector<384x512xi32> to vector<384x512xf32>
    %26 = arith.addf %18, %25 : vector<384x512xf32>
    %27 = vector.extract_strided_slice %0 {offsets = [0, 3], sizes = [384, 1], strides = [1, 1]} : vector<384x8xi32> to vector<384x1xi32>
    %c192_i32 = arith.constant 192 : i32
    %28 = vector.broadcast %c192_i32 : i32 to vector<384x1xi32>
    %29 = arith.addi %27, %28 : vector<384x1xi32>
    %30 = vector.broadcast %29 : vector<384x1xi32> to vector<384x512xi32>
    %31 = arith.cmpi eq, %30, %1 : vector<384x512xi32>
    %32 = arith.extui %31 : vector<384x512xi1> to vector<384x512xi32>
    %33 = arith.sitofp %32 : vector<384x512xi32> to vector<384x512xf32>
    %34 = arith.addf %26, %33 : vector<384x512xf32>
    %35 = vector.extract_strided_slice %0 {offsets = [0, 4], sizes = [384, 1], strides = [1, 1]} : vector<384x8xi32> to vector<384x1xi32>
    %c256_i32 = arith.constant 256 : i32
    %36 = vector.broadcast %c256_i32 : i32 to vector<384x1xi32>
    %37 = arith.addi %35, %36 : vector<384x1xi32>
    %38 = vector.broadcast %37 : vector<384x1xi32> to vector<384x512xi32>
    %39 = arith.cmpi eq, %38, %1 : vector<384x512xi32>
    %40 = arith.extui %39 : vector<384x512xi1> to vector<384x512xi32>
    %41 = arith.sitofp %40 : vector<384x512xi32> to vector<384x512xf32>
    %42 = arith.addf %34, %41 : vector<384x512xf32>
    %43 = vector.extract_strided_slice %0 {offsets = [0, 5], sizes = [384, 1], strides = [1, 1]} : vector<384x8xi32> to vector<384x1xi32>
    %c320_i32 = arith.constant 320 : i32
    %44 = vector.broadcast %c320_i32 : i32 to vector<384x1xi32>
    %45 = arith.addi %43, %44 : vector<384x1xi32>
    %46 = vector.broadcast %45 : vector<384x1xi32> to vector<384x512xi32>
    %47 = arith.cmpi eq, %46, %1 : vector<384x512xi32>
    %48 = arith.extui %47 : vector<384x512xi1> to vector<384x512xi32>
    %49 = arith.sitofp %48 : vector<384x512xi32> to vector<384x512xf32>
    %50 = arith.addf %42, %49 : vector<384x512xf32>
    %51 = vector.extract_strided_slice %0 {offsets = [0, 6], sizes = [384, 1], strides = [1, 1]} : vector<384x8xi32> to vector<384x1xi32>
    %c384_i32 = arith.constant 384 : i32
    %52 = vector.broadcast %c384_i32 : i32 to vector<384x1xi32>
    %53 = arith.addi %51, %52 : vector<384x1xi32>
    %54 = vector.broadcast %53 : vector<384x1xi32> to vector<384x512xi32>
    %55 = arith.cmpi eq, %54, %1 : vector<384x512xi32>
    %56 = arith.extui %55 : vector<384x512xi1> to vector<384x512xi32>
    %57 = arith.sitofp %56 : vector<384x512xi32> to vector<384x512xf32>
    %58 = arith.addf %50, %57 : vector<384x512xf32>
    %59 = vector.extract_strided_slice %0 {offsets = [0, 7], sizes = [384, 1], strides = [1, 1]} : vector<384x8xi32> to vector<384x1xi32>
    %c448_i32 = arith.constant 448 : i32
    %60 = vector.broadcast %c448_i32 : i32 to vector<384x1xi32>
    %61 = arith.addi %59, %60 : vector<384x1xi32>
    %62 = vector.broadcast %61 : vector<384x1xi32> to vector<384x512xi32>
    %63 = arith.cmpi eq, %62, %1 : vector<384x512xi32>
    %64 = arith.extui %63 : vector<384x512xi1> to vector<384x512xi32>
    %65 = arith.sitofp %64 : vector<384x512xi32> to vector<384x512xf32>
    %66 = arith.addf %58, %65 : vector<384x512xf32>
    %c0_1 = arith.constant 0 : index
    %c0_2 = arith.constant 0 : index
    %67 = vector.load %arg2[%c0_1, %c0_2] : memref<512x128xf32, #tpu.memory_space<vmem>>, vector<512x128xf32>
    %cst_3 = arith.constant dense<0.000000e+00> : vector<384x128xf32>
    %68 = tpu.matmul %66, %67, %cst_3 {dimension_numbers = #tpu.dot_dimension_numbers<[1], [0], [0], [1], [0, 0, 1, 1], [], []>} : vector<384x512xf32>, vector<512x128xf32>, vector<384x128xf32> -> vector<384x128xf32>
    %c0_4 = arith.constant 0 : index
    %c0_5 = arith.constant 0 : index
    %69 = vector.load %arg3[%c0_4, %c0_5] : memref<1x128xf32, #tpu.memory_space<vmem>>, vector<1x128xf32>
    %70 = vector.broadcast %69 : vector<1x128xf32> to vector<384x128xf32>
    %71 = arith.addf %68, %70 : vector<384x128xf32>
    %cst_6 = arith.constant 0.000000e+00 : f32
    %72 = vector.broadcast %cst_6 : f32 to vector<384x128xf32>
    %73 = arith.maximumf %71, %72 : vector<384x128xf32>
    %c0_7 = arith.constant 0 : index
    %c0_8 = arith.constant 0 : index
    %74 = vector.load %arg4[%c0_7, %c0_8] : memref<128x128xf32, #tpu.memory_space<vmem>>, vector<128x128xf32>
    %cst_9 = arith.constant dense<0.000000e+00> : vector<384x128xf32>
    %75 = tpu.matmul %73, %74, %cst_9 {dimension_numbers = #tpu.dot_dimension_numbers<[1], [0], [0], [1], [0, 0, 1, 1], [], []>} : vector<384x128xf32>, vector<128x128xf32>, vector<384x128xf32> -> vector<384x128xf32>
    %c0_10 = arith.constant 0 : index
    %c0_11 = arith.constant 0 : index
    %76 = vector.load %arg5[%c0_10, %c0_11] : memref<1x128xf32, #tpu.memory_space<vmem>>, vector<1x128xf32>
    %77 = vector.broadcast %76 : vector<1x128xf32> to vector<384x128xf32>
    %78 = arith.addf %75, %77 : vector<384x128xf32>
    %cst_12 = arith.constant dense<0xFF800000> : vector<384xf32>
    %79 = vector.multi_reduction <maximumf>, %78, %cst_12 [1] : vector<384x128xf32> to vector<384xf32>
    %80 = vector.shape_cast %79 : vector<384xf32> to vector<384x1xf32>
    %81 = vector.broadcast %80 : vector<384x1xf32> to vector<384x128xf32>
    %82 = arith.subf %78, %81 : vector<384x128xf32>
    %83 = math.exp %82 : vector<384x128xf32>
    %cst_13 = arith.constant dense<0.000000e+00> : vector<384xf32>
    %84 = vector.multi_reduction <add>, %83, %cst_13 [1] : vector<384x128xf32> to vector<384xf32>
    %85 = vector.shape_cast %84 : vector<384xf32> to vector<384x1xf32>
    %86 = math.log %85 : vector<384x1xf32>
    %87 = vector.broadcast %86 : vector<384x1xf32> to vector<384x128xf32>
    %88 = arith.subf %82, %87 : vector<384x128xf32>
    %c0_14 = arith.constant 0 : index
    %c0_15 = arith.constant 0 : index
    %89 = vector.load %arg6[%c0_14, %c0_15] : memref<384x128xf32, #tpu.memory_space<vmem>>, vector<384x128xf32>
    tpu.vector_store %arg6[%c0_14, %c0_15], %88 {strides = array<i32>} : memref<384x128xf32, #tpu.memory_space<vmem>>, vector<384x128xf32>,
    return
  }
  func.func @transform_0(%arg0: i32) -> (i32, i32) {
    %c0_i32 = arith.constant 0 : i32
    %c0_i32_0 = arith.constant 0 : i32
    return %arg0, %c0_i32 : i32, i32
  }
  func.func @transform_1(%arg0: i32) -> (i32, i32) {
    %c0_i32 = arith.constant 0 : i32
    %c0_i32_0 = arith.constant 0 : i32
    %c0_i32_1 = arith.constant 0 : i32
    return %c0_i32, %c0_i32_0 : i32, i32
  }
  func.func @transform_2(%arg0: i32) -> (i32, i32) {
    %c0_i32 = arith.constant 0 : i32
    %c0_i32_0 = arith.constant 0 : i32
    %c0_i32_1 = arith.constant 0 : i32
    return %c0_i32, %c0_i32_0 : i32, i32
  }
  func.func @transform_3(%arg0: i32) -> (i32, i32) {
    %c0_i32 = arith.constant 0 : i32
    %c0_i32_0 = arith.constant 0 : i32
    %c0_i32_1 = arith.constant 0 : i32
    return %c0_i32, %c0_i32_0 : i32, i32
  }
  func.func @transform_4(%arg0: i32) -> (i32, i32) {
    %c0_i32 = arith.constant 0 : i32
    %c0_i32_0 = arith.constant 0 : i32
    %c0_i32_1 = arith.constant 0 : i32
    return %c0_i32, %c0_i32_0 : i32, i32
  }
  func.func @transform_5(%arg0: i32) -> (i32, i32) {
    %c0_i32 = arith.constant 0 : i32
    %c0_i32_0 = arith.constant 0 : i32
    return %arg0, %c0_i32 : i32, i32
  }
}

</mosaic_0001>

<llo_original>
// kernel: tpu_custom_call.1
$region0: #{tpu_custom_call.1}
  #allocation0 [shape = 'u32[]', space=smem, size = 0x4, offset = 0x4, fixed_abs, tag = 'smem constant byte address 0x4 - core index']
  #allocation1 [shape = 'u32[144,128]{1,0:T(1,128)}', space=vmem, size = 0x12000, scoped, tag = 'internal scratch']
  %s0 = inlined_call_operand.vmem [shape: s32[384,8], index: 0, kind: input, shape index: {}]
  %s1 = inlined_call_operand.hbm [shape: f32[512,128], index: 1, kind: input, shape index: {}]
  %s2 = inlined_call_operand.vmem [shape: f32[1,128], index: 2, kind: input, shape index: {}]
  %s3 = inlined_call_operand.vmem [shape: f32[128,128], index: 3, kind: input, shape index: {}]
  %s4 = inlined_call_operand.vmem [shape: f32[1,128], index: 4, kind: input, shape index: {}]
  %s5 = inlined_call_operand.hbm [shape: f32[384,128], index: 5, kind: output, shape index: {}]
  %s6 = sld [smem:[#allocation0]]
  $region34: #{tpu_custom_call.1} parent=0
    _
  %s8 = ssub.s32 1, %s6
  %s9 = scalar_select 0, %s8, %s6
  $region1: #{tpu_custom_call.1} parent=0
    #allocation2 [shape = 'u8[262144]{0}', space=vmem, size = 0x40000, scoped, tag = 'input window, operand 1, single buffered']
    #allocation3 [shape = 's32[1]{0}', space=sflag, size = 0x4, scoped, tag = 'scoped memory for tpu_custom_call.1']
    #allocation4 [shape = 's32[1]{0}', space=sflag, size = 0x4, scoped, tag = 'scoped memory for tpu_custom_call.1']
    #allocation5 [shape = 'u8[196608]{0}', space=vmem, size = 0x30000, scoped, tag = 'output window, operand 0, single buffered']
    %10 = vsyncpa [#allocation3], 0
    %11 = vsyncpa [#allocation4], 0
    // Predicated region
    $region2: #{tpu_custom_call.1} parent=1 // pred_check
      _
    $region3: #{tpu_custom_call.1} parent=1 // pred_check_branch
      %13 = sbr.rel (0) target = $region5
    $region4: #{tpu_custom_call.1} parent=1 // pred_region
      _
    $region5: #{tpu_custom_call.1} parent=1 // pred_fallthru
      _
    // Predicated region
    $region6: #{tpu_custom_call.1} parent=1 // pred_check
      _
    $region7: #{tpu_custom_call.1} parent=1 // pred_check_branch
      %15 = sbr.rel (0) target = $region9
    $region8: #{tpu_custom_call.1} parent=1 // pred_region
      %s17 = ssub.s32 8192, 8192
      %18 = vsyncadd [#allocation3], %s17
      %s19 = sshll.u32 [#allocation2], 4
      %s20 = int_to_ptr.vmem [resolvable:$true] %s19
      %25 = dma.hbm_to_vmem [thread:$0]  %s1, 8192, %s20, [#allocation3], 128, 128, 8
    $region9: #{tpu_custom_call.1} parent=1 // pred_fallthru
      _
    // Predicated region
    $region10: #{tpu_custom_call.1} parent=1 // pred_check
      _
    $region11: #{tpu_custom_call.1} parent=1 // pred_check_branch
      %27 = sbr.rel (0) target = $region13
    $region12: #{tpu_custom_call.1} parent=1 // pred_region
      _
    $region13: #{tpu_custom_call.1} parent=1 // pred_fallthru
      _
    // Predicated region
    $region14: #{tpu_custom_call.1} parent=1 // pred_check
      _
    $region15: #{tpu_custom_call.1} parent=1 // pred_check_branch
      %29 = sbr.rel (0) target = $region17
    $region16: #{tpu_custom_call.1} parent=1 // pred_region
      _
    $region17: #{tpu_custom_call.1} parent=1 // pred_fallthru
      _
    // Predicated region
    $region18: #{tpu_custom_call.1} parent=1 // pred_check
      _
    $region19: #{tpu_custom_call.1} parent=1 // pred_check_branch
      %31 = sbr.rel (0) target = $region21
    $region20: #{tpu_custom_call.1} parent=1 // pred_region
      _
    $region21: #{tpu_custom_call.1} parent=1 // pred_fallthru
      _
    // Predicated region
    $region22: #{tpu_custom_call.1} parent=1 // pred_check
      _
    $region23: #{tpu_custom_call.1} parent=1 // pred_check_branch
      %33 = sbr.rel (0) target = $region25
    $region24: #{tpu_custom_call.1} parent=1 // pred_region
      %34 = dma.done [#allocation3], 8192
    $region25: #{tpu_custom_call.1} parent=1 // pred_fallthru
      _
    %v35 = vld [vmem:[%s0] sm:$0xff]
    %v36 = vld [vmem:[%s0 + $0x8] sm:$0xff]
    %v37 = vld [vmem:[%s0 + $0x10] sm:$0xff]
    %v38 = vld [vmem:[%s0 + $0x18] sm:$0xff]
    %v39 = vld [vmem:[%s0 + $0x20] sm:$0xff]
    %v40 = vld [vmem:[%s0 + $0x28] sm:$0xff]
    %v41 = vld [vmem:[%s0 + $0x30] sm:$0xff]
    %v42 = vld [vmem:[%s0 + $0x38] sm:$0xff]
    %v43 = vld [vmem:[%s0 + $0x40] sm:$0xff]
    %v44 = vld [vmem:[%s0 + $0x48] sm:$0xff]
    %v45 = vld [vmem:[%s0 + $0x50] sm:$0xff]
    %v46 = vld [vmem:[%s0 + $0x58] sm:$0xff]
    %v47 = vld [vmem:[%s0 + $0x60] sm:$0xff]
    %v48 = vld [vmem:[%s0 + $0x68] sm:$0xff]
    %v49 = vld [vmem:[%s0 + $0x70] sm:$0xff]
    %v50 = vld [vmem:[%s0 + $0x78] sm:$0xff]
    %v51 = vld [vmem:[%s0 + $0x80] sm:$0xff]
    %v52 = vld [vmem:[%s0 + $0x88] sm:$0xff]
    %v53 = vld [vmem:[%s0 + $0x90] sm:$0xff]
    %v54 = vld [vmem:[%s0 + $0x98] sm:$0xff]
    %v55 = vld [vmem:[%s0 + $0xa0] sm:$0xff]
    %v56 = vld [vmem:[%s0 + $0xa8] sm:$0xff]
    %v57 = vld [vmem:[%s0 + $0xb0] sm:$0xff]
    %v58 = vld [vmem:[%s0 + $0xb8] sm:$0xff]
    %v59 = vld [vmem:[%s0 + $0xc0] sm:$0xff]
    %v60 = vld [vmem:[%s0 + $0xc8] sm:$0xff]
    %v61 = vld [vmem:[%s0 + $0xd0] sm:$0xff]
    %v62 = vld [vmem:[%s0 + $0xd8] sm:$0xff]
    %v63 = vld [vmem:[%s0 + $0xe0] sm:$0xff]
    %v64 = vld [vmem:[%s0 + $0xe8] sm:$0xff]
    %v65 = vld [vmem:[%s0 + $0xf0] sm:$0xff]
    %v66 = vld [vmem:[%s0 + $0xf8] sm:$0xff]
    %v67 = vld [vmem:[%s0 + $0x100] sm:$0xff]
    %v68 = vld [vmem:[%s0 + $0x108] sm:$0xff]
    %v69 = vld [vmem:[%s0 + $0x110] sm:$0xff]
    %v70 = vld [vmem:[%s0 + $0x118] sm:$0xff]
    %v71 = vld [vmem:[%s0 + $0x120] sm:$0xff]
    %v72 = vld [vmem:[%s0 + $0x128] sm:$0xff]
    %v73 = vld [vmem:[%s0 + $0x130] sm:$0xff]
    %v74 = vld [vmem:[%s0 + $0x138] sm:$0xff]
    %v75 = vld [vmem:[%s0 + $0x140] sm:$0xff]
    %v76 = vld [vmem:[%s0 + $0x148] sm:$0xff]
    %v77 = vld [vmem:[%s0 + $0x150] sm:$0xff]
    %v78 = vld [vmem:[%s0 + $0x158] sm:$0xff]
    %v79 = vld [vmem:[%s0 + $0x160] sm:$0xff]
    %v80 = vld [vmem:[%s0 + $0x168] sm:$0xff]
    %v81 = vld [vmem:[%s0 + $0x170] sm:$0xff]
    %v82 = vld [vmem:[%s0 + $0x178] sm:$0xff]
    %v83 = vlaneseq
    %v84 = vand.u32 %v83, 127
    %v85 = vadd.s32 %v84, 128
    %v86 = vadd.s32 %v84, 256
    %v87 = vadd.s32 %v84, 384
    %88 = vset.pattern.permute.xlu0 0
    %89 = vperm.xlu0 %88, %v35
    %v90 = vpop.permute.xlu0 %89
    %91 = vset.pattern.permute.xlu0 0
    %92 = vperm.xlu0 %91, %v36
    %v93 = vpop.permute.xlu0 %92
    %94 = vset.pattern.permute.xlu0 0
    %95 = vperm.xlu0 %94, %v37
    %v96 = vpop.permute.xlu0 %95
    %97 = vset.pattern.permute.xlu0 0
    %98 = vperm.xlu0 %97, %v38
    %v99 = vpop.permute.xlu0 %98
    %100 = vset.pattern.permute.xlu0 0
    %101 = vperm.xlu0 %100, %v39
    %v102 = vpop.permute.xlu0 %101
    %103 = vset.pattern.permute.xlu0 0
    %104 = vperm.xlu0 %103, %v40
    %v105 = vpop.permute.xlu0 %104
    %106 = vset.pattern.permute.xlu0 0
    %107 = vperm.xlu0 %106, %v41
    %v108 = vpop.permute.xlu0 %107
    %109 = vset.pattern.permute.xlu0 0
    %110 = vperm.xlu0 %109, %v42
    %v111 = vpop.permute.xlu0 %110
    %112 = vset.pattern.permute.xlu0 0
    %113 = vperm.xlu0 %112, %v43
    %v114 = vpop.permute.xlu0 %113
    %115 = vset.pattern.permute.xlu0 0
    %116 = vperm.xlu0 %115, %v44
    %v117 = vpop.permute.xlu0 %116
    %118 = vset.pattern.permute.xlu0 0
    %119 = vperm.xlu0 %118, %v45
    %v120 = vpop.permute.xlu0 %119
    %121 = vset.pattern.permute.xlu0 0
    %122 = vperm.xlu0 %121, %v46
    %v123 = vpop.permute.xlu0 %122
    %124 = vset.pattern.permute.xlu0 0
    %125 = vperm.xlu0 %124, %v47
    %v126 = vpop.permute.xlu0 %125
    %127 = vset.pattern.permute.xlu0 0
    %128 = vperm.xlu0 %127, %v48
    %v129 = vpop.permute.xlu0 %128
    %130 = vset.pattern.permute.xlu0 0
    %131 = vperm.xlu0 %130, %v49
    %v132 = vpop.permute.xlu0 %131
    %133 = vset.pattern.permute.xlu0 0
    %134 = vperm.xlu0 %133, %v50
    %v135 = vpop.permute.xlu0 %134
    %136 = vset.pattern.permute.xlu0 0
    %137 = vperm.xlu0 %136, %v51
    %v138 = vpop.permute.xlu0 %137
    %139 = vset.pattern.permute.xlu0 0
    %140 = vperm.xlu0 %139, %v52
    %v141 = vpop.permute.xlu0 %140
    %142 = vset.pattern.permute.xlu0 0
    %143 = vperm.xlu0 %142, %v53
    %v144 = vpop.permute.xlu0 %143
    %145 = vset.pattern.permute.xlu0 0
    %146 = vperm.xlu0 %145, %v54
    %v147 = vpop.permute.xlu0 %146
    %148 = vset.pattern.permute.xlu0 0
    %149 = vperm.xlu0 %148, %v55
    %v150 = vpop.permute.xlu0 %149
    %151 = vset.pattern.permute.xlu0 0
    %152 = vperm.xlu0 %151, %v56
    %v153 = vpop.permute.xlu0 %152
    %154 = vset.pattern.permute.xlu0 0
    %155 = vperm.xlu0 %154, %v57
    %v156 = vpop.permute.xlu0 %155
    %157 = vset.pattern.permute.xlu0 0
    %158 = vperm.xlu0 %157, %v58
    %v159 = vpop.permute.xlu0 %158
    %160 = vset.pattern.permute.xlu0 0
    %161 = vperm.xlu0 %160, %v59
    %v162 = vpop.permute.xlu0 %161
    %163 = vset.pattern.permute.xlu0 0
    %164 = vperm.xlu0 %163, %v60
    %v165 = vpop.permute.xlu0 %164
    %166 = vset.pattern.permute.xlu0 0
    %167 = vperm.xlu0 %166, %v61
    %v168 = vpop.permute.xlu0 %167
    %169 = vset.pattern.permute.xlu0 0
    %170 = vperm.xlu0 %169, %v62
    %v171 = vpop.permute.xlu0 %170
    %172 = vset.pattern.permute.xlu0 0
    %173 = vperm.xlu0 %172, %v63
    %v174 = vpop.permute.xlu0 %173
    %175 = vset.pattern.permute.xlu0 0
    %176 = vperm.xlu0 %175, %v64
    %v177 = vpop.permute.xlu0 %176
    %178 = vset.pattern.permute.xlu0 0
    %179 = vperm.xlu0 %178, %v65
    %v180 = vpop.permute.xlu0 %179
    %181 = vset.pattern.permute.xlu0 0
    %182 = vperm.xlu0 %181, %v66
    %v183 = vpop.permute.xlu0 %182
    %184 = vset.pattern.permute.xlu0 0
    %185 = vperm.xlu0 %184, %v67
    %v186 = vpop.permute.xlu0 %185
    %187 = vset.pattern.permute.xlu0 0
    %188 = vperm.xlu0 %187, %v68
    %v189 = vpop.permute.xlu0 %188
    %190 = vset.pattern.permute.xlu0 0
    %191 = vperm.xlu0 %190, %v69
    %v192 = vpop.permute.xlu0 %191
    %193 = vset.pattern.permute.xlu0 0
    %194 = vperm.xlu0 %193, %v70
    %v195 = vpop.permute.xlu0 %194
    %196 = vset.pattern.permute.xlu0 0
    %197 = vperm.xlu0 %196, %v71
    %v198 = vpop.permute.xlu0 %197
    %199 = vset.pattern.permute.xlu0 0
    %200 = vperm.xlu0 %199, %v72
    %v201 = vpop.permute.xlu0 %200
    %202 = vset.pattern.permute.xlu0 0
    %203 = vperm.xlu0 %202, %v73
    %v204 = vpop.permute.xlu0 %203
    %205 = vset.pattern.permute.xlu0 0
    %206 = vperm.xlu0 %205, %v74
    %v207 = vpop.permute.xlu0 %206
    %208 = vset.pattern.permute.xlu0 0
    %209 = vperm.xlu0 %208, %v75
    %v210 = vpop.permute.xlu0 %209
    %211 = vset.pattern.permute.xlu0 0
    %212 = vperm.xlu0 %211, %v76
    %v213 = vpop.permute.xlu0 %212
    %214 = vset.pattern.permute.xlu0 0
    %215 = vperm.xlu0 %214, %v77
    %v216 = vpop.permute.xlu0 %215
    %217 = vset.pattern.permute.xlu0 0
    %218 = vperm.xlu0 %217, %v78
    %v219 = vpop.permute.xlu0 %218
    %220 = vset.pattern.permute.xlu0 0
    %221 = vperm.xlu0 %220, %v79
    %v222 = vpop.permute.xlu0 %221
    %223 = vset.pattern.permute.xlu0 0
    %224 = vperm.xlu0 %223, %v80
    %v225 = vpop.permute.xlu0 %224
    %226 = vset.pattern.permute.xlu0 0
    %227 = vperm.xlu0 %226, %v81
    %v228 = vpop.permute.xlu0 %227
    %229 = vset.pattern.permute.xlu0 0
    %230 = vperm.xlu0 %229, %v82
    %v231 = vpop.permute.xlu0 %230
    %vm232 = vcmp.eq.s32.totalorder %v90, %v84
    %vm233 = vcmp.eq.s32.totalorder %v90, %v85
    %vm234 = vcmp.eq.s32.totalorder %v90, %v86
    %vm235 = vcmp.eq.s32.totalorder %v90, %v87
    %vm236 = vcmp.eq.s32.totalorder %v93, %v84
    %vm237 = vcmp.eq.s32.totalorder %v93, %v85
    %vm238 = vcmp.eq.s32.totalorder %v93, %v86
    %vm239 = vcmp.eq.s32.totalorder %v93, %v87
    %vm240 = vcmp.eq.s32.totalorder %v96, %v84
    %vm241 = vcmp.eq.s32.totalorder %v96, %v85
    %vm242 = vcmp.eq.s32.totalorder %v96, %v86
    %vm243 = vcmp.eq.s32.totalorder %v96, %v87
    %vm244 = vcmp.eq.s32.totalorder %v99, %v84
    %vm245 = vcmp.eq.s32.totalorder %v99, %v85
    %vm246 = vcmp.eq.s32.totalorder %v99, %v86
    %vm247 = vcmp.eq.s32.totalorder %v99, %v87
    %vm248 = vcmp.eq.s32.totalorder %v102, %v84
    %vm249 = vcmp.eq.s32.totalorder %v102, %v85
    %vm250 = vcmp.eq.s32.totalorder %v102, %v86
    %vm251 = vcmp.eq.s32.totalorder %v102, %v87
    %vm252 = vcmp.eq.s32.totalorder %v105, %v84
    %vm253 = vcmp.eq.s32.totalorder %v105, %v85
    %vm254 = vcmp.eq.s32.totalorder %v105, %v86
    %vm255 = vcmp.eq.s32.totalorder %v105, %v87
    %vm256 = vcmp.eq.s32.totalorder %v108, %v84
    %vm257 = vcmp.eq.s32.totalorder %v108, %v85
    %vm258 = vcmp.eq.s32.totalorder %v108, %v86
    %vm259 = vcmp.eq.s32.totalorder %v108, %v87
    %vm260 = vcmp.eq.s32.totalorder %v111, %v84
    %vm261 = vcmp.eq.s32.totalorder %v111, %v85
    %vm262 = vcmp.eq.s32.totalorder %v111, %v86
    %vm263 = vcmp.eq.s32.totalorder %v111, %v87
    %vm264 = vcmp.eq.s32.totalorder %v114, %v84
    %vm265 = vcmp.eq.s32.totalorder %v114, %v85
    %vm266 = vcmp.eq.s32.totalorder %v114, %v86
    %vm267 = vcmp.eq.s32.totalorder %v114, %v87
    %vm268 = vcmp.eq.s32.totalorder %v117, %v84
    %vm269 = vcmp.eq.s32.totalorder %v117, %v85
    %vm270 = vcmp.eq.s32.totalorder %v117, %v86
    %vm271 = vcmp.eq.s32.totalorder %v117, %v87
    %vm272 = vcmp.eq.s32.totalorder %v120, %v84
    %vm273 = vcmp.eq.s32.totalorder %v120, %v85
    %vm274 = vcmp.eq.s32.totalorder %v120, %v86
    %vm275 = vcmp.eq.s32.totalorder %v120, %v87
    %vm276 = vcmp.eq.s32.totalorder %v123, %v84
    %vm277 = vcmp.eq.s32.totalorder %v123, %v85
    %vm278 = vcmp.eq.s32.totalorder %v123, %v86
    %vm279 = vcmp.eq.s32.totalorder %v123, %v87
    %vm280 = vcmp.eq.s32.totalorder %v126, %v84
    %vm281 = vcmp.eq.s32.totalorder %v126, %v85
    %vm282 = vcmp.eq.s32.totalorder %v126, %v86
    %vm283 = vcmp.eq.s32.totalorder %v126, %v87
    %vm284 = vcmp.eq.s32.totalorder %v129, %v84
    %vm285 = vcmp.eq.s32.totalorder %v129, %v85
    %vm286 = vcmp.eq.s32.totalorder %v129, %v86
    %vm287 = vcmp.eq.s32.totalorder %v129, %v87
    %vm288 = vcmp.eq.s32.totalorder %v132, %v84
    %vm289 = vcmp.eq.s32.totalorder %v132, %v85
    %vm290 = vcmp.eq.s32.totalorder %v132, %v86
    %vm291 = vcmp.eq.s32.totalorder %v132, %v87
    %vm292 = vcmp.eq.s32.totalorder %v135, %v84
    %vm293 = vcmp.eq.s32.totalorder %v135, %v85
    %vm294 = vcmp.eq.s32.totalorder %v135, %v86
    %vm295 = vcmp.eq.s32.totalorder %v135, %v87
    %vm296 = vcmp.eq.s32.totalorder %v138, %v84
    %vm297 = vcmp.eq.s32.totalorder %v138, %v85
    %vm298 = vcmp.eq.s32.totalorder %v138, %v86
    %vm299 = vcmp.eq.s32.totalorder %v138, %v87
    %vm300 = vcmp.eq.s32.totalorder %v141, %v84
    %vm301 = vcmp.eq.s32.totalorder %v141, %v85
    %vm302 = vcmp.eq.s32.totalorder %v141, %v86
    %vm303 = vcmp.eq.s32.totalorder %v141, %v87
    %vm304 = vcmp.eq.s32.totalorder %v144, %v84
    %vm305 = vcmp.eq.s32.totalorder %v144, %v85
    %vm306 = vcmp.eq.s32.totalorder %v144, %v86
    %vm307 = vcmp.eq.s32.totalorder %v144, %v87
    %vm308 = vcmp.eq.s32.totalorder %v147, %v84
    %vm309 = vcmp.eq.s32.totalorder %v147, %v85
    %vm310 = vcmp.eq.s32.totalorder %v147, %v86
    %vm311 = vcmp.eq.s32.totalorder %v147, %v87
    %vm312 = vcmp.eq.s32.totalorder %v150, %v84
    %vm313 = vcmp.eq.s32.totalorder %v150, %v85
    %vm314 = vcmp.eq.s32.totalorder %v150, %v86
    %vm315 = vcmp.eq.s32.totalorder %v150, %v87
    %vm316 = vcmp.eq.s32.totalorder %v153, %v84
    %vm317 = vcmp.eq.s32.totalorder %v153, %v85
    %vm318 = vcmp.eq.s32.totalorder %v153, %v86
    %vm319 = vcmp.eq.s32.totalorder %v153, %v87
    %vm320 = vcmp.eq.s32.totalorder %v156, %v84
    %vm321 = vcmp.eq.s32.totalorder %v156, %v85
    %vm322 = vcmp.eq.s32.totalorder %v156, %v86
    %vm323 = vcmp.eq.s32.totalorder %v156, %v87
    %vm324 = vcmp.eq.s32.totalorder %v159, %v84
    %vm325 = vcmp.eq.s32.totalorder %v159, %v85
    %vm326 = vcmp.eq.s32.totalorder %v159, %v86
    %vm327 = vcmp.eq.s32.totalorder %v159, %v87
    %vm328 = vcmp.eq.s32.totalorder %v162, %v84
    %vm329 = vcmp.eq.s32.totalorder %v162, %v85
    %vm330 = vcmp.eq.s32.totalorder %v162, %v86
    %vm331 = vcmp.eq.s32.totalorder %v162, %v87
    %vm332 = vcmp.eq.s32.totalorder %v165, %v84
    %vm333 = vcmp.eq.s32.totalorder %v165, %v85
    %vm334 = vcmp.eq.s32.totalorder %v165, %v86
    %vm335 = vcmp.eq.s32.totalorder %v165, %v87
    %vm336 = vcmp.eq.s32.totalorder %v168, %v84
    %vm337 = vcmp.eq.s32.totalorder %v168, %v85
    %vm338 = vcmp.eq.s32.totalorder %v168, %v86
    %vm339 = vcmp.eq.s32.totalorder %v168, %v87
    %vm340 = vcmp.eq.s32.totalorder %v171, %v84
    %vm341 = vcmp.eq.s32.totalorder %v171, %v85
    %vm342 = vcmp.eq.s32.totalorder %v171, %v86
    %vm343 = vcmp.eq.s32.totalorder %v171, %v87
    %vm344 = vcmp.eq.s32.totalorder %v174, %v84
    %vm345 = vcmp.eq.s32.totalorder %v174, %v85
    %vm346 = vcmp.eq.s32.totalorder %v174, %v86
    %vm347 = vcmp.eq.s32.totalorder %v174, %v87
    %vm348 = vcmp.eq.s32.totalorder %v177, %v84
    %vm349 = vcmp.eq.s32.totalorder %v177, %v85
    %vm350 = vcmp.eq.s32.totalorder %v177, %v86
    %vm351 = vcmp.eq.s32.totalorder %v177, %v87
    %vm352 = vcmp.eq.s32.totalorder %v180, %v84
    %vm353 = vcmp.eq.s32.totalorder %v180, %v85
    %vm354 = vcmp.eq.s32.totalorder %v180, %v86
    %vm355 = vcmp.eq.s32.totalorder %v180, %v87
    %vm356 = vcmp.eq.s32.totalorder %v183, %v84
    %vm357 = vcmp.eq.s32.totalorder %v183, %v85
    %vm358 = vcmp.eq.s32.totalorder %v183, %v86
    %vm359 = vcmp.eq.s32.totalorder %v183, %v87
    %vm360 = vcmp.eq.s32.totalorder %v186, %v84
    %vm361 = vcmp.eq.s32.totalorder %v186, %v85
    %vm362 = vcmp.eq.s32.totalorder %v186, %v86
    %vm363 = vcmp.eq.s32.totalorder %v186, %v87
    %vm364 = vcmp.eq.s32.totalorder %v189, %v84
    %vm365 = vcmp.eq.s32.totalorder %v189, %v85
    %vm366 = vcmp.eq.s32.totalorder %v189, %v86
    %vm367 = vcmp.eq.s32.totalorder %v189, %v87
    %vm368 = vcmp.eq.s32.totalorder %v192, %v84
    %vm369 = vcmp.eq.s32.totalorder %v192, %v85
    %vm370 = vcmp.eq.s32.totalorder %v192, %v86
    %vm371 = vcmp.eq.s32.totalorder %v192, %v87
    %vm372 = vcmp.eq.s32.totalorder %v195, %v84
    %vm373 = vcmp.eq.s32.totalorder %v195, %v85
    %vm374 = vcmp.eq.s32.totalorder %v195, %v86
    %vm375 = vcmp.eq.s32.totalorder %v195, %v87
    %vm376 = vcmp.eq.s32.totalorder %v198, %v84
    %vm377 = vcmp.eq.s32.totalorder %v198, %v85
    %vm378 = vcmp.eq.s32.totalorder %v198, %v86
    %vm379 = vcmp.eq.s32.totalorder %v198, %v87
    %vm380 = vcmp.eq.s32.totalorder %v201, %v84
    %vm381 = vcmp.eq.s32.totalorder %v201, %v85
    %vm382 = vcmp.eq.s32.totalorder %v201, %v86
    %vm383 = vcmp.eq.s32.totalorder %v201, %v87
    %vm384 = vcmp.eq.s32.totalorder %v204, %v84
    %vm385 = vcmp.eq.s32.totalorder %v204, %v85
    %vm386 = vcmp.eq.s32.totalorder %v204, %v86
    %vm387 = vcmp.eq.s32.totalorder %v204, %v87
    %vm388 = vcmp.eq.s32.totalorder %v207, %v84
    %vm389 = vcmp.eq.s32.totalorder %v207, %v85
    %vm390 = vcmp.eq.s32.totalorder %v207, %v86
    %vm391 = vcmp.eq.s32.totalorder %v207, %v87
    %vm392 = vcmp.eq.s32.totalorder %v210, %v84
    %vm393 = vcmp.eq.s32.totalorder %v210, %v85
    %vm394 = vcmp.eq.s32.totalorder %v210, %v86
    %vm395 = vcmp.eq.s32.totalorder %v210, %v87
    %vm396 = vcmp.eq.s32.totalorder %v213, %v84
    %vm397 = vcmp.eq.s32.totalorder %v213, %v85
    %vm398 = vcmp.eq.s32.totalorder %v213, %v86
    %vm399 = vcmp.eq.s32.totalorder %v213, %v87
    %vm400 = vcmp.eq.s32.totalorder %v216, %v84
    %vm401 = vcmp.eq.s32.totalorder %v216, %v85
    %vm402 = vcmp.eq.s32.totalorder %v216, %v86
    %vm403 = vcmp.eq.s32.totalorder %v216, %v87
    %vm404 = vcmp.eq.s32.totalorder %v219, %v84
    %vm405 = vcmp.eq.s32.totalorder %v219, %v85
    %vm406 = vcmp.eq.s32.totalorder %v219, %v86
    %vm407 = vcmp.eq.s32.totalorder %v219, %v87
    %vm408 = vcmp.eq.s32.totalorder %v222, %v84
    %vm409 = vcmp.eq.s32.totalorder %v222, %v85
    %vm410 = vcmp.eq.s32.totalorder %v222, %v86
    %vm411 = vcmp.eq.s32.totalorder %v222, %v87
    %vm412 = vcmp.eq.s32.totalorder %v225, %v84
    %vm413 = vcmp.eq.s32.totalorder %v225, %v85
    %vm414 = vcmp.eq.s32.totalorder %v225, %v86
    %vm415 = vcmp.eq.s32.totalorder %v225, %v87
    %vm416 = vcmp.eq.s32.totalorder %v228, %v84
    %vm417 = vcmp.eq.s32.totalorder %v228, %v85
    %vm418 = vcmp.eq.s32.totalorder %v228, %v86
    %vm419 = vcmp.eq.s32.totalorder %v228, %v87
    %vm420 = vcmp.eq.s32.totalorder %v231, %v84
    %vm421 = vcmp.eq.s32.totalorder %v231, %v85
    %vm422 = vcmp.eq.s32.totalorder %v231, %v86
    %vm423 = vcmp.eq.s32.totalorder %v231, %v87
    %v424 = vsel %vm232, 1, 0
    %v425 = vsel %vm233, 1, 0
    %v426 = vsel %vm234, 1, 0
    %v427 = vsel %vm235, 1, 0
    %v428 = vsel %vm236, 1, 0
    %v429 = vsel %vm237, 1, 0
    %v430 = vsel %vm238, 1, 0
    %v431 = vsel %vm239, 1, 0
    %v432 = vsel %vm240, 1, 0
    %v433 = vsel %vm241, 1, 0
    %v434 = vsel %vm242, 1, 0
    %v435 = vsel %vm243, 1, 0
    %v436 = vsel %vm244, 1, 0
    %v437 = vsel %vm245, 1, 0
    %v438 = vsel %vm246, 1, 0
    %v439 = vsel %vm247, 1, 0
    %v440 = vsel %vm248, 1, 0
    %v441 = vsel %vm249, 1, 0
    %v442 = vsel %vm250, 1, 0
    %v443 = vsel %vm251, 1, 0
    %v444 = vsel %vm252, 1, 0
    %v445 = vsel %vm253, 1, 0
    %v446 = vsel %vm254, 1, 0
    %v447 = vsel %vm255, 1, 0
    %v448 = vsel %vm256, 1, 0
    %v449 = vsel %vm257, 1, 0
    %v450 = vsel %vm258, 1, 0
    %v451 = vsel %vm259, 1, 0
    %v452 = vsel %vm260, 1, 0
    %v453 = vsel %vm261, 1, 0
    %v454 = vsel %vm262, 1, 0
    %v455 = vsel %vm263, 1, 0
    %v456 = vsel %vm264, 1, 0
    %v457 = vsel %vm265, 1, 0
    %v458 = vsel %vm266, 1, 0
    %v459 = vsel %vm267, 1, 0
    %v460 = vsel %vm268, 1, 0
    %v461 = vsel %vm269, 1, 0
    %v462 = vsel %vm270, 1, 0
    %v463 = vsel %vm271, 1, 0
    %v464 = vsel %vm272, 1, 0
    %v465 = vsel %vm273, 1, 0
    %v466 = vsel %vm274, 1, 0
    %v467 = vsel %vm275, 1, 0
    %v468 = vsel %vm276, 1, 0
    %v469 = vsel %vm277, 1, 0
    %v470 = vsel %vm278, 1, 0
    %v471 = vsel %vm279, 1, 0
    %v472 = vsel %vm280, 1, 0
    %v473 = vsel %vm281, 1, 0
    %v474 = vsel %vm282, 1, 0
    %v475 = vsel %vm283, 1, 0
    %v476 = vsel %vm284, 1, 0
    %v477 = vsel %vm285, 1, 0
    %v478 = vsel %vm286, 1, 0
    %v479 = vsel %vm287, 1, 0
    %v480 = vsel %vm288, 1, 0
    %v481 = vsel %vm289, 1, 0
    %v482 = vsel %vm290, 1, 0
    %v483 = vsel %vm291, 1, 0
    %v484 = vsel %vm292, 1, 0
    %v485 = vsel %vm293, 1, 0
    %v486 = vsel %vm294, 1, 0
    %v487 = vsel %vm295, 1, 0
    %v488 = vsel %vm296, 1, 0
    %v489 = vsel %vm297, 1, 0
    %v490 = vsel %vm298, 1, 0
    %v491 = vsel %vm299, 1, 0
    %v492 = vsel %vm300, 1, 0
    %v493 = vsel %vm301, 1, 0
    %v494 = vsel %vm302, 1, 0
    %v495 = vsel %vm303, 1, 0
    %v496 = vsel %vm304, 1, 0
    %v497 = vsel %vm305, 1, 0
    %v498 = vsel %vm306, 1, 0
    %v499 = vsel %vm307, 1, 0
    %v500 = vsel %vm308, 1, 0
    %v501 = vsel %vm309, 1, 0
    %v502 = vsel %vm310, 1, 0
    %v503 = vsel %vm311, 1, 0
    %v504 = vsel %vm312, 1, 0
    %v505 = vsel %vm313, 1, 0
    %v506 = vsel %vm314, 1, 0
    %v507 = vsel %vm315, 1, 0
    %v508 = vsel %vm316, 1, 0
    %v509 = vsel %vm317, 1, 0
    %v510 = vsel %vm318, 1, 0
    %v511 = vsel %vm319, 1, 0
    %v512 = vsel %vm320, 1, 0
    %v513 = vsel %vm321, 1, 0
    %v514 = vsel %vm322, 1, 0
    %v515 = vsel %vm323, 1, 0
    %v516 = vsel %vm324, 1, 0
    %v517 = vsel %vm325, 1, 0
    %v518 = vsel %vm326, 1, 0
    %v519 = vsel %vm327, 1, 0
    %v520 = vsel %vm328, 1, 0
    %v521 = vsel %vm329, 1, 0
    %v522 = vsel %vm330, 1, 0
    %v523 = vsel %vm331, 1, 0
    %v524 = vsel %vm332, 1, 0
    %v525 = vsel %vm333, 1, 0
    %v526 = vsel %vm334, 1, 0
    %v527 = vsel %vm335, 1, 0
    %v528 = vsel %vm336, 1, 0
    %v529 = vsel %vm337, 1, 0
    %v530 = vsel %vm338, 1, 0
    %v531 = vsel %vm339, 1, 0
    %v532 = vsel %vm340, 1, 0
    %v533 = vsel %vm341, 1, 0
    %v534 = vsel %vm342, 1, 0
    %v535 = vsel %vm343, 1, 0
    %v536 = vsel %vm344, 1, 0
    %v537 = vsel %vm345, 1, 0
    %v538 = vsel %vm346, 1, 0
    %v539 = vsel %vm347, 1, 0
    %v540 = vsel %vm348, 1, 0
    %v541 = vsel %vm349, 1, 0
    %v542 = vsel %vm350, 1, 0
    %v543 = vsel %vm351, 1, 0
    %v544 = vsel %vm352, 1, 0
    %v545 = vsel %vm353, 1, 0
    %v546 = vsel %vm354, 1, 0
    %v547 = vsel %vm355, 1, 0
    %v548 = vsel %vm356, 1, 0
    %v549 = vsel %vm357, 1, 0
    %v550 = vsel %vm358, 1, 0
    %v551 = vsel %vm359, 1, 0
    %v552 = vsel %vm360, 1, 0
    %v553 = vsel %vm361, 1, 0
    %v554 = vsel %vm362, 1, 0
    %v555 = vsel %vm363, 1, 0
    %v556 = vsel %vm364, 1, 0
    %v557 = vsel %vm365, 1, 0
    %v558 = vsel %vm366, 1, 0
    %v559 = vsel %vm367, 1, 0
    %v560 = vsel %vm368, 1, 0
    %v561 = vsel %vm369, 1, 0
    %v562 = vsel %vm370, 1, 0
    %v563 = vsel %vm371, 1, 0
    %v564 = vsel %vm372, 1, 0
    %v565 = vsel %vm373, 1, 0
    %v566 = vsel %vm374, 1, 0
    %v567 = vsel %vm375, 1, 0
    %v568 = vsel %vm376, 1, 0
    %v569 = vsel %vm377, 1, 0
    %v570 = vsel %vm378, 1, 0
    %v571 = vsel %vm379, 1, 0
    %v572 = vsel %vm380, 1, 0
    %v573 = vsel %vm381, 1, 0
    %v574 = vsel %vm382, 1, 0
    %v575 = vsel %vm383, 1, 0
    %v576 = vsel %vm384, 1, 0
    %v577 = vsel %vm385, 1, 0
    %v578 = vsel %vm386, 1, 0
    %v579 = vsel %vm387, 1, 0
    %v580 = vsel %vm388, 1, 0
    %v581 = vsel %vm389, 1, 0
    %v582 = vsel %vm390, 1, 0
    %v583 = vsel %vm391, 1, 0
    %v584 = vsel %vm392, 1, 0
    %v585 = vsel %vm393, 1, 0
    %v586 = vsel %vm394, 1, 0
    %v587 = vsel %vm395, 1, 0
    %v588 = vsel %vm396, 1, 0
    %v589 = vsel %vm397, 1, 0
    %v590 = vsel %vm398, 1, 0
    %v591 = vsel %vm399, 1, 0
    %v592 = vsel %vm400, 1, 0
    %v593 = vsel %vm401, 1, 0
    %v594 = vsel %vm402, 1, 0
    %v595 = vsel %vm403, 1, 0
    %v596 = vsel %vm404, 1, 0
    %v597 = vsel %vm405, 1, 0
    %v598 = vsel %vm406, 1, 0
    %v599 = vsel %vm407, 1, 0
    %v600 = vsel %vm408, 1, 0
    %v601 = vsel %vm409, 1, 0
    %v602 = vsel %vm410, 1, 0
    %v603 = vsel %vm411, 1, 0
    %v604 = vsel %vm412, 1, 0
    %v605 = vsel %vm413, 1, 0
    %v606 = vsel %vm414, 1, 0
    %v607 = vsel %vm415, 1, 0
    %v608 = vsel %vm416, 1, 0
    %v609 = vsel %vm417, 1, 0
    %v610 = vsel %vm418, 1, 0
    %v611 = vsel %vm419, 1, 0
    %v612 = vsel %vm420, 1, 0
    %v613 = vsel %vm421, 1, 0
    %v614 = vsel %vm422, 1, 0
    %v615 = vsel %vm423, 1, 0
    %v616 = vcvt.s32.f32 %v424
    %v617 = vcvt.s32.f32 %v425
    %v618 = vcvt.s32.f32 %v426
    %v619 = vcvt.s32.f32 %v427
    %v620 = vcvt.s32.f32 %v428
    %v621 = vcvt.s32.f32 %v429
    %v622 = vcvt.s32.f32 %v430
    %v623 = vcvt.s32.f32 %v431
    %v624 = vcvt.s32.f32 %v432
    %v625 = vcvt.s32.f32 %v433
    %v626 = vcvt.s32.f32 %v434
    %v627 = vcvt.s32.f32 %v435
    %v628 = vcvt.s32.f32 %v436
    %v629 = vcvt.s32.f32 %v437
    %v630 = vcvt.s32.f32 %v438
    %v631 = vcvt.s32.f32 %v439
    %v632 = vcvt.s32.f32 %v440
    %v633 = vcvt.s32.f32 %v441
    %v634 = vcvt.s32.f32 %v442
    %v635 = vcvt.s32.f32 %v443
    %v636 = vcvt.s32.f32 %v444
    %v637 = vcvt.s32.f32 %v445
    %v638 = vcvt.s32.f32 %v446
    %v639 = vcvt.s32.f32 %v447
    %v640 = vcvt.s32.f32 %v448
    %v641 = vcvt.s32.f32 %v449
    %v642 = vcvt.s32.f32 %v450
    %v643 = vcvt.s32.f32 %v451
    %v644 = vcvt.s32.f32 %v452
    %v645 = vcvt.s32.f32 %v453
    %v646 = vcvt.s32.f32 %v454
    %v647 = vcvt.s32.f32 %v455
    %v648 = vcvt.s32.f32 %v456
    %v649 = vcvt.s32.f32 %v457
    %v650 = vcvt.s32.f32 %v458
    %v651 = vcvt.s32.f32 %v459
    %v652 = vcvt.s32.f32 %v460
    %v653 = vcvt.s32.f32 %v461
    %v654 = vcvt.s32.f32 %v462
    %v655 = vcvt.s32.f32 %v463
    %v656 = vcvt.s32.f32 %v464
    %v657 = vcvt.s32.f32 %v465
    %v658 = vcvt.s32.f32 %v466
    %v659 = vcvt.s32.f32 %v467
    %v660 = vcvt.s32.f32 %v468
    %v661 = vcvt.s32.f32 %v469
    %v662 = vcvt.s32.f32 %v470
    %v663 = vcvt.s32.f32 %v471
    %v664 = vcvt.s32.f32 %v472
    %v665 = vcvt.s32.f32 %v473
    %v666 = vcvt.s32.f32 %v474
    %v667 = vcvt.s32.f32 %v475
    %v668 = vcvt.s32.f32 %v476
    %v669 = vcvt.s32.f32 %v477
    %v670 = vcvt.s32.f32 %v478
    %v671 = vcvt.s32.f32 %v479
    %v672 = vcvt.s32.f32 %v480
    %v673 = vcvt.s32.f32 %v481
    %v674 = vcvt.s32.f32 %v482
    %v675 = vcvt.s32.f32 %v483
    %v676 = vcvt.s32.f32 %v484
    %v677 = vcvt.s32.f32 %v485
    %v678 = vcvt.s32.f32 %v486
    %v679 = vcvt.s32.f32 %v487
    %v680 = vcvt.s32.f32 %v488
    %v681 = vcvt.s32.f32 %v489
    %v682 = vcvt.s32.f32 %v490
    %v683 = vcvt.s32.f32 %v491
    %v684 = vcvt.s32.f32 %v492
    %v685 = vcvt.s32.f32 %v493
    %v686 = vcvt.s32.f32 %v494
    %v687 = vcvt.s32.f32 %v495
    %v688 = vcvt.s32.f32 %v496
    %v689 = vcvt.s32.f32 %v497
    %v690 = vcvt.s32.f32 %v498
    %v691 = vcvt.s32.f32 %v499
    %v692 = vcvt.s32.f32 %v500
    %v693 = vcvt.s32.f32 %v501
    %v694 = vcvt.s32.f32 %v502
    %v695 = vcvt.s32.f32 %v503
    %v696 = vcvt.s32.f32 %v504
    %v697 = vcvt.s32.f32 %v505
    %v698 = vcvt.s32.f32 %v506
    %v699 = vcvt.s32.f32 %v507
    %v700 = vcvt.s32.f32 %v508
    %v701 = vcvt.s32.f32 %v509
    %v702 = vcvt.s32.f32 %v510
    %v703 = vcvt.s32.f32 %v511
    %v704 = vcvt.s32.f32 %v512
    %v705 = vcvt.s32.f32 %v513
    %v706 = vcvt.s32.f32 %v514
    %v707 = vcvt.s32.f32 %v515
    %v708 = vcvt.s32.f32 %v516
    %v709 = vcvt.s32.f32 %v517
    %v710 = vcvt.s32.f32 %v518
    %v711 = vcvt.s32.f32 %v519
    %v712 = vcvt.s32.f32 %v520
    %v713 = vcvt.s32.f32 %v521
    %v714 = vcvt.s32.f32 %v522
    %v715 = vcvt.s32.f32 %v523
    %v716 = vcvt.s32.f32 %v524
    %v717 = vcvt.s32.f32 %v525
    %v718 = vcvt.s32.f32 %v526
    %v719 = vcvt.s32.f32 %v527
    %v720 = vcvt.s32.f32 %v528
    %v721 = vcvt.s32.f32 %v529
    %v722 = vcvt.s32.f32 %v530
    %v723 = vcvt.s32.f32 %v531
    %v724 = vcvt.s32.f32 %v532
    %v725 = vcvt.s32.f32 %v533
    %v726 = vcvt.s32.f32 %v534
    %v727 = vcvt.s32.f32 %v535
    %v728 = vcvt.s32.f32 %v536
    %v729 = vcvt.s32.f32 %v537
    %v730 = vcvt.s32.f32 %v538
    %v731 = vcvt.s32.f32 %v539
    %v732 = vcvt.s32.f32 %v540
    %v733 = vcvt.s32.f32 %v541
    %v734 = vcvt.s32.f32 %v542
    %v735 = vcvt.s32.f32 %v543
    %v736 = vcvt.s32.f32 %v544
    %v737 = vcvt.s32.f32 %v545
    %v738 = vcvt.s32.f32 %v546
    %v739 = vcvt.s32.f32 %v547
    %v740 = vcvt.s32.f32 %v548
    %v741 = vcvt.s32.f32 %v549
    %v742 = vcvt.s32.f32 %v550
    %v743 = vcvt.s32.f32 %v551
    %v744 = vcvt.s32.f32 %v552
    %v745 = vcvt.s32.f32 %v553
    %v746 = vcvt.s32.f32 %v554
    %v747 = vcvt.s32.f32 %v555
    %v748 = vcvt.s32.f32 %v556
    %v749 = vcvt.s32.f32 %v557
    %v750 = vcvt.s32.f32 %v558
    %v751 = vcvt.s32.f32 %v559
    %v752 = vcvt.s32.f32 %v560
    %v753 = vcvt.s32.f32 %v561
    %v754 = vcvt.s32.f32 %v562
    %v755 = vcvt.s32.f32 %v563
    %v756 = vcvt.s32.f32 %v564
    %v757 = vcvt.s32.f32 %v565
    %v758 = vcvt.s32.f32 %v566
    %v759 = vcvt.s32.f32 %v567
    %v760 = vcvt.s32.f32 %v568
    %v761 = vcvt.s32.f32 %v569
    %v762 = vcvt.s32.f32 %v570
    %v763 = vcvt.s32.f32 %v571
    %v764 = vcvt.s32.f32 %v572
    %v765 = vcvt.s32.f32 %v573
    %v766 = vcvt.s32.f32 %v574
    %v767 = vcvt.s32.f32 %v575
    %v768 = vcvt.s32.f32 %v576
    %v769 = vcvt.s32.f32 %v577
    %v770 = vcvt.s32.f32 %v578
    %v771 = vcvt.s32.f32 %v579
    %v772 = vcvt.s32.f32 %v580
    %v773 = vcvt.s32.f32 %v581
    %v774 = vcvt.s32.f32 %v582
    %v775 = vcvt.s32.f32 %v583
    %v776 = vcvt.s32.f32 %v584
    %v777 = vcvt.s32.f32 %v585
    %v778 = vcvt.s32.f32 %v586
    %v779 = vcvt.s32.f32 %v587
    %v780 = vcvt.s32.f32 %v588
    %v781 = vcvt.s32.f32 %v589
    %v782 = vcvt.s32.f32 %v590
    %v783 = vcvt.s32.f32 %v591
    %v784 = vcvt.s32.f32 %v592
    %v785 = vcvt.s32.f32 %v593
    %v786 = vcvt.s32.f32 %v594
    %v787 = vcvt.s32.f32 %v595
    %v788 = vcvt.s32.f32 %v596
    %v789 = vcvt.s32.f32 %v597
    %v790 = vcvt.s32.f32 %v598
    %v791 = vcvt.s32.f32 %v599
    %v792 = vcvt.s32.f32 %v600
    %v793 = vcvt.s32.f32 %v601
    %v794 = vcvt.s32.f32 %v602
    %v795 = vcvt.s32.f32 %v603
    %v796 = vcvt.s32.f32 %v604
    %v797 = vcvt.s32.f32 %v605
    %v798 = vcvt.s32.f32 %v606
    %v799 = vcvt.s32.f32 %v607
    %v800 = vcvt.s32.f32 %v608
    %v801 = vcvt.s32.f32 %v609
    %v802 = vcvt.s32.f32 %v610
    %v803 = vcvt.s32.f32 %v611
    %v804 = vcvt.s32.f32 %v612
    %v805 = vcvt.s32.f32 %v613
    %v806 = vcvt.s32.f32 %v614
    %v807 = vcvt.s32.f32 %v615
    %v808 = vadd.f32 %v616, 0.0
    %v809 = vadd.f32 %v617, 0.0
    %v810 = vadd.f32 %v618, 0.0
    %v811 = vadd.f32 %v619, 0.0
    %v812 = vadd.f32 %v620, 0.0
    %v813 = vadd.f32 %v621, 0.0
    %v814 = vadd.f32 %v622, 0.0
    %v815 = vadd.f32 %v623, 0.0
    %v816 = vadd.f32 %v624, 0.0
    %v817 = vadd.f32 %v625, 0.0
    %v818 = vadd.f32 %v626, 0.0
    %v819 = vadd.f32 %v627, 0.0
    %v820 = vadd.f32 %v628, 0.0
    %v821 = vadd.f32 %v629, 0.0
    %v822 = vadd.f32 %v630, 0.0
    %v823 = vadd.f32 %v631, 0.0
    %v824 = vadd.f32 %v632, 0.0
    %v825 = vadd.f32 %v633, 0.0
    %v826 = vadd.f32 %v634, 0.0
    %v827 = vadd.f32 %v635, 0.0
    %v828 = vadd.f32 %v636, 0.0
    %v829 = vadd.f32 %v637, 0.0
    %v830 = vadd.f32 %v638, 0.0
    %v831 = vadd.f32 %v639, 0.0
    %v832 = vadd.f32 %v640, 0.0
    %v833 = vadd.f32 %v641, 0.0
    %v834 = vadd.f32 %v642, 0.0
    %v835 = vadd.f32 %v643, 0.0
    %v836 = vadd.f32 %v644, 0.0
    %v837 = vadd.f32 %v645, 0.0
    %v838 = vadd.f32 %v646, 0.0
    %v839 = vadd.f32 %v647, 0.0
    %v840 = vadd.f32 %v648, 0.0
    %v841 = vadd.f32 %v649, 0.0
    %v842 = vadd.f32 %v650, 0.0
    %v843 = vadd.f32 %v651, 0.0
    %v844 = vadd.f32 %v652, 0.0
    %v845 = vadd.f32 %v653, 0.0
    %v846 = vadd.f32 %v654, 0.0
    %v847 = vadd.f32 %v655, 0.0
    %v848 = vadd.f32 %v656, 0.0
    %v849 = vadd.f32 %v657, 0.0
    %v850 = vadd.f32 %v658, 0.0
    %v851 = vadd.f32 %v659, 0.0
    %v852 = vadd.f32 %v660, 0.0
    %v853 = vadd.f32 %v661, 0.0
    %v854 = vadd.f32 %v662, 0.0
    %v855 = vadd.f32 %v663, 0.0
    %v856 = vadd.f32 %v664, 0.0
    %v857 = vadd.f32 %v665, 0.0
    %v858 = vadd.f32 %v666, 0.0
    %v859 = vadd.f32 %v667, 0.0
    %v860 = vadd.f32 %v668, 0.0
    %v861 = vadd.f32 %v669, 0.0
    %v862 = vadd.f32 %v670, 0.0
    %v863 = vadd.f32 %v671, 0.0
    %v864 = vadd.f32 %v672, 0.0
    %v865 = vadd.f32 %v673, 0.0
    %v866 = vadd.f32 %v674, 0.0
    %v867 = vadd.f32 %v675, 0.0
    %v868 = vadd.f32 %v676, 0.0
    %v869 = vadd.f32 %v677, 0.0
    %v870 = vadd.f32 %v678, 0.0
    %v871 = vadd.f32 %v679, 0.0
    %v872 = vadd.f32 %v680, 0.0
    %v873 = vadd.f32 %v681, 0.0
    %v874 = vadd.f32 %v682, 0.0
    %v875 = vadd.f32 %v683, 0.0
    %v876 = vadd.f32 %v684, 0.0
    %v877 = vadd.f32 %v685, 0.0
    %v878 = vadd.f32 %v686, 0.0
    %v879 = vadd.f32 %v687, 0.0
    %v880 = vadd.f32 %v688, 0.0
    %v881 = vadd.f32 %v689, 0.0
    %v882 = vadd.f32 %v690, 0.0
    %v883 = vadd.f32 %v691, 0.0
    %v884 = vadd.f32 %v692, 0.0
    %v885 = vadd.f32 %v693, 0.0
    %v886 = vadd.f32 %v694, 0.0
    %v887 = vadd.f32 %v695, 0.0
    %v888 = vadd.f32 %v696, 0.0
    %v889 = vadd.f32 %v697, 0.0
    %v890 = vadd.f32 %v698, 0.0
    %v891 = vadd.f32 %v699, 0.0
    %v892 = vadd.f32 %v700, 0.0
    %v893 = vadd.f32 %v701, 0.0
    %v894 = vadd.f32 %v702, 0.0
    %v895 = vadd.f32 %v703, 0.0
    %v896 = vadd.f32 %v704, 0.0
    %v897 = vadd.f32 %v705, 0.0
    %v898 = vadd.f32 %v706, 0.0
    %v899 = vadd.f32 %v707, 0.0
    %v900 = vadd.f32 %v708, 0.0
    %v901 = vadd.f32 %v709, 0.0
    %v902 = vadd.f32 %v710, 0.0
    %v903 = vadd.f32 %v711, 0.0
    %v904 = vadd.f32 %v712, 0.0
    %v905 = vadd.f32 %v713, 0.0
    %v906 = vadd.f32 %v714, 0.0
    %v907 = vadd.f32 %v715, 0.0
    %v908 = vadd.f32 %v716, 0.0
    %v909 = vadd.f32 %v717, 0.0
    %v910 = vadd.f32 %v718, 0.0
    %v911 = vadd.f32 %v719, 0.0
    %v912 = vadd.f32 %v720, 0.0
    %v913 = vadd.f32 %v721, 0.0
    %v914 = vadd.f32 %v722, 0.0
    %v915 = vadd.f32 %v723, 0.0
    %v916 = vadd.f32 %v724, 0.0
    %v917 = vadd.f32 %v725, 0.0
    %v918 = vadd.f32 %v726, 0.0
    %v919 = vadd.f32 %v727, 0.0
    %v920 = vadd.f32 %v728, 0.0
    %v921 = vadd.f32 %v729, 0.0
    %v922 = vadd.f32 %v730, 0.0
    %v923 = vadd.f32 %v731, 0.0
    %v924 = vadd.f32 %v732, 0.0
    %v925 = vadd.f32 %v733, 0.0
    %v926 = vadd.f32 %v734, 0.0
    %v927 = vadd.f32 %v735, 0.0
    %v928 = vadd.f32 %v736, 0.0
    %v929 = vadd.f32 %v737, 0.0
    %v930 = vadd.f32 %v738, 0.0
    %v931 = vadd.f32 %v739, 0.0
    %v932 = vadd.f32 %v740, 0.0
    %v933 = vadd.f32 %v741, 0.0
    %v934 = vadd.f32 %v742, 0.0
    %v935 = vadd.f32 %v743, 0.0
    %v936 = vadd.f32 %v744, 0.0
    %v937 = vadd.f32 %v745, 0.0
    %v938 = vadd.f32 %v746, 0.0
    %v939 = vadd.f32 %v747, 0.0
    %v940 = vadd.f32 %v748, 0.0
    %v941 = vadd.f32 %v749, 0.0
    %v942 = vadd.f32 %v750, 0.0
    %v943 = vadd.f32 %v751, 0.0
    %v944 = vadd.f32 %v752, 0.0
    %v945 = vadd.f32 %v753, 0.0
    %v946 = vadd.f32 %v754, 0.0
    %v947 = vadd.f32 %v755, 0.0
    %v948 = vadd.f32 %v756, 0.0
    %v949 = vadd.f32 %v757, 0.0
    %v950 = vadd.f32 %v758, 0.0
    %v951 = vadd.f32 %v759, 0.0
    %v952 = vadd.f32 %v760, 0.0
    %v953 = vadd.f32 %v761, 0.0
    %v954 = vadd.f32 %v762, 0.0
    %v955 = vadd.f32 %v763, 0.0
    %v956 = vadd.f32 %v764, 0.0
    %v957 = vadd.f32 %v765, 0.0
    %v958 = vadd.f32 %v766, 0.0
    %v959 = vadd.f32 %v767, 0.0
    %v960 = vadd.f32 %v768, 0.0
    %v961 = vadd.f32 %v769, 0.0
    %v962 = vadd.f32 %v770, 0.0
    %v963 = vadd.f32 %v771, 0.0
    %v964 = vadd.f32 %v772, 0.0
    %v965 = vadd.f32 %v773, 0.0
    %v966 = vadd.f32 %v774, 0.0
    %v967 = vadd.f32 %v775, 0.0
    %v968 = vadd.f32 %v776, 0.0
    %v969 = vadd.f32 %v777, 0.0
    %v970 = vadd.f32 %v778, 0.0
    %v971 = vadd.f32 %v779, 0.0
    %v972 = vadd.f32 %v780, 0.0
    %v973 = vadd.f32 %v781, 0.0
    %v974 = vadd.f32 %v782, 0.0
    %v975 = vadd.f32 %v783, 0.0
    %v976 = vadd.f32 %v784, 0.0
    %v977 = vadd.f32 %v785, 0.0
    %v978 = vadd.f32 %v786, 0.0
    %v979 = vadd.f32 %v787, 0.0
    %v980 = vadd.f32 %v788, 0.0
    %v981 = vadd.f32 %v789, 0.0
    %v982 = vadd.f32 %v790, 0.0
    %v983 = vadd.f32 %v791, 0.0
    %v984 = vadd.f32 %v792, 0.0
    %v985 = vadd.f32 %v793, 0.0
    %v986 = vadd.f32 %v794, 0.0
    %v987 = vadd.f32 %v795, 0.0
    %v988 = vadd.f32 %v796, 0.0
    %v989 = vadd.f32 %v797, 0.0
    %v990 = vadd.f32 %v798, 0.0
    %v991 = vadd.f32 %v799, 0.0
    %v992 = vadd.f32 %v800, 0.0
    %v993 = vadd.f32 %v801, 0.0
    %v994 = vadd.f32 %v802, 0.0
    %v995 = vadd.f32 %v803, 0.0
    %v996 = vadd.f32 %v804, 0.0
    %v997 = vadd.f32 %v805, 0.0
    %v998 = vadd.f32 %v806, 0.0
    %v999 = vadd.f32 %v807, 0.0
    %v1000 = vadd.s32 %v35, 64
    %v1001 = vadd.s32 %v36, 64
    %v1002 = vadd.s32 %v37, 64
    %v1003 = vadd.s32 %v38, 64
    %v1004 = vadd.s32 %v39, 64
    %v1005 = vadd.s32 %v40, 64
    %v1006 = vadd.s32 %v41, 64
    %v1007 = vadd.s32 %v42, 64
    %v1008 = vadd.s32 %v43, 64
    %v1009 = vadd.s32 %v44, 64
    %v1010 = vadd.s32 %v45, 64
    %v1011 = vadd.s32 %v46, 64
    %v1012 = vadd.s32 %v47, 64
    %v1013 = vadd.s32 %v48, 64
    %v1014 = vadd.s32 %v49, 64
    %v1015 = vadd.s32 %v50, 64
    %v1016 = vadd.s32 %v51, 64
    %v1017 = vadd.s32 %v52, 64
    %v1018 = vadd.s32 %v53, 64
    %v1019 = vadd.s32 %v54, 64
    %v1020 = vadd.s32 %v55, 64
    %v1021 = vadd.s32 %v56, 64
    %v1022 = vadd.s32 %v57, 64
    %v1023 = vadd.s32 %v58, 64
    %v1024 = vadd.s32 %v59, 64
    %v1025 = vadd.s32 %v60, 64
    %v1026 = vadd.s32 %v61, 64
    %v1027 = vadd.s32 %v62, 64
    %v1028 = vadd.s32 %v63, 64
    %v1029 = vadd.s32 %v64, 64
    %v1030 = vadd.s32 %v65, 64
    %v1031 = vadd.s32 %v66, 64
    %v1032 = vadd.s32 %v67, 64
    %v1033 = vadd.s32 %v68, 64
    %v1034 = vadd.s32 %v69, 64
    %v1035 = vadd.s32 %v70, 64
    %v1036 = vadd.s32 %v71, 64
    %v1037 = vadd.s32 %v72, 64
    %v1038 = vadd.s32 %v73, 64
    %v1039 = vadd.s32 %v74, 64
    %v1040 = vadd.s32 %v75, 64
    %v1041 = vadd.s32 %v76, 64
    %v1042 = vadd.s32 %v77, 64
    %v1043 = vadd.s32 %v78, 64
    %v1044 = vadd.s32 %v79, 64
    %v1045 = vadd.s32 %v80, 64
    %v1046 = vadd.s32 %v81, 64
    %v1047 = vadd.s32 %v82, 64
    %1048 = vset.pattern.permute.xlu0 1
    %1049 = vperm.xlu0 %1048, %v1000
    %v1050 = vpop.permute.xlu0 %1049
    %1051 = vset.pattern.permute.xlu0 1
    %1052 = vperm.xlu0 %1051, %v1001
    %v1053 = vpop.permute.xlu0 %1052
    %1054 = vset.pattern.permute.xlu0 1
    %1055 = vperm.xlu0 %1054, %v1002
    %v1056 = vpop.permute.xlu0 %1055
    %1057 = vset.pattern.permute.xlu0 1
    %1058 = vperm.xlu0 %1057, %v1003
    %v1059 = vpop.permute.xlu0 %1058
    %1060 = vset.pattern.permute.xlu0 1
    %1061 = vperm.xlu0 %1060, %v1004
    %v1062 = vpop.permute.xlu0 %1061
    %1063 = vset.pattern.permute.xlu0 1
    %1064 = vperm.xlu0 %1063, %v1005
    %v1065 = vpop.permute.xlu0 %1064
    %1066 = vset.pattern.permute.xlu0 1
    %1067 = vperm.xlu0 %1066, %v1006
    %v1068 = vpop.permute.xlu0 %1067
    %1069 = vset.pattern.permute.xlu0 1
    %1070 = vperm.xlu0 %1069, %v1007
    %v1071 = vpop.permute.xlu0 %1070
    %1072 = vset.pattern.permute.xlu0 1
    %1073 = vperm.xlu0 %1072, %v1008
    %v1074 = vpop.permute.xlu0 %1073
    %1075 = vset.pattern.permute.xlu0 1
    %1076 = vperm.xlu0 %1075, %v1009
    %v1077 = vpop.permute.xlu0 %1076
    %1078 = vset.pattern.permute.xlu0 1
    %1079 = vperm.xlu0 %1078, %v1010
    %v1080 = vpop.permute.xlu0 %1079
    %1081 = vset.pattern.permute.xlu0 1
    %1082 = vperm.xlu0 %1081, %v1011
    %v1083 = vpop.permute.xlu0 %1082
    %1084 = vset.pattern.permute.xlu0 1
    %1085 = vperm.xlu0 %1084, %v1012
    %v1086 = vpop.permute.xlu0 %1085
    %1087 = vset.pattern.permute.xlu0 1
    %1088 = vperm.xlu0 %1087, %v1013
    %v1089 = vpop.permute.xlu0 %1088
    %1090 = vset.pattern.permute.xlu0 1
    %1091 = vperm.xlu0 %1090, %v1014
    %v1092 = vpop.permute.xlu0 %1091
    %1093 = vset.pattern.permute.xlu0 1
    %1094 = vperm.xlu0 %1093, %v1015
    %v1095 = vpop.permute.xlu0 %1094
    %1096 = vset.pattern.permute.xlu0 1
    %1097 = vperm.xlu0 %1096, %v1016
    %v1098 = vpop.permute.xlu0 %1097
    %1099 = vset.pattern.permute.xlu0 1
    %1100 = vperm.xlu0 %1099, %v1017
    %v1101 = vpop.permute.xlu0 %1100
    %1102 = vset.pattern.permute.xlu0 1
    %1103 = vperm.xlu0 %1102, %v1018
    %v1104 = vpop.permute.xlu0 %1103
    %1105 = vset.pattern.permute.xlu0 1
    %1106 = vperm.xlu0 %1105, %v1019
    %v1107 = vpop.permute.xlu0 %1106
    %1108 = vset.pattern.permute.xlu0 1
    %1109 = vperm.xlu0 %1108, %v1020
    %v1110 = vpop.permute.xlu0 %1109
    %1111 = vset.pattern.permute.xlu0 1
    %1112 = vperm.xlu0 %1111, %v1021
    %v1113 = vpop.permute.xlu0 %1112
    %1114 = vset.pattern.permute.xlu0 1
    %1115 = vperm.xlu0 %1114, %v1022
    %v1116 = vpop.permute.xlu0 %1115
    %1117 = vset.pattern.permute.xlu0 1
    %1118 = vperm.xlu0 %1117, %v1023
    %v1119 = vpop.permute.xlu0 %1118
    %1120 = vset.pattern.permute.xlu0 1
    %1121 = vperm.xlu0 %1120, %v1024
    %v1122 = vpop.permute.xlu0 %1121
    %1123 = vset.pattern.permute.xlu0 1
    %1124 = vperm.xlu0 %1123, %v1025
    %v1125 = vpop.permute.xlu0 %1124
    %1126 = vset.pattern.permute.xlu0 1
    %1127 = vperm.xlu0 %1126, %v1026
    %v1128 = vpop.permute.xlu0 %1127
    %1129 = vset.pattern.permute.xlu0 1
    %1130 = vperm.xlu0 %1129, %v1027
    %v1131 = vpop.permute.xlu0 %1130
    %1132 = vset.pattern.permute.xlu0 1
    %1133 = vperm.xlu0 %1132, %v1028
    %v1134 = vpop.permute.xlu0 %1133
    %1135 = vset.pattern.permute.xlu0 1
    %1136 = vperm.xlu0 %1135, %v1029
    %v1137 = vpop.permute.xlu0 %1136
    %1138 = vset.pattern.permute.xlu0 1
    %1139 = vperm.xlu0 %1138, %v1030
    %v1140 = vpop.permute.xlu0 %1139
    %1141 = vset.pattern.permute.xlu0 1
    %1142 = vperm.xlu0 %1141, %v1031
    %v1143 = vpop.permute.xlu0 %1142
    %1144 = vset.pattern.permute.xlu0 1
    %1145 = vperm.xlu0 %1144, %v1032
    %v1146 = vpop.permute.xlu0 %1145
    %1147 = vset.pattern.permute.xlu0 1
    %1148 = vperm.xlu0 %1147, %v1033
    %v1149 = vpop.permute.xlu0 %1148
    %1150 = vset.pattern.permute.xlu0 1
    %1151 = vperm.xlu0 %1150, %v1034
    %v1152 = vpop.permute.xlu0 %1151
    %1153 = vset.pattern.permute.xlu0 1
    %1154 = vperm.xlu0 %1153, %v1035
    %v1155 = vpop.permute.xlu0 %1154
    %1156 = vset.pattern.permute.xlu0 1
    %1157 = vperm.xlu0 %1156, %v1036
    %v1158 = vpop.permute.xlu0 %1157
    %1159 = vset.pattern.permute.xlu0 1
    %1160 = vperm.xlu0 %1159, %v1037
    %v1161 = vpop.permute.xlu0 %1160
    %1162 = vset.pattern.permute.xlu0 1
    %1163 = vperm.xlu0 %1162, %v1038
    %v1164 = vpop.permute.xlu0 %1163
    %1165 = vset.pattern.permute.xlu0 1
    %1166 = vperm.xlu0 %1165, %v1039
    %v1167 = vpop.permute.xlu0 %1166
    %1168 = vset.pattern.permute.xlu0 1
    %1169 = vperm.xlu0 %1168, %v1040
    %v1170 = vpop.permute.xlu0 %1169
    %1171 = vset.pattern.permute.xlu0 1
    %1172 = vperm.xlu0 %1171, %v1041
    %v1173 = vpop.permute.xlu0 %1172
    %1174 = vset.pattern.permute.xlu0 1
    %1175 = vperm.xlu0 %1174, %v1042
    %v1176 = vpop.permute.xlu0 %1175
    %1177 = vset.pattern.permute.xlu0 1
    %1178 = vperm.xlu0 %1177, %v1043
    %v1179 = vpop.permute.xlu0 %1178
    %1180 = vset.pattern.permute.xlu0 1
    %1181 = vperm.xlu0 %1180, %v1044
    %v1182 = vpop.permute.xlu0 %1181
    %1183 = vset.pattern.permute.xlu0 1
    %1184 = vperm.xlu0 %1183, %v1045
    %v1185 = vpop.permute.xlu0 %1184
    %1186 = vset.pattern.permute.xlu0 1
    %1187 = vperm.xlu0 %1186, %v1046
    %v1188 = vpop.permute.xlu0 %1187
    %1189 = vset.pattern.permute.xlu0 1
    %1190 = vperm.xlu0 %1189, %v1047
    %v1191 = vpop.permute.xlu0 %1190
    %vm1192 = vcmp.eq.s32.totalorder %v1050, %v84
    %vm1193 = vcmp.eq.s32.totalorder %v1050, %v85
    %vm1194 = vcmp.eq.s32.totalorder %v1050, %v86
    %vm1195 = vcmp.eq.s32.totalorder %v1050, %v87
    %vm1196 = vcmp.eq.s32.totalorder %v1053, %v84
    %vm1197 = vcmp.eq.s32.totalorder %v1053, %v85
    %vm1198 = vcmp.eq.s32.totalorder %v1053, %v86
    %vm1199 = vcmp.eq.s32.totalorder %v1053, %v87
    %vm1200 = vcmp.eq.s32.totalorder %v1056, %v84
    %vm1201 = vcmp.eq.s32.totalorder %v1056, %v85
    %vm1202 = vcmp.eq.s32.totalorder %v1056, %v86
    %vm1203 = vcmp.eq.s32.totalorder %v1056, %v87
    %vm1204 = vcmp.eq.s32.totalorder %v1059, %v84
    %vm1205 = vcmp.eq.s32.totalorder %v1059, %v85
    %vm1206 = vcmp.eq.s32.totalorder %v1059, %v86
    %vm1207 = vcmp.eq.s32.totalorder %v1059, %v87
    %vm1208 = vcmp.eq.s32.totalorder %v1062, %v84
    %vm1209 = vcmp.eq.s32.totalorder %v1062, %v85
    %vm1210 = vcmp.eq.s32.totalorder %v1062, %v86
    %vm1211 = vcmp.eq.s32.totalorder %v1062, %v87
    %vm1212 = vcmp.eq.s32.totalorder %v1065, %v84
    %vm1213 = vcmp.eq.s32.totalorder %v1065, %v85
    %vm1214 = vcmp.eq.s32.totalorder %v1065, %v86
    %vm1215 = vcmp.eq.s32.totalorder %v1065, %v87
    %vm1216 = vcmp.eq.s32.totalorder %v1068, %v84
    %vm1217 = vcmp.eq.s32.totalorder %v1068, %v85
    %vm1218 = vcmp.eq.s32.totalorder %v1068, %v86
    %vm1219 = vcmp.eq.s32.totalorder %v1068, %v87
    %vm1220 = vcmp.eq.s32.totalorder %v1071, %v84
    %vm1221 = vcmp.eq.s32.totalorder %v1071, %v85
    %vm1222 = vcmp.eq.s32.totalorder %v1071, %v86
    %vm1223 = vcmp.eq.s32.totalorder %v1071, %v87
    %vm1224 = vcmp.eq.s32.totalorder %v1074, %v84
    %vm1225 = vcmp.eq.s32.totalorder %v1074, %v85
    %vm1226 = vcmp.eq.s32.totalorder %v1074, %v86
    %vm1227 = vcmp.eq.s32.totalorder %v1074, %v87
    %vm1228 = vcmp.eq.s32.totalorder %v1077, %v84
    %vm1229 = vcmp.eq.s32.totalorder %v1077, %v85
    %vm1230 = vcmp.eq.s32.totalorder %v1077, %v86
    %vm1231 = vcmp.eq.s32.totalorder %v1077, %v87
    %vm1232 = vcmp.eq.s32.totalorder %v1080, %v84
    %vm1233 = vcmp.eq.s32.totalorder %v1080, %v85
    %vm1234 = vcmp.eq.s32.totalorder %v1080, %v86
    %vm1235 = vcmp.eq.s32.totalorder %v1080, %v87
    %vm1236 = vcmp.eq.s32.totalorder %v1083, %v84
    %vm1237 = vcmp.eq.s32.totalorder %v1083, %v85
    %vm1238 = vcmp.eq.s32.totalorder %v1083, %v86
    %vm1239 = vcmp.eq.s32.totalorder %v1083, %v87
    %vm1240 = vcmp.eq.s32.totalorder %v1086, %v84
    %vm1241 = vcmp.eq.s32.totalorder %v1086, %v85
    %vm1242 = vcmp.eq.s32.totalorder %v1086, %v86
    %vm1243 = vcmp.eq.s32.totalorder %v1086, %v87
    %vm1244 = vcmp.eq.s32.totalorder %v1089, %v84
    %vm1245 = vcmp.eq.s32.totalorder %v1089, %v85
    %vm1246 = vcmp.eq.s32.totalorder %v1089, %v86
    %vm1247 = vcmp.eq.s32.totalorder %v1089, %v87
    %vm1248 = vcmp.eq.s32.totalorder %v1092, %v84
    %vm1249 = vcmp.eq.s32.totalorder %v1092, %v85
    %vm1250 = vcmp.eq.s32.totalorder %v1092, %v86
    %vm1251 = vcmp.eq.s32.totalorder %v1092, %v87
    %vm1252 = vcmp.eq.s32.totalorder %v1095, %v84
    %vm1253 = vcmp.eq.s32.totalorder %v1095, %v85
    %vm1254 = vcmp.eq.s32.totalorder %v1095, %v86
    %vm1255 = vcmp.eq.s32.totalorder %v1095, %v87
    %vm1256 = vcmp.eq.s32.totalorder %v1098, %v84
    %vm1257 = vcmp.eq.s32.totalorder %v1098, %v85
    %vm1258 = vcmp.eq.s32.totalorder %v1098, %v86
    %vm1259 = vcmp.eq.s32.totalorder %v1098, %v87
    %vm1260 = vcmp.eq.s32.totalorder %v1101, %v84
    %vm1261 = vcmp.eq.s32.totalorder %v1101, %v85
    %vm1262 = vcmp.eq.s32.totalorder %v1101, %v86
    %vm1263 = vcmp.eq.s32.totalorder %v1101, %v87
    %vm1264 = vcmp.eq.s32.totalorder %v1104, %v84
    %vm1265 = vcmp.eq.s32.totalorder %v1104, %v85
    %vm1266 = vcmp.eq.s32.totalorder %v1104, %v86
    %vm1267 = vcmp.eq.s32.totalorder %v1104, %v87
    %vm1268 = vcmp.eq.s32.totalorder %v1107, %v84
    %vm1269 = vcmp.eq.s32.totalorder %v1107, %v85
    %vm1270 = vcmp.eq.s32.totalorder %v1107, %v86
    %vm1271 = vcmp.eq.s32.totalorder %v1107, %v87
    %vm1272 = vcmp.eq.s32.totalorder %v1110, %v84
    %vm1273 = vcmp.eq.s32.totalorder %v1110, %v85
    %vm1274 = vcmp.eq.s32.totalorder %v1110, %v86
    %vm1275 = vcmp.eq.s32.totalorder %v1110, %v87
    %vm1276 = vcmp.eq.s32.totalorder %v1113, %v84
    %vm1277 = vcmp.eq.s32.totalorder %v1113, %v85
    %vm1278 = vcmp.eq.s32.totalorder %v1113, %v86
    %vm1279 = vcmp.eq.s32.totalorder %v1113, %v87
    %vm1280 = vcmp.eq.s32.totalorder %v1116, %v84
    %vm1281 = vcmp.eq.s32.totalorder %v1116, %v85
    %vm1282 = vcmp.eq.s32.totalorder %v1116, %v86
    %vm1283 = vcmp.eq.s32.totalorder %v1116, %v87
    %vm1284 = vcmp.eq.s32.totalorder %v1119, %v84
    %vm1285 = vcmp.eq.s32.totalorder %v1119, %v85
    %vm1286 = vcmp.eq.s32.totalorder %v1119, %v86
    %vm1287 = vcmp.eq.s32.totalorder %v1119, %v87
    %vm1288 = vcmp.eq.s32.totalorder %v1122, %v84
    %vm1289 = vcmp.eq.s32.totalorder %v1122, %v85
    %vm1290 = vcmp.eq.s32.totalorder %v1122, %v86
    %vm1291 = vcmp.eq.s32.totalorder %v1122, %v87
    %vm1292 = vcmp.eq.s32.totalorder %v1125, %v84
    %vm1293 = vcmp.eq.s32.totalorder %v1125, %v85
    %vm1294 = vcmp.eq.s32.totalorder %v1125, %v86
    %vm1295 = vcmp.eq.s32.totalorder %v1125, %v87
    %vm1296 = vcmp.eq.s32.totalorder %v1128, %v84
    %vm1297 = vcmp.eq.s32.totalorder %v1128, %v85
    %vm1298 = vcmp.eq.s32.totalorder %v1128, %v86
    %vm1299 = vcmp.eq.s32.totalorder %v1128, %v87
    %vm1300 = vcmp.eq.s32.totalorder %v1131, %v84
    %vm1301 = vcmp.eq.s32.totalorder %v1131, %v85
    %vm1302 = vcmp.eq.s32.totalorder %v1131, %v86
    %vm1303 = vcmp.eq.s32.totalorder %v1131, %v87
    %vm1304 = vcmp.eq.s32.totalorder %v1134, %v84
    %vm1305 = vcmp.eq.s32.totalorder %v1134, %v85
    %vm1306 = vcmp.eq.s32.totalorder %v1134, %v86
    %vm1307 = vcmp.eq.s32.totalorder %v1134, %v87
    %vm1308 = vcmp.eq.s32.totalorder %v1137, %v84
    %vm1309 = vcmp.eq.s32.totalorder %v1137, %v85
    %vm1310 = vcmp.eq.s32.totalorder %v1137, %v86
    %vm1311 = vcmp.eq.s32.totalorder %v1137, %v87
    %vm1312 = vcmp.eq.s32.totalorder %v1140, %v84
    %vm1313 = vcmp.eq.s32.totalorder %v1140, %v85
    %vm1314 = vcmp.eq.s32.totalorder %v1140, %v86
    %vm1315 = vcmp.eq.s32.totalorder %v1140, %v87
    %vm1316 = vcmp.eq.s32.totalorder %v1143, %v84
    %vm1317 = vcmp.eq.s32.totalorder %v1143, %v85
    %vm1318 = vcmp.eq.s32.totalorder %v1143, %v86
    %vm1319 = vcmp.eq.s32.totalorder %v1143, %v87
    %vm1320 = vcmp.eq.s32.totalorder %v1146, %v84
    %vm1321 = vcmp.eq.s32.totalorder %v1146, %v85
    %vm1322 = vcmp.eq.s32.totalorder %v1146, %v86
    %vm1323 = vcmp.eq.s32.totalorder %v1146, %v87
    %vm1324 = vcmp.eq.s32.totalorder %v1149, %v84
    %vm1325 = vcmp.eq.s32.totalorder %v1149, %v85
    %vm1326 = vcmp.eq.s32.totalorder %v1149, %v86
    %vm1327 = vcmp.eq.s32.totalorder %v1149, %v87
    %vm1328 = vcmp.eq.s32.totalorder %v1152, %v84
    %vm1329 = vcmp.eq.s32.totalorder %v1152, %v85
    %vm1330 = vcmp.eq.s32.totalorder %v1152, %v86
    %vm1331 = vcmp.eq.s32.totalorder %v1152, %v87
    %vm1332 = vcmp.eq.s32.totalorder %v1155, %v84
    %vm1333 = vcmp.eq.s32.totalorder %v1155, %v85
    %vm1334 = vcmp.eq.s32.totalorder %v1155, %v86
    %vm1335 = vcmp.eq.s32.totalorder %v1155, %v87
    %vm1336 = vcmp.eq.s32.totalorder %v1158, %v84
    %vm1337 = vcmp.eq.s32.totalorder %v1158, %v85
    %vm1338 = vcmp.eq.s32.totalorder %v1158, %v86
    %vm1339 = vcmp.eq.s32.totalorder %v1158, %v87
    %vm1340 = vcmp.eq.s32.totalorder %v1161, %v84
    %vm1341 = vcmp.eq.s32.totalorder %v1161, %v85
    %vm1342 = vcmp.eq.s32.totalorder %v1161, %v86
    %vm1343 = vcmp.eq.s32.totalorder %v1161, %v87
    %vm1344 = vcmp.eq.s32.totalorder %v1164, %v84
    %vm1345 = vcmp.eq.s32.totalorder %v1164, %v85
    %vm1346 = vcmp.eq.s32.totalorder %v1164, %v86
    %vm1347 = vcmp.eq.s32.totalorder %v1164, %v87
    %vm1348 = vcmp.eq.s32.totalorder %v1167, %v84
    %vm1349 = vcmp.eq.s32.totalorder %v1167, %v85
    %vm1350 = vcmp.eq.s32.totalorder %v1167, %v86
    %vm1351 = vcmp.eq.s32.totalorder %v1167, %v87
    %vm1352 = vcmp.eq.s32.totalorder %v1170, %v84
    %vm1353 = vcmp.eq.s32.totalorder %v1170, %v85
    %vm1354 = vcmp.eq.s32.totalorder %v1170, %v86
    %vm1355 = vcmp.eq.s32.totalorder %v1170, %v87
    %vm1356 = vcmp.eq.s32.totalorder %v1173, %v84
    %vm1357 = vcmp.eq.s32.totalorder %v1173, %v85
    %vm1358 = vcmp.eq.s32.totalorder %v1173, %v86
    %vm1359 = vcmp.eq.s32.totalorder %v1173, %v87
    %vm1360 = vcmp.eq.s32.totalorder %v1176, %v84
    %vm1361 = vcmp.eq.s32.totalorder %v1176, %v85
    %vm1362 = vcmp.eq.s32.totalorder %v1176, %v86
    %vm1363 = vcmp.eq.s32.totalorder %v1176, %v87
    %vm1364 = vcmp.eq.s32.totalorder %v1179, %v84
    %vm1365 = vcmp.eq.s32.totalorder %v1179, %v85
    %vm1366 = vcmp.eq.s32.totalorder %v1179, %v86
    %vm1367 = vcmp.eq.s32.totalorder %v1179, %v87
    %vm1368 = vcmp.eq.s32.totalorder %v1182, %v84
    %vm1369 = vcmp.eq.s32.totalorder %v1182, %v85
    %vm1370 = vcmp.eq.s32.totalorder %v1182, %v86
    %vm1371 = vcmp.eq.s32.totalorder %v1182, %v87
    %vm1372 = vcmp.eq.s32.totalorder %v1185, %v84
    %vm1373 = vcmp.eq.s32.totalorder %v1185, %v85
    %vm1374 = vcmp.eq.s32.totalorder %v1185, %v86
    %vm1375 = vcmp.eq.s32.totalorder %v1185, %v87
    %vm1376 = vcmp.eq.s32.totalorder %v1188, %v84
    %vm1377 = vcmp.eq.s32.totalorder %v1188, %v85
    %vm1378 = vcmp.eq.s32.totalorder %v1188, %v86
    %vm1379 = vcmp.eq.s32.totalorder %v1188, %v87
    %vm1380 = vcmp.eq.s32.totalorder %v1191, %v84
    %vm1381 = vcmp.eq.s32.totalorder %v1191, %v85
    %vm1382 = vcmp.eq.s32.totalorder %v1191, %v86
    %vm1383 = vcmp.eq.s32.totalorder %v1191, %v87
    %v1384 = vsel %vm1192, 1, 0
    %v1385 = vsel %vm1193, 1, 0
    %v1386 = vsel %vm1194, 1, 0
    %v1387 = vsel %vm1195, 1, 0
    %v1388 = vsel %vm1196, 1, 0
    %v1389 = vsel %vm1197, 1, 0
    %v1390 = vsel %vm1198, 1, 0
    %v1391 = vsel %vm1199, 1, 0
    %v1392 = vsel %vm1200, 1, 0
    %v1393 = vsel %vm1201, 1, 0
    %v1394 = vsel %vm1202, 1, 0
    %v1395 = vsel %vm1203, 1, 0
    %v1396 = vsel %vm1204, 1, 0
    %v1397 = vsel %vm1205, 1, 0
    %v1398 = vsel %vm1206, 1, 0
    %v1399 = vsel %vm1207, 1, 0
    %v1400 = vsel %vm1208, 1, 0
    %v1401 = vsel %vm1209, 1, 0
    %v1402 = vsel %vm1210, 1, 0
    %v1403 = vsel %vm1211, 1, 0
    %v1404 = vsel %vm1212, 1, 0
    %v1405 = vsel %vm1213, 1, 0
    %v1406 = vsel %vm1214, 1, 0
    %v1407 = vsel %vm1215, 1, 0
    %v1408 = vsel %vm1216, 1, 0
    %v1409 = vsel %vm1217, 1, 0
    %v1410 = vsel %vm1218, 1, 0
    %v1411 = vsel %vm1219, 1, 0
    %v1412 = vsel %vm1220, 1, 0
    %v1413 = vsel %vm1221, 1, 0
    %v1414 = vsel %vm1222, 1, 0
    %v1415 = vsel %vm1223, 1, 0
    %v1416 = vsel %vm1224, 1, 0
    %v1417 = vsel %vm1225, 1, 0
    %v1418 = vsel %vm1226, 1, 0
    %v1419 = vsel %vm1227, 1, 0
    %v1420 = vsel %vm1228, 1, 0
    %v1421 = vsel %vm1229, 1, 0
    %v1422 = vsel %vm1230, 1, 0
    %v1423 = vsel %vm1231, 1, 0
    %v1424 = vsel %vm1232, 1, 0
    %v1425 = vsel %vm1233, 1, 0
    %v1426 = vsel %vm1234, 1, 0
    %v1427 = vsel %vm1235, 1, 0
    %v1428 = vsel %vm1236, 1, 0
    %v1429 = vsel %vm1237, 1, 0
    %v1430 = vsel %vm1238, 1, 0
    %v1431 = vsel %vm1239, 1, 0
    %v1432 = vsel %vm1240, 1, 0
    %v1433 = vsel %vm1241, 1, 0
    %v1434 = vsel %vm1242, 1, 0
    %v1435 = vsel %vm1243, 1, 0
    %v1436 = vsel %vm1244, 1, 0
    %v1437 = vsel %vm1245, 1, 0
    %v1438 = vsel %vm1246, 1, 0
    %v1439 = vsel %vm1247, 1, 0
    %v1440 = vsel %vm1248, 1, 0
    %v1441 = vsel %vm1249, 1, 0
    %v1442 = vsel %vm1250, 1, 0
    %v1443 = vsel %vm1251, 1, 0
    %v1444 = vsel %vm1252, 1, 0
    %v1445 = vsel %vm1253, 1, 0
    %v1446 = vsel %vm1254, 1, 0
    %v1447 = vsel %vm1255, 1, 0
    %v1448 = vsel %vm1256, 1, 0
    %v1449 = vsel %vm1257, 1, 0
    %v1450 = vsel %vm1258, 1, 0
    %v1451 = vsel %vm1259, 1, 0
    %v1452 = vsel %vm1260, 1, 0
    %v1453 = vsel %vm1261, 1, 0
    %v1454 = vsel %vm1262, 1, 0
    %v1455 = vsel %vm1263, 1, 0
    %v1456 = vsel %vm1264, 1, 0
    %v1457 = vsel %vm1265, 1, 0
    %v1458 = vsel %vm1266, 1, 0
    %v1459 = vsel %vm1267, 1, 0
    %v1460 = vsel %vm1268, 1, 0
    %v1461 = vsel %vm1269, 1, 0
    %v1462 = vsel %vm1270, 1, 0
    %v1463 = vsel %vm1271, 1, 0
    %v1464 = vsel %vm1272, 1, 0
    %v1465 = vsel %vm1273, 1, 0
    %v1466 = vsel %vm1274, 1, 0
    %v1467 = vsel %vm1275, 1, 0
    %v1468 = vsel %vm1276, 1, 0
    %v1469 = vsel %vm1277, 1, 0
    %v1470 = vsel %vm1278, 1, 0
    %v1471 = vsel %vm1279, 1, 0
    %v1472 = vsel %vm1280, 1, 0
    %v1473 = vsel %vm1281, 1, 0
    %v1474 = vsel %vm1282, 1, 0
    %v1475 = vsel %vm1283, 1, 0
    %v1476 = vsel %vm1284, 1, 0
    %v1477 = vsel %vm1285, 1, 0
    %v1478 = vsel %vm1286, 1, 0
    %v1479 = vsel %vm1287, 1, 0
    %v1480 = vsel %vm1288, 1, 0
    %v1481 = vsel %vm1289, 1, 0
    %v1482 = vsel %vm1290, 1, 0
    %v1483 = vsel %vm1291, 1, 0
    %v1484 = vsel %vm1292, 1, 0
    %v1485 = vsel %vm1293, 1, 0
    %v1486 = vsel %vm1294, 1, 0
    %v1487 = vsel %vm1295, 1, 0
    %v1488 = vsel %vm1296, 1, 0
    %v1489 = vsel %vm1297, 1, 0
    %v1490 = vsel %vm1298, 1, 0
    %v1491 = vsel %vm1299, 1, 0
    %v1492 = vsel %vm1300, 1, 0
    %v1493 = vsel %vm1301, 1, 0
    %v1494 = vsel %vm1302, 1, 0
    %v1495 = vsel %vm1303, 1, 0
    %v1496 = vsel %vm1304, 1, 0
    %v1497 = vsel %vm1305, 1, 0
    %v1498 = vsel %vm1306, 1, 0
    %v1499 = vsel %vm1307, 1, 0
    %v1500 = vsel %vm1308, 1, 0
    %v1501 = vsel %vm1309, 1, 0
    %v1502 = vsel %vm1310, 1, 0
    %v1503 = vsel %vm1311, 1, 0
    %v1504 = vsel %vm1312, 1, 0
    %v1505 = vsel %vm1313, 1, 0
    %v1506 = vsel %vm1314, 1, 0
    %v1507 = vsel %vm1315, 1, 0
    %v1508 = vsel %vm1316, 1, 0
    %v1509 = vsel %vm1317, 1, 0
    %v1510 = vsel %vm1318, 1, 0
    %v1511 = vsel %vm1319, 1, 0
    %v1512 = vsel %vm1320, 1, 0
    %v1513 = vsel %vm1321, 1, 0
    %v1514 = vsel %vm1322, 1, 0
    %v1515 = vsel %vm1323, 1, 0
    %v1516 = vsel %vm1324, 1, 0
    %v1517 = vsel %vm1325, 1, 0
    %v1518 = vsel %vm1326, 1, 0
    %v1519 = vsel %vm1327, 1, 0
    %v1520 = vsel %vm1328, 1, 0
    %v1521 = vsel %vm1329, 1, 0
    %v1522 = vsel %vm1330, 1, 0
    %v1523 = vsel %vm1331, 1, 0
    %v1524 = vsel %vm1332, 1, 0
    %v1525 = vsel %vm1333, 1, 0
    %v1526 = vsel %vm1334, 1, 0
    %v1527 = vsel %vm1335, 1, 0
    %v1528 = vsel %vm1336, 1, 0
    %v1529 = vsel %vm1337, 1, 0
    %v1530 = vsel %vm1338, 1, 0
    %v1531 = vsel %vm1339, 1, 0
    %v1532 = vsel %vm1340, 1, 0
    %v1533 = vsel %vm1341, 1, 0
    %v1534 = vsel %vm1342, 1, 0
    %v1535 = vsel %vm1343, 1, 0
    %v1536 = vsel %vm1344, 1, 0
    %v1537 = vsel %vm1345, 1, 0
    %v1538 = vsel %vm1346, 1, 0
    %v1539 = vsel %vm1347, 1, 0
    %v1540 = vsel %vm1348, 1, 0
    %v1541 = vsel %vm1349, 1, 0
    %v1542 = vsel %vm1350, 1, 0
    %v1543 = vsel %vm1351, 1, 0
    %v1544 = vsel %vm1352, 1, 0
    %v1545 = vsel %vm1353, 1, 0
    %v1546 = vsel %vm1354, 1, 0
    %v1547 = vsel %vm1355, 1, 0
    %v1548 = vsel %vm1356, 1, 0
    %v1549 = vsel %vm1357, 1, 0
    %v1550 = vsel %vm1358, 1, 0
    %v1551 = vsel %vm1359, 1, 0
    %v1552 = vsel %vm1360, 1, 0
    %v1553 = vsel %vm1361, 1, 0
    %v1554 = vsel %vm1362, 1, 0
    %v1555 = vsel %vm1363, 1, 0
    %v1556 = vsel %vm1364, 1, 0
    %v1557 = vsel %vm1365, 1, 0
    %v1558 = vsel %vm1366, 1, 0
    %v1559 = vsel %vm1367, 1, 0
    %v1560 = vsel %vm1368, 1, 0
    %v1561 = vsel %vm1369, 1, 0
    %v1562 = vsel %vm1370, 1, 0
    %v1563 = vsel %vm1371, 1, 0
    %v1564 = vsel %vm1372, 1, 0
    %v1565 = vsel %vm1373, 1, 0
    %v1566 = vsel %vm1374, 1, 0
    %v1567 = vsel %vm1375, 1, 0
    %v1568 = vsel %vm1376, 1, 0
    %v1569 = vsel %vm1377, 1, 0
    %v1570 = vsel %vm1378, 1, 0
    %v1571 = vsel %vm1379, 1, 0
    %v1572 = vsel %vm1380, 1, 0
    %v1573 = vsel %vm1381, 1, 0
    %v1574 = vsel %vm1382, 1, 0
    %v1575 = vsel %vm1383, 1, 0
    %v1576 = vcvt.s32.f32 %v1384
    %v1577 = vcvt.s32.f32 %v1385
    %v1578 = vcvt.s32.f32 %v1386
    %v1579 = vcvt.s32.f32 %v1387
    %v1580 = vcvt.s32.f32 %v1388
    %v1581 = vcvt.s32.f32 %v1389
    %v1582 = vcvt.s32.f32 %v1390
    %v1583 = vcvt.s32.f32 %v1391
    %v1584 = vcvt.s32.f32 %v1392
    %v1585 = vcvt.s32.f32 %v1393
    %v1586 = vcvt.s32.f32 %v1394
    %v1587 = vcvt.s32.f32 %v1395
    %v1588 = vcvt.s32.f32 %v1396
    %v1589 = vcvt.s32.f32 %v1397
    %v1590 = vcvt.s32.f32 %v1398
    %v1591 = vcvt.s32.f32 %v1399
    %v1592 = vcvt.s32.f32 %v1400
    %v1593 = vcvt.s32.f32 %v1401
    %v1594 = vcvt.s32.f32 %v1402
    %v1595 = vcvt.s32.f32 %v1403
    %v1596 = vcvt.s32.f32 %v1404
    %v1597 = vcvt.s32.f32 %v1405
    %v1598 = vcvt.s32.f32 %v1406
    %v1599 = vcvt.s32.f32 %v1407
    %v1600 = vcvt.s32.f32 %v1408
    %v1601 = vcvt.s32.f32 %v1409
    %v1602 = vcvt.s32.f32 %v1410
    %v1603 = vcvt.s32.f32 %v1411
    %v1604 = vcvt.s32.f32 %v1412
    %v1605 = vcvt.s32.f32 %v1413
    %v1606 = vcvt.s32.f32 %v1414
    %v1607 = vcvt.s32.f32 %v1415
    %v1608 = vcvt.s32.f32 %v1416
    %v1609 = vcvt.s32.f32 %v1417
    %v1610 = vcvt.s32.f32 %v1418
    %v1611 = vcvt.s32.f32 %v1419
    %v1612 = vcvt.s32.f32 %v1420
    %v1613 = vcvt.s32.f32 %v1421
    %v1614 = vcvt.s32.f32 %v1422
    %v1615 = vcvt.s32.f32 %v1423
    %v1616 = vcvt.s32.f32 %v1424
    %v1617 = vcvt.s32.f32 %v1425
    %v1618 = vcvt.s32.f32 %v1426
    %v1619 = vcvt.s32.f32 %v1427
    %v1620 = vcvt.s32.f32 %v1428
    %v1621 = vcvt.s32.f32 %v1429
    %v1622 = vcvt.s32.f32 %v1430
    %v1623 = vcvt.s32.f32 %v1431
    %v1624 = vcvt.s32.f32 %v1432
    %v1625 = vcvt.s32.f32 %v1433
    %v1626 = vcvt.s32.f32 %v1434
    %v1627 = vcvt.s32.f32 %v1435
    %v1628 = vcvt.s32.f32 %v1436
    %v1629 = vcvt.s32.f32 %v1437
    %v1630 = vcvt.s32.f32 %v1438
    %v1631 = vcvt.s32.f32 %v1439
    %v1632 = vcvt.s32.f32 %v1440
    %v1633 = vcvt.s32.f32 %v1441
    %v1634 = vcvt.s32.f32 %v1442
    %v1635 = vcvt.s32.f32 %v1443
    %v1636 = vcvt.s32.f32 %v1444
    %v1637 = vcvt.s32.f32 %v1445
    %v1638 = vcvt.s32.f32 %v1446
    %v1639 = vcvt.s32.f32 %v1447
    %v1640 = vcvt.s32.f32 %v1448
    %v1641 = vcvt.s32.f32 %v1449
    %v1642 = vcvt.s32.f32 %v1450
    %v1643 = vcvt.s32.f32 %v1451
    %v1644 = vcvt.s32.f32 %v1452
    %v1645 = vcvt.s32.f32 %v1453
    %v1646 = vcvt.s32.f32 %v1454
    %v1647 = vcvt.s32.f32 %v1455
    %v1648 = vcvt.s32.f32 %v1456
    %v1649 = vcvt.s32.f32 %v1457
    %v1650 = vcvt.s32.f32 %v1458
    %v1651 = vcvt.s32.f32 %v1459
    %v1652 = vcvt.s32.f32 %v1460
    %v1653 = vcvt.s32.f32 %v1461
    %v1654 = vcvt.s32.f32 %v1462
    %v1655 = vcvt.s32.f32 %v1463
    %v1656 = vcvt.s32.f32 %v1464
    %v1657 = vcvt.s32.f32 %v1465
    %v1658 = vcvt.s32.f32 %v1466
    %v1659 = vcvt.s32.f32 %v1467
    %v1660 = vcvt.s32.f32 %v1468
    %v1661 = vcvt.s32.f32 %v1469
    %v1662 = vcvt.s32.f32 %v1470
    %v1663 = vcvt.s32.f32 %v1471
    %v1664 = vcvt.s32.f32 %v1472
    %v1665 = vcvt.s32.f32 %v1473
    %v1666 = vcvt.s32.f32 %v1474
    %v1667 = vcvt.s32.f32 %v1475
    %v1668 = vcvt.s32.f32 %v1476
    %v1669 = vcvt.s32.f32 %v1477
    %v1670 = vcvt.s32.f32 %v1478
    %v1671 = vcvt.s32.f32 %v1479
    %v1672 = vcvt.s32.f32 %v1480
    %v1673 = vcvt.s32.f32 %v1481
    %v1674 = vcvt.s32.f32 %v1482
    %v1675 = vcvt.s32.f32 %v1483
    %v1676 = vcvt.s32.f32 %v1484
    %v1677 = vcvt.s32.f32 %v1485
    %v1678 = vcvt.s32.f32 %v1486
    %v1679 = vcvt.s32.f32 %v1487
    %v1680 = vcvt.s32.f32 %v1488
    %v1681 = vcvt.s32.f32 %v1489
    %v1682 = vcvt.s32.f32 %v1490
    %v1683 = vcvt.s32.f32 %v1491
    %v1684 = vcvt.s32.f32 %v1492
    %v1685 = vcvt.s32.f32 %v1493
    %v1686 = vcvt.s32.f32 %v1494
    %v1687 = vcvt.s32.f32 %v1495
    %v1688 = vcvt.s32.f32 %v1496
    %v1689 = vcvt.s32.f32 %v1497
    %v1690 = vcvt.s32.f32 %v1498
    %v1691 = vcvt.s32.f32 %v1499
    %v1692 = vcvt.s32.f32 %v1500
    %v1693 = vcvt.s32.f32 %v1501
    %v1694 = vcvt.s32.f32 %v1502
    %v1695 = vcvt.s32.f32 %v1503
    %v1696 = vcvt.s32.f32 %v1504
    %v1697 = vcvt.s32.f32 %v1505
    %v1698 = vcvt.s32.f32 %v1506
    %v1699 = vcvt.s32.f32 %v1507
    %v1700 = vcvt.s32.f32 %v1508
    %v1701 = vcvt.s32.f32 %v1509
    %v1702 = vcvt.s32.f32 %v1510
    %v1703 = vcvt.s32.f32 %v1511
    %v1704 = vcvt.s32.f32 %v1512
    %v1705 = vcvt.s32.f32 %v1513
    %v1706 = vcvt.s32.f32 %v1514
    %v1707 = vcvt.s32.f32 %v1515
    %v1708 = vcvt.s32.f32 %v1516
    %v1709 = vcvt.s32.f32 %v1517
    %v1710 = vcvt.s32.f32 %v1518
    %v1711 = vcvt.s32.f32 %v1519
    %v1712 = vcvt.s32.f32 %v1520
    %v1713 = vcvt.s32.f32 %v1521
    %v1714 = vcvt.s32.f32 %v1522
    %v1715 = vcvt.s32.f32 %v1523
    %v1716 = vcvt.s32.f32 %v1524
    %v1717 = vcvt.s32.f32 %v1525
    %v1718 = vcvt.s32.f32 %v1526
    %v1719 = vcvt.s32.f32 %v1527
    %v1720 = vcvt.s32.f32 %v1528
    %v1721 = vcvt.s32.f32 %v1529
    %v1722 = vcvt.s32.f32 %v1530
    %v1723 = vcvt.s32.f32 %v1531
    %v1724 = vcvt.s32.f32 %v1532
    %v1725 = vcvt.s32.f32 %v1533
    %v1726 = vcvt.s32.f32 %v1534
    %v1727 = vcvt.s32.f32 %v1535
    %v1728 = vcvt.s32.f32 %v1536
    %v1729 = vcvt.s32.f32 %v1537
    %v1730 = vcvt.s32.f32 %v1538
    %v1731 = vcvt.s32.f32 %v1539
    %v1732 = vcvt.s32.f32 %v1540
    %v1733 = vcvt.s32.f32 %v1541
    %v1734 = vcvt.s32.f32 %v1542
    %v1735 = vcvt.s32.f32 %v1543
    %v1736 = vcvt.s32.f32 %v1544
    %v1737 = vcvt.s32.f32 %v1545
    %v1738 = vcvt.s32.f32 %v1546
    %v1739 = vcvt.s32.f32 %v1547
    %v1740 = vcvt.s32.f32 %v1548
    %v1741 = vcvt.s32.f32 %v1549
    %v1742 = vcvt.s32.f32 %v1550
    %v1743 = vcvt.s32.f32 %v1551
    %v1744 = vcvt.s32.f32 %v1552
    %v1745 = vcvt.s32.f32 %v1553
    %v1746 = vcvt.s32.f32 %v1554
    %v1747 = vcvt.s32.f32 %v1555
    %v1748 = vcvt.s32.f32 %v1556
    %v1749 = vcvt.s32.f32 %v1557
    %v1750 = vcvt.s32.f32 %v1558
    %v1751 = vcvt.s32.f32 %v1559
    %v1752 = vcvt.s32.f32 %v1560
    %v1753 = vcvt.s32.f32 %v1561
    %v1754 = vcvt.s32.f32 %v1562
    %v1755 = vcvt.s32.f32 %v1563
    %v1756 = vcvt.s32.f32 %v1564
    %v1757 = vcvt.s32.f32 %v1565
    %v1758 = vcvt.s32.f32 %v1566
    %v1759 = vcvt.s32.f32 %v1567
    %v1760 = vcvt.s32.f32 %v1568
    %v1761 = vcvt.s32.f32 %v1569
    %v1762 = vcvt.s32.f32 %v1570
    %v1763 = vcvt.s32.f32 %v1571
    %v1764 = vcvt.s32.f32 %v1572
    %v1765 = vcvt.s32.f32 %v1573
    %v1766 = vcvt.s32.f32 %v1574
    %v1767 = vcvt.s32.f32 %v1575
    %v1768 = vadd.f32 %v808, %v1576
    %v1769 = vadd.f32 %v809, %v1577
    %v1770 = vadd.f32 %v810, %v1578
    %v1771 = vadd.f32 %v811, %v1579
    %v1772 = vadd.f32 %v812, %v1580
    %v1773 = vadd.f32 %v813, %v1581
    %v1774 = vadd.f32 %v814, %v1582
    %v1775 = vadd.f32 %v815, %v1583
    %v1776 = vadd.f32 %v816, %v1584
    %v1777 = vadd.f32 %v817, %v1585
    %v1778 = vadd.f32 %v818, %v1586
    %v1779 = vadd.f32 %v819, %v1587
    %v1780 = vadd.f32 %v820, %v1588
    %v1781 = vadd.f32 %v821, %v1589
    %v1782 = vadd.f32 %v822, %v1590
    %v1783 = vadd.f32 %v823, %v1591
    %v1784 = vadd.f32 %v824, %v1592
    %v1785 = vadd.f32 %v825, %v1593
    %v1786 = vadd.f32 %v826, %v1594
    %v1787 = vadd.f32 %v827, %v1595
    %v1788 = vadd.f32 %v828, %v1596
    %v1789 = vadd.f32 %v829, %v1597
    %v1790 = vadd.f32 %v830, %v1598
    %v1791 = vadd.f32 %v831, %v1599
    %v1792 = vadd.f32 %v832, %v1600
    %v1793 = vadd.f32 %v833, %v1601
    %v1794 = vadd.f32 %v834, %v1602
    %v1795 = vadd.f32 %v835, %v1603
    %v1796 = vadd.f32 %v836, %v1604
    %v1797 = vadd.f32 %v837, %v1605
    %v1798 = vadd.f32 %v838, %v1606
    %v1799 = vadd.f32 %v839, %v1607
    %v1800 = vadd.f32 %v840, %v1608
    %v1801 = vadd.f32 %v841, %v1609
    %v1802 = vadd.f32 %v842, %v1610
    %v1803 = vadd.f32 %v843, %v1611
    %v1804 = vadd.f32 %v844, %v1612
    %v1805 = vadd.f32 %v845, %v1613
    %v1806 = vadd.f32 %v846, %v1614
    %v1807 = vadd.f32 %v847, %v1615
    %v1808 = vadd.f32 %v848, %v1616
    %v1809 = vadd.f32 %v849, %v1617
    %v1810 = vadd.f32 %v850, %v1618
    %v1811 = vadd.f32 %v851, %v1619
    %v1812 = vadd.f32 %v852, %v1620
    %v1813 = vadd.f32 %v853, %v1621
    %v1814 = vadd.f32 %v854, %v1622
    %v1815 = vadd.f32 %v855, %v1623
    %v1816 = vadd.f32 %v856, %v1624
    %v1817 = vadd.f32 %v857, %v1625
    %v1818 = vadd.f32 %v858, %v1626
    %v1819 = vadd.f32 %v859, %v1627
    %v1820 = vadd.f32 %v860, %v1628
    %v1821 = vadd.f32 %v861, %v1629
    %v1822 = vadd.f32 %v862, %v1630
    %v1823 = vadd.f32 %v863, %v1631
    %v1824 = vadd.f32 %v864, %v1632
    %v1825 = vadd.f32 %v865, %v1633
    %v1826 = vadd.f32 %v866, %v1634
    %v1827 = vadd.f32 %v867, %v1635
    %v1828 = vadd.f32 %v868, %v1636
    %v1829 = vadd.f32 %v869, %v1637
    %v1830 = vadd.f32 %v870, %v1638
    %v1831 = vadd.f32 %v871, %v1639
    %v1832 = vadd.f32 %v872, %v1640
    %v1833 = vadd.f32 %v873, %v1641
    %v1834 = vadd.f32 %v874, %v1642
    %v1835 = vadd.f32 %v875, %v1643
    %v1836 = vadd.f32 %v876, %v1644
    %v1837 = vadd.f32 %v877, %v1645
    %v1838 = vadd.f32 %v878, %v1646
    %v1839 = vadd.f32 %v879, %v1647
    %v1840 = vadd.f32 %v880, %v1648
    %v1841 = vadd.f32 %v881, %v1649
    %v1842 = vadd.f32 %v882, %v1650
    %v1843 = vadd.f32 %v883, %v1651
    %v1844 = vadd.f32 %v884, %v1652
    %v1845 = vadd.f32 %v885, %v1653
    %v1846 = vadd.f32 %v886, %v1654
    %v1847 = vadd.f32 %v887, %v1655
    %v1848 = vadd.f32 %v888, %v1656
    %v1849 = vadd.f32 %v889, %v1657
    %v1850 = vadd.f32 %v890, %v1658
    %v1851 = vadd.f32 %v891, %v1659
    %v1852 = vadd.f32 %v892, %v1660
    %v1853 = vadd.f32 %v893, %v1661
    %v1854 = vadd.f32 %v894, %v1662
    %v1855 = vadd.f32 %v895, %v1663
    %v1856 = vadd.f32 %v896, %v1664
    %v1857 = vadd.f32 %v897, %v1665
    %v1858 = vadd.f32 %v898, %v1666
    %v1859 = vadd.f32 %v899, %v1667
    %v1860 = vadd.f32 %v900, %v1668
    %v1861 = vadd.f32 %v901, %v1669
    %v1862 = vadd.f32 %v902, %v1670
    %v1863 = vadd.f32 %v903, %v1671
    %v1864 = vadd.f32 %v904, %v1672
    %v1865 = vadd.f32 %v905, %v1673
    %v1866 = vadd.f32 %v906, %v1674
    %v1867 = vadd.f32 %v907, %v1675
    %v1868 = vadd.f32 %v908, %v1676
    %v1869 = vadd.f32 %v909, %v1677
    %v1870 = vadd.f32 %v910, %v1678
    %v1871 = vadd.f32 %v911, %v1679
    %v1872 = vadd.f32 %v912, %v1680
    %v1873 = vadd.f32 %v913, %v1681
    %v1874 = vadd.f32 %v914, %v1682
    %v1875 = vadd.f32 %v915, %v1683
    %v1876 = vadd.f32 %v916, %v1684
    %v1877 = vadd.f32 %v917, %v1685
    %v1878 = vadd.f32 %v918, %v1686
    %v1879 = vadd.f32 %v919, %v1687
    %v1880 = vadd.f32 %v920, %v1688
    %v1881 = vadd.f32 %v921, %v1689
    %v1882 = vadd.f32 %v922, %v1690
    %v1883 = vadd.f32 %v923, %v1691
    %v1884 = vadd.f32 %v924, %v1692
    %v1885 = vadd.f32 %v925, %v1693
    %v1886 = vadd.f32 %v926, %v1694
    %v1887 = vadd.f32 %v927, %v1695
    %v1888 = vadd.f32 %v928, %v1696
    %v1889 = vadd.f32 %v929, %v1697
    %v1890 = vadd.f32 %v930, %v1698
    %v1891 = vadd.f32 %v931, %v1699
    %v1892 = vadd.f32 %v932, %v1700
    %v1893 = vadd.f32 %v933, %v1701
    %v1894 = vadd.f32 %v934, %v1702
    %v1895 = vadd.f32 %v935, %v1703
    %v1896 = vadd.f32 %v936, %v1704
    %v1897 = vadd.f32 %v937, %v1705
    %v1898 = vadd.f32 %v938, %v1706
    %v1899 = vadd.f32 %v939, %v1707
    %v1900 = vadd.f32 %v940, %v1708
    %v1901 = vadd.f32 %v941, %v1709
    %v1902 = vadd.f32 %v942, %v1710
    %v1903 = vadd.f32 %v943, %v1711
    %v1904 = vadd.f32 %v944, %v1712
    %v1905 = vadd.f32 %v945, %v1713
    %v1906 = vadd.f32 %v946, %v1714
    %v1907 = vadd.f32 %v947, %v1715
    %v1908 = vadd.f32 %v948, %v1716
    %v1909 = vadd.f32 %v949, %v1717
    %v1910 = vadd.f32 %v950, %v1718
    %v1911 = vadd.f32 %v951, %v1719
    %v1912 = vadd.f32 %v952, %v1720
    %v1913 = vadd.f32 %v953, %v1721
    %v1914 = vadd.f32 %v954, %v1722
    %v1915 = vadd.f32 %v955, %v1723
    %v1916 = vadd.f32 %v956, %v1724
    %v1917 = vadd.f32 %v957, %v1725
    %v1918 = vadd.f32 %v958, %v1726
    %v1919 = vadd.f32 %v959, %v1727
    %v1920 = vadd.f32 %v960, %v1728
    %v1921 = vadd.f32 %v961, %v1729
    %v1922 = vadd.f32 %v962, %v1730
    %v1923 = vadd.f32 %v963, %v1731
    %v1924 = vadd.f32 %v964, %v1732
    %v1925 = vadd.f32 %v965, %v1733
    %v1926 = vadd.f32 %v966, %v1734
    %v1927 = vadd.f32 %v967, %v1735
    %v1928 = vadd.f32 %v968, %v1736
    %v1929 = vadd.f32 %v969, %v1737
    %v1930 = vadd.f32 %v970, %v1738
    %v1931 = vadd.f32 %v971, %v1739
    %v1932 = vadd.f32 %v972, %v1740
    %v1933 = vadd.f32 %v973, %v1741
    %v1934 = vadd.f32 %v974, %v1742
    %v1935 = vadd.f32 %v975, %v1743
    %v1936 = vadd.f32 %v976, %v1744
    %v1937 = vadd.f32 %v977, %v1745
    %v1938 = vadd.f32 %v978, %v1746
    %v1939 = vadd.f32 %v979, %v1747
    %v1940 = vadd.f32 %v980, %v1748
    %v1941 = vadd.f32 %v981, %v1749
    %v1942 = vadd.f32 %v982, %v1750
    %v1943 = vadd.f32 %v983, %v1751
    %v1944 = vadd.f32 %v984, %v1752
    %v1945 = vadd.f32 %v985, %v1753
    %v1946 = vadd.f32 %v986, %v1754
    %v1947 = vadd.f32 %v987, %v1755
    %v1948 = vadd.f32 %v988, %v1756
    %v1949 = vadd.f32 %v989, %v1757
    %v1950 = vadd.f32 %v990, %v1758
    %v1951 = vadd.f32 %v991, %v1759
    %v1952 = vadd.f32 %v992, %v1760
    %v1953 = vadd.f32 %v993, %v1761
    %v1954 = vadd.f32 %v994, %v1762
    %v1955 = vadd.f32 %v995, %v1763
    %v1956 = vadd.f32 %v996, %v1764
    %v1957 = vadd.f32 %v997, %v1765
    %v1958 = vadd.f32 %v998, %v1766
    %v1959 = vadd.f32 %v999, %v1767
    %v1960 = vadd.s32 %v35, 128
    %v1961 = vadd.s32 %v36, 128
    %v1962 = vadd.s32 %v37, 128
    %v1963 = vadd.s32 %v38, 128
    %v1964 = vadd.s32 %v39, 128
    %v1965 = vadd.s32 %v40, 128
    %v1966 = vadd.s32 %v41, 128
    %v1967 = vadd.s32 %v42, 128
    %v1968 = vadd.s32 %v43, 128
    %v1969 = vadd.s32 %v44, 128
    %v1970 = vadd.s32 %v45, 128
    %v1971 = vadd.s32 %v46, 128
    %v1972 = vadd.s32 %v47, 128
    %v1973 = vadd.s32 %v48, 128
    %v1974 = vadd.s32 %v49, 128
    %v1975 = vadd.s32 %v50, 128
    %v1976 = vadd.s32 %v51, 128
    %v1977 = vadd.s32 %v52, 128
    %v1978 = vadd.s32 %v53, 128
    %v1979 = vadd.s32 %v54, 128
    %v1980 = vadd.s32 %v55, 128
    %v1981 = vadd.s32 %v56, 128
    %v1982 = vadd.s32 %v57, 128
    %v1983 = vadd.s32 %v58, 128
    %v1984 = vadd.s32 %v59, 128
    %v1985 = vadd.s32 %v60, 128
    %v1986 = vadd.s32 %v61, 128
    %v1987 = vadd.s32 %v62, 128
    %v1988 = vadd.s32 %v63, 128
    %v1989 = vadd.s32 %v64, 128
    %v1990 = vadd.s32 %v65, 128
    %v1991 = vadd.s32 %v66, 128
    %v1992 = vadd.s32 %v67, 128
    %v1993 = vadd.s32 %v68, 128
    %v1994 = vadd.s32 %v69, 128
    %v1995 = vadd.s32 %v70, 128
    %v1996 = vadd.s32 %v71, 128
    %v1997 = vadd.s32 %v72, 128
    %v1998 = vadd.s32 %v73, 128
    %v1999 = vadd.s32 %v74, 128
    %v2000 = vadd.s32 %v75, 128
    %v2001 = vadd.s32 %v76, 128
    %v2002 = vadd.s32 %v77, 128
    %v2003 = vadd.s32 %v78, 128
    %v2004 = vadd.s32 %v79, 128
    %v2005 = vadd.s32 %v80, 128
    %v2006 = vadd.s32 %v81, 128
    %v2007 = vadd.s32 %v82, 128
    %2008 = vset.pattern.permute.xlu0 2
    %2009 = vperm.xlu0 %2008, %v1960
    %v2010 = vpop.permute.xlu0 %2009
    %2011 = vset.pattern.permute.xlu0 2
    %2012 = vperm.xlu0 %2011, %v1961
    %v2013 = vpop.permute.xlu0 %2012
    %2014 = vset.pattern.permute.xlu0 2
    %2015 = vperm.xlu0 %2014, %v1962
    %v2016 = vpop.permute.xlu0 %2015
    %2017 = vset.pattern.permute.xlu0 2
    %2018 = vperm.xlu0 %2017, %v1963
    %v2019 = vpop.permute.xlu0 %2018
    %2020 = vset.pattern.permute.xlu0 2
    %2021 = vperm.xlu0 %2020, %v1964
    %v2022 = vpop.permute.xlu0 %2021
    %2023 = vset.pattern.permute.xlu0 2
    %2024 = vperm.xlu0 %2023, %v1965
    %v2025 = vpop.permute.xlu0 %2024
    %2026 = vset.pattern.permute.xlu0 2
    %2027 = vperm.xlu0 %2026, %v1966
    %v2028 = vpop.permute.xlu0 %2027
    %2029 = vset.pattern.permute.xlu0 2
    %2030 = vperm.xlu0 %2029, %v1967
    %v2031 = vpop.permute.xlu0 %2030
    %2032 = vset.pattern.permute.xlu0 2
    %2033 = vperm.xlu0 %2032, %v1968
    %v2034 = vpop.permute.xlu0 %2033
    %2035 = vset.pattern.permute.xlu0 2
    %2036 = vperm.xlu0 %2035, %v1969
    %v2037 = vpop.permute.xlu0 %2036
    %2038 = vset.pattern.permute.xlu0 2
    %2039 = vperm.xlu0 %2038, %v1970
    %v2040 = vpop.permute.xlu0 %2039
    %2041 = vset.pattern.permute.xlu0 2
    %2042 = vperm.xlu0 %2041, %v1971
    %v2043 = vpop.permute.xlu0 %2042
    %2044 = vset.pattern.permute.xlu0 2
    %2045 = vperm.xlu0 %2044, %v1972
    %v2046 = vpop.permute.xlu0 %2045
    %2047 = vset.pattern.permute.xlu0 2
    %2048 = vperm.xlu0 %2047, %v1973
    %v2049 = vpop.permute.xlu0 %2048
    %2050 = vset.pattern.permute.xlu0 2
    %2051 = vperm.xlu0 %2050, %v1974
    %v2052 = vpop.permute.xlu0 %2051
    %2053 = vset.pattern.permute.xlu0 2
    %2054 = vperm.xlu0 %2053, %v1975
    %v2055 = vpop.permute.xlu0 %2054
    %2056 = vset.pattern.permute.xlu0 2
    %2057 = vperm.xlu0 %2056, %v1976
    %v2058 = vpop.permute.xlu0 %2057
    %2059 = vset.pattern.permute.xlu0 2
    %2060 = vperm.xlu0 %2059, %v1977
    %v2061 = vpop.permute.xlu0 %2060
    %2062 = vset.pattern.permute.xlu0 2
    %2063 = vperm.xlu0 %2062, %v1978
    %v2064 = vpop.permute.xlu0 %2063
    %2065 = vset.pattern.permute.xlu0 2
    %2066 = vperm.xlu0 %2065, %v1979
    %v2067 = vpop.permute.xlu0 %2066
    %2068 = vset.pattern.permute.xlu0 2
    %2069 = vperm.xlu0 %2068, %v1980
    %v2070 = vpop.permute.xlu0 %2069
    %2071 = vset.pattern.permute.xlu0 2
    %2072 = vperm.xlu0 %2071, %v1981
    %v2073 = vpop.permute.xlu0 %2072
    %2074 = vset.pattern.permute.xlu0 2
    %2075 = vperm.xlu0 %2074, %v1982
    %v2076 = vpop.permute.xlu0 %2075
    %2077 = vset.pattern.permute.xlu0 2
    %2078 = vperm.xlu0 %2077, %v1983
    %v2079 = vpop.permute.xlu0 %2078
    %2080 = vset.pattern.permute.xlu0 2
    %2081 = vperm.xlu0 %2080, %v1984
    %v2082 = vpop.permute.xlu0 %2081
    %2083 = vset.pattern.permute.xlu0 2
    %2084 = vperm.xlu0 %2083, %v1985
    %v2085 = vpop.permute.xlu0 %2084
    %2086 = vset.pattern.permute.xlu0 2
    %2087 = vperm.xlu0 %2086, %v1986
    %v2088 = vpop.permute.xlu0 %2087
    %2089 = vset.pattern.permute.xlu0 2
    %2090 = vperm.xlu0 %2089, %v1987
    %v2091 = vpop.permute.xlu0 %2090
    %2092 = vset.pattern.permute.xlu0 2
    %2093 = vperm.xlu0 %2092, %v1988
    %v2094 = vpop.permute.xlu0 %2093
    %2095 = vset.pattern.permute.xlu0 2
    %2096 = vperm.xlu0 %2095, %v1989
    %v2097 = vpop.permute.xlu0 %2096
    %2098 = vset.pattern.permute.xlu0 2
    %2099 = vperm.xlu0 %2098, %v1990
    %v2100 = vpop.permute.xlu0 %2099
    %2101 = vset.pattern.permute.xlu0 2
    %2102 = vperm.xlu0 %2101, %v1991
    %v2103 = vpop.permute.xlu0 %2102
    %2104 = vset.pattern.permute.xlu0 2
    %2105 = vperm.xlu0 %2104, %v1992
    %v2106 = vpop.permute.xlu0 %2105
    %2107 = vset.pattern.permute.xlu0 2
    %2108 = vperm.xlu0 %2107, %v1993
    %v2109 = vpop.permute.xlu0 %2108
    %2110 = vset.pattern.permute.xlu0 2
    %2111 = vperm.xlu0 %2110, %v1994
    %v2112 = vpop.permute.xlu0 %2111
    %2113 = vset.pattern.permute.xlu0 2
    %2114 = vperm.xlu0 %2113, %v1995
    %v2115 = vpop.permute.xlu0 %2114
    %2116 = vset.pattern.permute.xlu0 2
    %2117 = vperm.xlu0 %2116, %v1996
    %v2118 = vpop.permute.xlu0 %2117
    %2119 = vset.pattern.permute.xlu0 2
    %2120 = vperm.xlu0 %2119, %v1997
    %v2121 = vpop.permute.xlu0 %2120
    %2122 = vset.pattern.permute.xlu0 2
    %2123 = vperm.xlu0 %2122, %v1998
    %v2124 = vpop.permute.xlu0 %2123
    %2125 = vset.pattern.permute.xlu0 2
    %2126 = vperm.xlu0 %2125, %v1999
    %v2127 = vpop.permute.xlu0 %2126
    %2128 = vset.pattern.permute.xlu0 2
    %2129 = vperm.xlu0 %2128, %v2000
    %v2130 = vpop.permute.xlu0 %2129
    %2131 = vset.pattern.permute.xlu0 2
    %2132 = vperm.xlu0 %2131, %v2001
    %v2133 = vpop.permute.xlu0 %2132
    %2134 = vset.pattern.permute.xlu0 2
    %2135 = vperm.xlu0 %2134, %v2002
    %v2136 = vpop.permute.xlu0 %2135
    %2137 = vset.pattern.permute.xlu0 2
    %2138 = vperm.xlu0 %2137, %v2003
    %v2139 = vpop.permute.xlu0 %2138
    %2140 = vset.pattern.permute.xlu0 2
    %2141 = vperm.xlu0 %2140, %v2004
    %v2142 = vpop.permute.xlu0 %2141
    %2143 = vset.pattern.permute.xlu0 2
    %2144 = vperm.xlu0 %2143, %v2005
    %v2145 = vpop.permute.xlu0 %2144
    %2146 = vset.pattern.permute.xlu0 2
    %2147 = vperm.xlu0 %2146, %v2006
    %v2148 = vpop.permute.xlu0 %2147
    %2149 = vset.pattern.permute.xlu0 2
    %2150 = vperm.xlu0 %2149, %v2007
    %v2151 = vpop.permute.xlu0 %2150
    %vm2152 = vcmp.eq.s32.totalorder %v2010, %v84
    %vm2153 = vcmp.eq.s32.totalorder %v2010, %v85
    %vm2154 = vcmp.eq.s32.totalorder %v2010, %v86
    %vm2155 = vcmp.eq.s32.totalorder %v2010, %v87
    %vm2156 = vcmp.eq.s32.totalorder %v2013, %v84
    %vm2157 = vcmp.eq.s32.totalorder %v2013, %v85
    %vm2158 = vcmp.eq.s32.totalorder %v2013, %v86
    %vm2159 = vcmp.eq.s32.totalorder %v2013, %v87
    %vm2160 = vcmp.eq.s32.totalorder %v2016, %v84
    %vm2161 = vcmp.eq.s32.totalorder %v2016, %v85
    %vm2162 = vcmp.eq.s32.totalorder %v2016, %v86
    %vm2163 = vcmp.eq.s32.totalorder %v2016, %v87
    %vm2164 = vcmp.eq.s32.totalorder %v2019, %v84
    %vm2165 = vcmp.eq.s32.totalorder %v2019, %v85
    %vm2166 = vcmp.eq.s32.totalorder %v2019, %v86
    %vm2167 = vcmp.eq.s32.totalorder %v2019, %v87
    %vm2168 = vcmp.eq.s32.totalorder %v2022, %v84
    %vm2169 = vcmp.eq.s32.totalorder %v2022, %v85
    %vm2170 = vcmp.eq.s32.totalorder %v2022, %v86
    %vm2171 = vcmp.eq.s32.totalorder %v2022, %v87
    %vm2172 = vcmp.eq.s32.totalorder %v2025, %v84
    %vm2173 = vcmp.eq.s32.totalorder %v2025, %v85
    %vm2174 = vcmp.eq.s32.totalorder %v2025, %v86
    %vm2175 = vcmp.eq.s32.totalorder %v2025, %v87
    %vm2176 = vcmp.eq.s32.totalorder %v2028, %v84
    %vm2177 = vcmp.eq.s32.totalorder %v2028, %v85
    %vm2178 = vcmp.eq.s32.totalorder %v2028, %v86
    %vm2179 = vcmp.eq.s32.totalorder %v2028, %v87
    %vm2180 = vcmp.eq.s32.totalorder %v2031, %v84
    %vm2181 = vcmp.eq.s32.totalorder %v2031, %v85
    %vm2182 = vcmp.eq.s32.totalorder %v2031, %v86
    %vm2183 = vcmp.eq.s32.totalorder %v2031, %v87
    %vm2184 = vcmp.eq.s32.totalorder %v2034, %v84
    %vm2185 = vcmp.eq.s32.totalorder %v2034, %v85
    %vm2186 = vcmp.eq.s32.totalorder %v2034, %v86
    %vm2187 = vcmp.eq.s32.totalorder %v2034, %v87
    %vm2188 = vcmp.eq.s32.totalorder %v2037, %v84
    %vm2189 = vcmp.eq.s32.totalorder %v2037, %v85
    %vm2190 = vcmp.eq.s32.totalorder %v2037, %v86
    %vm2191 = vcmp.eq.s32.totalorder %v2037, %v87
    %vm2192 = vcmp.eq.s32.totalorder %v2040, %v84
    %vm2193 = vcmp.eq.s32.totalorder %v2040, %v85
    %vm2194 = vcmp.eq.s32.totalorder %v2040, %v86
    %vm2195 = vcmp.eq.s32.totalorder %v2040, %v87
    %vm2196 = vcmp.eq.s32.totalorder %v2043, %v84
    %vm2197 = vcmp.eq.s32.totalorder %v2043, %v85
    %vm2198 = vcmp.eq.s32.totalorder %v2043, %v86
    %vm2199 = vcmp.eq.s32.totalorder %v2043, %v87
    %vm2200 = vcmp.eq.s32.totalorder %v2046, %v84
    %vm2201 = vcmp.eq.s32.totalorder %v2046, %v85
    %vm2202 = vcmp.eq.s32.totalorder %v2046, %v86
    %vm2203 = vcmp.eq.s32.totalorder %v2046, %v87
    %vm2204 = vcmp.eq.s32.totalorder %v2049, %v84
    %vm2205 = vcmp.eq.s32.totalorder %v2049, %v85
    %vm2206 = vcmp.eq.s32.totalorder %v2049, %v86
    %vm2207 = vcmp.eq.s32.totalorder %v2049, %v87
    %vm2208 = vcmp.eq.s32.totalorder %v2052, %v84
    %vm2209 = vcmp.eq.s32.totalorder %v2052, %v85
    %vm2210 = vcmp.eq.s32.totalorder %v2052, %v86
    %vm2211 = vcmp.eq.s32.totalorder %v2052, %v87
    %vm2212 = vcmp.eq.s32.totalorder %v2055, %v84
    %vm2213 = vcmp.eq.s32.totalorder %v2055, %v85
    %vm2214 = vcmp.eq.s32.totalorder %v2055, %v86
    %vm2215 = vcmp.eq.s32.totalorder %v2055, %v87
    %vm2216 = vcmp.eq.s32.totalorder %v2058, %v84
    %vm2217 = vcmp.eq.s32.totalorder %v2058, %v85
    %vm2218 = vcmp.eq.s32.totalorder %v2058, %v86
    %vm2219 = vcmp.eq.s32.totalorder %v2058, %v87
    %vm2220 = vcmp.eq.s32.totalorder %v2061, %v84
    %vm2221 = vcmp.eq.s32.totalorder %v2061, %v85
    %vm2222 = vcmp.eq.s32.totalorder %v2061, %v86
    %vm2223 = vcmp.eq.s32.totalorder %v2061, %v87
    %vm2224 = vcmp.eq.s32.totalorder %v2064, %v84
    %vm2225 = vcmp.eq.s32.totalorder %v2064, %v85
    %vm2226 = vcmp.eq.s32.totalorder %v2064, %v86
    %vm2227 = vcmp.eq.s32.totalorder %v2064, %v87
    %vm2228 = vcmp.eq.s32.totalorder %v2067, %v84
    %vm2229 = vcmp.eq.s32.totalorder %v2067, %v85
    %vm2230 = vcmp.eq.s32.totalorder %v2067, %v86
    %vm2231 = vcmp.eq.s32.totalorder %v2067, %v87
    %vm2232 = vcmp.eq.s32.totalorder %v2070, %v84
    %vm2233 = vcmp.eq.s32.totalorder %v2070, %v85
    %vm2234 = vcmp.eq.s32.totalorder %v2070, %v86
    %vm2235 = vcmp.eq.s32.totalorder %v2070, %v87
    %vm2236 = vcmp.eq.s32.totalorder %v2073, %v84
    %vm2237 = vcmp.eq.s32.totalorder %v2073, %v85
    %vm2238 = vcmp.eq.s32.totalorder %v2073, %v86
    %vm2239 = vcmp.eq.s32.totalorder %v2073, %v87
    %vm2240 = vcmp.eq.s32.totalorder %v2076, %v84
    %vm2241 = vcmp.eq.s32.totalorder %v2076, %v85
    %vm2242 = vcmp.eq.s32.totalorder %v2076, %v86
    %vm2243 = vcmp.eq.s32.totalorder %v2076, %v87
    %vm2244 = vcmp.eq.s32.totalorder %v2079, %v84
    %vm2245 = vcmp.eq.s32.totalorder %v2079, %v85
    %vm2246 = vcmp.eq.s32.totalorder %v2079, %v86
    %vm2247 = vcmp.eq.s32.totalorder %v2079, %v87
    %vm2248 = vcmp.eq.s32.totalorder %v2082, %v84
    %vm2249 = vcmp.eq.s32.totalorder %v2082, %v85
    %vm2250 = vcmp.eq.s32.totalorder %v2082, %v86
    %vm2251 = vcmp.eq.s32.totalorder %v2082, %v87
    %vm2252 = vcmp.eq.s32.totalorder %v2085, %v84
    %vm2253 = vcmp.eq.s32.totalorder %v2085, %v85
    %vm2254 = vcmp.eq.s32.totalorder %v2085, %v86
    %vm2255 = vcmp.eq.s32.totalorder %v2085, %v87
    %vm2256 = vcmp.eq.s32.totalorder %v2088, %v84
    %vm2257 = vcmp.eq.s32.totalorder %v2088, %v85
    %vm2258 = vcmp.eq.s32.totalorder %v2088, %v86
    %vm2259 = vcmp.eq.s32.totalorder %v2088, %v87
    %vm2260 = vcmp.eq.s32.totalorder %v2091, %v84
    %vm2261 = vcmp.eq.s32.totalorder %v2091, %v85
    %vm2262 = vcmp.eq.s32.totalorder %v2091, %v86
    %vm2263 = vcmp.eq.s32.totalorder %v2091, %v87
    %vm2264 = vcmp.eq.s32.totalorder %v2094, %v84
    %vm2265 = vcmp.eq.s32.totalorder %v2094, %v85
    %vm2266 = vcmp.eq.s32.totalorder %v2094, %v86
    %vm2267 = vcmp.eq.s32.totalorder %v2094, %v87
    %vm2268 = vcmp.eq.s32.totalorder %v2097, %v84
    %vm2269 = vcmp.eq.s32.totalorder %v2097, %v85
    %vm2270 = vcmp.eq.s32.totalorder %v2097, %v86
    %vm2271 = vcmp.eq.s32.totalorder %v2097, %v87
    %vm2272 = vcmp.eq.s32.totalorder %v2100, %v84
    %vm2273 = vcmp.eq.s32.totalorder %v2100, %v85
    %vm2274 = vcmp.eq.s32.totalorder %v2100, %v86
    %vm2275 = vcmp.eq.s32.totalorder %v2100, %v87
    %vm2276 = vcmp.eq.s32.totalorder %v2103, %v84
    %vm2277 = vcmp.eq.s32.totalorder %v2103, %v85
    %vm2278 = vcmp.eq.s32.totalorder %v2103, %v86
    %vm2279 = vcmp.eq.s32.totalorder %v2103, %v87
    %vm2280 = vcmp.eq.s32.totalorder %v2106, %v84
    %vm2281 = vcmp.eq.s32.totalorder %v2106, %v85
    %vm2282 = vcmp.eq.s32.totalorder %v2106, %v86
    %vm2283 = vcmp.eq.s32.totalorder %v2106, %v87
    %vm2284 = vcmp.eq.s32.totalorder %v2109, %v84
    %vm2285 = vcmp.eq.s32.totalorder %v2109, %v85
    %vm2286 = vcmp.eq.s32.totalorder %v2109, %v86
    %vm2287 = vcmp.eq.s32.totalorder %v2109, %v87
    %vm2288 = vcmp.eq.s32.totalorder %v2112, %v84
    %vm2289 = vcmp.eq.s32.totalorder %v2112, %v85
    %vm2290 = vcmp.eq.s32.totalorder %v2112, %v86
    %vm2291 = vcmp.eq.s32.totalorder %v2112, %v87
    %vm2292 = vcmp.eq.s32.totalorder %v2115, %v84
    %vm2293 = vcmp.eq.s32.totalorder %v2115, %v85
    %vm2294 = vcmp.eq.s32.totalorder %v2115, %v86
    %vm2295 = vcmp.eq.s32.totalorder %v2115, %v87
    %vm2296 = vcmp.eq.s32.totalorder %v2118, %v84
    %vm2297 = vcmp.eq.s32.totalorder %v2118, %v85
    %vm2298 = vcmp.eq.s32.totalorder %v2118, %v86
    %vm2299 = vcmp.eq.s32.totalorder %v2118, %v87
    %vm2300 = vcmp.eq.s32.totalorder %v2121, %v84
    %vm2301 = vcmp.eq.s32.totalorder %v2121, %v85
    %vm2302 = vcmp.eq.s32.totalorder %v2121, %v86
    %vm2303 = vcmp.eq.s32.totalorder %v2121, %v87
    %vm2304 = vcmp.eq.s32.totalorder %v2124, %v84
    %vm2305 = vcmp.eq.s32.totalorder %v2124, %v85
    %vm2306 = vcmp.eq.s32.totalorder %v2124, %v86
    %vm2307 = vcmp.eq.s32.totalorder %v2124, %v87
    %vm2308 = vcmp.eq.s32.totalorder %v2127, %v84
    %vm2309 = vcmp.eq.s32.totalorder %v2127, %v85
    %vm2310 = vcmp.eq.s32.totalorder %v2127, %v86
    %vm2311 = vcmp.eq.s32.totalorder %v2127, %v87
    %vm2312 = vcmp.eq.s32.totalorder %v2130, %v84
    %vm2313 = vcmp.eq.s32.totalorder %v2130, %v85
    %vm2314 = vcmp.eq.s32.totalorder %v2130, %v86
    %vm2315 = vcmp.eq.s32.totalorder %v2130, %v87
    %vm2316 = vcmp.eq.s32.totalorder %v2133, %v84
    %vm2317 = vcmp.eq.s32.totalorder %v2133, %v85
    %vm2318 = vcmp.eq.s32.totalorder %v2133, %v86
    %vm2319 = vcmp.eq.s32.totalorder %v2133, %v87
    %vm2320 = vcmp.eq.s32.totalorder %v2136, %v84
    %vm2321 = vcmp.eq.s32.totalorder %v2136, %v85
    %vm2322 = vcmp.eq.s32.totalorder %v2136, %v86
    %vm2323 = vcmp.eq.s32.totalorder %v2136, %v87
    %vm2324 = vcmp.eq.s32.totalorder %v2139, %v84
    %vm2325 = vcmp.eq.s32.totalorder %v2139, %v85
    %vm2326 = vcmp.eq.s32.totalorder %v2139, %v86
    %vm2327 = vcmp.eq.s32.totalorder %v2139, %v87
    %vm2328 = vcmp.eq.s32.totalorder %v2142, %v84
    %vm2329 = vcmp.eq.s32.totalorder %v2142, %v85
    %vm2330 = vcmp.eq.s32.totalorder %v2142, %v86
    %vm2331 = vcmp.eq.s32.totalorder %v2142, %v87
    %vm2332 = vcmp.eq.s32.totalorder %v2145, %v84
    %vm2333 = vcmp.eq.s32.totalorder %v2145, %v85
    %vm2334 = vcmp.eq.s32.totalorder %v2145, %v86
    %vm2335 = vcmp.eq.s32.totalorder %v2145, %v87
    %vm2336 = vcmp.eq.s32.totalorder %v2148, %v84
    %vm2337 = vcmp.eq.s32.totalorder %v2148, %v85
    %vm2338 = vcmp.eq.s32.totalorder %v2148, %v86
    %vm2339 = vcmp.eq.s32.totalorder %v2148, %v87
    %vm2340 = vcmp.eq.s32.totalorder %v2151, %v84
    %vm2341 = vcmp.eq.s32.totalorder %v2151, %v85
    %vm2342 = vcmp.eq.s32.totalorder %v2151, %v86
    %vm2343 = vcmp.eq.s32.totalorder %v2151, %v87
    %v2344 = vsel %vm2152, 1, 0
    %v2345 = vsel %vm2153, 1, 0
    %v2346 = vsel %vm2154, 1, 0
    %v2347 = vsel %vm2155, 1, 0
    %v2348 = vsel %vm2156, 1, 0
    %v2349 = vsel %vm2157, 1, 0
    %v2350 = vsel %vm2158, 1, 0
    %v2351 = vsel %vm2159, 1, 0
    %v2352 = vsel %vm2160, 1, 0
    %v2353 = vsel %vm2161, 1, 0
    %v2354 = vsel %vm2162, 1, 0
    %v2355 = vsel %vm2163, 1, 0
    %v2356 = vsel %vm2164, 1, 0
    %v2357 = vsel %vm2165, 1, 0
    %v2358 = vsel %vm2166, 1, 0
    %v2359 = vsel %vm2167, 1, 0
    %v2360 = vsel %vm2168, 1, 0
    %v2361 = vsel %vm2169, 1, 0
    %v2362 = vsel %vm2170, 1, 0
    %v2363 = vsel %vm2171, 1, 0
    %v2364 = vsel %vm2172, 1, 0
    %v2365 = vsel %vm2173, 1, 0
    %v2366 = vsel %vm2174, 1, 0
    %v2367 = vsel %vm2175, 1, 0
    %v2368 = vsel %vm2176, 1, 0
    %v2369 = vsel %vm2177, 1, 0
    %v2370 = vsel %vm2178, 1, 0
    %v2371 = vsel %vm2179, 1, 0
    %v2372 = vsel %vm2180, 1, 0
    %v2373 = vsel %vm2181, 1, 0
    %v2374 = vsel %vm2182, 1, 0
    %v2375 = vsel %vm2183, 1, 0
    %v2376 = vsel %vm2184, 1, 0
    %v2377 = vsel %vm2185, 1, 0
    %v2378 = vsel %vm2186, 1, 0
    %v2379 = vsel %vm2187, 1, 0
    %v2380 = vsel %vm2188, 1, 0
    %v2381 = vsel %vm2189, 1, 0
    %v2382 = vsel %vm2190, 1, 0
    %v2383 = vsel %vm2191, 1, 0
    %v2384 = vsel %vm2192, 1, 0
    %v2385 = vsel %vm2193, 1, 0
    %v2386 = vsel %vm2194, 1, 0
    %v2387 = vsel %vm2195, 1, 0
    %v2388 = vsel %vm2196, 1, 0
    %v2389 = vsel %vm2197, 1, 0
    %v2390 = vsel %vm2198, 1, 0
    %v2391 = vsel %vm2199, 1, 0
    %v2392 = vsel %vm2200, 1, 0
    %v2393 = vsel %vm2201, 1, 0
    %v2394 = vsel %vm2202, 1, 0
    %v2395 = vsel %vm2203, 1, 0
    %v2396 = vsel %vm2204, 1, 0
    %v2397 = vsel %vm2205, 1, 0
    %v2398 = vsel %vm2206, 1, 0
    %v2399 = vsel %vm2207, 1, 0
    %v2400 = vsel %vm2208, 1, 0
    %v2401 = vsel %vm2209, 1, 0
    %v2402 = vsel %vm2210, 1, 0
    %v2403 = vsel %vm2211, 1, 0
    %v2404 = vsel %vm2212, 1, 0
    %v2405 = vsel %vm2213, 1, 0
    %v2406 = vsel %vm2214, 1, 0
    %v2407 = vsel %vm2215, 1, 0
    %v2408 = vsel %vm2216, 1, 0
    %v2409 = vsel %vm2217, 1, 0
    %v2410 = vsel %vm2218, 1, 0
    %v2411 = vsel %vm2219, 1, 0
    %v2412 = vsel %vm2220, 1, 0
    %v2413 = vsel %vm2221, 1, 0
    %v2414 = vsel %vm2222, 1, 0
    %v2415 = vsel %vm2223, 1, 0
    %v2416 = vsel %vm2224, 1, 0
    %v2417 = vsel %vm2225, 1, 0
    %v2418 = vsel %vm2226, 1, 0
    %v2419 = vsel %vm2227, 1, 0
    %v2420 = vsel %vm2228, 1, 0
    %v2421 = vsel %vm2229, 1, 0
    %v2422 = vsel %vm2230, 1, 0
    %v2423 = vsel %vm2231, 1, 0
    %v2424 = vsel %vm2232, 1, 0
    %v2425 = vsel %vm2233, 1, 0
    %v2426 = vsel %vm2234, 1, 0
    %v2427 = vsel %vm2235, 1, 0
    %v2428 = vsel %vm2236, 1, 0
    %v2429 = vsel %vm2237, 1, 0
    %v2430 = vsel %vm2238, 1, 0
    %v2431 = vsel %vm2239, 1, 0
    %v2432 = vsel %vm2240, 1, 0
    %v2433 = vsel %vm2241, 1, 0
    %v2434 = vsel %vm2242, 1, 0
    %v2435 = vsel %vm2243, 1, 0
    %v2436 = vsel %vm2244, 1, 0
    %v2437 = vsel %vm2245, 1, 0
    %v2438 = vsel %vm2246, 1, 0
    %v2439 = vsel %vm2247, 1, 0
    %v2440 = vsel %vm2248, 1, 0
    %v2441 = vsel %vm2249, 1, 0
    %v2442 = vsel %vm2250, 1, 0
    %v2443 = vsel %vm2251, 1, 0
    %v2444 = vsel %vm2252, 1, 0
    %v2445 = vsel %vm2253, 1, 0
    %v2446 = vsel %vm2254, 1, 0
    %v2447 = vsel %vm2255, 1, 0
    %v2448 = vsel %vm2256, 1, 0
    %v2449 = vsel %vm2257, 1, 0
    %v2450 = vsel %vm2258, 1, 0
    %v2451 = vsel %vm2259, 1, 0
    %v2452 = vsel %vm2260, 1, 0
    %v2453 = vsel %vm2261, 1, 0
    %v2454 = vsel %vm2262, 1, 0
    %v2455 = vsel %vm2263, 1, 0
    %v2456 = vsel %vm2264, 1, 0
    %v2457 = vsel %vm2265, 1, 0
    %v2458 = vsel %vm2266, 1, 0
    %v2459 = vsel %vm2267, 1, 0
    %v2460 = vsel %vm2268, 1, 0
    %v2461 = vsel %vm2269, 1, 0
    %v2462 = vsel %vm2270, 1, 0
    %v2463 = vsel %vm2271, 1, 0
    %v2464 = vsel %vm2272, 1, 0
    %v2465 = vsel %vm2273, 1, 0
    %v2466 = vsel %vm2274, 1, 0
    %v2467 = vsel %vm2275, 1, 0
    %v2468 = vsel %vm2276, 1, 0
    %v2469 = vsel %vm2277, 1, 0
    %v2470 = vsel %vm2278, 1, 0
    %v2471 = vsel %vm2279, 1, 0
    %v2472 = vsel %vm2280, 1, 0
    %v2473 = vsel %vm2281, 1, 0
    %v2474 = vsel %vm2282, 1, 0
    %v2475 = vsel %vm2283, 1, 0
    %v2476 = vsel %vm2284, 1, 0
    %v2477 = vsel %vm2285, 1, 0
    %v2478 = vsel %vm2286, 1, 0
    %v2479 = vsel %vm2287, 1, 0
    %v2480 = vsel %vm2288, 1, 0
    %v2481 = vsel %vm2289, 1, 0
    %v2482 = vsel %vm2290, 1, 0
    %v2483 = vsel %vm2291, 1, 0
    %v2484 = vsel %vm2292, 1, 0
    %v2485 = vsel %vm2293, 1, 0
    %v2486 = vsel %vm2294, 1, 0
    %v2487 = vsel %vm2295, 1, 0
    %v2488 = vsel %vm2296, 1, 0
    %v2489 = vsel %vm2297, 1, 0
    %v2490 = vsel %vm2298, 1, 0
    %v2491 = vsel %vm2299, 1, 0
    %v2492 = vsel %vm2300, 1, 0
    %v2493 = vsel %vm2301, 1, 0
    %v2494 = vsel %vm2302, 1, 0
    %v2495 = vsel %vm2303, 1, 0
    %v2496 = vsel %vm2304, 1, 0
    %v2497 = vsel %vm2305, 1, 0
    %v2498 = vsel %vm2306, 1, 0
    %v2499 = vsel %vm2307, 1, 0
    %v2500 = vsel %vm2308, 1, 0
    %v2501 = vsel %vm2309, 1, 0
    %v2502 = vsel %vm2310, 1, 0
    %v2503 = vsel %vm2311, 1, 0
    %v2504 = vsel %vm2312, 1, 0
    %v2505 = vsel %vm2313, 1, 0
    %v2506 = vsel %vm2314, 1, 0
    %v2507 = vsel %vm2315, 1, 0
    %v2508 = vsel %vm2316, 1, 0
    %v2509 = vsel %vm2317, 1, 0
    %v2510 = vsel %vm2318, 1, 0
    %v2511 = vsel %vm2319, 1, 0
    %v2512 = vsel %vm2320, 1, 0
    %v2513 = vsel %vm2321, 1, 0
    %v2514 = vsel %vm2322, 1, 0
    %v2515 = vsel %vm2323, 1, 0
    %v2516 = vsel %vm2324, 1, 0
    %v2517 = vsel %vm2325, 1, 0
    %v2518 = vsel %vm2326, 1, 0
    %v2519 = vsel %vm2327, 1, 0
    %v2520 = vsel %vm2328, 1, 0
    %v2521 = vsel %vm2329, 1, 0
    %v2522 = vsel %vm2330, 1, 0
    %v2523 = vsel %vm2331, 1, 0
    %v2524 = vsel %vm2332, 1, 0
    %v2525 = vsel %vm2333, 1, 0
    %v2526 = vsel %vm2334, 1, 0
    %v2527 = vsel %vm2335, 1, 0
    %v2528 = vsel %vm2336, 1, 0
    %v2529 = vsel %vm2337, 1, 0
    %v2530 = vsel %vm2338, 1, 0
    %v2531 = vsel %vm2339, 1, 0
    %v2532 = vsel %vm2340, 1, 0
    %v2533 = vsel %vm2341, 1, 0
    %v2534 = vsel %vm2342, 1, 0
    %v2535 = vsel %vm2343, 1, 0
    %v2536 = vcvt.s32.f32 %v2344
    %v2537 = vcvt.s32.f32 %v2345
    %v2538 = vcvt.s32.f32 %v2346
    %v2539 = vcvt.s32.f32 %v2347
    %v2540 = vcvt.s32.f32 %v2348
    %v2541 = vcvt.s32.f32 %v2349
    %v2542 = vcvt.s32.f32 %v2350
    %v2543 = vcvt.s32.f32 %v2351
    %v2544 = vcvt.s32.f32 %v2352
    %v2545 = vcvt.s32.f32 %v2353
    %v2546 = vcvt.s32.f32 %v2354
    %v2547 = vcvt.s32.f32 %v2355
    %v2548 = vcvt.s32.f32 %v2356
    %v2549 = vcvt.s32.f32 %v2357
    %v2550 = vcvt.s32.f32 %v2358
    %v2551 = vcvt.s32.f32 %v2359
    %v2552 = vcvt.s32.f32 %v2360
    %v2553 = vcvt.s32.f32 %v2361
    %v2554 = vcvt.s32.f32 %v2362
    %v2555 = vcvt.s32.f32 %v2363
    %v2556 = vcvt.s32.f32 %v2364
    %v2557 = vcvt.s32.f32 %v2365
    %v2558 = vcvt.s32.f32 %v2366
    %v2559 = vcvt.s32.f32 %v2367
    %v2560 = vcvt.s32.f32 %v2368
    %v2561 = vcvt.s32.f32 %v2369
    %v2562 = vcvt.s32.f32 %v2370
    %v2563 = vcvt.s32.f32 %v2371
    %v2564 = vcvt.s32.f32 %v2372
    %v2565 = vcvt.s32.f32 %v2373
    %v2566 = vcvt.s32.f32 %v2374
    %v2567 = vcvt.s32.f32 %v2375
    %v2568 = vcvt.s32.f32 %v2376
    %v2569 = vcvt.s32.f32 %v2377
    %v2570 = vcvt.s32.f32 %v2378
    %v2571 = vcvt.s32.f32 %v2379
    %v2572 = vcvt.s32.f32 %v2380
    %v2573 = vcvt.s32.f32 %v2381
    %v2574 = vcvt.s32.f32 %v2382
    %v2575 = vcvt.s32.f32 %v2383
    %v2576 = vcvt.s32.f32 %v2384
    %v2577 = vcvt.s32.f32 %v2385
    %v2578 = vcvt.s32.f32 %v2386
    %v2579 = vcvt.s32.f32 %v2387
    %v2580 = vcvt.s32.f32 %v2388
    %v2581 = vcvt.s32.f32 %v2389
    %v2582 = vcvt.s32.f32 %v2390
    %v2583 = vcvt.s32.f32 %v2391
    %v2584 = vcvt.s32.f32 %v2392
    %v2585 = vcvt.s32.f32 %v2393
    %v2586 = vcvt.s32.f32 %v2394
    %v2587 = vcvt.s32.f32 %v2395
    %v2588 = vcvt.s32.f32 %v2396
    %v2589 = vcvt.s32.f32 %v2397
    %v2590 = vcvt.s32.f32 %v2398
    %v2591 = vcvt.s32.f32 %v2399
    %v2592 = vcvt.s32.f32 %v2400
    %v2593 = vcvt.s32.f32 %v2401
    %v2594 = vcvt.s32.f32 %v2402
    %v2595 = vcvt.s32.f32 %v2403
    %v2596 = vcvt.s32.f32 %v2404
    %v2597 = vcvt.s32.f32 %v2405
    %v2598 = vcvt.s32.f32 %v2406
    %v2599 = vcvt.s32.f32 %v2407
    %v2600 = vcvt.s32.f32 %v2408
    %v2601 = vcvt.s32.f32 %v2409
    %v2602 = vcvt.s32.f32 %v2410
    %v2603 = vcvt.s32.f32 %v2411
    %v2604 = vcvt.s32.f32 %v2412
    %v2605 = vcvt.s32.f32 %v2413
    %v2606 = vcvt.s32.f32 %v2414
    %v2607 = vcvt.s32.f32 %v2415
    %v2608 = vcvt.s32.f32 %v2416
    %v2609 = vcvt.s32.f32 %v2417
    %v2610 = vcvt.s32.f32 %v2418
    %v2611 = vcvt.s32.f32 %v2419
    %v2612 = vcvt.s32.f32 %v2420
    %v2613 = vcvt.s32.f32 %v2421
    %v2614 = vcvt.s32.f32 %v2422
    %v2615 = vcvt.s32.f32 %v2423
    %v2616 = vcvt.s32.f32 %v2424
    %v2617 = vcvt.s32.f32 %v2425
    %v2618 = vcvt.s32.f32 %v2426
    %v2619 = vcvt.s32.f32 %v2427
    %v2620 = vcvt.s32.f32 %v2428
    %v2621 = vcvt.s32.f32 %v2429
    %v2622 = vcvt.s32.f32 %v2430
    %v2623 = vcvt.s32.f32 %v2431
    %v2624 = vcvt.s32.f32 %v2432
    %v2625 = vcvt.s32.f32 %v2433
    %v2626 = vcvt.s32.f32 %v2434
    %v2627 = vcvt.s32.f32 %v2435
    %v2628 = vcvt.s32.f32 %v2436
    %v2629 = vcvt.s32.f32 %v2437
    %v2630 = vcvt.s32.f32 %v2438
    %v2631 = vcvt.s32.f32 %v2439
    %v2632 = vcvt.s32.f32 %v2440
    %v2633 = vcvt.s32.f32 %v2441
    %v2634 = vcvt.s32.f32 %v2442
    %v2635 = vcvt.s32.f32 %v2443
    %v2636 = vcvt.s32.f32 %v2444
    %v2637 = vcvt.s32.f32 %v2445
    %v2638 = vcvt.s32.f32 %v2446
    %v2639 = vcvt.s32.f32 %v2447
    %v2640 = vcvt.s32.f32 %v2448
    %v2641 = vcvt.s32.f32 %v2449
    %v2642 = vcvt.s32.f32 %v2450
    %v2643 = vcvt.s32.f32 %v2451
    %v2644 = vcvt.s32.f32 %v2452
    %v2645 = vcvt.s32.f32 %v2453
    %v2646 = vcvt.s32.f32 %v2454
    %v2647 = vcvt.s32.f32 %v2455
    %v2648 = vcvt.s32.f32 %v2456
    %v2649 = vcvt.s32.f32 %v2457
    %v2650 = vcvt.s32.f32 %v2458
    %v2651 = vcvt.s32.f32 %v2459
    %v2652 = vcvt.s32.f32 %v2460
    %v2653 = vcvt.s32.f32 %v2461
    %v2654 = vcvt.s32.f32 %v2462
    %v2655 = vcvt.s32.f32 %v2463
    %v2656 = vcvt.s32.f32 %v2464
    %v2657 = vcvt.s32.f32 %v2465
    %v2658 = vcvt.s32.f32 %v2466
    %v2659 = vcvt.s32.f32 %v2467
    %v2660 = vcvt.s32.f32 %v2468
    %v2661 = vcvt.s32.f32 %v2469
    %v2662 = vcvt.s32.f32 %v2470
    %v2663 = vcvt.s32.f32 %v2471
    %v2664 = vcvt.s32.f32 %v2472
    %v2665 = vcvt.s32.f32 %v2473
    %v2666 = vcvt.s32.f32 %v2474
    %v2667 = vcvt.s32.f32 %v2475
    %v2668 = vcvt.s32.f32 %v2476
    %v2669 = vcvt.s32.f32 %v2477
    %v2670 = vcvt.s32.f32 %v2478
    %v2671 = vcvt.s32.f32 %v2479
    %v2672 = vcvt.s32.f32 %v2480
    %v2673 = vcvt.s32.f32 %v2481
    %v2674 = vcvt.s32.f32 %v2482
    %v2675 = vcvt.s32.f32 %v2483
    %v2676 = vcvt.s32.f32 %v2484
    %v2677 = vcvt.s32.f32 %v2485
    %v2678 = vcvt.s32.f32 %v2486
    %v2679 = vcvt.s32.f32 %v2487
    %v2680 = vcvt.s32.f32 %v2488
    %v2681 = vcvt.s32.f32 %v2489
    %v2682 = vcvt.s32.f32 %v2490
    %v2683 = vcvt.s32.f32 %v2491
    %v2684 = vcvt.s32.f32 %v2492
    %v2685 = vcvt.s32.f32 %v2493
    %v2686 = vcvt.s32.f32 %v2494
    %v2687 = vcvt.s32.f32 %v2495
    %v2688 = vcvt.s32.f32 %v2496
    %v2689 = vcvt.s32.f32 %v2497
    %v2690 = vcvt.s32.f32 %v2498
    %v2691 = vcvt.s32.f32 %v2499
    %v2692 = vcvt.s32.f32 %v2500
    %v2693 = vcvt.s32.f32 %v2501
    %v2694 = vcvt.s32.f32 %v2502
    %v2695 = vcvt.s32.f32 %v2503
    %v2696 = vcvt.s32.f32 %v2504
    %v2697 = vcvt.s32.f32 %v2505
    %v2698 = vcvt.s32.f32 %v2506
    %v2699 = vcvt.s32.f32 %v2507
    %v2700 = vcvt.s32.f32 %v2508
    %v2701 = vcvt.s32.f32 %v2509
    %v2702 = vcvt.s32.f32 %v2510
    %v2703 = vcvt.s32.f32 %v2511
    %v2704 = vcvt.s32.f32 %v2512
    %v2705 = vcvt.s32.f32 %v2513
    %v2706 = vcvt.s32.f32 %v2514
    %v2707 = vcvt.s32.f32 %v2515
    %v2708 = vcvt.s32.f32 %v2516
    %v2709 = vcvt.s32.f32 %v2517
    %v2710 = vcvt.s32.f32 %v2518
    %v2711 = vcvt.s32.f32 %v2519
    %v2712 = vcvt.s32.f32 %v2520
    %v2713 = vcvt.s32.f32 %v2521
    %v2714 = vcvt.s32.f32 %v2522
    %v2715 = vcvt.s32.f32 %v2523
    %v2716 = vcvt.s32.f32 %v2524
    %v2717 = vcvt.s32.f32 %v2525
    %v2718 = vcvt.s32.f32 %v2526
    %v2719 = vcvt.s32.f32 %v2527
    %v2720 = vcvt.s32.f32 %v2528
    %v2721 = vcvt.s32.f32 %v2529
    %v2722 = vcvt.s32.f32 %v2530
    %v2723 = vcvt.s32.f32 %v2531
    %v2724 = vcvt.s32.f32 %v2532
    %v2725 = vcvt.s32.f32 %v2533
    %v2726 = vcvt.s32.f32 %v2534
    %v2727 = vcvt.s32.f32 %v2535
    %v2728 = vadd.f32 %v1768, %v2536
    %v2729 = vadd.f32 %v1769, %v2537
    %v2730 = vadd.f32 %v1770, %v2538
    %v2731 = vadd.f32 %v1771, %v2539
    %v2732 = vadd.f32 %v1772, %v2540
    %v2733 = vadd.f32 %v1773, %v2541
    %v2734 = vadd.f32 %v1774, %v2542
    %v2735 = vadd.f32 %v1775, %v2543
    %v2736 = vadd.f32 %v1776, %v2544
    %v2737 = vadd.f32 %v1777, %v2545
    %v2738 = vadd.f32 %v1778, %v2546
    %v2739 = vadd.f32 %v1779, %v2547
    %v2740 = vadd.f32 %v1780, %v2548
    %v2741 = vadd.f32 %v1781, %v2549
    %v2742 = vadd.f32 %v1782, %v2550
    %v2743 = vadd.f32 %v1783, %v2551
    %v2744 = vadd.f32 %v1784, %v2552
    %v2745 = vadd.f32 %v1785, %v2553
    %v2746 = vadd.f32 %v1786, %v2554
    %v2747 = vadd.f32 %v1787, %v2555
    %v2748 = vadd.f32 %v1788, %v2556
    %v2749 = vadd.f32 %v1789, %v2557
    %v2750 = vadd.f32 %v1790, %v2558
    %v2751 = vadd.f32 %v1791, %v2559
    %v2752 = vadd.f32 %v1792, %v2560
    %v2753 = vadd.f32 %v1793, %v2561
    %v2754 = vadd.f32 %v1794, %v2562
    %v2755 = vadd.f32 %v1795, %v2563
    %v2756 = vadd.f32 %v1796, %v2564
    %v2757 = vadd.f32 %v1797, %v2565
    %v2758 = vadd.f32 %v1798, %v2566
    %v2759 = vadd.f32 %v1799, %v2567
    %v2760 = vadd.f32 %v1800, %v2568
    %v2761 = vadd.f32 %v1801, %v2569
    %v2762 = vadd.f32 %v1802, %v2570
    %v2763 = vadd.f32 %v1803, %v2571
    %v2764 = vadd.f32 %v1804, %v2572
    %v2765 = vadd.f32 %v1805, %v2573
    %v2766 = vadd.f32 %v1806, %v2574
    %v2767 = vadd.f32 %v1807, %v2575
    %v2768 = vadd.f32 %v1808, %v2576
    %v2769 = vadd.f32 %v1809, %v2577
    %v2770 = vadd.f32 %v1810, %v2578
    %v2771 = vadd.f32 %v1811, %v2579
    %v2772 = vadd.f32 %v1812, %v2580
    %v2773 = vadd.f32 %v1813, %v2581
    %v2774 = vadd.f32 %v1814, %v2582
    %v2775 = vadd.f32 %v1815, %v2583
    %v2776 = vadd.f32 %v1816, %v2584
    %v2777 = vadd.f32 %v1817, %v2585
    %v2778 = vadd.f32 %v1818, %v2586
    %v2779 = vadd.f32 %v1819, %v2587
    %v2780 = vadd.f32 %v1820, %v2588
    %v2781 = vadd.f32 %v1821, %v2589
    %v2782 = vadd.f32 %v1822, %v2590
    %v2783 = vadd.f32 %v1823, %v2591
    %v2784 = vadd.f32 %v1824, %v2592
    %v2785 = vadd.f32 %v1825, %v2593
    %v2786 = vadd.f32 %v1826, %v2594
    %v2787 = vadd.f32 %v1827, %v2595
    %v2788 = vadd.f32 %v1828, %v2596
    %v2789 = vadd.f32 %v1829, %v2597
    %v2790 = vadd.f32 %v1830, %v2598
    %v2791 = vadd.f32 %v1831, %v2599
    %v2792 = vadd.f32 %v1832, %v2600
    %v2793 = vadd.f32 %v1833, %v2601
    %v2794 = vadd.f32 %v1834, %v2602
    %v2795 = vadd.f32 %v1835, %v2603
    %v2796 = vadd.f32 %v1836, %v2604
    %v2797 = vadd.f32 %v1837, %v2605
    %v2798 = vadd.f32 %v1838, %v2606
    %v2799 = vadd.f32 %v1839, %v2607
    %v2800 = vadd.f32 %v1840, %v2608
    %v2801 = vadd.f32 %v1841, %v2609
    %v2802 = vadd.f32 %v1842, %v2610
    %v2803 = vadd.f32 %v1843, %v2611
    %v2804 = vadd.f32 %v1844, %v2612
    %v2805 = vadd.f32 %v1845, %v2613
    %v2806 = vadd.f32 %v1846, %v2614
    %v2807 = vadd.f32 %v1847, %v2615
    %v2808 = vadd.f32 %v1848, %v2616
    %v2809 = vadd.f32 %v1849, %v2617
    %v2810 = vadd.f32 %v1850, %v2618
    %v2811 = vadd.f32 %v1851, %v2619
    %v2812 = vadd.f32 %v1852, %v2620
    %v2813 = vadd.f32 %v1853, %v2621
    %v2814 = vadd.f32 %v1854, %v2622
    %v2815 = vadd.f32 %v1855, %v2623
    %v2816 = vadd.f32 %v1856, %v2624
    %v2817 = vadd.f32 %v1857, %v2625
    %v2818 = vadd.f32 %v1858, %v2626
    %v2819 = vadd.f32 %v1859, %v2627
    %v2820 = vadd.f32 %v1860, %v2628
    %v2821 = vadd.f32 %v1861, %v2629
    %v2822 = vadd.f32 %v1862, %v2630
    %v2823 = vadd.f32 %v1863, %v2631
    %v2824 = vadd.f32 %v1864, %v2632
    %v2825 = vadd.f32 %v1865, %v2633
    %v2826 = vadd.f32 %v1866, %v2634
    %v2827 = vadd.f32 %v1867, %v2635
    %v2828 = vadd.f32 %v1868, %v2636
    %v2829 = vadd.f32 %v1869, %v2637
    %v2830 = vadd.f32 %v1870, %v2638
    %v2831 = vadd.f32 %v1871, %v2639
    %v2832 = vadd.f32 %v1872, %v2640
    %v2833 = vadd.f32 %v1873, %v2641
    %v2834 = vadd.f32 %v1874, %v2642
    %v2835 = vadd.f32 %v1875, %v2643
    %v2836 = vadd.f32 %v1876, %v2644
    %v2837 = vadd.f32 %v1877, %v2645
    %v2838 = vadd.f32 %v1878, %v2646
    %v2839 = vadd.f32 %v1879, %v2647
    %v2840 = vadd.f32 %v1880, %v2648
    %v2841 = vadd.f32 %v1881, %v2649
    %v2842 = vadd.f32 %v1882, %v2650
    %v2843 = vadd.f32 %v1883, %v2651
    %v2844 = vadd.f32 %v1884, %v2652
    %v2845 = vadd.f32 %v1885, %v2653
    %v2846 = vadd.f32 %v1886, %v2654
    %v2847 = vadd.f32 %v1887, %v2655
    %v2848 = vadd.f32 %v1888, %v2656
    %v2849 = vadd.f32 %v1889, %v2657
    %v2850 = vadd.f32 %v1890, %v2658
    %v2851 = vadd.f32 %v1891, %v2659
    %v2852 = vadd.f32 %v1892, %v2660
    %v2853 = vadd.f32 %v1893, %v2661
    %v2854 = vadd.f32 %v1894, %v2662
    %v2855 = vadd.f32 %v1895, %v2663
    %v2856 = vadd.f32 %v1896, %v2664
    %v2857 = vadd.f32 %v1897, %v2665
    %v2858 = vadd.f32 %v1898, %v2666
    %v2859 = vadd.f32 %v1899, %v2667
    %v2860 = vadd.f32 %v1900, %v2668
    %v2861 = vadd.f32 %v1901, %v2669
    %v2862 = vadd.f32 %v1902, %v2670
    %v2863 = vadd.f32 %v1903, %v2671
    %v2864 = vadd.f32 %v1904, %v2672
    %v2865 = vadd.f32 %v1905, %v2673
    %v2866 = vadd.f32 %v1906, %v2674
    %v2867 = vadd.f32 %v1907, %v2675
    %v2868 = vadd.f32 %v1908, %v2676
    %v2869 = vadd.f32 %v1909, %v2677
    %v2870 = vadd.f32 %v1910, %v2678
    %v2871 = vadd.f32 %v1911, %v2679
    %v2872 = vadd.f32 %v1912, %v2680
    %v2873 = vadd.f32 %v1913, %v2681
    %v2874 = vadd.f32 %v1914, %v2682
    %v2875 = vadd.f32 %v1915, %v2683
    %v2876 = vadd.f32 %v1916, %v2684
    %v2877 = vadd.f32 %v1917, %v2685
    %v2878 = vadd.f32 %v1918, %v2686
    %v2879 = vadd.f32 %v1919, %v2687
    %v2880 = vadd.f32 %v1920, %v2688
    %v2881 = vadd.f32 %v1921, %v2689
    %v2882 = vadd.f32 %v1922, %v2690
    %v2883 = vadd.f32 %v1923, %v2691
    %v2884 = vadd.f32 %v1924, %v2692
    %v2885 = vadd.f32 %v1925, %v2693
    %v2886 = vadd.f32 %v1926, %v2694
    %v2887 = vadd.f32 %v1927, %v2695
    %v2888 = vadd.f32 %v1928, %v2696
    %v2889 = vadd.f32 %v1929, %v2697
    %v2890 = vadd.f32 %v1930, %v2698
    %v2891 = vadd.f32 %v1931, %v2699
    %v2892 = vadd.f32 %v1932, %v2700
    %v2893 = vadd.f32 %v1933, %v2701
    %v2894 = vadd.f32 %v1934, %v2702
    %v2895 = vadd.f32 %v1935, %v2703
    %v2896 = vadd.f32 %v1936, %v2704
    %v2897 = vadd.f32 %v1937, %v2705
    %v2898 = vadd.f32 %v1938, %v2706
    %v2899 = vadd.f32 %v1939, %v2707
    %v2900 = vadd.f32 %v1940, %v2708
    %v2901 = vadd.f32 %v1941, %v2709
    %v2902 = vadd.f32 %v1942, %v2710
    %v2903 = vadd.f32 %v1943, %v2711
    %v2904 = vadd.f32 %v1944, %v2712
    %v2905 = vadd.f32 %v1945, %v2713
    %v2906 = vadd.f32 %v1946, %v2714
    %v2907 = vadd.f32 %v1947, %v2715
    %v2908 = vadd.f32 %v1948, %v2716
    %v2909 = vadd.f32 %v1949, %v2717
    %v2910 = vadd.f32 %v1950, %v2718
    %v2911 = vadd.f32 %v1951, %v2719
    %v2912 = vadd.f32 %v1952, %v2720
    %v2913 = vadd.f32 %v1953, %v2721
    %v2914 = vadd.f32 %v1954, %v2722
    %v2915 = vadd.f32 %v1955, %v2723
    %v2916 = vadd.f32 %v1956, %v2724
    %v2917 = vadd.f32 %v1957, %v2725
    %v2918 = vadd.f32 %v1958, %v2726
    %v2919 = vadd.f32 %v1959, %v2727
    %v2920 = vadd.s32 %v35, 192
    %v2921 = vadd.s32 %v36, 192
    %v2922 = vadd.s32 %v37, 192
    %v2923 = vadd.s32 %v38, 192
    %v2924 = vadd.s32 %v39, 192
    %v2925 = vadd.s32 %v40, 192
    %v2926 = vadd.s32 %v41, 192
    %v2927 = vadd.s32 %v42, 192
    %v2928 = vadd.s32 %v43, 192
    %v2929 = vadd.s32 %v44, 192
    %v2930 = vadd.s32 %v45, 192
    %v2931 = vadd.s32 %v46, 192
    %v2932 = vadd.s32 %v47, 192
    %v2933 = vadd.s32 %v48, 192
    %v2934 = vadd.s32 %v49, 192
    %v2935 = vadd.s32 %v50, 192
    %v2936 = vadd.s32 %v51, 192
    %v2937 = vadd.s32 %v52, 192
    %v2938 = vadd.s32 %v53, 192
    %v2939 = vadd.s32 %v54, 192
    %v2940 = vadd.s32 %v55, 192
    %v2941 = vadd.s32 %v56, 192
    %v2942 = vadd.s32 %v57, 192
    %v2943 = vadd.s32 %v58, 192
    %v2944 = vadd.s32 %v59, 192
    %v2945 = vadd.s32 %v60, 192
    %v2946 = vadd.s32 %v61, 192
    %v2947 = vadd.s32 %v62, 192
    %v2948 = vadd.s32 %v63, 192
    %v2949 = vadd.s32 %v64, 192
    %v2950 = vadd.s32 %v65, 192
    %v2951 = vadd.s32 %v66, 192
    %v2952 = vadd.s32 %v67, 192
    %v2953 = vadd.s32 %v68, 192
    %v2954 = vadd.s32 %v69, 192
    %v2955 = vadd.s32 %v70, 192
    %v2956 = vadd.s32 %v71, 192
    %v2957 = vadd.s32 %v72, 192
    %v2958 = vadd.s32 %v73, 192
    %v2959 = vadd.s32 %v74, 192
    %v2960 = vadd.s32 %v75, 192
    %v2961 = vadd.s32 %v76, 192
    %v2962 = vadd.s32 %v77, 192
    %v2963 = vadd.s32 %v78, 192
    %v2964 = vadd.s32 %v79, 192
    %v2965 = vadd.s32 %v80, 192
    %v2966 = vadd.s32 %v81, 192
    %v2967 = vadd.s32 %v82, 192
    %2968 = vset.pattern.permute.xlu0 3
    %2969 = vperm.xlu0 %2968, %v2920
    %v2970 = vpop.permute.xlu0 %2969
    %2971 = vset.pattern.permute.xlu0 3
    %2972 = vperm.xlu0 %2971, %v2921
    %v2973 = vpop.permute.xlu0 %2972
    %2974 = vset.pattern.permute.xlu0 3
    %2975 = vperm.xlu0 %2974, %v2922
    %v2976 = vpop.permute.xlu0 %2975
    %2977 = vset.pattern.permute.xlu0 3
    %2978 = vperm.xlu0 %2977, %v2923
    %v2979 = vpop.permute.xlu0 %2978
    %2980 = vset.pattern.permute.xlu0 3
    %2981 = vperm.xlu0 %2980, %v2924
    %v2982 = vpop.permute.xlu0 %2981
    %2983 = vset.pattern.permute.xlu0 3
    %2984 = vperm.xlu0 %2983, %v2925
    %v2985 = vpop.permute.xlu0 %2984
    %2986 = vset.pattern.permute.xlu0 3
    %2987 = vperm.xlu0 %2986, %v2926
    %v2988 = vpop.permute.xlu0 %2987
    %2989 = vset.pattern.permute.xlu0 3
    %2990 = vperm.xlu0 %2989, %v2927
    %v2991 = vpop.permute.xlu0 %2990
    %2992 = vset.pattern.permute.xlu0 3
    %2993 = vperm.xlu0 %2992, %v2928
    %v2994 = vpop.permute.xlu0 %2993
    %2995 = vset.pattern.permute.xlu0 3
    %2996 = vperm.xlu0 %2995, %v2929
    %v2997 = vpop.permute.xlu0 %2996
    %2998 = vset.pattern.permute.xlu0 3
    %2999 = vperm.xlu0 %2998, %v2930
    %v3000 = vpop.permute.xlu0 %2999
    %3001 = vset.pattern.permute.xlu0 3
    %3002 = vperm.xlu0 %3001, %v2931
    %v3003 = vpop.permute.xlu0 %3002
    %3004 = vset.pattern.permute.xlu0 3
    %3005 = vperm.xlu0 %3004, %v2932
    %v3006 = vpop.permute.xlu0 %3005
    %3007 = vset.pattern.permute.xlu0 3
    %3008 = vperm.xlu0 %3007, %v2933
    %v3009 = vpop.permute.xlu0 %3008
    %3010 = vset.pattern.permute.xlu0 3
    %3011 = vperm.xlu0 %3010, %v2934
    %v3012 = vpop.permute.xlu0 %3011
    %3013 = vset.pattern.permute.xlu0 3
    %3014 = vperm.xlu0 %3013, %v2935
    %v3015 = vpop.permute.xlu0 %3014
    %3016 = vset.pattern.permute.xlu0 3
    %3017 = vperm.xlu0 %3016, %v2936
    %v3018 = vpop.permute.xlu0 %3017
    %3019 = vset.pattern.permute.xlu0 3
    %3020 = vperm.xlu0 %3019, %v2937
    %v3021 = vpop.permute.xlu0 %3020
    %3022 = vset.pattern.permute.xlu0 3
    %3023 = vperm.xlu0 %3022, %v2938
    %v3024 = vpop.permute.xlu0 %3023
    %3025 = vset.pattern.permute.xlu0 3
    %3026 = vperm.xlu0 %3025, %v2939
    %v3027 = vpop.permute.xlu0 %3026
    %3028 = vset.pattern.permute.xlu0 3
    %3029 = vperm.xlu0 %3028, %v2940
    %v3030 = vpop.permute.xlu0 %3029
    %3031 = vset.pattern.permute.xlu0 3
    %3032 = vperm.xlu0 %3031, %v2941
    %v3033 = vpop.permute.xlu0 %3032
    %3034 = vset.pattern.permute.xlu0 3
    %3035 = vperm.xlu0 %3034, %v2942
    %v3036 = vpop.permute.xlu0 %3035
    %3037 = vset.pattern.permute.xlu0 3
    %3038 = vperm.xlu0 %3037, %v2943
    %v3039 = vpop.permute.xlu0 %3038
    %3040 = vset.pattern.permute.xlu0 3
    %3041 = vperm.xlu0 %3040, %v2944
    %v3042 = vpop.permute.xlu0 %3041
    %3043 = vset.pattern.permute.xlu0 3
    %3044 = vperm.xlu0 %3043, %v2945
    %v3045 = vpop.permute.xlu0 %3044
    %3046 = vset.pattern.permute.xlu0 3
    %3047 = vperm.xlu0 %3046, %v2946
    %v3048 = vpop.permute.xlu0 %3047
    %3049 = vset.pattern.permute.xlu0 3
    %3050 = vperm.xlu0 %3049, %v2947
    %v3051 = vpop.permute.xlu0 %3050
    %3052 = vset.pattern.permute.xlu0 3
    %3053 = vperm.xlu0 %3052, %v2948
    %v3054 = vpop.permute.xlu0 %3053
    %3055 = vset.pattern.permute.xlu0 3
    %3056 = vperm.xlu0 %3055, %v2949
    %v3057 = vpop.permute.xlu0 %3056
    %3058 = vset.pattern.permute.xlu0 3
    %3059 = vperm.xlu0 %3058, %v2950
    %v3060 = vpop.permute.xlu0 %3059
    %3061 = vset.pattern.permute.xlu0 3
    %3062 = vperm.xlu0 %3061, %v2951
    %v3063 = vpop.permute.xlu0 %3062
    %3064 = vset.pattern.permute.xlu0 3
    %3065 = vperm.xlu0 %3064, %v2952
    %v3066 = vpop.permute.xlu0 %3065
    %3067 = vset.pattern.permute.xlu0 3
    %3068 = vperm.xlu0 %3067, %v2953
    %v3069 = vpop.permute.xlu0 %3068
    %3070 = vset.pattern.permute.xlu0 3
    %3071 = vperm.xlu0 %3070, %v2954
    %v3072 = vpop.permute.xlu0 %3071
    %3073 = vset.pattern.permute.xlu0 3
    %3074 = vperm.xlu0 %3073, %v2955
    %v3075 = vpop.permute.xlu0 %3074
    %3076 = vset.pattern.permute.xlu0 3
    %3077 = vperm.xlu0 %3076, %v2956
    %v3078 = vpop.permute.xlu0 %3077
    %3079 = vset.pattern.permute.xlu0 3
    %3080 = vperm.xlu0 %3079, %v2957
    %v3081 = vpop.permute.xlu0 %3080
    %3082 = vset.pattern.permute.xlu0 3
    %3083 = vperm.xlu0 %3082, %v2958
    %v3084 = vpop.permute.xlu0 %3083
    %3085 = vset.pattern.permute.xlu0 3
    %3086 = vperm.xlu0 %3085, %v2959
    %v3087 = vpop.permute.xlu0 %3086
    %3088 = vset.pattern.permute.xlu0 3
    %3089 = vperm.xlu0 %3088, %v2960
    %v3090 = vpop.permute.xlu0 %3089
    %3091 = vset.pattern.permute.xlu0 3
    %3092 = vperm.xlu0 %3091, %v2961
    %v3093 = vpop.permute.xlu0 %3092
    %3094 = vset.pattern.permute.xlu0 3
    %3095 = vperm.xlu0 %3094, %v2962
    %v3096 = vpop.permute.xlu0 %3095
    %3097 = vset.pattern.permute.xlu0 3
    %3098 = vperm.xlu0 %3097, %v2963
    %v3099 = vpop.permute.xlu0 %3098
    %3100 = vset.pattern.permute.xlu0 3
    %3101 = vperm.xlu0 %3100, %v2964
    %v3102 = vpop.permute.xlu0 %3101
    %3103 = vset.pattern.permute.xlu0 3
    %3104 = vperm.xlu0 %3103, %v2965
    %v3105 = vpop.permute.xlu0 %3104
    %3106 = vset.pattern.permute.xlu0 3
    %3107 = vperm.xlu0 %3106, %v2966
    %v3108 = vpop.permute.xlu0 %3107
    %3109 = vset.pattern.permute.xlu0 3
    %3110 = vperm.xlu0 %3109, %v2967
    %v3111 = vpop.permute.xlu0 %3110
    %vm3112 = vcmp.eq.s32.totalorder %v2970, %v84
    %vm3113 = vcmp.eq.s32.totalorder %v2970, %v85
    %vm3114 = vcmp.eq.s32.totalorder %v2970, %v86
    %vm3115 = vcmp.eq.s32.totalorder %v2970, %v87
    %vm3116 = vcmp.eq.s32.totalorder %v2973, %v84
    %vm3117 = vcmp.eq.s32.totalorder %v2973, %v85
    %vm3118 = vcmp.eq.s32.totalorder %v2973, %v86
    %vm3119 = vcmp.eq.s32.totalorder %v2973, %v87
    %vm3120 = vcmp.eq.s32.totalorder %v2976, %v84
    %vm3121 = vcmp.eq.s32.totalorder %v2976, %v85
    %vm3122 = vcmp.eq.s32.totalorder %v2976, %v86
    %vm3123 = vcmp.eq.s32.totalorder %v2976, %v87
    %vm3124 = vcmp.eq.s32.totalorder %v2979, %v84
    %vm3125 = vcmp.eq.s32.totalorder %v2979, %v85
    %vm3126 = vcmp.eq.s32.totalorder %v2979, %v86
    %vm3127 = vcmp.eq.s32.totalorder %v2979, %v87
    %vm3128 = vcmp.eq.s32.totalorder %v2982, %v84
    %vm3129 = vcmp.eq.s32.totalorder %v2982, %v85
    %vm3130 = vcmp.eq.s32.totalorder %v2982, %v86
    %vm3131 = vcmp.eq.s32.totalorder %v2982, %v87
    %vm3132 = vcmp.eq.s32.totalorder %v2985, %v84
    %vm3133 = vcmp.eq.s32.totalorder %v2985, %v85
    %vm3134 = vcmp.eq.s32.totalorder %v2985, %v86
    %vm3135 = vcmp.eq.s32.totalorder %v2985, %v87
    %vm3136 = vcmp.eq.s32.totalorder %v2988, %v84
    %vm3137 = vcmp.eq.s32.totalorder %v2988, %v85
    %vm3138 = vcmp.eq.s32.totalorder %v2988, %v86
    %vm3139 = vcmp.eq.s32.totalorder %v2988, %v87
    %vm3140 = vcmp.eq.s32.totalorder %v2991, %v84
    %vm3141 = vcmp.eq.s32.totalorder %v2991, %v85
    %vm3142 = vcmp.eq.s32.totalorder %v2991, %v86
    %vm3143 = vcmp.eq.s32.totalorder %v2991, %v87
    %vm3144 = vcmp.eq.s32.totalorder %v2994, %v84
    %vm3145 = vcmp.eq.s32.totalorder %v2994, %v85
    %vm3146 = vcmp.eq.s32.totalorder %v2994, %v86
    %vm3147 = vcmp.eq.s32.totalorder %v2994, %v87
    %vm3148 = vcmp.eq.s32.totalorder %v2997, %v84
    %vm3149 = vcmp.eq.s32.totalorder %v2997, %v85
    %vm3150 = vcmp.eq.s32.totalorder %v2997, %v86
    %vm3151 = vcmp.eq.s32.totalorder %v2997, %v87
    %vm3152 = vcmp.eq.s32.totalorder %v3000, %v84
    %vm3153 = vcmp.eq.s32.totalorder %v3000, %v85
    %vm3154 = vcmp.eq.s32.totalorder %v3000, %v86
    %vm3155 = vcmp.eq.s32.totalorder %v3000, %v87
    %vm3156 = vcmp.eq.s32.totalorder %v3003, %v84
    %vm3157 = vcmp.eq.s32.totalorder %v3003, %v85
    %vm3158 = vcmp.eq.s32.totalorder %v3003, %v86
    %vm3159 = vcmp.eq.s32.totalorder %v3003, %v87
    %vm3160 = vcmp.eq.s32.totalorder %v3006, %v84
    %vm3161 = vcmp.eq.s32.totalorder %v3006, %v85
    %vm3162 = vcmp.eq.s32.totalorder %v3006, %v86
    %vm3163 = vcmp.eq.s32.totalorder %v3006, %v87
    %vm3164 = vcmp.eq.s32.totalorder %v3009, %v84
    %vm3165 = vcmp.eq.s32.totalorder %v3009, %v85
    %vm3166 = vcmp.eq.s32.totalorder %v3009, %v86
    %vm3167 = vcmp.eq.s32.totalorder %v3009, %v87
    %vm3168 = vcmp.eq.s32.totalorder %v3012, %v84
    %vm3169 = vcmp.eq.s32.totalorder %v3012, %v85
    %vm3170 = vcmp.eq.s32.totalorder %v3012, %v86
    %vm3171 = vcmp.eq.s32.totalorder %v3012, %v87
    %vm3172 = vcmp.eq.s32.totalorder %v3015, %v84
    %vm3173 = vcmp.eq.s32.totalorder %v3015, %v85
    %vm3174 = vcmp.eq.s32.totalorder %v3015, %v86
    %vm3175 = vcmp.eq.s32.totalorder %v3015, %v87
    %vm3176 = vcmp.eq.s32.totalorder %v3018, %v84
    %vm3177 = vcmp.eq.s32.totalorder %v3018, %v85
    %vm3178 = vcmp.eq.s32.totalorder %v3018, %v86
    %vm3179 = vcmp.eq.s32.totalorder %v3018, %v87
    %vm3180 = vcmp.eq.s32.totalorder %v3021, %v84
    %vm3181 = vcmp.eq.s32.totalorder %v3021, %v85
    %vm3182 = vcmp.eq.s32.totalorder %v3021, %v86
    %vm3183 = vcmp.eq.s32.totalorder %v3021, %v87
    %vm3184 = vcmp.eq.s32.totalorder %v3024, %v84
    %vm3185 = vcmp.eq.s32.totalorder %v3024, %v85
    %vm3186 = vcmp.eq.s32.totalorder %v3024, %v86
    %vm3187 = vcmp.eq.s32.totalorder %v3024, %v87
    %vm3188 = vcmp.eq.s32.totalorder %v3027, %v84
    %vm3189 = vcmp.eq.s32.totalorder %v3027, %v85
    %vm3190 = vcmp.eq.s32.totalorder %v3027, %v86
    %vm3191 = vcmp.eq.s32.totalorder %v3027, %v87
    %vm3192 = vcmp.eq.s32.totalorder %v3030, %v84
    %vm3193 = vcmp.eq.s32.totalorder %v3030, %v85
    %vm3194 = vcmp.eq.s32.totalorder %v3030, %v86
    %vm3195 = vcmp.eq.s32.totalorder %v3030, %v87
    %vm3196 = vcmp.eq.s32.totalorder %v3033, %v84
    %vm3197 = vcmp.eq.s32.totalorder %v3033, %v85
    %vm3198 = vcmp.eq.s32.totalorder %v3033, %v86
    %vm3199 = vcmp.eq.s32.totalorder %v3033, %v87
    %vm3200 = vcmp.eq.s32.totalorder %v3036, %v84
    %vm3201 = vcmp.eq.s32.totalorder %v3036, %v85
    %vm3202 = vcmp.eq.s32.totalorder %v3036, %v86
    %vm3203 = vcmp.eq.s32.totalorder %v3036, %v87
    %vm3204 = vcmp.eq.s32.totalorder %v3039, %v84
    %vm3205 = vcmp.eq.s32.totalorder %v3039, %v85
    %vm3206 = vcmp.eq.s32.totalorder %v3039, %v86
    %vm3207 = vcmp.eq.s32.totalorder %v3039, %v87
    %vm3208 = vcmp.eq.s32.totalorder %v3042, %v84
    %vm3209 = vcmp.eq.s32.totalorder %v3042, %v85
    %vm3210 = vcmp.eq.s32.totalorder %v3042, %v86
    %vm3211 = vcmp.eq.s32.totalorder %v3042, %v87
    %vm3212 = vcmp.eq.s32.totalorder %v3045, %v84
    %vm3213 = vcmp.eq.s32.totalorder %v3045, %v85
    %vm3214 = vcmp.eq.s32.totalorder %v3045, %v86
    %vm3215 = vcmp.eq.s32.totalorder %v3045, %v87
    %vm3216 = vcmp.eq.s32.totalorder %v3048, %v84
    %vm3217 = vcmp.eq.s32.totalorder %v3048, %v85
    %vm3218 = vcmp.eq.s32.totalorder %v3048, %v86
    %vm3219 = vcmp.eq.s32.totalorder %v3048, %v87
    %vm3220 = vcmp.eq.s32.totalorder %v3051, %v84
    %vm3221 = vcmp.eq.s32.totalorder %v3051, %v85
    %vm3222 = vcmp.eq.s32.totalorder %v3051, %v86
    %vm3223 = vcmp.eq.s32.totalorder %v3051, %v87
    %vm3224 = vcmp.eq.s32.totalorder %v3054, %v84
    %vm3225 = vcmp.eq.s32.totalorder %v3054, %v85
    %vm3226 = vcmp.eq.s32.totalorder %v3054, %v86
    %vm3227 = vcmp.eq.s32.totalorder %v3054, %v87
    %vm3228 = vcmp.eq.s32.totalorder %v3057, %v84
    %vm3229 = vcmp.eq.s32.totalorder %v3057, %v85
    %vm3230 = vcmp.eq.s32.totalorder %v3057, %v86
    %vm3231 = vcmp.eq.s32.totalorder %v3057, %v87
    %vm3232 = vcmp.eq.s32.totalorder %v3060, %v84
    %vm3233 = vcmp.eq.s32.totalorder %v3060, %v85
    %vm3234 = vcmp.eq.s32.totalorder %v3060, %v86
    %vm3235 = vcmp.eq.s32.totalorder %v3060, %v87
    %vm3236 = vcmp.eq.s32.totalorder %v3063, %v84
    %vm3237 = vcmp.eq.s32.totalorder %v3063, %v85
    %vm3238 = vcmp.eq.s32.totalorder %v3063, %v86
    %vm3239 = vcmp.eq.s32.totalorder %v3063, %v87
    %vm3240 = vcmp.eq.s32.totalorder %v3066, %v84
    %vm3241 = vcmp.eq.s32.totalorder %v3066, %v85
    %vm3242 = vcmp.eq.s32.totalorder %v3066, %v86
    %vm3243 = vcmp.eq.s32.totalorder %v3066, %v87
    %vm3244 = vcmp.eq.s32.totalorder %v3069, %v84
    %vm3245 = vcmp.eq.s32.totalorder %v3069, %v85
    %vm3246 = vcmp.eq.s32.totalorder %v3069, %v86
    %vm3247 = vcmp.eq.s32.totalorder %v3069, %v87
    %vm3248 = vcmp.eq.s32.totalorder %v3072, %v84
    %vm3249 = vcmp.eq.s32.totalorder %v3072, %v85
    %vm3250 = vcmp.eq.s32.totalorder %v3072, %v86
    %vm3251 = vcmp.eq.s32.totalorder %v3072, %v87
    %vm3252 = vcmp.eq.s32.totalorder %v3075, %v84
    %vm3253 = vcmp.eq.s32.totalorder %v3075, %v85
    %vm3254 = vcmp.eq.s32.totalorder %v3075, %v86
    %vm3255 = vcmp.eq.s32.totalorder %v3075, %v87
    %vm3256 = vcmp.eq.s32.totalorder %v3078, %v84
    %vm3257 = vcmp.eq.s32.totalorder %v3078, %v85
    %vm3258 = vcmp.eq.s32.totalorder %v3078, %v86
    %vm3259 = vcmp.eq.s32.totalorder %v3078, %v87
    %vm3260 = vcmp.eq.s32.totalorder %v3081, %v84
    %vm3261 = vcmp.eq.s32.totalorder %v3081, %v85
    %vm3262 = vcmp.eq.s32.totalorder %v3081, %v86
    %vm3263 = vcmp.eq.s32.totalorder %v3081, %v87
    %vm3264 = vcmp.eq.s32.totalorder %v3084, %v84
    %vm3265 = vcmp.eq.s32.totalorder %v3084, %v85
    %vm3266 = vcmp.eq.s32.totalorder %v3084, %v86
    %vm3267 = vcmp.eq.s32.totalorder %v3084, %v87
    %vm3268 = vcmp.eq.s32.totalorder %v3087, %v84
    %vm3269 = vcmp.eq.s32.totalorder %v3087, %v85
    %vm3270 = vcmp.eq.s32.totalorder %v3087, %v86
    %vm3271 = vcmp.eq.s32.totalorder %v3087, %v87
    %vm3272 = vcmp.eq.s32.totalorder %v3090, %v84
    %vm3273 = vcmp.eq.s32.totalorder %v3090, %v85
    %vm3274 = vcmp.eq.s32.totalorder %v3090, %v86
    %vm3275 = vcmp.eq.s32.totalorder %v3090, %v87
    %vm3276 = vcmp.eq.s32.totalorder %v3093, %v84
    %vm3277 = vcmp.eq.s32.totalorder %v3093, %v85
    %vm3278 = vcmp.eq.s32.totalorder %v3093, %v86
    %vm3279 = vcmp.eq.s32.totalorder %v3093, %v87
    %vm3280 = vcmp.eq.s32.totalorder %v3096, %v84
    %vm3281 = vcmp.eq.s32.totalorder %v3096, %v85
    %vm3282 = vcmp.eq.s32.totalorder %v3096, %v86
    %vm3283 = vcmp.eq.s32.totalorder %v3096, %v87
    %vm3284 = vcmp.eq.s32.totalorder %v3099, %v84
    %vm3285 = vcmp.eq.s32.totalorder %v3099, %v85
    %vm3286 = vcmp.eq.s32.totalorder %v3099, %v86
    %vm3287 = vcmp.eq.s32.totalorder %v3099, %v87
    %vm3288 = vcmp.eq.s32.totalorder %v3102, %v84
    %vm3289 = vcmp.eq.s32.totalorder %v3102, %v85
    %vm3290 = vcmp.eq.s32.totalorder %v3102, %v86
    %vm3291 = vcmp.eq.s32.totalorder %v3102, %v87
    %vm3292 = vcmp.eq.s32.totalorder %v3105, %v84
    %vm3293 = vcmp.eq.s32.totalorder %v3105, %v85
    %vm3294 = vcmp.eq.s32.totalorder %v3105, %v86
    %vm3295 = vcmp.eq.s32.totalorder %v3105, %v87
    %vm3296 = vcmp.eq.s32.totalorder %v3108, %v84
    %vm3297 = vcmp.eq.s32.totalorder %v3108, %v85
    %vm3298 = vcmp.eq.s32.totalorder %v3108, %v86
    %vm3299 = vcmp.eq.s32.totalorder %v3108, %v87
    %vm3300 = vcmp.eq.s32.totalorder %v3111, %v84
    %vm3301 = vcmp.eq.s32.totalorder %v3111, %v85
    %vm3302 = vcmp.eq.s32.totalorder %v3111, %v86
    %vm3303 = vcmp.eq.s32.totalorder %v3111, %v87
    %v3304 = vsel %vm3112, 1, 0
    %v3305 = vsel %vm3113, 1, 0
    %v3306 = vsel %vm3114, 1, 0
    %v3307 = vsel %vm3115, 1, 0
    %v3308 = vsel %vm3116, 1, 0
    %v3309 = vsel %vm3117, 1, 0
    %v3310 = vsel %vm3118, 1, 0
    %v3311 = vsel %vm3119, 1, 0
    %v3312 = vsel %vm3120, 1, 0
    %v3313 = vsel %vm3121, 1, 0
    %v3314 = vsel %vm3122, 1, 0
    %v3315 = vsel %vm3123, 1, 0
    %v3316 = vsel %vm3124, 1, 0
    %v3317 = vsel %vm3125, 1, 0
    %v3318 = vsel %vm3126, 1, 0
    %v3319 = vsel %vm3127, 1, 0
    %v3320 = vsel %vm3128, 1, 0
    %v3321 = vsel %vm3129, 1, 0
    %v3322 = vsel %vm3130, 1, 0
    %v3323 = vsel %vm3131, 1, 0
    %v3324 = vsel %vm3132, 1, 0
    %v3325 = vsel %vm3133, 1, 0
    %v3326 = vsel %vm3134, 1, 0
    %v3327 = vsel %vm3135, 1, 0
    %v3328 = vsel %vm3136, 1, 0
    %v3329 = vsel %vm3137, 1, 0
    %v3330 = vsel %vm3138, 1, 0
    %v3331 = vsel %vm3139, 1, 0
    %v3332 = vsel %vm3140, 1, 0
    %v3333 = vsel %vm3141, 1, 0
    %v3334 = vsel %vm3142, 1, 0
    %v3335 = vsel %vm3143, 1, 0
    %v3336 = vsel %vm3144, 1, 0
    %v3337 = vsel %vm3145, 1, 0
    %v3338 = vsel %vm3146, 1, 0
    %v3339 = vsel %vm3147, 1, 0
    %v3340 = vsel %vm3148, 1, 0
    %v3341 = vsel %vm3149, 1, 0
    %v3342 = vsel %vm3150, 1, 0
    %v3343 = vsel %vm3151, 1, 0
    %v3344 = vsel %vm3152, 1, 0
    %v3345 = vsel %vm3153, 1, 0
    %v3346 = vsel %vm3154, 1, 0
    %v3347 = vsel %vm3155, 1, 0
    %v3348 = vsel %vm3156, 1, 0
    %v3349 = vsel %vm3157, 1, 0
    %v3350 = vsel %vm3158, 1, 0
    %v3351 = vsel %vm3159, 1, 0
    %v3352 = vsel %vm3160, 1, 0
    %v3353 = vsel %vm3161, 1, 0
    %v3354 = vsel %vm3162, 1, 0
    %v3355 = vsel %vm3163, 1, 0
    %v3356 = vsel %vm3164, 1, 0
    %v3357 = vsel %vm3165, 1, 0
    %v3358 = vsel %vm3166, 1, 0
    %v3359 = vsel %vm3167, 1, 0
    %v3360 = vsel %vm3168, 1, 0
    %v3361 = vsel %vm3169, 1, 0
    %v3362 = vsel %vm3170, 1, 0
    %v3363 = vsel %vm3171, 1, 0
    %v3364 = vsel %vm3172, 1, 0
    %v3365 = vsel %vm3173, 1, 0
    %v3366 = vsel %vm3174, 1, 0
    %v3367 = vsel %vm3175, 1, 0
    %v3368 = vsel %vm3176, 1, 0
    %v3369 = vsel %vm3177, 1, 0
    %v3370 = vsel %vm3178, 1, 0
    %v3371 = vsel %vm3179, 1, 0
    %v3372 = vsel %vm3180, 1, 0
    %v3373 = vsel %vm3181, 1, 0
    %v3374 = vsel %vm3182, 1, 0
    %v3375 = vsel %vm3183, 1, 0
    %v3376 = vsel %vm3184, 1, 0
    %v3377 = vsel %vm3185, 1, 0
    %v3378 = vsel %vm3186, 1, 0
    %v3379 = vsel %vm3187, 1, 0
    %v3380 = vsel %vm3188, 1, 0
    %v3381 = vsel %vm3189, 1, 0
    %v3382 = vsel %vm3190, 1, 0
    %v3383 = vsel %vm3191, 1, 0
    %v3384 = vsel %vm3192, 1, 0
    %v3385 = vsel %vm3193, 1, 0
    %v3386 = vsel %vm3194, 1, 0
    %v3387 = vsel %vm3195, 1, 0
    %v3388 = vsel %vm3196, 1, 0
    %v3389 = vsel %vm3197, 1, 0
    %v3390 = vsel %vm3198, 1, 0
    %v3391 = vsel %vm3199, 1, 0
    %v3392 = vsel %vm3200, 1, 0
    %v3393 = vsel %vm3201, 1, 0
    %v3394 = vsel %vm3202, 1, 0
    %v3395 = vsel %vm3203, 1, 0
    %v3396 = vsel %vm3204, 1, 0
    %v3397 = vsel %vm3205, 1, 0
    %v3398 = vsel %vm3206, 1, 0
    %v3399 = vsel %vm3207, 1, 0
    %v3400 = vsel %vm3208, 1, 0
    %v3401 = vsel %vm3209, 1, 0
    %v3402 = vsel %vm3210, 1, 0
    %v3403 = vsel %vm3211, 1, 0
    %v3404 = vsel %vm3212, 1, 0
    %v3405 = vsel %vm3213, 1, 0
    %v3406 = vsel %vm3214, 1, 0
    %v3407 = vsel %vm3215, 1, 0
    %v3408 = vsel %vm3216, 1, 0
    %v3409 = vsel %vm3217, 1, 0
    %v3410 = vsel %vm3218, 1, 0
    %v3411 = vsel %vm3219, 1, 0
    %v3412 = vsel %vm3220, 1, 0
    %v3413 = vsel %vm3221, 1, 0
    %v3414 = vsel %vm3222, 1, 0
    %v3415 = vsel %vm3223, 1, 0
    %v3416 = vsel %vm3224, 1, 0
    %v3417 = vsel %vm3225, 1, 0
    %v3418 = vsel %vm3226, 1, 0
    %v3419 = vsel %vm3227, 1, 0
    %v3420 = vsel %vm3228, 1, 0
    %v3421 = vsel %vm3229, 1, 0
    %v3422 = vsel %vm3230, 1, 0
    %v3423 = vsel %vm3231, 1, 0
    %v3424 = vsel %vm3232, 1, 0
    %v3425 = vsel %vm3233, 1, 0
    %v3426 = vsel %vm3234, 1, 0
    %v3427 = vsel %vm3235, 1, 0
    %v3428 = vsel %vm3236, 1, 0
    %v3429 = vsel %vm3237, 1, 0
    %v3430 = vsel %vm3238, 1, 0
    %v3431 = vsel %vm3239, 1, 0
    %v3432 = vsel %vm3240, 1, 0
    %v3433 = vsel %vm3241, 1, 0
    %v3434 = vsel %vm3242, 1, 0
    %v3435 = vsel %vm3243, 1, 0
    %v3436 = vsel %vm3244, 1, 0
    %v3437 = vsel %vm3245, 1, 0
    %v3438 = vsel %vm3246, 1, 0
    %v3439 = vsel %vm3247, 1, 0
    %v3440 = vsel %vm3248, 1, 0
    %v3441 = vsel %vm3249, 1, 0
    %v3442 = vsel %vm3250, 1, 0
    %v3443 = vsel %vm3251, 1, 0
    %v3444 = vsel %vm3252, 1, 0
    %v3445 = vsel %vm3253, 1, 0
    %v3446 = vsel %vm3254, 1, 0
    %v3447 = vsel %vm3255, 1, 0
    %v3448 = vsel %vm3256, 1, 0
    %v3449 = vsel %vm3257, 1, 0
    %v3450 = vsel %vm3258, 1, 0
    %v3451 = vsel %vm3259, 1, 0
    %v3452 = vsel %vm3260, 1, 0
    %v3453 = vsel %vm3261, 1, 0
    %v3454 = vsel %vm3262, 1, 0
    %v3455 = vsel %vm3263, 1, 0
    %v3456 = vsel %vm3264, 1, 0
    %v3457 = vsel %vm3265, 1, 0
    %v3458 = vsel %vm3266, 1, 0
    %v3459 = vsel %vm3267, 1, 0
    %v3460 = vsel %vm3268, 1, 0
    %v3461 = vsel %vm3269, 1, 0
    %v3462 = vsel %vm3270, 1, 0
    %v3463 = vsel %vm3271, 1, 0
    %v3464 = vsel %vm3272, 1, 0
    %v3465 = vsel %vm3273, 1, 0
    %v3466 = vsel %vm3274, 1, 0
    %v3467 = vsel %vm3275, 1, 0
    %v3468 = vsel %vm3276, 1, 0
    %v3469 = vsel %vm3277, 1, 0
    %v3470 = vsel %vm3278, 1, 0
    %v3471 = vsel %vm3279, 1, 0
    %v3472 = vsel %vm3280, 1, 0
    %v3473 = vsel %vm3281, 1, 0
    %v3474 = vsel %vm3282, 1, 0
    %v3475 = vsel %vm3283, 1, 0
    %v3476 = vsel %vm3284, 1, 0
    %v3477 = vsel %vm3285, 1, 0
    %v3478 = vsel %vm3286, 1, 0
    %v3479 = vsel %vm3287, 1, 0
    %v3480 = vsel %vm3288, 1, 0
    %v3481 = vsel %vm3289, 1, 0
    %v3482 = vsel %vm3290, 1, 0
    %v3483 = vsel %vm3291, 1, 0
    %v3484 = vsel %vm3292, 1, 0
    %v3485 = vsel %vm3293, 1, 0
    %v3486 = vsel %vm3294, 1, 0
    %v3487 = vsel %vm3295, 1, 0
    %v3488 = vsel %vm3296, 1, 0
    %v3489 = vsel %vm3297, 1, 0
    %v3490 = vsel %vm3298, 1, 0
    %v3491 = vsel %vm3299, 1, 0
    %v3492 = vsel %vm3300, 1, 0
    %v3493 = vsel %vm3301, 1, 0
    %v3494 = vsel %vm3302, 1, 0
    %v3495 = vsel %vm3303, 1, 0
    %v3496 = vcvt.s32.f32 %v3304
    %v3497 = vcvt.s32.f32 %v3305
    %v3498 = vcvt.s32.f32 %v3306
    %v3499 = vcvt.s32.f32 %v3307
    %v3500 = vcvt.s32.f32 %v3308
    %v3501 = vcvt.s32.f32 %v3309
    %v3502 = vcvt.s32.f32 %v3310
    %v3503 = vcvt.s32.f32 %v3311
    %v3504 = vcvt.s32.f32 %v3312
    %v3505 = vcvt.s32.f32 %v3313
    %v3506 = vcvt.s32.f32 %v3314
    %v3507 = vcvt.s32.f32 %v3315
    %v3508 = vcvt.s32.f32 %v3316
    %v3509 = vcvt.s32.f32 %v3317
    %v3510 = vcvt.s32.f32 %v3318
    %v3511 = vcvt.s32.f32 %v3319
    %v3512 = vcvt.s32.f32 %v3320
    %v3513 = vcvt.s32.f32 %v3321
    %v3514 = vcvt.s32.f32 %v3322
    %v3515 = vcvt.s32.f32 %v3323
    %v3516 = vcvt.s32.f32 %v3324
    %v3517 = vcvt.s32.f32 %v3325
    %v3518 = vcvt.s32.f32 %v3326
    %v3519 = vcvt.s32.f32 %v3327
    %v3520 = vcvt.s32.f32 %v3328
    %v3521 = vcvt.s32.f32 %v3329
    %v3522 = vcvt.s32.f32 %v3330
    %v3523 = vcvt.s32.f32 %v3331
    %v3524 = vcvt.s32.f32 %v3332
    %v3525 = vcvt.s32.f32 %v3333
    %v3526 = vcvt.s32.f32 %v3334
    %v3527 = vcvt.s32.f32 %v3335
    %v3528 = vcvt.s32.f32 %v3336
    %v3529 = vcvt.s32.f32 %v3337
    %v3530 = vcvt.s32.f32 %v3338
    %v3531 = vcvt.s32.f32 %v3339
    %v3532 = vcvt.s32.f32 %v3340
    %v3533 = vcvt.s32.f32 %v3341
    %v3534 = vcvt.s32.f32 %v3342
    %v3535 = vcvt.s32.f32 %v3343
    %v3536 = vcvt.s32.f32 %v3344
    %v3537 = vcvt.s32.f32 %v3345
    %v3538 = vcvt.s32.f32 %v3346
    %v3539 = vcvt.s32.f32 %v3347
    %v3540 = vcvt.s32.f32 %v3348
    %v3541 = vcvt.s32.f32 %v3349
    %v3542 = vcvt.s32.f32 %v3350
    %v3543 = vcvt.s32.f32 %v3351
    %v3544 = vcvt.s32.f32 %v3352
    %v3545 = vcvt.s32.f32 %v3353
    %v3546 = vcvt.s32.f32 %v3354
    %v3547 = vcvt.s32.f32 %v3355
    %v3548 = vcvt.s32.f32 %v3356
    %v3549 = vcvt.s32.f32 %v3357
    %v3550 = vcvt.s32.f32 %v3358
    %v3551 = vcvt.s32.f32 %v3359
    %v3552 = vcvt.s32.f32 %v3360
    %v3553 = vcvt.s32.f32 %v3361
    %v3554 = vcvt.s32.f32 %v3362
    %v3555 = vcvt.s32.f32 %v3363
    %v3556 = vcvt.s32.f32 %v3364
    %v3557 = vcvt.s32.f32 %v3365
    %v3558 = vcvt.s32.f32 %v3366
    %v3559 = vcvt.s32.f32 %v3367
    %v3560 = vcvt.s32.f32 %v3368
    %v3561 = vcvt.s32.f32 %v3369
    %v3562 = vcvt.s32.f32 %v3370
    %v3563 = vcvt.s32.f32 %v3371
    %v3564 = vcvt.s32.f32 %v3372
    %v3565 = vcvt.s32.f32 %v3373
    %v3566 = vcvt.s32.f32 %v3374
    %v3567 = vcvt.s32.f32 %v3375
    %v3568 = vcvt.s32.f32 %v3376
    %v3569 = vcvt.s32.f32 %v3377
    %v3570 = vcvt.s32.f32 %v3378
    %v3571 = vcvt.s32.f32 %v3379
    %v3572 = vcvt.s32.f32 %v3380
    %v3573 = vcvt.s32.f32 %v3381
    %v3574 = vcvt.s32.f32 %v3382
    %v3575 = vcvt.s32.f32 %v3383
    %v3576 = vcvt.s32.f32 %v3384
    %v3577 = vcvt.s32.f32 %v3385
    %v3578 = vcvt.s32.f32 %v3386
    %v3579 = vcvt.s32.f32 %v3387
    %v3580 = vcvt.s32.f32 %v3388
    %v3581 = vcvt.s32.f32 %v3389
    %v3582 = vcvt.s32.f32 %v3390
    %v3583 = vcvt.s32.f32 %v3391
    %v3584 = vcvt.s32.f32 %v3392
    %v3585 = vcvt.s32.f32 %v3393
    %v3586 = vcvt.s32.f32 %v3394
    %v3587 = vcvt.s32.f32 %v3395
    %v3588 = vcvt.s32.f32 %v3396
    %v3589 = vcvt.s32.f32 %v3397
    %v3590 = vcvt.s32.f32 %v3398
    %v3591 = vcvt.s32.f32 %v3399
    %v3592 = vcvt.s32.f32 %v3400
    %v3593 = vcvt.s32.f32 %v3401
    %v3594 = vcvt.s32.f32 %v3402
    %v3595 = vcvt.s32.f32 %v3403
    %v3596 = vcvt.s32.f32 %v3404
    %v3597 = vcvt.s32.f32 %v3405
    %v3598 = vcvt.s32.f32 %v3406
    %v3599 = vcvt.s32.f32 %v3407
    %v3600 = vcvt.s32.f32 %v3408
    %v3601 = vcvt.s32.f32 %v3409
    %v3602 = vcvt.s32.f32 %v3410
    %v3603 = vcvt.s32.f32 %v3411
    %v3604 = vcvt.s32.f32 %v3412
    %v3605 = vcvt.s32.f32 %v3413
    %v3606 = vcvt.s32.f32 %v3414
    %v3607 = vcvt.s32.f32 %v3415
    %v3608 = vcvt.s32.f32 %v3416
    %v3609 = vcvt.s32.f32 %v3417
    %v3610 = vcvt.s32.f32 %v3418
    %v3611 = vcvt.s32.f32 %v3419
    %v3612 = vcvt.s32.f32 %v3420
    %v3613 = vcvt.s32.f32 %v3421
    %v3614 = vcvt.s32.f32 %v3422
    %v3615 = vcvt.s32.f32 %v3423
    %v3616 = vcvt.s32.f32 %v3424
    %v3617 = vcvt.s32.f32 %v3425
    %v3618 = vcvt.s32.f32 %v3426
    %v3619 = vcvt.s32.f32 %v3427
    %v3620 = vcvt.s32.f32 %v3428
    %v3621 = vcvt.s32.f32 %v3429
    %v3622 = vcvt.s32.f32 %v3430
    %v3623 = vcvt.s32.f32 %v3431
    %v3624 = vcvt.s32.f32 %v3432
    %v3625 = vcvt.s32.f32 %v3433
    %v3626 = vcvt.s32.f32 %v3434
    %v3627 = vcvt.s32.f32 %v3435
    %v3628 = vcvt.s32.f32 %v3436
    %v3629 = vcvt.s32.f32 %v3437
    %v3630 = vcvt.s32.f32 %v3438
    %v3631 = vcvt.s32.f32 %v3439
    %v3632 = vcvt.s32.f32 %v3440
    %v3633 = vcvt.s32.f32 %v3441
    %v3634 = vcvt.s32.f32 %v3442
    %v3635 = vcvt.s32.f32 %v3443
    %v3636 = vcvt.s32.f32 %v3444
    %v3637 = vcvt.s32.f32 %v3445
    %v3638 = vcvt.s32.f32 %v3446
    %v3639 = vcvt.s32.f32 %v3447
    %v3640 = vcvt.s32.f32 %v3448
    %v3641 = vcvt.s32.f32 %v3449
    %v3642 = vcvt.s32.f32 %v3450
    %v3643 = vcvt.s32.f32 %v3451
    %v3644 = vcvt.s32.f32 %v3452
    %v3645 = vcvt.s32.f32 %v3453
    %v3646 = vcvt.s32.f32 %v3454
    %v3647 = vcvt.s32.f32 %v3455
    %v3648 = vcvt.s32.f32 %v3456
    %v3649 = vcvt.s32.f32 %v3457
    %v3650 = vcvt.s32.f32 %v3458
    %v3651 = vcvt.s32.f32 %v3459
    %v3652 = vcvt.s32.f32 %v3460
    %v3653 = vcvt.s32.f32 %v3461
    %v3654 = vcvt.s32.f32 %v3462
    %v3655 = vcvt.s32.f32 %v3463
    %v3656 = vcvt.s32.f32 %v3464
    %v3657 = vcvt.s32.f32 %v3465
    %v3658 = vcvt.s32.f32 %v3466
    %v3659 = vcvt.s32.f32 %v3467
    %v3660 = vcvt.s32.f32 %v3468
    %v3661 = vcvt.s32.f32 %v3469
    %v3662 = vcvt.s32.f32 %v3470
    %v3663 = vcvt.s32.f32 %v3471
    %v3664 = vcvt.s32.f32 %v3472
    %v3665 = vcvt.s32.f32 %v3473
    %v3666 = vcvt.s32.f32 %v3474
    %v3667 = vcvt.s32.f32 %v3475
    %v3668 = vcvt.s32.f32 %v3476
    %v3669 = vcvt.s32.f32 %v3477
    %v3670 = vcvt.s32.f32 %v3478
    %v3671 = vcvt.s32.f32 %v3479
    %v3672 = vcvt.s32.f32 %v3480
    %v3673 = vcvt.s32.f32 %v3481
    %v3674 = vcvt.s32.f32 %v3482
    %v3675 = vcvt.s32.f32 %v3483
    %v3676 = vcvt.s32.f32 %v3484
    %v3677 = vcvt.s32.f32 %v3485
    %v3678 = vcvt.s32.f32 %v3486
    %v3679 = vcvt.s32.f32 %v3487
    %v3680 = vcvt.s32.f32 %v3488
    %v3681 = vcvt.s32.f32 %v3489
    %v3682 = vcvt.s32.f32 %v3490
    %v3683 = vcvt.s32.f32 %v3491
    %v3684 = vcvt.s32.f32 %v3492
    %v3685 = vcvt.s32.f32 %v3493
    %v3686 = vcvt.s32.f32 %v3494
    %v3687 = vcvt.s32.f32 %v3495
    %v3688 = vadd.f32 %v2728, %v3496
    %v3689 = vadd.f32 %v2729, %v3497
    %v3690 = vadd.f32 %v2730, %v3498
    %v3691 = vadd.f32 %v2731, %v3499
    %v3692 = vadd.f32 %v2732, %v3500
    %v3693 = vadd.f32 %v2733, %v3501
    %v3694 = vadd.f32 %v2734, %v3502
    %v3695 = vadd.f32 %v2735, %v3503
    %v3696 = vadd.f32 %v2736, %v3504
    %v3697 = vadd.f32 %v2737, %v3505
    %v3698 = vadd.f32 %v2738, %v3506
    %v3699 = vadd.f32 %v2739, %v3507
    %v3700 = vadd.f32 %v2740, %v3508
    %v3701 = vadd.f32 %v2741, %v3509
    %v3702 = vadd.f32 %v2742, %v3510
    %v3703 = vadd.f32 %v2743, %v3511
    %v3704 = vadd.f32 %v2744, %v3512
    %v3705 = vadd.f32 %v2745, %v3513
    %v3706 = vadd.f32 %v2746, %v3514
    %v3707 = vadd.f32 %v2747, %v3515
    %v3708 = vadd.f32 %v2748, %v3516
    %v3709 = vadd.f32 %v2749, %v3517
    %v3710 = vadd.f32 %v2750, %v3518
    %v3711 = vadd.f32 %v2751, %v3519
    %v3712 = vadd.f32 %v2752, %v3520
    %v3713 = vadd.f32 %v2753, %v3521
    %v3714 = vadd.f32 %v2754, %v3522
    %v3715 = vadd.f32 %v2755, %v3523
    %v3716 = vadd.f32 %v2756, %v3524
    %v3717 = vadd.f32 %v2757, %v3525
    %v3718 = vadd.f32 %v2758, %v3526
    %v3719 = vadd.f32 %v2759, %v3527
    %v3720 = vadd.f32 %v2760, %v3528
    %v3721 = vadd.f32 %v2761, %v3529
    %v3722 = vadd.f32 %v2762, %v3530
    %v3723 = vadd.f32 %v2763, %v3531
    %v3724 = vadd.f32 %v2764, %v3532
    %v3725 = vadd.f32 %v2765, %v3533
    %v3726 = vadd.f32 %v2766, %v3534
    %v3727 = vadd.f32 %v2767, %v3535
    %v3728 = vadd.f32 %v2768, %v3536
    %v3729 = vadd.f32 %v2769, %v3537
    %v3730 = vadd.f32 %v2770, %v3538
    %v3731 = vadd.f32 %v2771, %v3539
    %v3732 = vadd.f32 %v2772, %v3540
    %v3733 = vadd.f32 %v2773, %v3541
    %v3734 = vadd.f32 %v2774, %v3542
    %v3735 = vadd.f32 %v2775, %v3543
    %v3736 = vadd.f32 %v2776, %v3544
    %v3737 = vadd.f32 %v2777, %v3545
    %v3738 = vadd.f32 %v2778, %v3546
    %v3739 = vadd.f32 %v2779, %v3547
    %v3740 = vadd.f32 %v2780, %v3548
    %v3741 = vadd.f32 %v2781, %v3549
    %v3742 = vadd.f32 %v2782, %v3550
    %v3743 = vadd.f32 %v2783, %v3551
    %v3744 = vadd.f32 %v2784, %v3552
    %v3745 = vadd.f32 %v2785, %v3553
    %v3746 = vadd.f32 %v2786, %v3554
    %v3747 = vadd.f32 %v2787, %v3555
    %v3748 = vadd.f32 %v2788, %v3556
    %v3749 = vadd.f32 %v2789, %v3557
    %v3750 = vadd.f32 %v2790, %v3558
    %v3751 = vadd.f32 %v2791, %v3559
    %v3752 = vadd.f32 %v2792, %v3560
    %v3753 = vadd.f32 %v2793, %v3561
    %v3754 = vadd.f32 %v2794, %v3562
    %v3755 = vadd.f32 %v2795, %v3563
    %v3756 = vadd.f32 %v2796, %v3564
    %v3757 = vadd.f32 %v2797, %v3565
    %v3758 = vadd.f32 %v2798, %v3566
    %v3759 = vadd.f32 %v2799, %v3567
    %v3760 = vadd.f32 %v2800, %v3568
    %v3761 = vadd.f32 %v2801, %v3569
    %v3762 = vadd.f32 %v2802, %v3570
    %v3763 = vadd.f32 %v2803, %v3571
    %v3764 = vadd.f32 %v2804, %v3572
    %v3765 = vadd.f32 %v2805, %v3573
    %v3766 = vadd.f32 %v2806, %v3574
    %v3767 = vadd.f32 %v2807, %v3575
    %v3768 = vadd.f32 %v2808, %v3576
    %v3769 = vadd.f32 %v2809, %v3577
    %v3770 = vadd.f32 %v2810, %v3578
    %v3771 = vadd.f32 %v2811, %v3579
    %v3772 = vadd.f32 %v2812, %v3580
    %v3773 = vadd.f32 %v2813, %v3581
    %v3774 = vadd.f32 %v2814, %v3582
    %v3775 = vadd.f32 %v2815, %v3583
    %v3776 = vadd.f32 %v2816, %v3584
    %v3777 = vadd.f32 %v2817, %v3585
    %v3778 = vadd.f32 %v2818, %v3586
    %v3779 = vadd.f32 %v2819, %v3587
    %v3780 = vadd.f32 %v2820, %v3588
    %v3781 = vadd.f32 %v2821, %v3589
    %v3782 = vadd.f32 %v2822, %v3590
    %v3783 = vadd.f32 %v2823, %v3591
    %v3784 = vadd.f32 %v2824, %v3592
    %v3785 = vadd.f32 %v2825, %v3593
    %v3786 = vadd.f32 %v2826, %v3594
    %v3787 = vadd.f32 %v2827, %v3595
    %v3788 = vadd.f32 %v2828, %v3596
    %v3789 = vadd.f32 %v2829, %v3597
    %v3790 = vadd.f32 %v2830, %v3598
    %v3791 = vadd.f32 %v2831, %v3599
    %v3792 = vadd.f32 %v2832, %v3600
    %v3793 = vadd.f32 %v2833, %v3601
    %v3794 = vadd.f32 %v2834, %v3602
    %v3795 = vadd.f32 %v2835, %v3603
    %v3796 = vadd.f32 %v2836, %v3604
    %v3797 = vadd.f32 %v2837, %v3605
    %v3798 = vadd.f32 %v2838, %v3606
    %v3799 = vadd.f32 %v2839, %v3607
    %v3800 = vadd.f32 %v2840, %v3608
    %v3801 = vadd.f32 %v2841, %v3609
    %v3802 = vadd.f32 %v2842, %v3610
    %v3803 = vadd.f32 %v2843, %v3611
    %v3804 = vadd.f32 %v2844, %v3612
    %v3805 = vadd.f32 %v2845, %v3613
    %v3806 = vadd.f32 %v2846, %v3614
    %v3807 = vadd.f32 %v2847, %v3615
    %v3808 = vadd.f32 %v2848, %v3616
    %v3809 = vadd.f32 %v2849, %v3617
    %v3810 = vadd.f32 %v2850, %v3618
    %v3811 = vadd.f32 %v2851, %v3619
    %v3812 = vadd.f32 %v2852, %v3620
    %v3813 = vadd.f32 %v2853, %v3621
    %v3814 = vadd.f32 %v2854, %v3622
    %v3815 = vadd.f32 %v2855, %v3623
    %v3816 = vadd.f32 %v2856, %v3624
    %v3817 = vadd.f32 %v2857, %v3625
    %v3818 = vadd.f32 %v2858, %v3626
    %v3819 = vadd.f32 %v2859, %v3627
    %v3820 = vadd.f32 %v2860, %v3628
    %v3821 = vadd.f32 %v2861, %v3629
    %v3822 = vadd.f32 %v2862, %v3630
    %v3823 = vadd.f32 %v2863, %v3631
    %v3824 = vadd.f32 %v2864, %v3632
    %v3825 = vadd.f32 %v2865, %v3633
    %v3826 = vadd.f32 %v2866, %v3634
    %v3827 = vadd.f32 %v2867, %v3635
    %v3828 = vadd.f32 %v2868, %v3636
    %v3829 = vadd.f32 %v2869, %v3637
    %v3830 = vadd.f32 %v2870, %v3638
    %v3831 = vadd.f32 %v2871, %v3639
    %v3832 = vadd.f32 %v2872, %v3640
    %v3833 = vadd.f32 %v2873, %v3641
    %v3834 = vadd.f32 %v2874, %v3642
    %v3835 = vadd.f32 %v2875, %v3643
    %v3836 = vadd.f32 %v2876, %v3644
    %v3837 = vadd.f32 %v2877, %v3645
    %v3838 = vadd.f32 %v2878, %v3646
    %v3839 = vadd.f32 %v2879, %v3647
    %v3840 = vadd.f32 %v2880, %v3648
    %v3841 = vadd.f32 %v2881, %v3649
    %v3842 = vadd.f32 %v2882, %v3650
    %v3843 = vadd.f32 %v2883, %v3651
    %v3844 = vadd.f32 %v2884, %v3652
    %v3845 = vadd.f32 %v2885, %v3653
    %v3846 = vadd.f32 %v2886, %v3654
    %v3847 = vadd.f32 %v2887, %v3655
    %v3848 = vadd.f32 %v2888, %v3656
    %v3849 = vadd.f32 %v2889, %v3657
    %v3850 = vadd.f32 %v2890, %v3658
    %v3851 = vadd.f32 %v2891, %v3659
    %v3852 = vadd.f32 %v2892, %v3660
    %v3853 = vadd.f32 %v2893, %v3661
    %v3854 = vadd.f32 %v2894, %v3662
    %v3855 = vadd.f32 %v2895, %v3663
    %v3856 = vadd.f32 %v2896, %v3664
    %v3857 = vadd.f32 %v2897, %v3665
    %v3858 = vadd.f32 %v2898, %v3666
    %v3859 = vadd.f32 %v2899, %v3667
    %v3860 = vadd.f32 %v2900, %v3668
    %v3861 = vadd.f32 %v2901, %v3669
    %v3862 = vadd.f32 %v2902, %v3670
    %v3863 = vadd.f32 %v2903, %v3671
    %v3864 = vadd.f32 %v2904, %v3672
    %v3865 = vadd.f32 %v2905, %v3673
    %v3866 = vadd.f32 %v2906, %v3674
    %v3867 = vadd.f32 %v2907, %v3675
    %v3868 = vadd.f32 %v2908, %v3676
    %v3869 = vadd.f32 %v2909, %v3677
    %v3870 = vadd.f32 %v2910, %v3678
    %v3871 = vadd.f32 %v2911, %v3679
    %v3872 = vadd.f32 %v2912, %v3680
    %v3873 = vadd.f32 %v2913, %v3681
    %v3874 = vadd.f32 %v2914, %v3682
    %v3875 = vadd.f32 %v2915, %v3683
    %v3876 = vadd.f32 %v2916, %v3684
    %v3877 = vadd.f32 %v2917, %v3685
    %v3878 = vadd.f32 %v2918, %v3686
    %v3879 = vadd.f32 %v2919, %v3687
    %v3880 = vadd.s32 %v35, 256
    %v3881 = vadd.s32 %v36, 256
    %v3882 = vadd.s32 %v37, 256
    %v3883 = vadd.s32 %v38, 256
    %v3884 = vadd.s32 %v39, 256
    %v3885 = vadd.s32 %v40, 256
    %v3886 = vadd.s32 %v41, 256
    %v3887 = vadd.s32 %v42, 256
    %v3888 = vadd.s32 %v43, 256
    %v3889 = vadd.s32 %v44, 256
    %v3890 = vadd.s32 %v45, 256
    %v3891 = vadd.s32 %v46, 256
    %v3892 = vadd.s32 %v47, 256
    %v3893 = vadd.s32 %v48, 256
    %v3894 = vadd.s32 %v49, 256
    %v3895 = vadd.s32 %v50, 256
    %v3896 = vadd.s32 %v51, 256
    %v3897 = vadd.s32 %v52, 256
    %v3898 = vadd.s32 %v53, 256
    %v3899 = vadd.s32 %v54, 256
    %v3900 = vadd.s32 %v55, 256
    %v3901 = vadd.s32 %v56, 256
    %v3902 = vadd.s32 %v57, 256
    %v3903 = vadd.s32 %v58, 256
    %v3904 = vadd.s32 %v59, 256
    %v3905 = vadd.s32 %v60, 256
    %v3906 = vadd.s32 %v61, 256
    %v3907 = vadd.s32 %v62, 256
    %v3908 = vadd.s32 %v63, 256
    %v3909 = vadd.s32 %v64, 256
    %v3910 = vadd.s32 %v65, 256
    %v3911 = vadd.s32 %v66, 256
    %v3912 = vadd.s32 %v67, 256
    %v3913 = vadd.s32 %v68, 256
    %v3914 = vadd.s32 %v69, 256
    %v3915 = vadd.s32 %v70, 256
    %v3916 = vadd.s32 %v71, 256
    %v3917 = vadd.s32 %v72, 256
    %v3918 = vadd.s32 %v73, 256
    %v3919 = vadd.s32 %v74, 256
    %v3920 = vadd.s32 %v75, 256
    %v3921 = vadd.s32 %v76, 256
    %v3922 = vadd.s32 %v77, 256
    %v3923 = vadd.s32 %v78, 256
    %v3924 = vadd.s32 %v79, 256
    %v3925 = vadd.s32 %v80, 256
    %v3926 = vadd.s32 %v81, 256
    %v3927 = vadd.s32 %v82, 256
    %3928 = vset.pattern.permute.xlu0 4
    %3929 = vperm.xlu0 %3928, %v3880
    %v3930 = vpop.permute.xlu0 %3929
    %3931 = vset.pattern.permute.xlu0 4
    %3932 = vperm.xlu0 %3931, %v3881
    %v3933 = vpop.permute.xlu0 %3932
    %3934 = vset.pattern.permute.xlu0 4
    %3935 = vperm.xlu0 %3934, %v3882
    %v3936 = vpop.permute.xlu0 %3935
    %3937 = vset.pattern.permute.xlu0 4
    %3938 = vperm.xlu0 %3937, %v3883
    %v3939 = vpop.permute.xlu0 %3938
    %3940 = vset.pattern.permute.xlu0 4
    %3941 = vperm.xlu0 %3940, %v3884
    %v3942 = vpop.permute.xlu0 %3941
    %3943 = vset.pattern.permute.xlu0 4
    %3944 = vperm.xlu0 %3943, %v3885
    %v3945 = vpop.permute.xlu0 %3944
    %3946 = vset.pattern.permute.xlu0 4
    %3947 = vperm.xlu0 %3946, %v3886
    %v3948 = vpop.permute.xlu0 %3947
    %3949 = vset.pattern.permute.xlu0 4
    %3950 = vperm.xlu0 %3949, %v3887
    %v3951 = vpop.permute.xlu0 %3950
    %3952 = vset.pattern.permute.xlu0 4
    %3953 = vperm.xlu0 %3952, %v3888
    %v3954 = vpop.permute.xlu0 %3953
    %3955 = vset.pattern.permute.xlu0 4
    %3956 = vperm.xlu0 %3955, %v3889
    %v3957 = vpop.permute.xlu0 %3956
    %3958 = vset.pattern.permute.xlu0 4
    %3959 = vperm.xlu0 %3958, %v3890
    %v3960 = vpop.permute.xlu0 %3959
    %3961 = vset.pattern.permute.xlu0 4
    %3962 = vperm.xlu0 %3961, %v3891
    %v3963 = vpop.permute.xlu0 %3962
    %3964 = vset.pattern.permute.xlu0 4
    %3965 = vperm.xlu0 %3964, %v3892
    %v3966 = vpop.permute.xlu0 %3965
    %3967 = vset.pattern.permute.xlu0 4
    %3968 = vperm.xlu0 %3967, %v3893
    %v3969 = vpop.permute.xlu0 %3968
    %3970 = vset.pattern.permute.xlu0 4
    %3971 = vperm.xlu0 %3970, %v3894
    %v3972 = vpop.permute.xlu0 %3971
    %3973 = vset.pattern.permute.xlu0 4
    %3974 = vperm.xlu0 %3973, %v3895
    %v3975 = vpop.permute.xlu0 %3974
    %3976 = vset.pattern.permute.xlu0 4
    %3977 = vperm.xlu0 %3976, %v3896
    %v3978 = vpop.permute.xlu0 %3977
    %3979 = vset.pattern.permute.xlu0 4
    %3980 = vperm.xlu0 %3979, %v3897
    %v3981 = vpop.permute.xlu0 %3980
    %3982 = vset.pattern.permute.xlu0 4
    %3983 = vperm.xlu0 %3982, %v3898
    %v3984 = vpop.permute.xlu0 %3983
    %3985 = vset.pattern.permute.xlu0 4
    %3986 = vperm.xlu0 %3985, %v3899
    %v3987 = vpop.permute.xlu0 %3986
    %3988 = vset.pattern.permute.xlu0 4
    %3989 = vperm.xlu0 %3988, %v3900
    %v3990 = vpop.permute.xlu0 %3989
    %3991 = vset.pattern.permute.xlu0 4
    %3992 = vperm.xlu0 %3991, %v3901
    %v3993 = vpop.permute.xlu0 %3992
    %3994 = vset.pattern.permute.xlu0 4
    %3995 = vperm.xlu0 %3994, %v3902
    %v3996 = vpop.permute.xlu0 %3995
    %3997 = vset.pattern.permute.xlu0 4
    %3998 = vperm.xlu0 %3997, %v3903
    %v3999 = vpop.permute.xlu0 %3998
    %4000 = vset.pattern.permute.xlu0 4
    %4001 = vperm.xlu0 %4000, %v3904
    %v4002 = vpop.permute.xlu0 %4001
    %4003 = vset.pattern.permute.xlu0 4
    %4004 = vperm.xlu0 %4003, %v3905
    %v4005 = vpop.permute.xlu0 %4004
    %4006 = vset.pattern.permute.xlu0 4
    %4007 = vperm.xlu0 %4006, %v3906
    %v4008 = vpop.permute.xlu0 %4007
    %4009 = vset.pattern.permute.xlu0 4
    %4010 = vperm.xlu0 %4009, %v3907
    %v4011 = vpop.permute.xlu0 %4010
    %4012 = vset.pattern.permute.xlu0 4
    %4013 = vperm.xlu0 %4012, %v3908
    %v4014 = vpop.permute.xlu0 %4013
    %4015 = vset.pattern.permute.xlu0 4
    %4016 = vperm.xlu0 %4015, %v3909
    %v4017 = vpop.permute.xlu0 %4016
    %4018 = vset.pattern.permute.xlu0 4
    %4019 = vperm.xlu0 %4018, %v3910
    %v4020 = vpop.permute.xlu0 %4019
    %4021 = vset.pattern.permute.xlu0 4
    %4022 = vperm.xlu0 %4021, %v3911
    %v4023 = vpop.permute.xlu0 %4022
    %4024 = vset.pattern.permute.xlu0 4
    %4025 = vperm.xlu0 %4024, %v3912
    %v4026 = vpop.permute.xlu0 %4025
    %4027 = vset.pattern.permute.xlu0 4
    %4028 = vperm.xlu0 %4027, %v3913
    %v4029 = vpop.permute.xlu0 %4028
    %4030 = vset.pattern.permute.xlu0 4
    %4031 = vperm.xlu0 %4030, %v3914
    %v4032 = vpop.permute.xlu0 %4031
    %4033 = vset.pattern.permute.xlu0 4
    %4034 = vperm.xlu0 %4033, %v3915
    %v4035 = vpop.permute.xlu0 %4034
    %4036 = vset.pattern.permute.xlu0 4
    %4037 = vperm.xlu0 %4036, %v3916
    %v4038 = vpop.permute.xlu0 %4037
    %4039 = vset.pattern.permute.xlu0 4
    %4040 = vperm.xlu0 %4039, %v3917
    %v4041 = vpop.permute.xlu0 %4040
    %4042 = vset.pattern.permute.xlu0 4
    %4043 = vperm.xlu0 %4042, %v3918
    %v4044 = vpop.permute.xlu0 %4043
    %4045 = vset.pattern.permute.xlu0 4
    %4046 = vperm.xlu0 %4045, %v3919
    %v4047 = vpop.permute.xlu0 %4046
    %4048 = vset.pattern.permute.xlu0 4
    %4049 = vperm.xlu0 %4048, %v3920
    %v4050 = vpop.permute.xlu0 %4049
    %4051 = vset.pattern.permute.xlu0 4
    %4052 = vperm.xlu0 %4051, %v3921
    %v4053 = vpop.permute.xlu0 %4052
    %4054 = vset.pattern.permute.xlu0 4
    %4055 = vperm.xlu0 %4054, %v3922
    %v4056 = vpop.permute.xlu0 %4055
    %4057 = vset.pattern.permute.xlu0 4
    %4058 = vperm.xlu0 %4057, %v3923
    %v4059 = vpop.permute.xlu0 %4058
    %4060 = vset.pattern.permute.xlu0 4
    %4061 = vperm.xlu0 %4060, %v3924
    %v4062 = vpop.permute.xlu0 %4061
    %4063 = vset.pattern.permute.xlu0 4
    %4064 = vperm.xlu0 %4063, %v3925
    %v4065 = vpop.permute.xlu0 %4064
    %4066 = vset.pattern.permute.xlu0 4
    %4067 = vperm.xlu0 %4066, %v3926
    %v4068 = vpop.permute.xlu0 %4067
    %4069 = vset.pattern.permute.xlu0 4
    %4070 = vperm.xlu0 %4069, %v3927
    %v4071 = vpop.permute.xlu0 %4070
    %vm4072 = vcmp.eq.s32.totalorder %v3930, %v84
    %vm4073 = vcmp.eq.s32.totalorder %v3930, %v85
    %vm4074 = vcmp.eq.s32.totalorder %v3930, %v86
    %vm4075 = vcmp.eq.s32.totalorder %v3930, %v87
    %vm4076 = vcmp.eq.s32.totalorder %v3933, %v84
    %vm4077 = vcmp.eq.s32.totalorder %v3933, %v85
    %vm4078 = vcmp.eq.s32.totalorder %v3933, %v86
    %vm4079 = vcmp.eq.s32.totalorder %v3933, %v87
    %vm4080 = vcmp.eq.s32.totalorder %v3936, %v84
    %vm4081 = vcmp.eq.s32.totalorder %v3936, %v85
    %vm4082 = vcmp.eq.s32.totalorder %v3936, %v86
    %vm4083 = vcmp.eq.s32.totalorder %v3936, %v87
    %vm4084 = vcmp.eq.s32.totalorder %v3939, %v84
    %vm4085 = vcmp.eq.s32.totalorder %v3939, %v85
    %vm4086 = vcmp.eq.s32.totalorder %v3939, %v86
    %vm4087 = vcmp.eq.s32.totalorder %v3939, %v87
    %vm4088 = vcmp.eq.s32.totalorder %v3942, %v84
    %vm4089 = vcmp.eq.s32.totalorder %v3942, %v85
    %vm4090 = vcmp.eq.s32.totalorder %v3942, %v86
    %vm4091 = vcmp.eq.s32.totalorder %v3942, %v87
    %vm4092 = vcmp.eq.s32.totalorder %v3945, %v84
    %vm4093 = vcmp.eq.s32.totalorder %v3945, %v85
    %vm4094 = vcmp.eq.s32.totalorder %v3945, %v86
    %vm4095 = vcmp.eq.s32.totalorder %v3945, %v87
    %vm4096 = vcmp.eq.s32.totalorder %v3948, %v84
    %vm4097 = vcmp.eq.s32.totalorder %v3948, %v85
    %vm4098 = vcmp.eq.s32.totalorder %v3948, %v86
    %vm4099 = vcmp.eq.s32.totalorder %v3948, %v87
    %vm4100 = vcmp.eq.s32.totalorder %v3951, %v84
    %vm4101 = vcmp.eq.s32.totalorder %v3951, %v85
    %vm4102 = vcmp.eq.s32.totalorder %v3951, %v86
    %vm4103 = vcmp.eq.s32.totalorder %v3951, %v87
    %vm4104 = vcmp.eq.s32.totalorder %v3954, %v84
    %vm4105 = vcmp.eq.s32.totalorder %v3954, %v85
    %vm4106 = vcmp.eq.s32.totalorder %v3954, %v86
    %vm4107 = vcmp.eq.s32.totalorder %v3954, %v87
    %vm4108 = vcmp.eq.s32.totalorder %v3957, %v84
    %vm4109 = vcmp.eq.s32.totalorder %v3957, %v85
    %vm4110 = vcmp.eq.s32.totalorder %v3957, %v86
    %vm4111 = vcmp.eq.s32.totalorder %v3957, %v87
    %vm4112 = vcmp.eq.s32.totalorder %v3960, %v84
    %vm4113 = vcmp.eq.s32.totalorder %v3960, %v85
    %vm4114 = vcmp.eq.s32.totalorder %v3960, %v86
    %vm4115 = vcmp.eq.s32.totalorder %v3960, %v87
    %vm4116 = vcmp.eq.s32.totalorder %v3963, %v84
    %vm4117 = vcmp.eq.s32.totalorder %v3963, %v85
    %vm4118 = vcmp.eq.s32.totalorder %v3963, %v86
    %vm4119 = vcmp.eq.s32.totalorder %v3963, %v87
    %vm4120 = vcmp.eq.s32.totalorder %v3966, %v84
    %vm4121 = vcmp.eq.s32.totalorder %v3966, %v85
    %vm4122 = vcmp.eq.s32.totalorder %v3966, %v86
    %vm4123 = vcmp.eq.s32.totalorder %v3966, %v87
    %vm4124 = vcmp.eq.s32.totalorder %v3969, %v84
    %vm4125 = vcmp.eq.s32.totalorder %v3969, %v85
    %vm4126 = vcmp.eq.s32.totalorder %v3969, %v86
    %vm4127 = vcmp.eq.s32.totalorder %v3969, %v87
    %vm4128 = vcmp.eq.s32.totalorder %v3972, %v84
    %vm4129 = vcmp.eq.s32.totalorder %v3972, %v85
    %vm4130 = vcmp.eq.s32.totalorder %v3972, %v86
    %vm4131 = vcmp.eq.s32.totalorder %v3972, %v87
    %vm4132 = vcmp.eq.s32.totalorder %v3975, %v84
    %vm4133 = vcmp.eq.s32.totalorder %v3975, %v85
    %vm4134 = vcmp.eq.s32.totalorder %v3975, %v86
    %vm4135 = vcmp.eq.s32.totalorder %v3975, %v87
    %vm4136 = vcmp.eq.s32.totalorder %v3978, %v84
    %vm4137 = vcmp.eq.s32.totalorder %v3978, %v85
    %vm4138 = vcmp.eq.s32.totalorder %v3978, %v86
    %vm4139 = vcmp.eq.s32.totalorder %v3978, %v87
    %vm4140 = vcmp.eq.s32.totalorder %v3981, %v84
    %vm4141 = vcmp.eq.s32.totalorder %v3981, %v85
    %vm4142 = vcmp.eq.s32.totalorder %v3981, %v86
    %vm4143 = vcmp.eq.s32.totalorder %v3981, %v87
    %vm4144 = vcmp.eq.s32.totalorder %v3984, %v84
    %vm4145 = vcmp.eq.s32.totalorder %v3984, %v85
    %vm4146 = vcmp.eq.s32.totalorder %v3984, %v86
    %vm4147 = vcmp.eq.s32.totalorder %v3984, %v87
    %vm4148 = vcmp.eq.s32.totalorder %v3987, %v84
    %vm4149 = vcmp.eq.s32.totalorder %v3987, %v85
    %vm4150 = vcmp.eq.s32.totalorder %v3987, %v86
    %vm4151 = vcmp.eq.s32.totalorder %v3987, %v87
    %vm4152 = vcmp.eq.s32.totalorder %v3990, %v84
    %vm4153 = vcmp.eq.s32.totalorder %v3990, %v85
    %vm4154 = vcmp.eq.s32.totalorder %v3990, %v86
    %vm4155 = vcmp.eq.s32.totalorder %v3990, %v87
    %vm4156 = vcmp.eq.s32.totalorder %v3993, %v84
    %vm4157 = vcmp.eq.s32.totalorder %v3993, %v85
    %vm4158 = vcmp.eq.s32.totalorder %v3993, %v86
    %vm4159 = vcmp.eq.s32.totalorder %v3993, %v87
    %vm4160 = vcmp.eq.s32.totalorder %v3996, %v84
    %vm4161 = vcmp.eq.s32.totalorder %v3996, %v85
    %vm4162 = vcmp.eq.s32.totalorder %v3996, %v86
    %vm4163 = vcmp.eq.s32.totalorder %v3996, %v87
    %vm4164 = vcmp.eq.s32.totalorder %v3999, %v84
    %vm4165 = vcmp.eq.s32.totalorder %v3999, %v85
    %vm4166 = vcmp.eq.s32.totalorder %v3999, %v86
    %vm4167 = vcmp.eq.s32.totalorder %v3999, %v87
    %vm4168 = vcmp.eq.s32.totalorder %v4002, %v84
    %vm4169 = vcmp.eq.s32.totalorder %v4002, %v85
    %vm4170 = vcmp.eq.s32.totalorder %v4002, %v86
    %vm4171 = vcmp.eq.s32.totalorder %v4002, %v87
    %vm4172 = vcmp.eq.s32.totalorder %v4005, %v84
    %vm4173 = vcmp.eq.s32.totalorder %v4005, %v85
    %vm4174 = vcmp.eq.s32.totalorder %v4005, %v86
    %vm4175 = vcmp.eq.s32.totalorder %v4005, %v87
    %vm4176 = vcmp.eq.s32.totalorder %v4008, %v84
    %vm4177 = vcmp.eq.s32.totalorder %v4008, %v85
    %vm4178 = vcmp.eq.s32.totalorder %v4008, %v86
    %vm4179 = vcmp.eq.s32.totalorder %v4008, %v87
    %vm4180 = vcmp.eq.s32.totalorder %v4011, %v84
    %vm4181 = vcmp.eq.s32.totalorder %v4011, %v85
    %vm4182 = vcmp.eq.s32.totalorder %v4011, %v86
    %vm4183 = vcmp.eq.s32.totalorder %v4011, %v87
    %vm4184 = vcmp.eq.s32.totalorder %v4014, %v84
    %vm4185 = vcmp.eq.s32.totalorder %v4014, %v85
    %vm4186 = vcmp.eq.s32.totalorder %v4014, %v86
    %vm4187 = vcmp.eq.s32.totalorder %v4014, %v87
    %vm4188 = vcmp.eq.s32.totalorder %v4017, %v84
    %vm4189 = vcmp.eq.s32.totalorder %v4017, %v85
    %vm4190 = vcmp.eq.s32.totalorder %v4017, %v86
    %vm4191 = vcmp.eq.s32.totalorder %v4017, %v87
    %vm4192 = vcmp.eq.s32.totalorder %v4020, %v84
    %vm4193 = vcmp.eq.s32.totalorder %v4020, %v85
    %vm4194 = vcmp.eq.s32.totalorder %v4020, %v86
    %vm4195 = vcmp.eq.s32.totalorder %v4020, %v87
    %vm4196 = vcmp.eq.s32.totalorder %v4023, %v84
    %vm4197 = vcmp.eq.s32.totalorder %v4023, %v85
    %vm4198 = vcmp.eq.s32.totalorder %v4023, %v86
    %vm4199 = vcmp.eq.s32.totalorder %v4023, %v87
    %vm4200 = vcmp.eq.s32.totalorder %v4026, %v84
    %vm4201 = vcmp.eq.s32.totalorder %v4026, %v85
    %vm4202 = vcmp.eq.s32.totalorder %v4026, %v86
    %vm4203 = vcmp.eq.s32.totalorder %v4026, %v87
    %vm4204 = vcmp.eq.s32.totalorder %v4029, %v84
    %vm4205 = vcmp.eq.s32.totalorder %v4029, %v85
    %vm4206 = vcmp.eq.s32.totalorder %v4029, %v86
    %vm4207 = vcmp.eq.s32.totalorder %v4029, %v87
    %vm4208 = vcmp.eq.s32.totalorder %v4032, %v84
    %vm4209 = vcmp.eq.s32.totalorder %v4032, %v85
    %vm4210 = vcmp.eq.s32.totalorder %v4032, %v86
    %vm4211 = vcmp.eq.s32.totalorder %v4032, %v87
    %vm4212 = vcmp.eq.s32.totalorder %v4035, %v84
    %vm4213 = vcmp.eq.s32.totalorder %v4035, %v85
    %vm4214 = vcmp.eq.s32.totalorder %v4035, %v86
    %vm4215 = vcmp.eq.s32.totalorder %v4035, %v87
    %vm4216 = vcmp.eq.s32.totalorder %v4038, %v84
    %vm4217 = vcmp.eq.s32.totalorder %v4038, %v85
    %vm4218 = vcmp.eq.s32.totalorder %v4038, %v86
    %vm4219 = vcmp.eq.s32.totalorder %v4038, %v87
    %vm4220 = vcmp.eq.s32.totalorder %v4041, %v84
    %vm4221 = vcmp.eq.s32.totalorder %v4041, %v85
    %vm4222 = vcmp.eq.s32.totalorder %v4041, %v86
    %vm4223 = vcmp.eq.s32.totalorder %v4041, %v87
    %vm4224 = vcmp.eq.s32.totalorder %v4044, %v84
    %vm4225 = vcmp.eq.s32.totalorder %v4044, %v85
    %vm4226 = vcmp.eq.s32.totalorder %v4044, %v86
    %vm4227 = vcmp.eq.s32.totalorder %v4044, %v87
    %vm4228 = vcmp.eq.s32.totalorder %v4047, %v84
    %vm4229 = vcmp.eq.s32.totalorder %v4047, %v85
    %vm4230 = vcmp.eq.s32.totalorder %v4047, %v86
    %vm4231 = vcmp.eq.s32.totalorder %v4047, %v87
    %vm4232 = vcmp.eq.s32.totalorder %v4050, %v84
    %vm4233 = vcmp.eq.s32.totalorder %v4050, %v85
    %vm4234 = vcmp.eq.s32.totalorder %v4050, %v86
    %vm4235 = vcmp.eq.s32.totalorder %v4050, %v87
    %vm4236 = vcmp.eq.s32.totalorder %v4053, %v84
    %vm4237 = vcmp.eq.s32.totalorder %v4053, %v85
    %vm4238 = vcmp.eq.s32.totalorder %v4053, %v86
    %vm4239 = vcmp.eq.s32.totalorder %v4053, %v87
    %vm4240 = vcmp.eq.s32.totalorder %v4056, %v84
    %vm4241 = vcmp.eq.s32.totalorder %v4056, %v85
    %vm4242 = vcmp.eq.s32.totalorder %v4056, %v86
    %vm4243 = vcmp.eq.s32.totalorder %v4056, %v87
    %vm4244 = vcmp.eq.s32.totalorder %v4059, %v84
    %vm4245 = vcmp.eq.s32.totalorder %v4059, %v85
    %vm4246 = vcmp.eq.s32.totalorder %v4059, %v86
    %vm4247 = vcmp.eq.s32.totalorder %v4059, %v87
    %vm4248 = vcmp.eq.s32.totalorder %v4062, %v84
    %vm4249 = vcmp.eq.s32.totalorder %v4062, %v85
    %vm4250 = vcmp.eq.s32.totalorder %v4062, %v86
    %vm4251 = vcmp.eq.s32.totalorder %v4062, %v87
    %vm4252 = vcmp.eq.s32.totalorder %v4065, %v84
    %vm4253 = vcmp.eq.s32.totalorder %v4065, %v85
    %vm4254 = vcmp.eq.s32.totalorder %v4065, %v86
    %vm4255 = vcmp.eq.s32.totalorder %v4065, %v87
    %vm4256 = vcmp.eq.s32.totalorder %v4068, %v84
    %vm4257 = vcmp.eq.s32.totalorder %v4068, %v85
    %vm4258 = vcmp.eq.s32.totalorder %v4068, %v86
    %vm4259 = vcmp.eq.s32.totalorder %v4068, %v87
    %vm4260 = vcmp.eq.s32.totalorder %v4071, %v84
    %vm4261 = vcmp.eq.s32.totalorder %v4071, %v85
    %vm4262 = vcmp.eq.s32.totalorder %v4071, %v86
    %vm4263 = vcmp.eq.s32.totalorder %v4071, %v87
    %v4264 = vsel %vm4072, 1, 0
    %v4265 = vsel %vm4073, 1, 0
    %v4266 = vsel %vm4074, 1, 0
    %v4267 = vsel %vm4075, 1, 0
    %v4268 = vsel %vm4076, 1, 0
    %v4269 = vsel %vm4077, 1, 0
    %v4270 = vsel %vm4078, 1, 0
    %v4271 = vsel %vm4079, 1, 0
    %v4272 = vsel %vm4080, 1, 0
    %v4273 = vsel %vm4081, 1, 0
    %v4274 = vsel %vm4082, 1, 0
    %v4275 = vsel %vm4083, 1, 0
    %v4276 = vsel %vm4084, 1, 0
    %v4277 = vsel %vm4085, 1, 0
    %v4278 = vsel %vm4086, 1, 0
    %v4279 = vsel %vm4087, 1, 0
    %v4280 = vsel %vm4088, 1, 0
    %v4281 = vsel %vm4089, 1, 0
    %v4282 = vsel %vm4090, 1, 0
    %v4283 = vsel %vm4091, 1, 0
    %v4284 = vsel %vm4092, 1, 0
    %v4285 = vsel %vm4093, 1, 0
    %v4286 = vsel %vm4094, 1, 0
    %v4287 = vsel %vm4095, 1, 0
    %v4288 = vsel %vm4096, 1, 0
    %v4289 = vsel %vm4097, 1, 0
    %v4290 = vsel %vm4098, 1, 0
    %v4291 = vsel %vm4099, 1, 0
    %v4292 = vsel %vm4100, 1, 0
    %v4293 = vsel %vm4101, 1, 0
    %v4294 = vsel %vm4102, 1, 0
    %v4295 = vsel %vm4103, 1, 0
    %v4296 = vsel %vm4104, 1, 0
    %v4297 = vsel %vm4105, 1, 0
    %v4298 = vsel %vm4106, 1, 0
    %v4299 = vsel %vm4107, 1, 0
    %v4300 = vsel %vm4108, 1, 0
    %v4301 = vsel %vm4109, 1, 0
    %v4302 = vsel %vm4110, 1, 0
    %v4303 = vsel %vm4111, 1, 0
    %v4304 = vsel %vm4112, 1, 0
    %v4305 = vsel %vm4113, 1, 0
    %v4306 = vsel %vm4114, 1, 0
    %v4307 = vsel %vm4115, 1, 0
    %v4308 = vsel %vm4116, 1, 0
    %v4309 = vsel %vm4117, 1, 0
    %v4310 = vsel %vm4118, 1, 0
    %v4311 = vsel %vm4119, 1, 0
    %v4312 = vsel %vm4120, 1, 0
    %v4313 = vsel %vm4121, 1, 0
    %v4314 = vsel %vm4122, 1, 0
    %v4315 = vsel %vm4123, 1, 0
    %v4316 = vsel %vm4124, 1, 0
    %v4317 = vsel %vm4125, 1, 0
    %v4318 = vsel %vm4126, 1, 0
    %v4319 = vsel %vm4127, 1, 0
    %v4320 = vsel %vm4128, 1, 0
    %v4321 = vsel %vm4129, 1, 0
    %v4322 = vsel %vm4130, 1, 0
    %v4323 = vsel %vm4131, 1, 0
    %v4324 = vsel %vm4132, 1, 0
    %v4325 = vsel %vm4133, 1, 0
    %v4326 = vsel %vm4134, 1, 0
    %v4327 = vsel %vm4135, 1, 0
    %v4328 = vsel %vm4136, 1, 0
    %v4329 = vsel %vm4137, 1, 0
    %v4330 = vsel %vm4138, 1, 0
    %v4331 = vsel %vm4139, 1, 0
    %v4332 = vsel %vm4140, 1, 0
    %v4333 = vsel %vm4141, 1, 0
    %v4334 = vsel %vm4142, 1, 0
    %v4335 = vsel %vm4143, 1, 0
    %v4336 = vsel %vm4144, 1, 0
    %v4337 = vsel %vm4145, 1, 0
    %v4338 = vsel %vm4146, 1, 0
    %v4339 = vsel %vm4147, 1, 0
    %v4340 = vsel %vm4148, 1, 0
    %v4341 = vsel %vm4149, 1, 0
    %v4342 = vsel %vm4150, 1, 0
    %v4343 = vsel %vm4151, 1, 0
    %v4344 = vsel %vm4152, 1, 0
    %v4345 = vsel %vm4153, 1, 0
    %v4346 = vsel %vm4154, 1, 0
    %v4347 = vsel %vm4155, 1, 0
    %v4348 = vsel %vm4156, 1, 0
    %v4349 = vsel %vm4157, 1, 0
    %v4350 = vsel %vm4158, 1, 0
    %v4351 = vsel %vm4159, 1, 0
    %v4352 = vsel %vm4160, 1, 0
    %v4353 = vsel %vm4161, 1, 0
    %v4354 = vsel %vm4162, 1, 0
    %v4355 = vsel %vm4163, 1, 0
    %v4356 = vsel %vm4164, 1, 0
    %v4357 = vsel %vm4165, 1, 0
    %v4358 = vsel %vm4166, 1, 0
    %v4359 = vsel %vm4167, 1, 0
    %v4360 = vsel %vm4168, 1, 0
    %v4361 = vsel %vm4169, 1, 0
    %v4362 = vsel %vm4170, 1, 0
    %v4363 = vsel %vm4171, 1, 0
    %v4364 = vsel %vm4172, 1, 0
    %v4365 = vsel %vm4173, 1, 0
    %v4366 = vsel %vm4174, 1, 0
    %v4367 = vsel %vm4175, 1, 0
    %v4368 = vsel %vm4176, 1, 0
    %v4369 = vsel %vm4177, 1, 0
    %v4370 = vsel %vm4178, 1, 0
    %v4371 = vsel %vm4179, 1, 0
    %v4372 = vsel %vm4180, 1, 0
    %v4373 = vsel %vm4181, 1, 0
    %v4374 = vsel %vm4182, 1, 0
    %v4375 = vsel %vm4183, 1, 0
    %v4376 = vsel %vm4184, 1, 0
    %v4377 = vsel %vm4185, 1, 0
    %v4378 = vsel %vm4186, 1, 0
    %v4379 = vsel %vm4187, 1, 0
    %v4380 = vsel %vm4188, 1, 0
    %v4381 = vsel %vm4189, 1, 0
    %v4382 = vsel %vm4190, 1, 0
    %v4383 = vsel %vm4191, 1, 0
    %v4384 = vsel %vm4192, 1, 0
    %v4385 = vsel %vm4193, 1, 0
    %v4386 = vsel %vm4194, 1, 0
    %v4387 = vsel %vm4195, 1, 0
    %v4388 = vsel %vm4196, 1, 0
    %v4389 = vsel %vm4197, 1, 0
    %v4390 = vsel %vm4198, 1, 0
    %v4391 = vsel %vm4199, 1, 0
    %v4392 = vsel %vm4200, 1, 0
    %v4393 = vsel %vm4201, 1, 0
    %v4394 = vsel %vm4202, 1, 0
    %v4395 = vsel %vm4203, 1, 0
    %v4396 = vsel %vm4204, 1, 0
    %v4397 = vsel %vm4205, 1, 0
    %v4398 = vsel %vm4206, 1, 0
    %v4399 = vsel %vm4207, 1, 0
    %v4400 = vsel %vm4208, 1, 0
    %v4401 = vsel %vm4209, 1, 0
    %v4402 = vsel %vm4210, 1, 0
    %v4403 = vsel %vm4211, 1, 0
    %v4404 = vsel %vm4212, 1, 0
    %v4405 = vsel %vm4213, 1, 0
    %v4406 = vsel %vm4214, 1, 0
    %v4407 = vsel %vm4215, 1, 0
    %v4408 = vsel %vm4216, 1, 0
    %v4409 = vsel %vm4217, 1, 0
    %v4410 = vsel %vm4218, 1, 0
    %v4411 = vsel %vm4219, 1, 0
    %v4412 = vsel %vm4220, 1, 0
    %v4413 = vsel %vm4221, 1, 0
    %v4414 = vsel %vm4222, 1, 0
    %v4415 = vsel %vm4223, 1, 0
    %v4416 = vsel %vm4224, 1, 0
    %v4417 = vsel %vm4225, 1, 0
    %v4418 = vsel %vm4226, 1, 0
    %v4419 = vsel %vm4227, 1, 0
    %v4420 = vsel %vm4228, 1, 0
    %v4421 = vsel %vm4229, 1, 0
    %v4422 = vsel %vm4230, 1, 0
    %v4423 = vsel %vm4231, 1, 0
    %v4424 = vsel %vm4232, 1, 0
    %v4425 = vsel %vm4233, 1, 0
    %v4426 = vsel %vm4234, 1, 0
    %v4427 = vsel %vm4235, 1, 0
    %v4428 = vsel %vm4236, 1, 0
    %v4429 = vsel %vm4237, 1, 0
    %v4430 = vsel %vm4238, 1, 0
    %v4431 = vsel %vm4239, 1, 0
    %v4432 = vsel %vm4240, 1, 0
    %v4433 = vsel %vm4241, 1, 0
    %v4434 = vsel %vm4242, 1, 0
    %v4435 = vsel %vm4243, 1, 0
    %v4436 = vsel %vm4244, 1, 0
    %v4437 = vsel %vm4245, 1, 0
    %v4438 = vsel %vm4246, 1, 0
    %v4439 = vsel %vm4247, 1, 0
    %v4440 = vsel %vm4248, 1, 0
    %v4441 = vsel %vm4249, 1, 0
    %v4442 = vsel %vm4250, 1, 0
    %v4443 = vsel %vm4251, 1, 0
    %v4444 = vsel %vm4252, 1, 0
    %v4445 = vsel %vm4253, 1, 0
    %v4446 = vsel %vm4254, 1, 0
    %v4447 = vsel %vm4255, 1, 0
    %v4448 = vsel %vm4256, 1, 0
    %v4449 = vsel %vm4257, 1, 0
    %v4450 = vsel %vm4258, 1, 0
    %v4451 = vsel %vm4259, 1, 0
    %v4452 = vsel %vm4260, 1, 0
    %v4453 = vsel %vm4261, 1, 0
    %v4454 = vsel %vm4262, 1, 0
    %v4455 = vsel %vm4263, 1, 0
    %v4456 = vcvt.s32.f32 %v4264
    %v4457 = vcvt.s32.f32 %v4265
    %v4458 = vcvt.s32.f32 %v4266
    %v4459 = vcvt.s32.f32 %v4267
    %v4460 = vcvt.s32.f32 %v4268
    %v4461 = vcvt.s32.f32 %v4269
    %v4462 = vcvt.s32.f32 %v4270
    %v4463 = vcvt.s32.f32 %v4271
    %v4464 = vcvt.s32.f32 %v4272
    %v4465 = vcvt.s32.f32 %v4273
    %v4466 = vcvt.s32.f32 %v4274
    %v4467 = vcvt.s32.f32 %v4275
    %v4468 = vcvt.s32.f32 %v4276
    %v4469 = vcvt.s32.f32 %v4277
    %v4470 = vcvt.s32.f32 %v4278
    %v4471 = vcvt.s32.f32 %v4279
    %v4472 = vcvt.s32.f32 %v4280
    %v4473 = vcvt.s32.f32 %v4281
    %v4474 = vcvt.s32.f32 %v4282
    %v4475 = vcvt.s32.f32 %v4283
    %v4476 = vcvt.s32.f32 %v4284
    %v4477 = vcvt.s32.f32 %v4285
    %v4478 = vcvt.s32.f32 %v4286
    %v4479 = vcvt.s32.f32 %v4287
    %v4480 = vcvt.s32.f32 %v4288
    %v4481 = vcvt.s32.f32 %v4289
    %v4482 = vcvt.s32.f32 %v4290
    %v4483 = vcvt.s32.f32 %v4291
    %v4484 = vcvt.s32.f32 %v4292
    %v4485 = vcvt.s32.f32 %v4293
    %v4486 = vcvt.s32.f32 %v4294
    %v4487 = vcvt.s32.f32 %v4295
    %v4488 = vcvt.s32.f32 %v4296
    %v4489 = vcvt.s32.f32 %v4297
    %v4490 = vcvt.s32.f32 %v4298
    %v4491 = vcvt.s32.f32 %v4299
    %v4492 = vcvt.s32.f32 %v4300
    %v4493 = vcvt.s32.f32 %v4301
    %v4494 = vcvt.s32.f32 %v4302
    %v4495 = vcvt.s32.f32 %v4303
    %v4496 = vcvt.s32.f32 %v4304
    %v4497 = vcvt.s32.f32 %v4305
    %v4498 = vcvt.s32.f32 %v4306
    %v4499 = vcvt.s32.f32 %v4307
    %v4500 = vcvt.s32.f32 %v4308
    %v4501 = vcvt.s32.f32 %v4309
    %v4502 = vcvt.s32.f32 %v4310
    %v4503 = vcvt.s32.f32 %v4311
    %v4504 = vcvt.s32.f32 %v4312
    %v4505 = vcvt.s32.f32 %v4313
    %v4506 = vcvt.s32.f32 %v4314
    %v4507 = vcvt.s32.f32 %v4315
    %v4508 = vcvt.s32.f32 %v4316
    %v4509 = vcvt.s32.f32 %v4317
    %v4510 = vcvt.s32.f32 %v4318
    %v4511 = vcvt.s32.f32 %v4319
    %v4512 = vcvt.s32.f32 %v4320
    %v4513 = vcvt.s32.f32 %v4321
    %v4514 = vcvt.s32.f32 %v4322
    %v4515 = vcvt.s32.f32 %v4323
    %v4516 = vcvt.s32.f32 %v4324
    %v4517 = vcvt.s32.f32 %v4325
    %v4518 = vcvt.s32.f32 %v4326
    %v4519 = vcvt.s32.f32 %v4327
    %v4520 = vcvt.s32.f32 %v4328
    %v4521 = vcvt.s32.f32 %v4329
    %v4522 = vcvt.s32.f32 %v4330
    %v4523 = vcvt.s32.f32 %v4331
    %v4524 = vcvt.s32.f32 %v4332
    %v4525 = vcvt.s32.f32 %v4333
    %v4526 = vcvt.s32.f32 %v4334
    %v4527 = vcvt.s32.f32 %v4335
    %v4528 = vcvt.s32.f32 %v4336
    %v4529 = vcvt.s32.f32 %v4337
    %v4530 = vcvt.s32.f32 %v4338
    %v4531 = vcvt.s32.f32 %v4339
    %v4532 = vcvt.s32.f32 %v4340
    %v4533 = vcvt.s32.f32 %v4341
    %v4534 = vcvt.s32.f32 %v4342
    %v4535 = vcvt.s32.f32 %v4343
    %v4536 = vcvt.s32.f32 %v4344
    %v4537 = vcvt.s32.f32 %v4345
    %v4538 = vcvt.s32.f32 %v4346
    %v4539 = vcvt.s32.f32 %v4347
    %v4540 = vcvt.s32.f32 %v4348
    %v4541 = vcvt.s32.f32 %v4349
    %v4542 = vcvt.s32.f32 %v4350
    %v4543 = vcvt.s32.f32 %v4351
    %v4544 = vcvt.s32.f32 %v4352
    %v4545 = vcvt.s32.f32 %v4353
    %v4546 = vcvt.s32.f32 %v4354
    %v4547 = vcvt.s32.f32 %v4355
    %v4548 = vcvt.s32.f32 %v4356
    %v4549 = vcvt.s32.f32 %v4357
    %v4550 = vcvt.s32.f32 %v4358
    %v4551 = vcvt.s32.f32 %v4359
    %v4552 = vcvt.s32.f32 %v4360
    %v4553 = vcvt.s32.f32 %v4361
    %v4554 = vcvt.s32.f32 %v4362
    %v4555 = vcvt.s32.f32 %v4363
    %v4556 = vcvt.s32.f32 %v4364
    %v4557 = vcvt.s32.f32 %v4365
    %v4558 = vcvt.s32.f32 %v4366
    %v4559 = vcvt.s32.f32 %v4367
    %v4560 = vcvt.s32.f32 %v4368
    %v4561 = vcvt.s32.f32 %v4369
    %v4562 = vcvt.s32.f32 %v4370
    %v4563 = vcvt.s32.f32 %v4371
    %v4564 = vcvt.s32.f32 %v4372
    %v4565 = vcvt.s32.f32 %v4373
    %v4566 = vcvt.s32.f32 %v4374
    %v4567 = vcvt.s32.f32 %v4375
    %v4568 = vcvt.s32.f32 %v4376
    %v4569 = vcvt.s32.f32 %v4377
    %v4570 = vcvt.s32.f32 %v4378
    %v4571 = vcvt.s32.f32 %v4379
    %v4572 = vcvt.s32.f32 %v4380
    %v4573 = vcvt.s32.f32 %v4381
    %v4574 = vcvt.s32.f32 %v4382
    %v4575 = vcvt.s32.f32 %v4383
    %v4576 = vcvt.s32.f32 %v4384
    %v4577 = vcvt.s32.f32 %v4385
    %v4578 = vcvt.s32.f32 %v4386
    %v4579 = vcvt.s32.f32 %v4387
    %v4580 = vcvt.s32.f32 %v4388
    %v4581 = vcvt.s32.f32 %v4389
    %v4582 = vcvt.s32.f32 %v4390
    %v4583 = vcvt.s32.f32 %v4391
    %v4584 = vcvt.s32.f32 %v4392
    %v4585 = vcvt.s32.f32 %v4393
    %v4586 = vcvt.s32.f32 %v4394
    %v4587 = vcvt.s32.f32 %v4395
    %v4588 = vcvt.s32.f32 %v4396
    %v4589 = vcvt.s32.f32 %v4397
    %v4590 = vcvt.s32.f32 %v4398
    %v4591 = vcvt.s32.f32 %v4399
    %v4592 = vcvt.s32.f32 %v4400
    %v4593 = vcvt.s32.f32 %v4401
    %v4594 = vcvt.s32.f32 %v4402
    %v4595 = vcvt.s32.f32 %v4403
    %v4596 = vcvt.s32.f32 %v4404
    %v4597 = vcvt.s32.f32 %v4405
    %v4598 = vcvt.s32.f32 %v4406
    %v4599 = vcvt.s32.f32 %v4407
    %v4600 = vcvt.s32.f32 %v4408
    %v4601 = vcvt.s32.f32 %v4409
    %v4602 = vcvt.s32.f32 %v4410
    %v4603 = vcvt.s32.f32 %v4411
    %v4604 = vcvt.s32.f32 %v4412
    %v4605 = vcvt.s32.f32 %v4413
    %v4606 = vcvt.s32.f32 %v4414
    %v4607 = vcvt.s32.f32 %v4415
    %v4608 = vcvt.s32.f32 %v4416
    %v4609 = vcvt.s32.f32 %v4417
    %v4610 = vcvt.s32.f32 %v4418
    %v4611 = vcvt.s32.f32 %v4419
    %v4612 = vcvt.s32.f32 %v4420
    %v4613 = vcvt.s32.f32 %v4421
    %v4614 = vcvt.s32.f32 %v4422
    %v4615 = vcvt.s32.f32 %v4423
    %v4616 = vcvt.s32.f32 %v4424
    %v4617 = vcvt.s32.f32 %v4425
    %v4618 = vcvt.s32.f32 %v4426
    %v4619 = vcvt.s32.f32 %v4427
    %v4620 = vcvt.s32.f32 %v4428
    %v4621 = vcvt.s32.f32 %v4429
    %v4622 = vcvt.s32.f32 %v4430
    %v4623 = vcvt.s32.f32 %v4431
    %v4624 = vcvt.s32.f32 %v4432
    %v4625 = vcvt.s32.f32 %v4433
    %v4626 = vcvt.s32.f32 %v4434
    %v4627 = vcvt.s32.f32 %v4435
    %v4628 = vcvt.s32.f32 %v4436
    %v4629 = vcvt.s32.f32 %v4437
    %v4630 = vcvt.s32.f32 %v4438
    %v4631 = vcvt.s32.f32 %v4439
    %v4632 = vcvt.s32.f32 %v4440
    %v4633 = vcvt.s32.f32 %v4441
    %v4634 = vcvt.s32.f32 %v4442
    %v4635 = vcvt.s32.f32 %v4443
    %v4636 = vcvt.s32.f32 %v4444
    %v4637 = vcvt.s32.f32 %v4445
    %v4638 = vcvt.s32.f32 %v4446
    %v4639 = vcvt.s32.f32 %v4447
    %v4640 = vcvt.s32.f32 %v4448
    %v4641 = vcvt.s32.f32 %v4449
    %v4642 = vcvt.s32.f32 %v4450
    %v4643 = vcvt.s32.f32 %v4451
    %v4644 = vcvt.s32.f32 %v4452
    %v4645 = vcvt.s32.f32 %v4453
    %v4646 = vcvt.s32.f32 %v4454
    %v4647 = vcvt.s32.f32 %v4455
    %v4648 = vadd.f32 %v3688, %v4456
    %v4649 = vadd.f32 %v3689, %v4457
    %v4650 = vadd.f32 %v3690, %v4458
    %v4651 = vadd.f32 %v3691, %v4459
    %v4652 = vadd.f32 %v3692, %v4460
    %v4653 = vadd.f32 %v3693, %v4461
    %v4654 = vadd.f32 %v3694, %v4462
    %v4655 = vadd.f32 %v3695, %v4463
    %v4656 = vadd.f32 %v3696, %v4464
    %v4657 = vadd.f32 %v3697, %v4465
    %v4658 = vadd.f32 %v3698, %v4466
    %v4659 = vadd.f32 %v3699, %v4467
    %v4660 = vadd.f32 %v3700, %v4468
    %v4661 = vadd.f32 %v3701, %v4469
    %v4662 = vadd.f32 %v3702, %v4470
    %v4663 = vadd.f32 %v3703, %v4471
    %v4664 = vadd.f32 %v3704, %v4472
    %v4665 = vadd.f32 %v3705, %v4473
    %v4666 = vadd.f32 %v3706, %v4474
    %v4667 = vadd.f32 %v3707, %v4475
    %v4668 = vadd.f32 %v3708, %v4476
    %v4669 = vadd.f32 %v3709, %v4477
    %v4670 = vadd.f32 %v3710, %v4478
    %v4671 = vadd.f32 %v3711, %v4479
    %v4672 = vadd.f32 %v3712, %v4480
    %v4673 = vadd.f32 %v3713, %v4481
    %v4674 = vadd.f32 %v3714, %v4482
    %v4675 = vadd.f32 %v3715, %v4483
    %v4676 = vadd.f32 %v3716, %v4484
    %v4677 = vadd.f32 %v3717, %v4485
    %v4678 = vadd.f32 %v3718, %v4486
    %v4679 = vadd.f32 %v3719, %v4487
    %v4680 = vadd.f32 %v3720, %v4488
    %v4681 = vadd.f32 %v3721, %v4489
    %v4682 = vadd.f32 %v3722, %v4490
    %v4683 = vadd.f32 %v3723, %v4491
    %v4684 = vadd.f32 %v3724, %v4492
    %v4685 = vadd.f32 %v3725, %v4493
    %v4686 = vadd.f32 %v3726, %v4494
    %v4687 = vadd.f32 %v3727, %v4495
    %v4688 = vadd.f32 %v3728, %v4496
    %v4689 = vadd.f32 %v3729, %v4497
    %v4690 = vadd.f32 %v3730, %v4498
    %v4691 = vadd.f32 %v3731, %v4499
    %v4692 = vadd.f32 %v3732, %v4500
    %v4693 = vadd.f32 %v3733, %v4501
    %v4694 = vadd.f32 %v3734, %v4502
    %v4695 = vadd.f32 %v3735, %v4503
    %v4696 = vadd.f32 %v3736, %v4504
    %v4697 = vadd.f32 %v3737, %v4505
    %v4698 = vadd.f32 %v3738, %v4506
    %v4699 = vadd.f32 %v3739, %v4507
    %v4700 = vadd.f32 %v3740, %v4508
    %v4701 = vadd.f32 %v3741, %v4509
    %v4702 = vadd.f32 %v3742, %v4510
    %v4703 = vadd.f32 %v3743, %v4511
    %v4704 = vadd.f32 %v3744, %v4512
    %v4705 = vadd.f32 %v3745, %v4513
    %v4706 = vadd.f32 %v3746, %v4514
    %v4707 = vadd.f32 %v3747, %v4515
    %v4708 = vadd.f32 %v3748, %v4516
    %v4709 = vadd.f32 %v3749, %v4517
    %v4710 = vadd.f32 %v3750, %v4518
    %v4711 = vadd.f32 %v3751, %v4519
    %v4712 = vadd.f32 %v3752, %v4520
    %v4713 = vadd.f32 %v3753, %v4521
    %v4714 = vadd.f32 %v3754, %v4522
    %v4715 = vadd.f32 %v3755, %v4523
    %v4716 = vadd.f32 %v3756, %v4524
    %v4717 = vadd.f32 %v3757, %v4525
    %v4718 = vadd.f32 %v3758, %v4526
    %v4719 = vadd.f32 %v3759, %v4527
    %v4720 = vadd.f32 %v3760, %v4528
    %v4721 = vadd.f32 %v3761, %v4529
    %v4722 = vadd.f32 %v3762, %v4530
    %v4723 = vadd.f32 %v3763, %v4531
    %v4724 = vadd.f32 %v3764, %v4532
    %v4725 = vadd.f32 %v3765, %v4533
    %v4726 = vadd.f32 %v3766, %v4534
    %v4727 = vadd.f32 %v3767, %v4535
    %v4728 = vadd.f32 %v3768, %v4536
    %v4729 = vadd.f32 %v3769, %v4537
    %v4730 = vadd.f32 %v3770, %v4538
    %v4731 = vadd.f32 %v3771, %v4539
    %v4732 = vadd.f32 %v3772, %v4540
    %v4733 = vadd.f32 %v3773, %v4541
    %v4734 = vadd.f32 %v3774, %v4542
    %v4735 = vadd.f32 %v3775, %v4543
    %v4736 = vadd.f32 %v3776, %v4544
    %v4737 = vadd.f32 %v3777, %v4545
    %v4738 = vadd.f32 %v3778, %v4546
    %v4739 = vadd.f32 %v3779, %v4547
    %v4740 = vadd.f32 %v3780, %v4548
    %v4741 = vadd.f32 %v3781, %v4549
    %v4742 = vadd.f32 %v3782, %v4550
    %v4743 = vadd.f32 %v3783, %v4551
    %v4744 = vadd.f32 %v3784, %v4552
    %v4745 = vadd.f32 %v3785, %v4553
    %v4746 = vadd.f32 %v3786, %v4554
    %v4747 = vadd.f32 %v3787, %v4555
    %v4748 = vadd.f32 %v3788, %v4556
    %v4749 = vadd.f32 %v3789, %v4557
    %v4750 = vadd.f32 %v3790, %v4558
    %v4751 = vadd.f32 %v3791, %v4559
    %v4752 = vadd.f32 %v3792, %v4560
    %v4753 = vadd.f32 %v3793, %v4561
    %v4754 = vadd.f32 %v3794, %v4562
    %v4755 = vadd.f32 %v3795, %v4563
    %v4756 = vadd.f32 %v3796, %v4564
    %v4757 = vadd.f32 %v3797, %v4565
    %v4758 = vadd.f32 %v3798, %v4566
    %v4759 = vadd.f32 %v3799, %v4567
    %v4760 = vadd.f32 %v3800, %v4568
    %v4761 = vadd.f32 %v3801, %v4569
    %v4762 = vadd.f32 %v3802, %v4570
    %v4763 = vadd.f32 %v3803, %v4571
    %v4764 = vadd.f32 %v3804, %v4572
    %v4765 = vadd.f32 %v3805, %v4573
    %v4766 = vadd.f32 %v3806, %v4574
    %v4767 = vadd.f32 %v3807, %v4575
    %v4768 = vadd.f32 %v3808, %v4576
    %v4769 = vadd.f32 %v3809, %v4577
    %v4770 = vadd.f32 %v3810, %v4578
    %v4771 = vadd.f32 %v3811, %v4579
    %v4772 = vadd.f32 %v3812, %v4580
    %v4773 = vadd.f32 %v3813, %v4581
    %v4774 = vadd.f32 %v3814, %v4582
    %v4775 = vadd.f32 %v3815, %v4583
    %v4776 = vadd.f32 %v3816, %v4584
    %v4777 = vadd.f32 %v3817, %v4585
    %v4778 = vadd.f32 %v3818, %v4586
    %v4779 = vadd.f32 %v3819, %v4587
    %v4780 = vadd.f32 %v3820, %v4588
    %v4781 = vadd.f32 %v3821, %v4589
    %v4782 = vadd.f32 %v3822, %v4590
    %v4783 = vadd.f32 %v3823, %v4591
    %v4784 = vadd.f32 %v3824, %v4592
    %v4785 = vadd.f32 %v3825, %v4593
    %v4786 = vadd.f32 %v3826, %v4594
    %v4787 = vadd.f32 %v3827, %v4595
    %v4788 = vadd.f32 %v3828, %v4596
    %v4789 = vadd.f32 %v3829, %v4597
    %v4790 = vadd.f32 %v3830, %v4598
    %v4791 = vadd.f32 %v3831, %v4599
    %v4792 = vadd.f32 %v3832, %v4600
    %v4793 = vadd.f32 %v3833, %v4601
    %v4794 = vadd.f32 %v3834, %v4602
    %v4795 = vadd.f32 %v3835, %v4603
    %v4796 = vadd.f32 %v3836, %v4604
    %v4797 = vadd.f32 %v3837, %v4605
    %v4798 = vadd.f32 %v3838, %v4606
    %v4799 = vadd.f32 %v3839, %v4607
    %v4800 = vadd.f32 %v3840, %v4608
    %v4801 = vadd.f32 %v3841, %v4609
    %v4802 = vadd.f32 %v3842, %v4610
    %v4803 = vadd.f32 %v3843, %v4611
    %v4804 = vadd.f32 %v3844, %v4612
    %v4805 = vadd.f32 %v3845, %v4613
    %v4806 = vadd.f32 %v3846, %v4614
    %v4807 = vadd.f32 %v3847, %v4615
    %v4808 = vadd.f32 %v3848, %v4616
    %v4809 = vadd.f32 %v3849, %v4617
    %v4810 = vadd.f32 %v3850, %v4618
    %v4811 = vadd.f32 %v3851, %v4619
    %v4812 = vadd.f32 %v3852, %v4620
    %v4813 = vadd.f32 %v3853, %v4621
    %v4814 = vadd.f32 %v3854, %v4622
    %v4815 = vadd.f32 %v3855, %v4623
    %v4816 = vadd.f32 %v3856, %v4624
    %v4817 = vadd.f32 %v3857, %v4625
    %v4818 = vadd.f32 %v3858, %v4626
    %v4819 = vadd.f32 %v3859, %v4627
    %v4820 = vadd.f32 %v3860, %v4628
    %v4821 = vadd.f32 %v3861, %v4629
    %v4822 = vadd.f32 %v3862, %v4630
    %v4823 = vadd.f32 %v3863, %v4631
    %v4824 = vadd.f32 %v3864, %v4632
    %v4825 = vadd.f32 %v3865, %v4633
    %v4826 = vadd.f32 %v3866, %v4634
    %v4827 = vadd.f32 %v3867, %v4635
    %v4828 = vadd.f32 %v3868, %v4636
    %v4829 = vadd.f32 %v3869, %v4637
    %v4830 = vadd.f32 %v3870, %v4638
    %v4831 = vadd.f32 %v3871, %v4639
    %v4832 = vadd.f32 %v3872, %v4640
    %v4833 = vadd.f32 %v3873, %v4641
    %v4834 = vadd.f32 %v3874, %v4642
    %v4835 = vadd.f32 %v3875, %v4643
    %v4836 = vadd.f32 %v3876, %v4644
    %v4837 = vadd.f32 %v3877, %v4645
    %v4838 = vadd.f32 %v3878, %v4646
    %v4839 = vadd.f32 %v3879, %v4647
    %v4840 = vadd.s32 %v35, 320
    %v4841 = vadd.s32 %v36, 320
    %v4842 = vadd.s32 %v37, 320
    %v4843 = vadd.s32 %v38, 320
    %v4844 = vadd.s32 %v39, 320
    %v4845 = vadd.s32 %v40, 320
    %v4846 = vadd.s32 %v41, 320
    %v4847 = vadd.s32 %v42, 320
    %v4848 = vadd.s32 %v43, 320
    %v4849 = vadd.s32 %v44, 320
    %v4850 = vadd.s32 %v45, 320
    %v4851 = vadd.s32 %v46, 320
    %v4852 = vadd.s32 %v47, 320
    %v4853 = vadd.s32 %v48, 320
    %v4854 = vadd.s32 %v49, 320
    %v4855 = vadd.s32 %v50, 320
    %v4856 = vadd.s32 %v51, 320
    %v4857 = vadd.s32 %v52, 320
    %v4858 = vadd.s32 %v53, 320
    %v4859 = vadd.s32 %v54, 320
    %v4860 = vadd.s32 %v55, 320
    %v4861 = vadd.s32 %v56, 320
    %v4862 = vadd.s32 %v57, 320
    %v4863 = vadd.s32 %v58, 320
    %v4864 = vadd.s32 %v59, 320
    %v4865 = vadd.s32 %v60, 320
    %v4866 = vadd.s32 %v61, 320
    %v4867 = vadd.s32 %v62, 320
    %v4868 = vadd.s32 %v63, 320
    %v4869 = vadd.s32 %v64, 320
    %v4870 = vadd.s32 %v65, 320
    %v4871 = vadd.s32 %v66, 320
    %v4872 = vadd.s32 %v67, 320
    %v4873 = vadd.s32 %v68, 320
    %v4874 = vadd.s32 %v69, 320
    %v4875 = vadd.s32 %v70, 320
    %v4876 = vadd.s32 %v71, 320
    %v4877 = vadd.s32 %v72, 320
    %v4878 = vadd.s32 %v73, 320
    %v4879 = vadd.s32 %v74, 320
    %v4880 = vadd.s32 %v75, 320
    %v4881 = vadd.s32 %v76, 320
    %v4882 = vadd.s32 %v77, 320
    %v4883 = vadd.s32 %v78, 320
    %v4884 = vadd.s32 %v79, 320
    %v4885 = vadd.s32 %v80, 320
    %v4886 = vadd.s32 %v81, 320
    %v4887 = vadd.s32 %v82, 320
    %4888 = vset.pattern.permute.xlu0 5
    %4889 = vperm.xlu0 %4888, %v4840
    %v4890 = vpop.permute.xlu0 %4889
    %4891 = vset.pattern.permute.xlu0 5
    %4892 = vperm.xlu0 %4891, %v4841
    %v4893 = vpop.permute.xlu0 %4892
    %4894 = vset.pattern.permute.xlu0 5
    %4895 = vperm.xlu0 %4894, %v4842
    %v4896 = vpop.permute.xlu0 %4895
    %4897 = vset.pattern.permute.xlu0 5
    %4898 = vperm.xlu0 %4897, %v4843
    %v4899 = vpop.permute.xlu0 %4898
    %4900 = vset.pattern.permute.xlu0 5
    %4901 = vperm.xlu0 %4900, %v4844
    %v4902 = vpop.permute.xlu0 %4901
    %4903 = vset.pattern.permute.xlu0 5
    %4904 = vperm.xlu0 %4903, %v4845
    %v4905 = vpop.permute.xlu0 %4904
    %4906 = vset.pattern.permute.xlu0 5
    %4907 = vperm.xlu0 %4906, %v4846
    %v4908 = vpop.permute.xlu0 %4907
    %4909 = vset.pattern.permute.xlu0 5
    %4910 = vperm.xlu0 %4909, %v4847
    %v4911 = vpop.permute.xlu0 %4910
    %4912 = vset.pattern.permute.xlu0 5
    %4913 = vperm.xlu0 %4912, %v4848
    %v4914 = vpop.permute.xlu0 %4913
    %4915 = vset.pattern.permute.xlu0 5
    %4916 = vperm.xlu0 %4915, %v4849
    %v4917 = vpop.permute.xlu0 %4916
    %4918 = vset.pattern.permute.xlu0 5
    %4919 = vperm.xlu0 %4918, %v4850
    %v4920 = vpop.permute.xlu0 %4919
    %4921 = vset.pattern.permute.xlu0 5
    %4922 = vperm.xlu0 %4921, %v4851
    %v4923 = vpop.permute.xlu0 %4922
    %4924 = vset.pattern.permute.xlu0 5
    %4925 = vperm.xlu0 %4924, %v4852
    %v4926 = vpop.permute.xlu0 %4925
    %4927 = vset.pattern.permute.xlu0 5
    %4928 = vperm.xlu0 %4927, %v4853
    %v4929 = vpop.permute.xlu0 %4928
    %4930 = vset.pattern.permute.xlu0 5
    %4931 = vperm.xlu0 %4930, %v4854
    %v4932 = vpop.permute.xlu0 %4931
    %4933 = vset.pattern.permute.xlu0 5
    %4934 = vperm.xlu0 %4933, %v4855
    %v4935 = vpop.permute.xlu0 %4934
    %4936 = vset.pattern.permute.xlu0 5
    %4937 = vperm.xlu0 %4936, %v4856
    %v4938 = vpop.permute.xlu0 %4937
    %4939 = vset.pattern.permute.xlu0 5
    %4940 = vperm.xlu0 %4939, %v4857
    %v4941 = vpop.permute.xlu0 %4940
    %4942 = vset.pattern.permute.xlu0 5
    %4943 = vperm.xlu0 %4942, %v4858
    %v4944 = vpop.permute.xlu0 %4943
    %4945 = vset.pattern.permute.xlu0 5
    %4946 = vperm.xlu0 %4945, %v4859
    %v4947 = vpop.permute.xlu0 %4946
    %4948 = vset.pattern.permute.xlu0 5
    %4949 = vperm.xlu0 %4948, %v4860
    %v4950 = vpop.permute.xlu0 %4949
    %4951 = vset.pattern.permute.xlu0 5
    %4952 = vperm.xlu0 %4951, %v4861
    %v4953 = vpop.permute.xlu0 %4952
    %4954 = vset.pattern.permute.xlu0 5
    %4955 = vperm.xlu0 %4954, %v4862
    %v4956 = vpop.permute.xlu0 %4955
    %4957 = vset.pattern.permute.xlu0 5
    %4958 = vperm.xlu0 %4957, %v4863
    %v4959 = vpop.permute.xlu0 %4958
    %4960 = vset.pattern.permute.xlu0 5
    %4961 = vperm.xlu0 %4960, %v4864
    %v4962 = vpop.permute.xlu0 %4961
    %4963 = vset.pattern.permute.xlu0 5
    %4964 = vperm.xlu0 %4963, %v4865
    %v4965 = vpop.permute.xlu0 %4964
    %4966 = vset.pattern.permute.xlu0 5
    %4967 = vperm.xlu0 %4966, %v4866
    %v4968 = vpop.permute.xlu0 %4967
    %4969 = vset.pattern.permute.xlu0 5
    %4970 = vperm.xlu0 %4969, %v4867
    %v4971 = vpop.permute.xlu0 %4970
    %4972 = vset.pattern.permute.xlu0 5
    %4973 = vperm.xlu0 %4972, %v4868
    %v4974 = vpop.permute.xlu0 %4973
    %4975 = vset.pattern.permute.xlu0 5
    %4976 = vperm.xlu0 %4975, %v4869
    %v4977 = vpop.permute.xlu0 %4976
    %4978 = vset.pattern.permute.xlu0 5
    %4979 = vperm.xlu0 %4978, %v4870
    %v4980 = vpop.permute.xlu0 %4979
    %4981 = vset.pattern.permute.xlu0 5
    %4982 = vperm.xlu0 %4981, %v4871
    %v4983 = vpop.permute.xlu0 %4982
    %4984 = vset.pattern.permute.xlu0 5
    %4985 = vperm.xlu0 %4984, %v4872
    %v4986 = vpop.permute.xlu0 %4985
    %4987 = vset.pattern.permute.xlu0 5
    %4988 = vperm.xlu0 %4987, %v4873
    %v4989 = vpop.permute.xlu0 %4988
    %4990 = vset.pattern.permute.xlu0 5
    %4991 = vperm.xlu0 %4990, %v4874
    %v4992 = vpop.permute.xlu0 %4991
    %4993 = vset.pattern.permute.xlu0 5
    %4994 = vperm.xlu0 %4993, %v4875
    %v4995 = vpop.permute.xlu0 %4994
    %4996 = vset.pattern.permute.xlu0 5
    %4997 = vperm.xlu0 %4996, %v4876
    %v4998 = vpop.permute.xlu0 %4997
    %4999 = vset.pattern.permute.xlu0 5
    %5000 = vperm.xlu0 %4999, %v4877
    %v5001 = vpop.permute.xlu0 %5000
    %5002 = vset.pattern.permute.xlu0 5
    %5003 = vperm.xlu0 %5002, %v4878
    %v5004 = vpop.permute.xlu0 %5003
    %5005 = vset.pattern.permute.xlu0 5
    %5006 = vperm.xlu0 %5005, %v4879
    %v5007 = vpop.permute.xlu0 %5006
    %5008 = vset.pattern.permute.xlu0 5
    %5009 = vperm.xlu0 %5008, %v4880
    %v5010 = vpop.permute.xlu0 %5009
    %5011 = vset.pattern.permute.xlu0 5
    %5012 = vperm.xlu0 %5011, %v4881
    %v5013 = vpop.permute.xlu0 %5012
    %5014 = vset.pattern.permute.xlu0 5
    %5015 = vperm.xlu0 %5014, %v4882
    %v5016 = vpop.permute.xlu0 %5015
    %5017 = vset.pattern.permute.xlu0 5
    %5018 = vperm.xlu0 %5017, %v4883
    %v5019 = vpop.permute.xlu0 %5018
    %5020 = vset.pattern.permute.xlu0 5
    %5021 = vperm.xlu0 %5020, %v4884
    %v5022 = vpop.permute.xlu0 %5021
    %5023 = vset.pattern.permute.xlu0 5
    %5024 = vperm.xlu0 %5023, %v4885
    %v5025 = vpop.permute.xlu0 %5024
    %5026 = vset.pattern.permute.xlu0 5
    %5027 = vperm.xlu0 %5026, %v4886
    %v5028 = vpop.permute.xlu0 %5027
    %5029 = vset.pattern.permute.xlu0 5
    %5030 = vperm.xlu0 %5029, %v4887
    %v5031 = vpop.permute.xlu0 %5030
    %vm5032 = vcmp.eq.s32.totalorder %v4890, %v84
    %vm5033 = vcmp.eq.s32.totalorder %v4890, %v85
    %vm5034 = vcmp.eq.s32.totalorder %v4890, %v86
    %vm5035 = vcmp.eq.s32.totalorder %v4890, %v87
    %vm5036 = vcmp.eq.s32.totalorder %v4893, %v84
    %vm5037 = vcmp.eq.s32.totalorder %v4893, %v85
    %vm5038 = vcmp.eq.s32.totalorder %v4893, %v86
    %vm5039 = vcmp.eq.s32.totalorder %v4893, %v87
    %vm5040 = vcmp.eq.s32.totalorder %v4896, %v84
    %vm5041 = vcmp.eq.s32.totalorder %v4896, %v85
    %vm5042 = vcmp.eq.s32.totalorder %v4896, %v86
    %vm5043 = vcmp.eq.s32.totalorder %v4896, %v87
    %vm5044 = vcmp.eq.s32.totalorder %v4899, %v84
    %vm5045 = vcmp.eq.s32.totalorder %v4899, %v85
    %vm5046 = vcmp.eq.s32.totalorder %v4899, %v86
    %vm5047 = vcmp.eq.s32.totalorder %v4899, %v87
    %vm5048 = vcmp.eq.s32.totalorder %v4902, %v84
    %vm5049 = vcmp.eq.s32.totalorder %v4902, %v85
    %vm5050 = vcmp.eq.s32.totalorder %v4902, %v86
    %vm5051 = vcmp.eq.s32.totalorder %v4902, %v87
    %vm5052 = vcmp.eq.s32.totalorder %v4905, %v84
    %vm5053 = vcmp.eq.s32.totalorder %v4905, %v85
    %vm5054 = vcmp.eq.s32.totalorder %v4905, %v86
    %vm5055 = vcmp.eq.s32.totalorder %v4905, %v87
    %vm5056 = vcmp.eq.s32.totalorder %v4908, %v84
    %vm5057 = vcmp.eq.s32.totalorder %v4908, %v85
    %vm5058 = vcmp.eq.s32.totalorder %v4908, %v86
    %vm5059 = vcmp.eq.s32.totalorder %v4908, %v87
    %vm5060 = vcmp.eq.s32.totalorder %v4911, %v84
    %vm5061 = vcmp.eq.s32.totalorder %v4911, %v85
    %vm5062 = vcmp.eq.s32.totalorder %v4911, %v86
    %vm5063 = vcmp.eq.s32.totalorder %v4911, %v87
    %vm5064 = vcmp.eq.s32.totalorder %v4914, %v84
    %vm5065 = vcmp.eq.s32.totalorder %v4914, %v85
    %vm5066 = vcmp.eq.s32.totalorder %v4914, %v86
    %vm5067 = vcmp.eq.s32.totalorder %v4914, %v87
    %vm5068 = vcmp.eq.s32.totalorder %v4917, %v84
    %vm5069 = vcmp.eq.s32.totalorder %v4917, %v85
    %vm5070 = vcmp.eq.s32.totalorder %v4917, %v86
    %vm5071 = vcmp.eq.s32.totalorder %v4917, %v87
    %vm5072 = vcmp.eq.s32.totalorder %v4920, %v84
    %vm5073 = vcmp.eq.s32.totalorder %v4920, %v85
    %vm5074 = vcmp.eq.s32.totalorder %v4920, %v86
    %vm5075 = vcmp.eq.s32.totalorder %v4920, %v87
    %vm5076 = vcmp.eq.s32.totalorder %v4923, %v84
    %vm5077 = vcmp.eq.s32.totalorder %v4923, %v85
    %vm5078 = vcmp.eq.s32.totalorder %v4923, %v86
    %vm5079 = vcmp.eq.s32.totalorder %v4923, %v87
    %vm5080 = vcmp.eq.s32.totalorder %v4926, %v84
    %vm5081 = vcmp.eq.s32.totalorder %v4926, %v85
    %vm5082 = vcmp.eq.s32.totalorder %v4926, %v86
    %vm5083 = vcmp.eq.s32.totalorder %v4926, %v87
    %vm5084 = vcmp.eq.s32.totalorder %v4929, %v84
    %vm5085 = vcmp.eq.s32.totalorder %v4929, %v85
    %vm5086 = vcmp.eq.s32.totalorder %v4929, %v86
    %vm5087 = vcmp.eq.s32.totalorder %v4929, %v87
    %vm5088 = vcmp.eq.s32.totalorder %v4932, %v84
    %vm5089 = vcmp.eq.s32.totalorder %v4932, %v85
    %vm5090 = vcmp.eq.s32.totalorder %v4932, %v86
    %vm5091 = vcmp.eq.s32.totalorder %v4932, %v87
    %vm5092 = vcmp.eq.s32.totalorder %v4935, %v84
    %vm5093 = vcmp.eq.s32.totalorder %v4935, %v85
    %vm5094 = vcmp.eq.s32.totalorder %v4935, %v86
    %vm5095 = vcmp.eq.s32.totalorder %v4935, %v87
    %vm5096 = vcmp.eq.s32.totalorder %v4938, %v84
    %vm5097 = vcmp.eq.s32.totalorder %v4938, %v85
    %vm5098 = vcmp.eq.s32.totalorder %v4938, %v86
    %vm5099 = vcmp.eq.s32.totalorder %v4938, %v87
    %vm5100 = vcmp.eq.s32.totalorder %v4941, %v84
    %vm5101 = vcmp.eq.s32.totalorder %v4941, %v85
    %vm5102 = vcmp.eq.s32.totalorder %v4941, %v86
    %vm5103 = vcmp.eq.s32.totalorder %v4941, %v87
    %vm5104 = vcmp.eq.s32.totalorder %v4944, %v84
    %vm5105 = vcmp.eq.s32.totalorder %v4944, %v85
    %vm5106 = vcmp.eq.s32.totalorder %v4944, %v86
    %vm5107 = vcmp.eq.s32.totalorder %v4944, %v87
    %vm5108 = vcmp.eq.s32.totalorder %v4947, %v84
    %vm5109 = vcmp.eq.s32.totalorder %v4947, %v85
    %vm5110 = vcmp.eq.s32.totalorder %v4947, %v86
    %vm5111 = vcmp.eq.s32.totalorder %v4947, %v87
    %vm5112 = vcmp.eq.s32.totalorder %v4950, %v84
    %vm5113 = vcmp.eq.s32.totalorder %v4950, %v85
    %vm5114 = vcmp.eq.s32.totalorder %v4950, %v86
    %vm5115 = vcmp.eq.s32.totalorder %v4950, %v87
    %vm5116 = vcmp.eq.s32.totalorder %v4953, %v84
    %vm5117 = vcmp.eq.s32.totalorder %v4953, %v85
    %vm5118 = vcmp.eq.s32.totalorder %v4953, %v86
    %vm5119 = vcmp.eq.s32.totalorder %v4953, %v87
    %vm5120 = vcmp.eq.s32.totalorder %v4956, %v84
    %vm5121 = vcmp.eq.s32.totalorder %v4956, %v85
    %vm5122 = vcmp.eq.s32.totalorder %v4956, %v86
    %vm5123 = vcmp.eq.s32.totalorder %v4956, %v87
    %vm5124 = vcmp.eq.s32.totalorder %v4959, %v84
    %vm5125 = vcmp.eq.s32.totalorder %v4959, %v85
    %vm5126 = vcmp.eq.s32.totalorder %v4959, %v86
    %vm5127 = vcmp.eq.s32.totalorder %v4959, %v87
    %vm5128 = vcmp.eq.s32.totalorder %v4962, %v84
    %vm5129 = vcmp.eq.s32.totalorder %v4962, %v85
    %vm5130 = vcmp.eq.s32.totalorder %v4962, %v86
    %vm5131 = vcmp.eq.s32.totalorder %v4962, %v87
    %vm5132 = vcmp.eq.s32.totalorder %v4965, %v84
    %vm5133 = vcmp.eq.s32.totalorder %v4965, %v85
    %vm5134 = vcmp.eq.s32.totalorder %v4965, %v86
    %vm5135 = vcmp.eq.s32.totalorder %v4965, %v87
    %vm5136 = vcmp.eq.s32.totalorder %v4968, %v84
    %vm5137 = vcmp.eq.s32.totalorder %v4968, %v85
    %vm5138 = vcmp.eq.s32.totalorder %v4968, %v86
    %vm5139 = vcmp.eq.s32.totalorder %v4968, %v87
    %vm5140 = vcmp.eq.s32.totalorder %v4971, %v84
    %vm5141 = vcmp.eq.s32.totalorder %v4971, %v85
    %vm5142 = vcmp.eq.s32.totalorder %v4971, %v86
    %vm5143 = vcmp.eq.s32.totalorder %v4971, %v87
    %vm5144 = vcmp.eq.s32.totalorder %v4974, %v84
    %vm5145 = vcmp.eq.s32.totalorder %v4974, %v85
    %vm5146 = vcmp.eq.s32.totalorder %v4974, %v86
    %vm5147 = vcmp.eq.s32.totalorder %v4974, %v87
    %vm5148 = vcmp.eq.s32.totalorder %v4977, %v84
    %vm5149 = vcmp.eq.s32.totalorder %v4977, %v85
    %vm5150 = vcmp.eq.s32.totalorder %v4977, %v86
    %vm5151 = vcmp.eq.s32.totalorder %v4977, %v87
    %vm5152 = vcmp.eq.s32.totalorder %v4980, %v84
    %vm5153 = vcmp.eq.s32.totalorder %v4980, %v85
    %vm5154 = vcmp.eq.s32.totalorder %v4980, %v86
    %vm5155 = vcmp.eq.s32.totalorder %v4980, %v87
    %vm5156 = vcmp.eq.s32.totalorder %v4983, %v84
    %vm5157 = vcmp.eq.s32.totalorder %v4983, %v85
    %vm5158 = vcmp.eq.s32.totalorder %v4983, %v86
    %vm5159 = vcmp.eq.s32.totalorder %v4983, %v87
    %vm5160 = vcmp.eq.s32.totalorder %v4986, %v84
    %vm5161 = vcmp.eq.s32.totalorder %v4986, %v85
    %vm5162 = vcmp.eq.s32.totalorder %v4986, %v86
    %vm5163 = vcmp.eq.s32.totalorder %v4986, %v87
    %vm5164 = vcmp.eq.s32.totalorder %v4989, %v84
    %vm5165 = vcmp.eq.s32.totalorder %v4989, %v85
    %vm5166 = vcmp.eq.s32.totalorder %v4989, %v86
    %vm5167 = vcmp.eq.s32.totalorder %v4989, %v87
    %vm5168 = vcmp.eq.s32.totalorder %v4992, %v84
    %vm5169 = vcmp.eq.s32.totalorder %v4992, %v85
    %vm5170 = vcmp.eq.s32.totalorder %v4992, %v86
    %vm5171 = vcmp.eq.s32.totalorder %v4992, %v87
    %vm5172 = vcmp.eq.s32.totalorder %v4995, %v84
    %vm5173 = vcmp.eq.s32.totalorder %v4995, %v85
    %vm5174 = vcmp.eq.s32.totalorder %v4995, %v86
    %vm5175 = vcmp.eq.s32.totalorder %v4995, %v87
    %vm5176 = vcmp.eq.s32.totalorder %v4998, %v84
    %vm5177 = vcmp.eq.s32.totalorder %v4998, %v85
    %vm5178 = vcmp.eq.s32.totalorder %v4998, %v86
    %vm5179 = vcmp.eq.s32.totalorder %v4998, %v87
    %vm5180 = vcmp.eq.s32.totalorder %v5001, %v84
    %vm5181 = vcmp.eq.s32.totalorder %v5001, %v85
    %vm5182 = vcmp.eq.s32.totalorder %v5001, %v86
    %vm5183 = vcmp.eq.s32.totalorder %v5001, %v87
    %vm5184 = vcmp.eq.s32.totalorder %v5004, %v84
    %vm5185 = vcmp.eq.s32.totalorder %v5004, %v85
    %vm5186 = vcmp.eq.s32.totalorder %v5004, %v86
    %vm5187 = vcmp.eq.s32.totalorder %v5004, %v87
    %vm5188 = vcmp.eq.s32.totalorder %v5007, %v84
    %vm5189 = vcmp.eq.s32.totalorder %v5007, %v85
    %vm5190 = vcmp.eq.s32.totalorder %v5007, %v86
    %vm5191 = vcmp.eq.s32.totalorder %v5007, %v87
    %vm5192 = vcmp.eq.s32.totalorder %v5010, %v84
    %vm5193 = vcmp.eq.s32.totalorder %v5010, %v85
    %vm5194 = vcmp.eq.s32.totalorder %v5010, %v86
    %vm5195 = vcmp.eq.s32.totalorder %v5010, %v87
    %vm5196 = vcmp.eq.s32.totalorder %v5013, %v84
    %vm5197 = vcmp.eq.s32.totalorder %v5013, %v85
    %vm5198 = vcmp.eq.s32.totalorder %v5013, %v86
    %vm5199 = vcmp.eq.s32.totalorder %v5013, %v87
    %vm5200 = vcmp.eq.s32.totalorder %v5016, %v84
    %vm5201 = vcmp.eq.s32.totalorder %v5016, %v85
    %vm5202 = vcmp.eq.s32.totalorder %v5016, %v86
    %vm5203 = vcmp.eq.s32.totalorder %v5016, %v87
    %vm5204 = vcmp.eq.s32.totalorder %v5019, %v84
    %vm5205 = vcmp.eq.s32.totalorder %v5019, %v85
    %vm5206 = vcmp.eq.s32.totalorder %v5019, %v86
    %vm5207 = vcmp.eq.s32.totalorder %v5019, %v87
    %vm5208 = vcmp.eq.s32.totalorder %v5022, %v84
    %vm5209 = vcmp.eq.s32.totalorder %v5022, %v85
    %vm5210 = vcmp.eq.s32.totalorder %v5022, %v86
    %vm5211 = vcmp.eq.s32.totalorder %v5022, %v87
    %vm5212 = vcmp.eq.s32.totalorder %v5025, %v84
    %vm5213 = vcmp.eq.s32.totalorder %v5025, %v85
    %vm5214 = vcmp.eq.s32.totalorder %v5025, %v86
    %vm5215 = vcmp.eq.s32.totalorder %v5025, %v87
    %vm5216 = vcmp.eq.s32.totalorder %v5028, %v84
    %vm5217 = vcmp.eq.s32.totalorder %v5028, %v85
    %vm5218 = vcmp.eq.s32.totalorder %v5028, %v86
    %vm5219 = vcmp.eq.s32.totalorder %v5028, %v87
    %vm5220 = vcmp.eq.s32.totalorder %v5031, %v84
    %vm5221 = vcmp.eq.s32.totalorder %v5031, %v85
    %vm5222 = vcmp.eq.s32.totalorder %v5031, %v86
    %vm5223 = vcmp.eq.s32.totalorder %v5031, %v87
    %v5224 = vsel %vm5032, 1, 0
    %v5225 = vsel %vm5033, 1, 0
    %v5226 = vsel %vm5034, 1, 0
    %v5227 = vsel %vm5035, 1, 0
    %v5228 = vsel %vm5036, 1, 0
    %v5229 = vsel %vm5037, 1, 0
    %v5230 = vsel %vm5038, 1, 0
    %v5231 = vsel %vm5039, 1, 0
    %v5232 = vsel %vm5040, 1, 0
    %v5233 = vsel %vm5041, 1, 0
    %v5234 = vsel %vm5042, 1, 0
    %v5235 = vsel %vm5043, 1, 0
    %v5236 = vsel %vm5044, 1, 0
    %v5237 = vsel %vm5045, 1, 0
    %v5238 = vsel %vm5046, 1, 0
    %v5239 = vsel %vm5047, 1, 0
    %v5240 = vsel %vm5048, 1, 0
    %v5241 = vsel %vm5049, 1, 0
    %v5242 = vsel %vm5050, 1, 0
    %v5243 = vsel %vm5051, 1, 0
    %v5244 = vsel %vm5052, 1, 0
    %v5245 = vsel %vm5053, 1, 0
    %v5246 = vsel %vm5054, 1, 0
    %v5247 = vsel %vm5055, 1, 0
    %v5248 = vsel %vm5056, 1, 0
    %v5249 = vsel %vm5057, 1, 0
    %v5250 = vsel %vm5058, 1, 0
    %v5251 = vsel %vm5059, 1, 0
    %v5252 = vsel %vm5060, 1, 0
    %v5253 = vsel %vm5061, 1, 0
    %v5254 = vsel %vm5062, 1, 0
    %v5255 = vsel %vm5063, 1, 0
    %v5256 = vsel %vm5064, 1, 0
    %v5257 = vsel %vm5065, 1, 0
    %v5258 = vsel %vm5066, 1, 0
    %v5259 = vsel %vm5067, 1, 0
    %v5260 = vsel %vm5068, 1, 0
    %v5261 = vsel %vm5069, 1, 0
    %v5262 = vsel %vm5070, 1, 0
    %v5263 = vsel %vm5071, 1, 0
    %v5264 = vsel %vm5072, 1, 0
    %v5265 = vsel %vm5073, 1, 0
    %v5266 = vsel %vm5074, 1, 0
    %v5267 = vsel %vm5075, 1, 0
    %v5268 = vsel %vm5076, 1, 0
    %v5269 = vsel %vm5077, 1, 0
    %v5270 = vsel %vm5078, 1, 0
    %v5271 = vsel %vm5079, 1, 0
    %v5272 = vsel %vm5080, 1, 0
    %v5273 = vsel %vm5081, 1, 0
    %v5274 = vsel %vm5082, 1, 0
    %v5275 = vsel %vm5083, 1, 0
    %v5276 = vsel %vm5084, 1, 0
    %v5277 = vsel %vm5085, 1, 0
    %v5278 = vsel %vm5086, 1, 0
    %v5279 = vsel %vm5087, 1, 0
    %v5280 = vsel %vm5088, 1, 0
    %v5281 = vsel %vm5089, 1, 0
    %v5282 = vsel %vm5090, 1, 0
    %v5283 = vsel %vm5091, 1, 0
    %v5284 = vsel %vm5092, 1, 0
    %v5285 = vsel %vm5093, 1, 0
    %v5286 = vsel %vm5094, 1, 0
    %v5287 = vsel %vm5095, 1, 0
    %v5288 = vsel %vm5096, 1, 0
    %v5289 = vsel %vm5097, 1, 0
    %v5290 = vsel %vm5098, 1, 0
    %v5291 = vsel %vm5099, 1, 0
    %v5292 = vsel %vm5100, 1, 0
    %v5293 = vsel %vm5101, 1, 0
    %v5294 = vsel %vm5102, 1, 0
    %v5295 = vsel %vm5103, 1, 0
    %v5296 = vsel %vm5104, 1, 0
    %v5297 = vsel %vm5105, 1, 0
    %v5298 = vsel %vm5106, 1, 0
    %v5299 = vsel %vm5107, 1, 0
    %v5300 = vsel %vm5108, 1, 0
    %v5301 = vsel %vm5109, 1, 0
    %v5302 = vsel %vm5110, 1, 0
    %v5303 = vsel %vm5111, 1, 0
    %v5304 = vsel %vm5112, 1, 0
    %v5305 = vsel %vm5113, 1, 0
    %v5306 = vsel %vm5114, 1, 0
    %v5307 = vsel %vm5115, 1, 0
    %v5308 = vsel %vm5116, 1, 0
    %v5309 = vsel %vm5117, 1, 0
    %v5310 = vsel %vm5118, 1, 0
    %v5311 = vsel %vm5119, 1, 0
    %v5312 = vsel %vm5120, 1, 0
    %v5313 = vsel %vm5121, 1, 0
    %v5314 = vsel %vm5122, 1, 0
    %v5315 = vsel %vm5123, 1, 0
    %v5316 = vsel %vm5124, 1, 0
    %v5317 = vsel %vm5125, 1, 0
    %v5318 = vsel %vm5126, 1, 0
    %v5319 = vsel %vm5127, 1, 0
    %v5320 = vsel %vm5128, 1, 0
    %v5321 = vsel %vm5129, 1, 0
    %v5322 = vsel %vm5130, 1, 0
    %v5323 = vsel %vm5131, 1, 0
    %v5324 = vsel %vm5132, 1, 0
    %v5325 = vsel %vm5133, 1, 0
    %v5326 = vsel %vm5134, 1, 0
    %v5327 = vsel %vm5135, 1, 0
    %v5328 = vsel %vm5136, 1, 0
    %v5329 = vsel %vm5137, 1, 0
    %v5330 = vsel %vm5138, 1, 0
    %v5331 = vsel %vm5139, 1, 0
    %v5332 = vsel %vm5140, 1, 0
    %v5333 = vsel %vm5141, 1, 0
    %v5334 = vsel %vm5142, 1, 0
    %v5335 = vsel %vm5143, 1, 0
    %v5336 = vsel %vm5144, 1, 0
    %v5337 = vsel %vm5145, 1, 0
    %v5338 = vsel %vm5146, 1, 0
    %v5339 = vsel %vm5147, 1, 0
    %v5340 = vsel %vm5148, 1, 0
    %v5341 = vsel %vm5149, 1, 0
    %v5342 = vsel %vm5150, 1, 0
    %v5343 = vsel %vm5151, 1, 0
    %v5344 = vsel %vm5152, 1, 0
    %v5345 = vsel %vm5153, 1, 0
    %v5346 = vsel %vm5154, 1, 0
    %v5347 = vsel %vm5155, 1, 0
    %v5348 = vsel %vm5156, 1, 0
    %v5349 = vsel %vm5157, 1, 0
    %v5350 = vsel %vm5158, 1, 0
    %v5351 = vsel %vm5159, 1, 0
    %v5352 = vsel %vm5160, 1, 0
    %v5353 = vsel %vm5161, 1, 0
    %v5354 = vsel %vm5162, 1, 0
    %v5355 = vsel %vm5163, 1, 0
    %v5356 = vsel %vm5164, 1, 0
    %v5357 = vsel %vm5165, 1, 0
    %v5358 = vsel %vm5166, 1, 0
    %v5359 = vsel %vm5167, 1, 0
    %v5360 = vsel %vm5168, 1, 0
    %v5361 = vsel %vm5169, 1, 0
    %v5362 = vsel %vm5170, 1, 0
    %v5363 = vsel %vm5171, 1, 0
    %v5364 = vsel %vm5172, 1, 0
    %v5365 = vsel %vm5173, 1, 0
    %v5366 = vsel %vm5174, 1, 0
    %v5367 = vsel %vm5175, 1, 0
    %v5368 = vsel %vm5176, 1, 0
    %v5369 = vsel %vm5177, 1, 0
    %v5370 = vsel %vm5178, 1, 0
    %v5371 = vsel %vm5179, 1, 0
    %v5372 = vsel %vm5180, 1, 0
    %v5373 = vsel %vm5181, 1, 0
    %v5374 = vsel %vm5182, 1, 0
    %v5375 = vsel %vm5183, 1, 0
    %v5376 = vsel %vm5184, 1, 0
    %v5377 = vsel %vm5185, 1, 0
    %v5378 = vsel %vm5186, 1, 0
    %v5379 = vsel %vm5187, 1, 0
    %v5380 = vsel %vm5188, 1, 0
    %v5381 = vsel %vm5189, 1, 0
    %v5382 = vsel %vm5190, 1, 0
    %v5383 = vsel %vm5191, 1, 0
    %v5384 = vsel %vm5192, 1, 0
    %v5385 = vsel %vm5193, 1, 0
    %v5386 = vsel %vm5194, 1, 0
    %v5387 = vsel %vm5195, 1, 0
    %v5388 = vsel %vm5196, 1, 0
    %v5389 = vsel %vm5197, 1, 0
    %v5390 = vsel %vm5198, 1, 0
    %v5391 = vsel %vm5199, 1, 0
    %v5392 = vsel %vm5200, 1, 0
    %v5393 = vsel %vm5201, 1, 0
    %v5394 = vsel %vm5202, 1, 0
    %v5395 = vsel %vm5203, 1, 0
    %v5396 = vsel %vm5204, 1, 0
    %v5397 = vsel %vm5205, 1, 0
    %v5398 = vsel %vm5206, 1, 0
    %v5399 = vsel %vm5207, 1, 0
    %v5400 = vsel %vm5208, 1, 0
    %v5401 = vsel %vm5209, 1, 0
    %v5402 = vsel %vm5210, 1, 0
    %v5403 = vsel %vm5211, 1, 0
    %v5404 = vsel %vm5212, 1, 0
    %v5405 = vsel %vm5213, 1, 0
    %v5406 = vsel %vm5214, 1, 0
    %v5407 = vsel %vm5215, 1, 0
    %v5408 = vsel %vm5216, 1, 0
    %v5409 = vsel %vm5217, 1, 0
    %v5410 = vsel %vm5218, 1, 0
    %v5411 = vsel %vm5219, 1, 0
    %v5412 = vsel %vm5220, 1, 0
    %v5413 = vsel %vm5221, 1, 0
    %v5414 = vsel %vm5222, 1, 0
    %v5415 = vsel %vm5223, 1, 0
    %v5416 = vcvt.s32.f32 %v5224
    %v5417 = vcvt.s32.f32 %v5225
    %v5418 = vcvt.s32.f32 %v5226
    %v5419 = vcvt.s32.f32 %v5227
    %v5420 = vcvt.s32.f32 %v5228
    %v5421 = vcvt.s32.f32 %v5229
    %v5422 = vcvt.s32.f32 %v5230
    %v5423 = vcvt.s32.f32 %v5231
    %v5424 = vcvt.s32.f32 %v5232
    %v5425 = vcvt.s32.f32 %v5233
    %v5426 = vcvt.s32.f32 %v5234
    %v5427 = vcvt.s32.f32 %v5235
    %v5428 = vcvt.s32.f32 %v5236
    %v5429 = vcvt.s32.f32 %v5237
    %v5430 = vcvt.s32.f32 %v5238
    %v5431 = vcvt.s32.f32 %v5239
    %v5432 = vcvt.s32.f32 %v5240
    %v5433 = vcvt.s32.f32 %v5241
    %v5434 = vcvt.s32.f32 %v5242
    %v5435 = vcvt.s32.f32 %v5243
    %v5436 = vcvt.s32.f32 %v5244
    %v5437 = vcvt.s32.f32 %v5245
    %v5438 = vcvt.s32.f32 %v5246
    %v5439 = vcvt.s32.f32 %v5247
    %v5440 = vcvt.s32.f32 %v5248
    %v5441 = vcvt.s32.f32 %v5249
    %v5442 = vcvt.s32.f32 %v5250
    %v5443 = vcvt.s32.f32 %v5251
    %v5444 = vcvt.s32.f32 %v5252
    %v5445 = vcvt.s32.f32 %v5253
    %v5446 = vcvt.s32.f32 %v5254
    %v5447 = vcvt.s32.f32 %v5255
    %v5448 = vcvt.s32.f32 %v5256
    %v5449 = vcvt.s32.f32 %v5257
    %v5450 = vcvt.s32.f32 %v5258
    %v5451 = vcvt.s32.f32 %v5259
    %v5452 = vcvt.s32.f32 %v5260
    %v5453 = vcvt.s32.f32 %v5261
    %v5454 = vcvt.s32.f32 %v5262
    %v5455 = vcvt.s32.f32 %v5263
    %v5456 = vcvt.s32.f32 %v5264
    %v5457 = vcvt.s32.f32 %v5265
    %v5458 = vcvt.s32.f32 %v5266
    %v5459 = vcvt.s32.f32 %v5267
    %v5460 = vcvt.s32.f32 %v5268
    %v5461 = vcvt.s32.f32 %v5269
    %v5462 = vcvt.s32.f32 %v5270
    %v5463 = vcvt.s32.f32 %v5271
    %v5464 = vcvt.s32.f32 %v5272
    %v5465 = vcvt.s32.f32 %v5273
    %v5466 = vcvt.s32.f32 %v5274
    %v5467 = vcvt.s32.f32 %v5275
    %v5468 = vcvt.s32.f32 %v5276
    %v5469 = vcvt.s32.f32 %v5277
    %v5470 = vcvt.s32.f32 %v5278
    %v5471 = vcvt.s32.f32 %v5279
    %v5472 = vcvt.s32.f32 %v5280
    %v5473 = vcvt.s32.f32 %v5281
    %v5474 = vcvt.s32.f32 %v5282
    %v5475 = vcvt.s32.f32 %v5283
    %v5476 = vcvt.s32.f32 %v5284
    %v5477 = vcvt.s32.f32 %v5285
    %v5478 = vcvt.s32.f32 %v5286
    %v5479 = vcvt.s32.f32 %v5287
    %v5480 = vcvt.s32.f32 %v5288
    %v5481 = vcvt.s32.f32 %v5289
    %v5482 = vcvt.s32.f32 %v5290
    %v5483 = vcvt.s32.f32 %v5291
    %v5484 = vcvt.s32.f32 %v5292
    %v5485 = vcvt.s32.f32 %v5293
    %v5486 = vcvt.s32.f32 %v5294
    %v5487 = vcvt.s32.f32 %v5295
    %v5488 = vcvt.s32.f32 %v5296
    %v5489 = vcvt.s32.f32 %v5297
    %v5490 = vcvt.s32.f32 %v5298
    %v5491 = vcvt.s32.f32 %v5299
    %v5492 = vcvt.s32.f32 %v5300
    %v5493 = vcvt.s32.f32 %v5301
    %v5494 = vcvt.s32.f32 %v5302
    %v5495 = vcvt.s32.f32 %v5303
    %v5496 = vcvt.s32.f32 %v5304
    %v5497 = vcvt.s32.f32 %v5305
    %v5498 = vcvt.s32.f32 %v5306
    %v5499 = vcvt.s32.f32 %v5307
    %v5500 = vcvt.s32.f32 %v5308
    %v5501 = vcvt.s32.f32 %v5309
    %v5502 = vcvt.s32.f32 %v5310
    %v5503 = vcvt.s32.f32 %v5311
    %v5504 = vcvt.s32.f32 %v5312
    %v5505 = vcvt.s32.f32 %v5313
    %v5506 = vcvt.s32.f32 %v5314
    %v5507 = vcvt.s32.f32 %v5315
    %v5508 = vcvt.s32.f32 %v5316
    %v5509 = vcvt.s32.f32 %v5317
    %v5510 = vcvt.s32.f32 %v5318
    %v5511 = vcvt.s32.f32 %v5319
    %v5512 = vcvt.s32.f32 %v5320
    %v5513 = vcvt.s32.f32 %v5321
    %v5514 = vcvt.s32.f32 %v5322
    %v5515 = vcvt.s32.f32 %v5323
    %v5516 = vcvt.s32.f32 %v5324
    %v5517 = vcvt.s32.f32 %v5325
    %v5518 = vcvt.s32.f32 %v5326
    %v5519 = vcvt.s32.f32 %v5327
    %v5520 = vcvt.s32.f32 %v5328
    %v5521 = vcvt.s32.f32 %v5329
    %v5522 = vcvt.s32.f32 %v5330
    %v5523 = vcvt.s32.f32 %v5331
    %v5524 = vcvt.s32.f32 %v5332
    %v5525 = vcvt.s32.f32 %v5333
    %v5526 = vcvt.s32.f32 %v5334
    %v5527 = vcvt.s32.f32 %v5335
    %v5528 = vcvt.s32.f32 %v5336
    %v5529 = vcvt.s32.f32 %v5337
    %v5530 = vcvt.s32.f32 %v5338
    %v5531 = vcvt.s32.f32 %v5339
    %v5532 = vcvt.s32.f32 %v5340
    %v5533 = vcvt.s32.f32 %v5341
    %v5534 = vcvt.s32.f32 %v5342
    %v5535 = vcvt.s32.f32 %v5343
    %v5536 = vcvt.s32.f32 %v5344
    %v5537 = vcvt.s32.f32 %v5345
    %v5538 = vcvt.s32.f32 %v5346
    %v5539 = vcvt.s32.f32 %v5347
    %v5540 = vcvt.s32.f32 %v5348
    %v5541 = vcvt.s32.f32 %v5349
    %v5542 = vcvt.s32.f32 %v5350
    %v5543 = vcvt.s32.f32 %v5351
    %v5544 = vcvt.s32.f32 %v5352
    %v5545 = vcvt.s32.f32 %v5353
    %v5546 = vcvt.s32.f32 %v5354
    %v5547 = vcvt.s32.f32 %v5355
    %v5548 = vcvt.s32.f32 %v5356
    %v5549 = vcvt.s32.f32 %v5357
    %v5550 = vcvt.s32.f32 %v5358
    %v5551 = vcvt.s32.f32 %v5359
    %v5552 = vcvt.s32.f32 %v5360
    %v5553 = vcvt.s32.f32 %v5361
    %v5554 = vcvt.s32.f32 %v5362
    %v5555 = vcvt.s32.f32 %v5363
    %v5556 = vcvt.s32.f32 %v5364
    %v5557 = vcvt.s32.f32 %v5365
    %v5558 = vcvt.s32.f32 %v5366
    %v5559 = vcvt.s32.f32 %v5367
    %v5560 = vcvt.s32.f32 %v5368
    %v5561 = vcvt.s32.f32 %v5369
    %v5562 = vcvt.s32.f32 %v5370
    %v5563 = vcvt.s32.f32 %v5371
    %v5564 = vcvt.s32.f32 %v5372
    %v5565 = vcvt.s32.f32 %v5373
    %v5566 = vcvt.s32.f32 %v5374
    %v5567 = vcvt.s32.f32 %v5375
    %v5568 = vcvt.s32.f32 %v5376
    %v5569 = vcvt.s32.f32 %v5377
    %v5570 = vcvt.s32.f32 %v5378
    %v5571 = vcvt.s32.f32 %v5379
    %v5572 = vcvt.s32.f32 %v5380
    %v5573 = vcvt.s32.f32 %v5381
    %v5574 = vcvt.s32.f32 %v5382
    %v5575 = vcvt.s32.f32 %v5383
    %v5576 = vcvt.s32.f32 %v5384
    %v5577 = vcvt.s32.f32 %v5385
    %v5578 = vcvt.s32.f32 %v5386
    %v5579 = vcvt.s32.f32 %v5387
    %v5580 = vcvt.s32.f32 %v5388
    %v5581 = vcvt.s32.f32 %v5389
    %v5582 = vcvt.s32.f32 %v5390
    %v5583 = vcvt.s32.f32 %v5391
    %v5584 = vcvt.s32.f32 %v5392
    %v5585 = vcvt.s32.f32 %v5393
    %v5586 = vcvt.s32.f32 %v5394
    %v5587 = vcvt.s32.f32 %v5395
    %v5588 = vcvt.s32.f32 %v5396
    %v5589 = vcvt.s32.f32 %v5397
    %v5590 = vcvt.s32.f32 %v5398
    %v5591 = vcvt.s32.f32 %v5399
    %v5592 = vcvt.s32.f32 %v5400
    %v5593 = vcvt.s32.f32 %v5401
    %v5594 = vcvt.s32.f32 %v5402
    %v5595 = vcvt.s32.f32 %v5403
    %v5596 = vcvt.s32.f32 %v5404
    %v5597 = vcvt.s32.f32 %v5405
    %v5598 = vcvt.s32.f32 %v5406
    %v5599 = vcvt.s32.f32 %v5407
    %v5600 = vcvt.s32.f32 %v5408
    %v5601 = vcvt.s32.f32 %v5409
    %v5602 = vcvt.s32.f32 %v5410
    %v5603 = vcvt.s32.f32 %v5411
    %v5604 = vcvt.s32.f32 %v5412
    %v5605 = vcvt.s32.f32 %v5413
    %v5606 = vcvt.s32.f32 %v5414
    %v5607 = vcvt.s32.f32 %v5415
    %v5608 = vadd.f32 %v4648, %v5416
    %v5609 = vadd.f32 %v4649, %v5417
    %v5610 = vadd.f32 %v4650, %v5418
    %v5611 = vadd.f32 %v4651, %v5419
    %v5612 = vadd.f32 %v4652, %v5420
    %v5613 = vadd.f32 %v4653, %v5421
    %v5614 = vadd.f32 %v4654, %v5422
    %v5615 = vadd.f32 %v4655, %v5423
    %v5616 = vadd.f32 %v4656, %v5424
    %v5617 = vadd.f32 %v4657, %v5425
    %v5618 = vadd.f32 %v4658, %v5426
    %v5619 = vadd.f32 %v4659, %v5427
    %v5620 = vadd.f32 %v4660, %v5428
    %v5621 = vadd.f32 %v4661, %v5429
    %v5622 = vadd.f32 %v4662, %v5430
    %v5623 = vadd.f32 %v4663, %v5431
    %v5624 = vadd.f32 %v4664, %v5432
    %v5625 = vadd.f32 %v4665, %v5433
    %v5626 = vadd.f32 %v4666, %v5434
    %v5627 = vadd.f32 %v4667, %v5435
    %v5628 = vadd.f32 %v4668, %v5436
    %v5629 = vadd.f32 %v4669, %v5437
    %v5630 = vadd.f32 %v4670, %v5438
    %v5631 = vadd.f32 %v4671, %v5439
    %v5632 = vadd.f32 %v4672, %v5440
    %v5633 = vadd.f32 %v4673, %v5441
    %v5634 = vadd.f32 %v4674, %v5442
    %v5635 = vadd.f32 %v4675, %v5443
    %v5636 = vadd.f32 %v4676, %v5444
    %v5637 = vadd.f32 %v4677, %v5445
    %v5638 = vadd.f32 %v4678, %v5446
    %v5639 = vadd.f32 %v4679, %v5447
    %v5640 = vadd.f32 %v4680, %v5448
    %v5641 = vadd.f32 %v4681, %v5449
    %v5642 = vadd.f32 %v4682, %v5450
    %v5643 = vadd.f32 %v4683, %v5451
    %v5644 = vadd.f32 %v4684, %v5452
    %v5645 = vadd.f32 %v4685, %v5453
    %v5646 = vadd.f32 %v4686, %v5454
    %v5647 = vadd.f32 %v4687, %v5455
    %v5648 = vadd.f32 %v4688, %v5456
    %v5649 = vadd.f32 %v4689, %v5457
    %v5650 = vadd.f32 %v4690, %v5458
    %v5651 = vadd.f32 %v4691, %v5459
    %v5652 = vadd.f32 %v4692, %v5460
    %v5653 = vadd.f32 %v4693, %v5461
    %v5654 = vadd.f32 %v4694, %v5462
    %v5655 = vadd.f32 %v4695, %v5463
    %v5656 = vadd.f32 %v4696, %v5464
    %v5657 = vadd.f32 %v4697, %v5465
    %v5658 = vadd.f32 %v4698, %v5466
    %v5659 = vadd.f32 %v4699, %v5467
    %v5660 = vadd.f32 %v4700, %v5468
    %v5661 = vadd.f32 %v4701, %v5469
    %v5662 = vadd.f32 %v4702, %v5470
    %v5663 = vadd.f32 %v4703, %v5471
    %v5664 = vadd.f32 %v4704, %v5472
    %v5665 = vadd.f32 %v4705, %v5473
    %v5666 = vadd.f32 %v4706, %v5474
    %v5667 = vadd.f32 %v4707, %v5475
    %v5668 = vadd.f32 %v4708, %v5476
    %v5669 = vadd.f32 %v4709, %v5477
    %v5670 = vadd.f32 %v4710, %v5478
    %v5671 = vadd.f32 %v4711, %v5479
    %v5672 = vadd.f32 %v4712, %v5480
    %v5673 = vadd.f32 %v4713, %v5481
    %v5674 = vadd.f32 %v4714, %v5482
    %v5675 = vadd.f32 %v4715, %v5483
    %v5676 = vadd.f32 %v4716, %v5484
    %v5677 = vadd.f32 %v4717, %v5485
    %v5678 = vadd.f32 %v4718, %v5486
    %v5679 = vadd.f32 %v4719, %v5487
    %v5680 = vadd.f32 %v4720, %v5488
    %v5681 = vadd.f32 %v4721, %v5489
    %v5682 = vadd.f32 %v4722, %v5490
    %v5683 = vadd.f32 %v4723, %v5491
    %v5684 = vadd.f32 %v4724, %v5492
    %v5685 = vadd.f32 %v4725, %v5493
    %v5686 = vadd.f32 %v4726, %v5494
    %v5687 = vadd.f32 %v4727, %v5495
    %v5688 = vadd.f32 %v4728, %v5496
    %v5689 = vadd.f32 %v4729, %v5497
    %v5690 = vadd.f32 %v4730, %v5498
    %v5691 = vadd.f32 %v4731, %v5499
    %v5692 = vadd.f32 %v4732, %v5500
    %v5693 = vadd.f32 %v4733, %v5501
    %v5694 = vadd.f32 %v4734, %v5502
    %v5695 = vadd.f32 %v4735, %v5503
    %v5696 = vadd.f32 %v4736, %v5504
    %v5697 = vadd.f32 %v4737, %v5505
    %v5698 = vadd.f32 %v4738, %v5506
    %v5699 = vadd.f32 %v4739, %v5507
    %v5700 = vadd.f32 %v4740, %v5508
    %v5701 = vadd.f32 %v4741, %v5509
    %v5702 = vadd.f32 %v4742, %v5510
    %v5703 = vadd.f32 %v4743, %v5511
    %v5704 = vadd.f32 %v4744, %v5512
    %v5705 = vadd.f32 %v4745, %v5513
    %v5706 = vadd.f32 %v4746, %v5514
    %v5707 = vadd.f32 %v4747, %v5515
    %v5708 = vadd.f32 %v4748, %v5516
    %v5709 = vadd.f32 %v4749, %v5517
    %v5710 = vadd.f32 %v4750, %v5518
    %v5711 = vadd.f32 %v4751, %v5519
    %v5712 = vadd.f32 %v4752, %v5520
    %v5713 = vadd.f32 %v4753, %v5521
    %v5714 = vadd.f32 %v4754, %v5522
    %v5715 = vadd.f32 %v4755, %v5523
    %v5716 = vadd.f32 %v4756, %v5524
    %v5717 = vadd.f32 %v4757, %v5525
    %v5718 = vadd.f32 %v4758, %v5526
    %v5719 = vadd.f32 %v4759, %v5527
    %v5720 = vadd.f32 %v4760, %v5528
    %v5721 = vadd.f32 %v4761, %v5529
    %v5722 = vadd.f32 %v4762, %v5530
    %v5723 = vadd.f32 %v4763, %v5531
    %v5724 = vadd.f32 %v4764, %v5532
    %v5725 = vadd.f32 %v4765, %v5533
    %v5726 = vadd.f32 %v4766, %v5534
    %v5727 = vadd.f32 %v4767, %v5535
    %v5728 = vadd.f32 %v4768, %v5536
    %v5729 = vadd.f32 %v4769, %v5537
    %v5730 = vadd.f32 %v4770, %v5538
    %v5731 = vadd.f32 %v4771, %v5539
    %v5732 = vadd.f32 %v4772, %v5540
    %v5733 = vadd.f32 %v4773, %v5541
    %v5734 = vadd.f32 %v4774, %v5542
    %v5735 = vadd.f32 %v4775, %v5543
    %v5736 = vadd.f32 %v4776, %v5544
    %v5737 = vadd.f32 %v4777, %v5545
    %v5738 = vadd.f32 %v4778, %v5546
    %v5739 = vadd.f32 %v4779, %v5547
    %v5740 = vadd.f32 %v4780, %v5548
    %v5741 = vadd.f32 %v4781, %v5549
    %v5742 = vadd.f32 %v4782, %v5550
    %v5743 = vadd.f32 %v4783, %v5551
    %v5744 = vadd.f32 %v4784, %v5552
    %v5745 = vadd.f32 %v4785, %v5553
    %v5746 = vadd.f32 %v4786, %v5554
    %v5747 = vadd.f32 %v4787, %v5555
    %v5748 = vadd.f32 %v4788, %v5556
    %v5749 = vadd.f32 %v4789, %v5557
    %v5750 = vadd.f32 %v4790, %v5558
    %v5751 = vadd.f32 %v4791, %v5559
    %v5752 = vadd.f32 %v4792, %v5560
    %v5753 = vadd.f32 %v4793, %v5561
    %v5754 = vadd.f32 %v4794, %v5562
    %v5755 = vadd.f32 %v4795, %v5563
    %v5756 = vadd.f32 %v4796, %v5564
    %v5757 = vadd.f32 %v4797, %v5565
    %v5758 = vadd.f32 %v4798, %v5566
    %v5759 = vadd.f32 %v4799, %v5567
    %v5760 = vadd.f32 %v4800, %v5568
    %v5761 = vadd.f32 %v4801, %v5569
    %v5762 = vadd.f32 %v4802, %v5570
    %v5763 = vadd.f32 %v4803, %v5571
    %v5764 = vadd.f32 %v4804, %v5572
    %v5765 = vadd.f32 %v4805, %v5573
    %v5766 = vadd.f32 %v4806, %v5574
    %v5767 = vadd.f32 %v4807, %v5575
    %v5768 = vadd.f32 %v4808, %v5576
    %v5769 = vadd.f32 %v4809, %v5577
    %v5770 = vadd.f32 %v4810, %v5578
    %v5771 = vadd.f32 %v4811, %v5579
    %v5772 = vadd.f32 %v4812, %v5580
    %v5773 = vadd.f32 %v4813, %v5581
    %v5774 = vadd.f32 %v4814, %v5582
    %v5775 = vadd.f32 %v4815, %v5583
    %v5776 = vadd.f32 %v4816, %v5584
    %v5777 = vadd.f32 %v4817, %v5585
    %v5778 = vadd.f32 %v4818, %v5586
    %v5779 = vadd.f32 %v4819, %v5587
    %v5780 = vadd.f32 %v4820, %v5588
    %v5781 = vadd.f32 %v4821, %v5589
    %v5782 = vadd.f32 %v4822, %v5590
    %v5783 = vadd.f32 %v4823, %v5591
    %v5784 = vadd.f32 %v4824, %v5592
    %v5785 = vadd.f32 %v4825, %v5593
    %v5786 = vadd.f32 %v4826, %v5594
    %v5787 = vadd.f32 %v4827, %v5595
    %v5788 = vadd.f32 %v4828, %v5596
    %v5789 = vadd.f32 %v4829, %v5597
    %v5790 = vadd.f32 %v4830, %v5598
    %v5791 = vadd.f32 %v4831, %v5599
    %v5792 = vadd.f32 %v4832, %v5600
    %v5793 = vadd.f32 %v4833, %v5601
    %v5794 = vadd.f32 %v4834, %v5602
    %v5795 = vadd.f32 %v4835, %v5603
    %v5796 = vadd.f32 %v4836, %v5604
    %v5797 = vadd.f32 %v4837, %v5605
    %v5798 = vadd.f32 %v4838, %v5606
    %v5799 = vadd.f32 %v4839, %v5607
    %v5800 = vadd.s32 %v35, 384
    %v5801 = vadd.s32 %v36, 384
    %v5802 = vadd.s32 %v37, 384
    %v5803 = vadd.s32 %v38, 384
    %v5804 = vadd.s32 %v39, 384
    %v5805 = vadd.s32 %v40, 384
    %v5806 = vadd.s32 %v41, 384
    %v5807 = vadd.s32 %v42, 384
    %v5808 = vadd.s32 %v43, 384
    %v5809 = vadd.s32 %v44, 384
    %v5810 = vadd.s32 %v45, 384
    %v5811 = vadd.s32 %v46, 384
    %v5812 = vadd.s32 %v47, 384
    %v5813 = vadd.s32 %v48, 384
    %v5814 = vadd.s32 %v49, 384
    %v5815 = vadd.s32 %v50, 384
    %v5816 = vadd.s32 %v51, 384
    %v5817 = vadd.s32 %v52, 384
    %v5818 = vadd.s32 %v53, 384
    %v5819 = vadd.s32 %v54, 384
    %v5820 = vadd.s32 %v55, 384
    %v5821 = vadd.s32 %v56, 384
    %v5822 = vadd.s32 %v57, 384
    %v5823 = vadd.s32 %v58, 384
    %v5824 = vadd.s32 %v59, 384
    %v5825 = vadd.s32 %v60, 384
    %v5826 = vadd.s32 %v61, 384
    %v5827 = vadd.s32 %v62, 384
    %v5828 = vadd.s32 %v63, 384
    %v5829 = vadd.s32 %v64, 384
    %v5830 = vadd.s32 %v65, 384
    %v5831 = vadd.s32 %v66, 384
    %v5832 = vadd.s32 %v67, 384
    %v5833 = vadd.s32 %v68, 384
    %v5834 = vadd.s32 %v69, 384
    %v5835 = vadd.s32 %v70, 384
    %v5836 = vadd.s32 %v71, 384
    %v5837 = vadd.s32 %v72, 384
    %v5838 = vadd.s32 %v73, 384
    %v5839 = vadd.s32 %v74, 384
    %v5840 = vadd.s32 %v75, 384
    %v5841 = vadd.s32 %v76, 384
    %v5842 = vadd.s32 %v77, 384
    %v5843 = vadd.s32 %v78, 384
    %v5844 = vadd.s32 %v79, 384
    %v5845 = vadd.s32 %v80, 384
    %v5846 = vadd.s32 %v81, 384
    %v5847 = vadd.s32 %v82, 384
    %5848 = vset.pattern.permute.xlu0 6
    %5849 = vperm.xlu0 %5848, %v5800
    %v5850 = vpop.permute.xlu0 %5849
    %5851 = vset.pattern.permute.xlu0 6
    %5852 = vperm.xlu0 %5851, %v5801
    %v5853 = vpop.permute.xlu0 %5852
    %5854 = vset.pattern.permute.xlu0 6
    %5855 = vperm.xlu0 %5854, %v5802
    %v5856 = vpop.permute.xlu0 %5855
    %5857 = vset.pattern.permute.xlu0 6
    %5858 = vperm.xlu0 %5857, %v5803
    %v5859 = vpop.permute.xlu0 %5858
    %5860 = vset.pattern.permute.xlu0 6
    %5861 = vperm.xlu0 %5860, %v5804
    %v5862 = vpop.permute.xlu0 %5861
    %5863 = vset.pattern.permute.xlu0 6
    %5864 = vperm.xlu0 %5863, %v5805
    %v5865 = vpop.permute.xlu0 %5864
    %5866 = vset.pattern.permute.xlu0 6
    %5867 = vperm.xlu0 %5866, %v5806
    %v5868 = vpop.permute.xlu0 %5867
    %5869 = vset.pattern.permute.xlu0 6
    %5870 = vperm.xlu0 %5869, %v5807
    %v5871 = vpop.permute.xlu0 %5870
    %5872 = vset.pattern.permute.xlu0 6
    %5873 = vperm.xlu0 %5872, %v5808
    %v5874 = vpop.permute.xlu0 %5873
    %5875 = vset.pattern.permute.xlu0 6
    %5876 = vperm.xlu0 %5875, %v5809
    %v5877 = vpop.permute.xlu0 %5876
    %5878 = vset.pattern.permute.xlu0 6
    %5879 = vperm.xlu0 %5878, %v5810
    %v5880 = vpop.permute.xlu0 %5879
    %5881 = vset.pattern.permute.xlu0 6
    %5882 = vperm.xlu0 %5881, %v5811
    %v5883 = vpop.permute.xlu0 %5882
    %5884 = vset.pattern.permute.xlu0 6
    %5885 = vperm.xlu0 %5884, %v5812
    %v5886 = vpop.permute.xlu0 %5885
    %5887 = vset.pattern.permute.xlu0 6
    %5888 = vperm.xlu0 %5887, %v5813
    %v5889 = vpop.permute.xlu0 %5888
    %5890 = vset.pattern.permute.xlu0 6
    %5891 = vperm.xlu0 %5890, %v5814
    %v5892 = vpop.permute.xlu0 %5891
    %5893 = vset.pattern.permute.xlu0 6
    %5894 = vperm.xlu0 %5893, %v5815
    %v5895 = vpop.permute.xlu0 %5894
    %5896 = vset.pattern.permute.xlu0 6
    %5897 = vperm.xlu0 %5896, %v5816
    %v5898 = vpop.permute.xlu0 %5897
    %5899 = vset.pattern.permute.xlu0 6
    %5900 = vperm.xlu0 %5899, %v5817
    %v5901 = vpop.permute.xlu0 %5900
    %5902 = vset.pattern.permute.xlu0 6
    %5903 = vperm.xlu0 %5902, %v5818
    %v5904 = vpop.permute.xlu0 %5903
    %5905 = vset.pattern.permute.xlu0 6
    %5906 = vperm.xlu0 %5905, %v5819
    %v5907 = vpop.permute.xlu0 %5906
    %5908 = vset.pattern.permute.xlu0 6
    %5909 = vperm.xlu0 %5908, %v5820
    %v5910 = vpop.permute.xlu0 %5909
    %5911 = vset.pattern.permute.xlu0 6
    %5912 = vperm.xlu0 %5911, %v5821
    %v5913 = vpop.permute.xlu0 %5912
    %5914 = vset.pattern.permute.xlu0 6
    %5915 = vperm.xlu0 %5914, %v5822
    %v5916 = vpop.permute.xlu0 %5915
    %5917 = vset.pattern.permute.xlu0 6
    %5918 = vperm.xlu0 %5917, %v5823
    %v5919 = vpop.permute.xlu0 %5918
    %5920 = vset.pattern.permute.xlu0 6
    %5921 = vperm.xlu0 %5920, %v5824
    %v5922 = vpop.permute.xlu0 %5921
    %5923 = vset.pattern.permute.xlu0 6
    %5924 = vperm.xlu0 %5923, %v5825
    %v5925 = vpop.permute.xlu0 %5924
    %5926 = vset.pattern.permute.xlu0 6
    %5927 = vperm.xlu0 %5926, %v5826
    %v5928 = vpop.permute.xlu0 %5927
    %5929 = vset.pattern.permute.xlu0 6
    %5930 = vperm.xlu0 %5929, %v5827
    %v5931 = vpop.permute.xlu0 %5930
    %5932 = vset.pattern.permute.xlu0 6
    %5933 = vperm.xlu0 %5932, %v5828
    %v5934 = vpop.permute.xlu0 %5933
    %5935 = vset.pattern.permute.xlu0 6
    %5936 = vperm.xlu0 %5935, %v5829
    %v5937 = vpop.permute.xlu0 %5936
    %5938 = vset.pattern.permute.xlu0 6
    %5939 = vperm.xlu0 %5938, %v5830
    %v5940 = vpop.permute.xlu0 %5939
    %5941 = vset.pattern.permute.xlu0 6
    %5942 = vperm.xlu0 %5941, %v5831
    %v5943 = vpop.permute.xlu0 %5942
    %5944 = vset.pattern.permute.xlu0 6
    %5945 = vperm.xlu0 %5944, %v5832
    %v5946 = vpop.permute.xlu0 %5945
    %5947 = vset.pattern.permute.xlu0 6
    %5948 = vperm.xlu0 %5947, %v5833
    %v5949 = vpop.permute.xlu0 %5948
    %5950 = vset.pattern.permute.xlu0 6
    %5951 = vperm.xlu0 %5950, %v5834
    %v5952 = vpop.permute.xlu0 %5951
    %5953 = vset.pattern.permute.xlu0 6
    %5954 = vperm.xlu0 %5953, %v5835
    %v5955 = vpop.permute.xlu0 %5954
    %5956 = vset.pattern.permute.xlu0 6
    %5957 = vperm.xlu0 %5956, %v5836
    %v5958 = vpop.permute.xlu0 %5957
    %5959 = vset.pattern.permute.xlu0 6
    %5960 = vperm.xlu0 %5959, %v5837
    %v5961 = vpop.permute.xlu0 %5960
    %5962 = vset.pattern.permute.xlu0 6
    %5963 = vperm.xlu0 %5962, %v5838
    %v5964 = vpop.permute.xlu0 %5963
    %5965 = vset.pattern.permute.xlu0 6
    %5966 = vperm.xlu0 %5965, %v5839
    %v5967 = vpop.permute.xlu0 %5966
    %5968 = vset.pattern.permute.xlu0 6
    %5969 = vperm.xlu0 %5968, %v5840
    %v5970 = vpop.permute.xlu0 %5969
    %5971 = vset.pattern.permute.xlu0 6
    %5972 = vperm.xlu0 %5971, %v5841
    %v5973 = vpop.permute.xlu0 %5972
    %5974 = vset.pattern.permute.xlu0 6
    %5975 = vperm.xlu0 %5974, %v5842
    %v5976 = vpop.permute.xlu0 %5975
    %5977 = vset.pattern.permute.xlu0 6
    %5978 = vperm.xlu0 %5977, %v5843
    %v5979 = vpop.permute.xlu0 %5978
    %5980 = vset.pattern.permute.xlu0 6
    %5981 = vperm.xlu0 %5980, %v5844
    %v5982 = vpop.permute.xlu0 %5981
    %5983 = vset.pattern.permute.xlu0 6
    %5984 = vperm.xlu0 %5983, %v5845
    %v5985 = vpop.permute.xlu0 %5984
    %5986 = vset.pattern.permute.xlu0 6
    %5987 = vperm.xlu0 %5986, %v5846
    %v5988 = vpop.permute.xlu0 %5987
    %5989 = vset.pattern.permute.xlu0 6
    %5990 = vperm.xlu0 %5989, %v5847
    %v5991 = vpop.permute.xlu0 %5990
    %vm5992 = vcmp.eq.s32.totalorder %v5850, %v84
    %vm5993 = vcmp.eq.s32.totalorder %v5850, %v85
    %vm5994 = vcmp.eq.s32.totalorder %v5850, %v86
    %vm5995 = vcmp.eq.s32.totalorder %v5850, %v87
    %vm5996 = vcmp.eq.s32.totalorder %v5853, %v84
    %vm5997 = vcmp.eq.s32.totalorder %v5853, %v85
    %vm5998 = vcmp.eq.s32.totalorder %v5853, %v86
    %vm5999 = vcmp.eq.s32.totalorder %v5853, %v87
    %vm6000 = vcmp.eq.s32.totalorder %v5856, %v84
    %vm6001 = vcmp.eq.s32.totalorder %v5856, %v85
    %vm6002 = vcmp.eq.s32.totalorder %v5856, %v86
    %vm6003 = vcmp.eq.s32.totalorder %v5856, %v87
    %vm6004 = vcmp.eq.s32.totalorder %v5859, %v84
    %vm6005 = vcmp.eq.s32.totalorder %v5859, %v85
    %vm6006 = vcmp.eq.s32.totalorder %v5859, %v86
    %vm6007 = vcmp.eq.s32.totalorder %v5859, %v87
    %vm6008 = vcmp.eq.s32.totalorder %v5862, %v84
    %vm6009 = vcmp.eq.s32.totalorder %v5862, %v85
    %vm6010 = vcmp.eq.s32.totalorder %v5862, %v86
    %vm6011 = vcmp.eq.s32.totalorder %v5862, %v87
    %vm6012 = vcmp.eq.s32.totalorder %v5865, %v84
    %vm6013 = vcmp.eq.s32.totalorder %v5865, %v85
    %vm6014 = vcmp.eq.s32.totalorder %v5865, %v86
    %vm6015 = vcmp.eq.s32.totalorder %v5865, %v87
    %vm6016 = vcmp.eq.s32.totalorder %v5868, %v84
    %vm6017 = vcmp.eq.s32.totalorder %v5868, %v85
    %vm6018 = vcmp.eq.s32.totalorder %v5868, %v86
    %vm6019 = vcmp.eq.s32.totalorder %v5868, %v87
    %vm6020 = vcmp.eq.s32.totalorder %v5871, %v84
    %vm6021 = vcmp.eq.s32.totalorder %v5871, %v85
    %vm6022 = vcmp.eq.s32.totalorder %v5871, %v86
    %vm6023 = vcmp.eq.s32.totalorder %v5871, %v87
    %vm6024 = vcmp.eq.s32.totalorder %v5874, %v84
    %vm6025 = vcmp.eq.s32.totalorder %v5874, %v85
    %vm6026 = vcmp.eq.s32.totalorder %v5874, %v86
    %vm6027 = vcmp.eq.s32.totalorder %v5874, %v87
    %vm6028 = vcmp.eq.s32.totalorder %v5877, %v84
    %vm6029 = vcmp.eq.s32.totalorder %v5877, %v85
    %vm6030 = vcmp.eq.s32.totalorder %v5877, %v86
    %vm6031 = vcmp.eq.s32.totalorder %v5877, %v87
    %vm6032 = vcmp.eq.s32.totalorder %v5880, %v84
    %vm6033 = vcmp.eq.s32.totalorder %v5880, %v85
    %vm6034 = vcmp.eq.s32.totalorder %v5880, %v86
    %vm6035 = vcmp.eq.s32.totalorder %v5880, %v87
    %vm6036 = vcmp.eq.s32.totalorder %v5883, %v84
    %vm6037 = vcmp.eq.s32.totalorder %v5883, %v85
    %vm6038 = vcmp.eq.s32.totalorder %v5883, %v86
    %vm6039 = vcmp.eq.s32.totalorder %v5883, %v87
    %vm6040 = vcmp.eq.s32.totalorder %v5886, %v84
    %vm6041 = vcmp.eq.s32.totalorder %v5886, %v85
    %vm6042 = vcmp.eq.s32.totalorder %v5886, %v86
    %vm6043 = vcmp.eq.s32.totalorder %v5886, %v87
    %vm6044 = vcmp.eq.s32.totalorder %v5889, %v84
    %vm6045 = vcmp.eq.s32.totalorder %v5889, %v85
    %vm6046 = vcmp.eq.s32.totalorder %v5889, %v86
    %vm6047 = vcmp.eq.s32.totalorder %v5889, %v87
    %vm6048 = vcmp.eq.s32.totalorder %v5892, %v84
    %vm6049 = vcmp.eq.s32.totalorder %v5892, %v85
    %vm6050 = vcmp.eq.s32.totalorder %v5892, %v86
    %vm6051 = vcmp.eq.s32.totalorder %v5892, %v87
    %vm6052 = vcmp.eq.s32.totalorder %v5895, %v84
    %vm6053 = vcmp.eq.s32.totalorder %v5895, %v85
    %vm6054 = vcmp.eq.s32.totalorder %v5895, %v86
    %vm6055 = vcmp.eq.s32.totalorder %v5895, %v87
    %vm6056 = vcmp.eq.s32.totalorder %v5898, %v84
    %vm6057 = vcmp.eq.s32.totalorder %v5898, %v85
    %vm6058 = vcmp.eq.s32.totalorder %v5898, %v86
    %vm6059 = vcmp.eq.s32.totalorder %v5898, %v87
    %vm6060 = vcmp.eq.s32.totalorder %v5901, %v84
    %vm6061 = vcmp.eq.s32.totalorder %v5901, %v85
    %vm6062 = vcmp.eq.s32.totalorder %v5901, %v86
    %vm6063 = vcmp.eq.s32.totalorder %v5901, %v87
    %vm6064 = vcmp.eq.s32.totalorder %v5904, %v84
    %vm6065 = vcmp.eq.s32.totalorder %v5904, %v85
    %vm6066 = vcmp.eq.s32.totalorder %v5904, %v86
    %vm6067 = vcmp.eq.s32.totalorder %v5904, %v87
    %vm6068 = vcmp.eq.s32.totalorder %v5907, %v84
    %vm6069 = vcmp.eq.s32.totalorder %v5907, %v85
    %vm6070 = vcmp.eq.s32.totalorder %v5907, %v86
    %vm6071 = vcmp.eq.s32.totalorder %v5907, %v87
    %vm6072 = vcmp.eq.s32.totalorder %v5910, %v84
    %vm6073 = vcmp.eq.s32.totalorder %v5910, %v85
    %vm6074 = vcmp.eq.s32.totalorder %v5910, %v86
    %vm6075 = vcmp.eq.s32.totalorder %v5910, %v87
    %vm6076 = vcmp.eq.s32.totalorder %v5913, %v84
    %vm6077 = vcmp.eq.s32.totalorder %v5913, %v85
    %vm6078 = vcmp.eq.s32.totalorder %v5913, %v86
    %vm6079 = vcmp.eq.s32.totalorder %v5913, %v87
    %vm6080 = vcmp.eq.s32.totalorder %v5916, %v84
    %vm6081 = vcmp.eq.s32.totalorder %v5916, %v85
    %vm6082 = vcmp.eq.s32.totalorder %v5916, %v86
    %vm6083 = vcmp.eq.s32.totalorder %v5916, %v87
    %vm6084 = vcmp.eq.s32.totalorder %v5919, %v84
    %vm6085 = vcmp.eq.s32.totalorder %v5919, %v85
    %vm6086 = vcmp.eq.s32.totalorder %v5919, %v86
    %vm6087 = vcmp.eq.s32.totalorder %v5919, %v87
    %vm6088 = vcmp.eq.s32.totalorder %v5922, %v84
    %vm6089 = vcmp.eq.s32.totalorder %v5922, %v85
    %vm6090 = vcmp.eq.s32.totalorder %v5922, %v86
    %vm6091 = vcmp.eq.s32.totalorder %v5922, %v87
    %vm6092 = vcmp.eq.s32.totalorder %v5925, %v84
    %vm6093 = vcmp.eq.s32.totalorder %v5925, %v85
    %vm6094 = vcmp.eq.s32.totalorder %v5925, %v86
    %vm6095 = vcmp.eq.s32.totalorder %v5925, %v87
    %vm6096 = vcmp.eq.s32.totalorder %v5928, %v84
    %vm6097 = vcmp.eq.s32.totalorder %v5928, %v85
    %vm6098 = vcmp.eq.s32.totalorder %v5928, %v86
    %vm6099 = vcmp.eq.s32.totalorder %v5928, %v87
    %vm6100 = vcmp.eq.s32.totalorder %v5931, %v84
    %vm6101 = vcmp.eq.s32.totalorder %v5931, %v85
    %vm6102 = vcmp.eq.s32.totalorder %v5931, %v86
    %vm6103 = vcmp.eq.s32.totalorder %v5931, %v87
    %vm6104 = vcmp.eq.s32.totalorder %v5934, %v84
    %vm6105 = vcmp.eq.s32.totalorder %v5934, %v85
    %vm6106 = vcmp.eq.s32.totalorder %v5934, %v86
    %vm6107 = vcmp.eq.s32.totalorder %v5934, %v87
    %vm6108 = vcmp.eq.s32.totalorder %v5937, %v84
    %vm6109 = vcmp.eq.s32.totalorder %v5937, %v85
    %vm6110 = vcmp.eq.s32.totalorder %v5937, %v86
    %vm6111 = vcmp.eq.s32.totalorder %v5937, %v87
    %vm6112 = vcmp.eq.s32.totalorder %v5940, %v84
    %vm6113 = vcmp.eq.s32.totalorder %v5940, %v85
    %vm6114 = vcmp.eq.s32.totalorder %v5940, %v86
    %vm6115 = vcmp.eq.s32.totalorder %v5940, %v87
    %vm6116 = vcmp.eq.s32.totalorder %v5943, %v84
    %vm6117 = vcmp.eq.s32.totalorder %v5943, %v85
    %vm6118 = vcmp.eq.s32.totalorder %v5943, %v86
    %vm6119 = vcmp.eq.s32.totalorder %v5943, %v87
    %vm6120 = vcmp.eq.s32.totalorder %v5946, %v84
    %vm6121 = vcmp.eq.s32.totalorder %v5946, %v85
    %vm6122 = vcmp.eq.s32.totalorder %v5946, %v86
    %vm6123 = vcmp.eq.s32.totalorder %v5946, %v87
    %vm6124 = vcmp.eq.s32.totalorder %v5949, %v84
    %vm6125 = vcmp.eq.s32.totalorder %v5949, %v85
    %vm6126 = vcmp.eq.s32.totalorder %v5949, %v86
    %vm6127 = vcmp.eq.s32.totalorder %v5949, %v87
    %vm6128 = vcmp.eq.s32.totalorder %v5952, %v84
    %vm6129 = vcmp.eq.s32.totalorder %v5952, %v85
    %vm6130 = vcmp.eq.s32.totalorder %v5952, %v86
    %vm6131 = vcmp.eq.s32.totalorder %v5952, %v87
    %vm6132 = vcmp.eq.s32.totalorder %v5955, %v84
    %vm6133 = vcmp.eq.s32.totalorder %v5955, %v85
    %vm6134 = vcmp.eq.s32.totalorder %v5955, %v86
    %vm6135 = vcmp.eq.s32.totalorder %v5955, %v87
    %vm6136 = vcmp.eq.s32.totalorder %v5958, %v84
    %vm6137 = vcmp.eq.s32.totalorder %v5958, %v85
    %vm6138 = vcmp.eq.s32.totalorder %v5958, %v86
    %vm6139 = vcmp.eq.s32.totalorder %v5958, %v87
    %vm6140 = vcmp.eq.s32.totalorder %v5961, %v84
    %vm6141 = vcmp.eq.s32.totalorder %v5961, %v85
    %vm6142 = vcmp.eq.s32.totalorder %v5961, %v86
    %vm6143 = vcmp.eq.s32.totalorder %v5961, %v87
    %vm6144 = vcmp.eq.s32.totalorder %v5964, %v84
    %vm6145 = vcmp.eq.s32.totalorder %v5964, %v85
    %vm6146 = vcmp.eq.s32.totalorder %v5964, %v86
    %vm6147 = vcmp.eq.s32.totalorder %v5964, %v87
    %vm6148 = vcmp.eq.s32.totalorder %v5967, %v84
    %vm6149 = vcmp.eq.s32.totalorder %v5967, %v85
    %vm6150 = vcmp.eq.s32.totalorder %v5967, %v86
    %vm6151 = vcmp.eq.s32.totalorder %v5967, %v87
    %vm6152 = vcmp.eq.s32.totalorder %v5970, %v84
    %vm6153 = vcmp.eq.s32.totalorder %v5970, %v85
    %vm6154 = vcmp.eq.s32.totalorder %v5970, %v86
    %vm6155 = vcmp.eq.s32.totalorder %v5970, %v87
    %vm6156 = vcmp.eq.s32.totalorder %v5973, %v84
    %vm6157 = vcmp.eq.s32.totalorder %v5973, %v85
    %vm6158 = vcmp.eq.s32.totalorder %v5973, %v86
    %vm6159 = vcmp.eq.s32.totalorder %v5973, %v87
    %vm6160 = vcmp.eq.s32.totalorder %v5976, %v84
    %vm6161 = vcmp.eq.s32.totalorder %v5976, %v85
    %vm6162 = vcmp.eq.s32.totalorder %v5976, %v86
    %vm6163 = vcmp.eq.s32.totalorder %v5976, %v87
    %vm6164 = vcmp.eq.s32.totalorder %v5979, %v84
    %vm6165 = vcmp.eq.s32.totalorder %v5979, %v85
    %vm6166 = vcmp.eq.s32.totalorder %v5979, %v86
    %vm6167 = vcmp.eq.s32.totalorder %v5979, %v87
    %vm6168 = vcmp.eq.s32.totalorder %v5982, %v84
    %vm6169 = vcmp.eq.s32.totalorder %v5982, %v85
    %vm6170 = vcmp.eq.s32.totalorder %v5982, %v86
    %vm6171 = vcmp.eq.s32.totalorder %v5982, %v87
    %vm6172 = vcmp.eq.s32.totalorder %v5985, %v84
    %vm6173 = vcmp.eq.s32.totalorder %v5985, %v85
    %vm6174 = vcmp.eq.s32.totalorder %v5985, %v86
    %vm6175 = vcmp.eq.s32.totalorder %v5985, %v87
    %vm6176 = vcmp.eq.s32.totalorder %v5988, %v84
    %vm6177 = vcmp.eq.s32.totalorder %v5988, %v85
    %vm6178 = vcmp.eq.s32.totalorder %v5988, %v86
    %vm6179 = vcmp.eq.s32.totalorder %v5988, %v87
    %vm6180 = vcmp.eq.s32.totalorder %v5991, %v84
    %vm6181 = vcmp.eq.s32.totalorder %v5991, %v85
    %vm6182 = vcmp.eq.s32.totalorder %v5991, %v86
    %vm6183 = vcmp.eq.s32.totalorder %v5991, %v87
    %v6184 = vsel %vm5992, 1, 0
    %v6185 = vsel %vm5993, 1, 0
    %v6186 = vsel %vm5994, 1, 0
    %v6187 = vsel %vm5995, 1, 0
    %v6188 = vsel %vm5996, 1, 0
    %v6189 = vsel %vm5997, 1, 0
    %v6190 = vsel %vm5998, 1, 0
    %v6191 = vsel %vm5999, 1, 0
    %v6192 = vsel %vm6000, 1, 0
    %v6193 = vsel %vm6001, 1, 0
    %v6194 = vsel %vm6002, 1, 0
    %v6195 = vsel %vm6003, 1, 0
    %v6196 = vsel %vm6004, 1, 0
    %v6197 = vsel %vm6005, 1, 0
    %v6198 = vsel %vm6006, 1, 0
    %v6199 = vsel %vm6007, 1, 0
    %v6200 = vsel %vm6008, 1, 0
    %v6201 = vsel %vm6009, 1, 0
    %v6202 = vsel %vm6010, 1, 0
    %v6203 = vsel %vm6011, 1, 0
    %v6204 = vsel %vm6012, 1, 0
    %v6205 = vsel %vm6013, 1, 0
    %v6206 = vsel %vm6014, 1, 0
    %v6207 = vsel %vm6015, 1, 0
    %v6208 = vsel %vm6016, 1, 0
    %v6209 = vsel %vm6017, 1, 0
    %v6210 = vsel %vm6018, 1, 0
    %v6211 = vsel %vm6019, 1, 0
    %v6212 = vsel %vm6020, 1, 0
    %v6213 = vsel %vm6021, 1, 0
    %v6214 = vsel %vm6022, 1, 0
    %v6215 = vsel %vm6023, 1, 0
    %v6216 = vsel %vm6024, 1, 0
    %v6217 = vsel %vm6025, 1, 0
    %v6218 = vsel %vm6026, 1, 0
    %v6219 = vsel %vm6027, 1, 0
    %v6220 = vsel %vm6028, 1, 0
    %v6221 = vsel %vm6029, 1, 0
    %v6222 = vsel %vm6030, 1, 0
    %v6223 = vsel %vm6031, 1, 0
    %v6224 = vsel %vm6032, 1, 0
    %v6225 = vsel %vm6033, 1, 0
    %v6226 = vsel %vm6034, 1, 0
    %v6227 = vsel %vm6035, 1, 0
    %v6228 = vsel %vm6036, 1, 0
    %v6229 = vsel %vm6037, 1, 0
    %v6230 = vsel %vm6038, 1, 0
    %v6231 = vsel %vm6039, 1, 0
    %v6232 = vsel %vm6040, 1, 0
    %v6233 = vsel %vm6041, 1, 0
    %v6234 = vsel %vm6042, 1, 0
    %v6235 = vsel %vm6043, 1, 0
    %v6236 = vsel %vm6044, 1, 0
    %v6237 = vsel %vm6045, 1, 0
    %v6238 = vsel %vm6046, 1, 0
    %v6239 = vsel %vm6047, 1, 0
    %v6240 = vsel %vm6048, 1, 0
    %v6241 = vsel %vm6049, 1, 0
    %v6242 = vsel %vm6050, 1, 0
    %v6243 = vsel %vm6051, 1, 0
    %v6244 = vsel %vm6052, 1, 0
    %v6245 = vsel %vm6053, 1, 0
    %v6246 = vsel %vm6054, 1, 0
    %v6247 = vsel %vm6055, 1, 0
    %v6248 = vsel %vm6056, 1, 0
    %v6249 = vsel %vm6057, 1, 0
    %v6250 = vsel %vm6058, 1, 0
    %v6251 = vsel %vm6059, 1, 0
    %v6252 = vsel %vm6060, 1, 0
    %v6253 = vsel %vm6061, 1, 0
    %v6254 = vsel %vm6062, 1, 0
    %v6255 = vsel %vm6063, 1, 0
    %v6256 = vsel %vm6064, 1, 0
    %v6257 = vsel %vm6065, 1, 0
    %v6258 = vsel %vm6066, 1, 0
    %v6259 = vsel %vm6067, 1, 0
    %v6260 = vsel %vm6068, 1, 0
    %v6261 = vsel %vm6069, 1, 0
    %v6262 = vsel %vm6070, 1, 0
    %v6263 = vsel %vm6071, 1, 0
    %v6264 = vsel %vm6072, 1, 0
    %v6265 = vsel %vm6073, 1, 0
    %v6266 = vsel %vm6074, 1, 0
    %v6267 = vsel %vm6075, 1, 0
    %v6268 = vsel %vm6076, 1, 0
    %v6269 = vsel %vm6077, 1, 0
    %v6270 = vsel %vm6078, 1, 0
    %v6271 = vsel %vm6079, 1, 0
    %v6272 = vsel %vm6080, 1, 0
    %v6273 = vsel %vm6081, 1, 0
    %v6274 = vsel %vm6082, 1, 0
    %v6275 = vsel %vm6083, 1, 0
    %v6276 = vsel %vm6084, 1, 0
    %v6277 = vsel %vm6085, 1, 0
    %v6278 = vsel %vm6086, 1, 0
    %v6279 = vsel %vm6087, 1, 0
    %v6280 = vsel %vm6088, 1, 0
    %v6281 = vsel %vm6089, 1, 0
    %v6282 = vsel %vm6090, 1, 0
    %v6283 = vsel %vm6091, 1, 0
    %v6284 = vsel %vm6092, 1, 0
    %v6285 = vsel %vm6093, 1, 0
    %v6286 = vsel %vm6094, 1, 0
    %v6287 = vsel %vm6095, 1, 0
    %v6288 = vsel %vm6096, 1, 0
    %v6289 = vsel %vm6097, 1, 0
    %v6290 = vsel %vm6098, 1, 0
    %v6291 = vsel %vm6099, 1, 0
    %v6292 = vsel %vm6100, 1, 0
    %v6293 = vsel %vm6101, 1, 0
    %v6294 = vsel %vm6102, 1, 0
    %v6295 = vsel %vm6103, 1, 0
    %v6296 = vsel %vm6104, 1, 0
    %v6297 = vsel %vm6105, 1, 0
    %v6298 = vsel %vm6106, 1, 0
    %v6299 = vsel %vm6107, 1, 0
    %v6300 = vsel %vm6108, 1, 0
    %v6301 = vsel %vm6109, 1, 0
    %v6302 = vsel %vm6110, 1, 0
    %v6303 = vsel %vm6111, 1, 0
    %v6304 = vsel %vm6112, 1, 0
    %v6305 = vsel %vm6113, 1, 0
    %v6306 = vsel %vm6114, 1, 0
    %v6307 = vsel %vm6115, 1, 0
    %v6308 = vsel %vm6116, 1, 0
    %v6309 = vsel %vm6117, 1, 0
    %v6310 = vsel %vm6118, 1, 0
    %v6311 = vsel %vm6119, 1, 0
    %v6312 = vsel %vm6120, 1, 0
    %v6313 = vsel %vm6121, 1, 0
    %v6314 = vsel %vm6122, 1, 0
    %v6315 = vsel %vm6123, 1, 0
    %v6316 = vsel %vm6124, 1, 0
    %v6317 = vsel %vm6125, 1, 0
    %v6318 = vsel %vm6126, 1, 0
    %v6319 = vsel %vm6127, 1, 0
    %v6320 = vsel %vm6128, 1, 0
    %v6321 = vsel %vm6129, 1, 0
    %v6322 = vsel %vm6130, 1, 0
    %v6323 = vsel %vm6131, 1, 0
    %v6324 = vsel %vm6132, 1, 0
    %v6325 = vsel %vm6133, 1, 0
    %v6326 = vsel %vm6134, 1, 0
    %v6327 = vsel %vm6135, 1, 0
    %v6328 = vsel %vm6136, 1, 0
    %v6329 = vsel %vm6137, 1, 0
    %v6330 = vsel %vm6138, 1, 0
    %v6331 = vsel %vm6139, 1, 0
    %v6332 = vsel %vm6140, 1, 0
    %v6333 = vsel %vm6141, 1, 0
    %v6334 = vsel %vm6142, 1, 0
    %v6335 = vsel %vm6143, 1, 0
    %v6336 = vsel %vm6144, 1, 0
    %v6337 = vsel %vm6145, 1, 0
    %v6338 = vsel %vm6146, 1, 0
    %v6339 = vsel %vm6147, 1, 0
    %v6340 = vsel %vm6148, 1, 0
    %v6341 = vsel %vm6149, 1, 0
    %v6342 = vsel %vm6150, 1, 0
    %v6343 = vsel %vm6151, 1, 0
    %v6344 = vsel %vm6152, 1, 0
    %v6345 = vsel %vm6153, 1, 0
    %v6346 = vsel %vm6154, 1, 0
    %v6347 = vsel %vm6155, 1, 0
    %v6348 = vsel %vm6156, 1, 0
    %v6349 = vsel %vm6157, 1, 0
    %v6350 = vsel %vm6158, 1, 0
    %v6351 = vsel %vm6159, 1, 0
    %v6352 = vsel %vm6160, 1, 0
    %v6353 = vsel %vm6161, 1, 0
    %v6354 = vsel %vm6162, 1, 0
    %v6355 = vsel %vm6163, 1, 0
    %v6356 = vsel %vm6164, 1, 0
    %v6357 = vsel %vm6165, 1, 0
    %v6358 = vsel %vm6166, 1, 0
    %v6359 = vsel %vm6167, 1, 0
    %v6360 = vsel %vm6168, 1, 0
    %v6361 = vsel %vm6169, 1, 0
    %v6362 = vsel %vm6170, 1, 0
    %v6363 = vsel %vm6171, 1, 0
    %v6364 = vsel %vm6172, 1, 0
    %v6365 = vsel %vm6173, 1, 0
    %v6366 = vsel %vm6174, 1, 0
    %v6367 = vsel %vm6175, 1, 0
    %v6368 = vsel %vm6176, 1, 0
    %v6369 = vsel %vm6177, 1, 0
    %v6370 = vsel %vm6178, 1, 0
    %v6371 = vsel %vm6179, 1, 0
    %v6372 = vsel %vm6180, 1, 0
    %v6373 = vsel %vm6181, 1, 0
    %v6374 = vsel %vm6182, 1, 0
    %v6375 = vsel %vm6183, 1, 0
    %v6376 = vcvt.s32.f32 %v6184
    %v6377 = vcvt.s32.f32 %v6185
    %v6378 = vcvt.s32.f32 %v6186
    %v6379 = vcvt.s32.f32 %v6187
    %v6380 = vcvt.s32.f32 %v6188
    %v6381 = vcvt.s32.f32 %v6189
    %v6382 = vcvt.s32.f32 %v6190
    %v6383 = vcvt.s32.f32 %v6191
    %v6384 = vcvt.s32.f32 %v6192
    %v6385 = vcvt.s32.f32 %v6193
    %v6386 = vcvt.s32.f32 %v6194
    %v6387 = vcvt.s32.f32 %v6195
    %v6388 = vcvt.s32.f32 %v6196
    %v6389 = vcvt.s32.f32 %v6197
    %v6390 = vcvt.s32.f32 %v6198
    %v6391 = vcvt.s32.f32 %v6199
    %v6392 = vcvt.s32.f32 %v6200
    %v6393 = vcvt.s32.f32 %v6201
    %v6394 = vcvt.s32.f32 %v6202
    %v6395 = vcvt.s32.f32 %v6203
    %v6396 = vcvt.s32.f32 %v6204
    %v6397 = vcvt.s32.f32 %v6205
    %v6398 = vcvt.s32.f32 %v6206
    %v6399 = vcvt.s32.f32 %v6207
    %v6400 = vcvt.s32.f32 %v6208
    %v6401 = vcvt.s32.f32 %v6209
    %v6402 = vcvt.s32.f32 %v6210
    %v6403 = vcvt.s32.f32 %v6211
    %v6404 = vcvt.s32.f32 %v6212
    %v6405 = vcvt.s32.f32 %v6213
    %v6406 = vcvt.s32.f32 %v6214
    %v6407 = vcvt.s32.f32 %v6215
    %v6408 = vcvt.s32.f32 %v6216
    %v6409 = vcvt.s32.f32 %v6217
    %v6410 = vcvt.s32.f32 %v6218
    %v6411 = vcvt.s32.f32 %v6219
    %v6412 = vcvt.s32.f32 %v6220
    %v6413 = vcvt.s32.f32 %v6221
    %v6414 = vcvt.s32.f32 %v6222
    %v6415 = vcvt.s32.f32 %v6223
    %v6416 = vcvt.s32.f32 %v6224
    %v6417 = vcvt.s32.f32 %v6225
    %v6418 = vcvt.s32.f32 %v6226
    %v6419 = vcvt.s32.f32 %v6227
    %v6420 = vcvt.s32.f32 %v6228
    %v6421 = vcvt.s32.f32 %v6229
    %v6422 = vcvt.s32.f32 %v6230
    %v6423 = vcvt.s32.f32 %v6231
    %v6424 = vcvt.s32.f32 %v6232
    %v6425 = vcvt.s32.f32 %v6233
    %v6426 = vcvt.s32.f32 %v6234
    %v6427 = vcvt.s32.f32 %v6235
    %v6428 = vcvt.s32.f32 %v6236
    %v6429 = vcvt.s32.f32 %v6237
    %v6430 = vcvt.s32.f32 %v6238
    %v6431 = vcvt.s32.f32 %v6239
    %v6432 = vcvt.s32.f32 %v6240
    %v6433 = vcvt.s32.f32 %v6241
    %v6434 = vcvt.s32.f32 %v6242
    %v6435 = vcvt.s32.f32 %v6243
    %v6436 = vcvt.s32.f32 %v6244
    %v6437 = vcvt.s32.f32 %v6245
    %v6438 = vcvt.s32.f32 %v6246
    %v6439 = vcvt.s32.f32 %v6247
    %v6440 = vcvt.s32.f32 %v6248
    %v6441 = vcvt.s32.f32 %v6249
    %v6442 = vcvt.s32.f32 %v6250
    %v6443 = vcvt.s32.f32 %v6251
    %v6444 = vcvt.s32.f32 %v6252
    %v6445 = vcvt.s32.f32 %v6253
    %v6446 = vcvt.s32.f32 %v6254
    %v6447 = vcvt.s32.f32 %v6255
    %v6448 = vcvt.s32.f32 %v6256
    %v6449 = vcvt.s32.f32 %v6257
    %v6450 = vcvt.s32.f32 %v6258
    %v6451 = vcvt.s32.f32 %v6259
    %v6452 = vcvt.s32.f32 %v6260
    %v6453 = vcvt.s32.f32 %v6261
    %v6454 = vcvt.s32.f32 %v6262
    %v6455 = vcvt.s32.f32 %v6263
    %v6456 = vcvt.s32.f32 %v6264
    %v6457 = vcvt.s32.f32 %v6265
    %v6458 = vcvt.s32.f32 %v6266
    %v6459 = vcvt.s32.f32 %v6267
    %v6460 = vcvt.s32.f32 %v6268
    %v6461 = vcvt.s32.f32 %v6269
    %v6462 = vcvt.s32.f32 %v6270
    %v6463 = vcvt.s32.f32 %v6271
    %v6464 = vcvt.s32.f32 %v6272
    %v6465 = vcvt.s32.f32 %v6273
    %v6466 = vcvt.s32.f32 %v6274
    %v6467 = vcvt.s32.f32 %v6275
    %v6468 = vcvt.s32.f32 %v6276
    %v6469 = vcvt.s32.f32 %v6277
    %v6470 = vcvt.s32.f32 %v6278
    %v6471 = vcvt.s32.f32 %v6279
    %v6472 = vcvt.s32.f32 %v6280
    %v6473 = vcvt.s32.f32 %v6281
    %v6474 = vcvt.s32.f32 %v6282
    %v6475 = vcvt.s32.f32 %v6283
    %v6476 = vcvt.s32.f32 %v6284
    %v6477 = vcvt.s32.f32 %v6285
    %v6478 = vcvt.s32.f32 %v6286
    %v6479 = vcvt.s32.f32 %v6287
    %v6480 = vcvt.s32.f32 %v6288
    %v6481 = vcvt.s32.f32 %v6289
    %v6482 = vcvt.s32.f32 %v6290
    %v6483 = vcvt.s32.f32 %v6291
    %v6484 = vcvt.s32.f32 %v6292
    %v6485 = vcvt.s32.f32 %v6293
    %v6486 = vcvt.s32.f32 %v6294
    %v6487 = vcvt.s32.f32 %v6295
    %v6488 = vcvt.s32.f32 %v6296
    %v6489 = vcvt.s32.f32 %v6297
    %v6490 = vcvt.s32.f32 %v6298
    %v6491 = vcvt.s32.f32 %v6299
    %v6492 = vcvt.s32.f32 %v6300
    %v6493 = vcvt.s32.f32 %v6301
    %v6494 = vcvt.s32.f32 %v6302
    %v6495 = vcvt.s32.f32 %v6303
    %v6496 = vcvt.s32.f32 %v6304
    %v6497 = vcvt.s32.f32 %v6305
    %v6498 = vcvt.s32.f32 %v6306
    %v6499 = vcvt.s32.f32 %v6307
    %v6500 = vcvt.s32.f32 %v6308
    %v6501 = vcvt.s32.f32 %v6309
    %v6502 = vcvt.s32.f32 %v6310
    %v6503 = vcvt.s32.f32 %v6311
    %v6504 = vcvt.s32.f32 %v6312
    %v6505 = vcvt.s32.f32 %v6313
    %v6506 = vcvt.s32.f32 %v6314
    %v6507 = vcvt.s32.f32 %v6315
    %v6508 = vcvt.s32.f32 %v6316
    %v6509 = vcvt.s32.f32 %v6317
    %v6510 = vcvt.s32.f32 %v6318
    %v6511 = vcvt.s32.f32 %v6319
    %v6512 = vcvt.s32.f32 %v6320
    %v6513 = vcvt.s32.f32 %v6321
    %v6514 = vcvt.s32.f32 %v6322
    %v6515 = vcvt.s32.f32 %v6323
    %v6516 = vcvt.s32.f32 %v6324
    %v6517 = vcvt.s32.f32 %v6325
    %v6518 = vcvt.s32.f32 %v6326
    %v6519 = vcvt.s32.f32 %v6327
    %v6520 = vcvt.s32.f32 %v6328
    %v6521 = vcvt.s32.f32 %v6329
    %v6522 = vcvt.s32.f32 %v6330
    %v6523 = vcvt.s32.f32 %v6331
    %v6524 = vcvt.s32.f32 %v6332
    %v6525 = vcvt.s32.f32 %v6333
    %v6526 = vcvt.s32.f32 %v6334
    %v6527 = vcvt.s32.f32 %v6335
    %v6528 = vcvt.s32.f32 %v6336
    %v6529 = vcvt.s32.f32 %v6337
    %v6530 = vcvt.s32.f32 %v6338
    %v6531 = vcvt.s32.f32 %v6339
    %v6532 = vcvt.s32.f32 %v6340
    %v6533 = vcvt.s32.f32 %v6341
    %v6534 = vcvt.s32.f32 %v6342
    %v6535 = vcvt.s32.f32 %v6343
    %v6536 = vcvt.s32.f32 %v6344
    %v6537 = vcvt.s32.f32 %v6345
    %v6538 = vcvt.s32.f32 %v6346
    %v6539 = vcvt.s32.f32 %v6347
    %v6540 = vcvt.s32.f32 %v6348
    %v6541 = vcvt.s32.f32 %v6349
    %v6542 = vcvt.s32.f32 %v6350
    %v6543 = vcvt.s32.f32 %v6351
    %v6544 = vcvt.s32.f32 %v6352
    %v6545 = vcvt.s32.f32 %v6353
    %v6546 = vcvt.s32.f32 %v6354
    %v6547 = vcvt.s32.f32 %v6355
    %v6548 = vcvt.s32.f32 %v6356
    %v6549 = vcvt.s32.f32 %v6357
    %v6550 = vcvt.s32.f32 %v6358
    %v6551 = vcvt.s32.f32 %v6359
    %v6552 = vcvt.s32.f32 %v6360
    %v6553 = vcvt.s32.f32 %v6361
    %v6554 = vcvt.s32.f32 %v6362
    %v6555 = vcvt.s32.f32 %v6363
    %v6556 = vcvt.s32.f32 %v6364
    %v6557 = vcvt.s32.f32 %v6365
    %v6558 = vcvt.s32.f32 %v6366
    %v6559 = vcvt.s32.f32 %v6367
    %v6560 = vcvt.s32.f32 %v6368
    %v6561 = vcvt.s32.f32 %v6369
    %v6562 = vcvt.s32.f32 %v6370
    %v6563 = vcvt.s32.f32 %v6371
    %v6564 = vcvt.s32.f32 %v6372
    %v6565 = vcvt.s32.f32 %v6373
    %v6566 = vcvt.s32.f32 %v6374
    %v6567 = vcvt.s32.f32 %v6375
    %v6568 = vadd.f32 %v5608, %v6376
    %v6569 = vadd.f32 %v5609, %v6377
    %v6570 = vadd.f32 %v5610, %v6378
    %v6571 = vadd.f32 %v5611, %v6379
    %v6572 = vadd.f32 %v5612, %v6380
    %v6573 = vadd.f32 %v5613, %v6381
    %v6574 = vadd.f32 %v5614, %v6382
    %v6575 = vadd.f32 %v5615, %v6383
    %v6576 = vadd.f32 %v5616, %v6384
    %v6577 = vadd.f32 %v5617, %v6385
    %v6578 = vadd.f32 %v5618, %v6386
    %v6579 = vadd.f32 %v5619, %v6387
    %v6580 = vadd.f32 %v5620, %v6388
    %v6581 = vadd.f32 %v5621, %v6389
    %v6582 = vadd.f32 %v5622, %v6390
    %v6583 = vadd.f32 %v5623, %v6391
    %v6584 = vadd.f32 %v5624, %v6392
    %v6585 = vadd.f32 %v5625, %v6393
    %v6586 = vadd.f32 %v5626, %v6394
    %v6587 = vadd.f32 %v5627, %v6395
    %v6588 = vadd.f32 %v5628, %v6396
    %v6589 = vadd.f32 %v5629, %v6397
    %v6590 = vadd.f32 %v5630, %v6398
    %v6591 = vadd.f32 %v5631, %v6399
    %v6592 = vadd.f32 %v5632, %v6400
    %v6593 = vadd.f32 %v5633, %v6401
    %v6594 = vadd.f32 %v5634, %v6402
    %v6595 = vadd.f32 %v5635, %v6403
    %v6596 = vadd.f32 %v5636, %v6404
    %v6597 = vadd.f32 %v5637, %v6405
    %v6598 = vadd.f32 %v5638, %v6406
    %v6599 = vadd.f32 %v5639, %v6407
    %v6600 = vadd.f32 %v5640, %v6408
    %v6601 = vadd.f32 %v5641, %v6409
    %v6602 = vadd.f32 %v5642, %v6410
    %v6603 = vadd.f32 %v5643, %v6411
    %v6604 = vadd.f32 %v5644, %v6412
    %v6605 = vadd.f32 %v5645, %v6413
    %v6606 = vadd.f32 %v5646, %v6414
    %v6607 = vadd.f32 %v5647, %v6415
    %v6608 = vadd.f32 %v5648, %v6416
    %v6609 = vadd.f32 %v5649, %v6417
    %v6610 = vadd.f32 %v5650, %v6418
    %v6611 = vadd.f32 %v5651, %v6419
    %v6612 = vadd.f32 %v5652, %v6420
    %v6613 = vadd.f32 %v5653, %v6421
    %v6614 = vadd.f32 %v5654, %v6422
    %v6615 = vadd.f32 %v5655, %v6423
    %v6616 = vadd.f32 %v5656, %v6424
    %v6617 = vadd.f32 %v5657, %v6425
    %v6618 = vadd.f32 %v5658, %v6426
    %v6619 = vadd.f32 %v5659, %v6427
    %v6620 = vadd.f32 %v5660, %v6428
    %v6621 = vadd.f32 %v5661, %v6429
    %v6622 = vadd.f32 %v5662, %v6430
    %v6623 = vadd.f32 %v5663, %v6431
    %v6624 = vadd.f32 %v5664, %v6432
    %v6625 = vadd.f32 %v5665, %v6433
    %v6626 = vadd.f32 %v5666, %v6434
    %v6627 = vadd.f32 %v5667, %v6435
    %v6628 = vadd.f32 %v5668, %v6436
    %v6629 = vadd.f32 %v5669, %v6437
    %v6630 = vadd.f32 %v5670, %v6438
    %v6631 = vadd.f32 %v5671, %v6439
    %v6632 = vadd.f32 %v5672, %v6440
    %v6633 = vadd.f32 %v5673, %v6441
    %v6634 = vadd.f32 %v5674, %v6442
    %v6635 = vadd.f32 %v5675, %v6443
    %v6636 = vadd.f32 %v5676, %v6444
    %v6637 = vadd.f32 %v5677, %v6445
    %v6638 = vadd.f32 %v5678, %v6446
    %v6639 = vadd.f32 %v5679, %v6447
    %v6640 = vadd.f32 %v5680, %v6448
    %v6641 = vadd.f32 %v5681, %v6449
    %v6642 = vadd.f32 %v5682, %v6450
    %v6643 = vadd.f32 %v5683, %v6451
    %v6644 = vadd.f32 %v5684, %v6452
    %v6645 = vadd.f32 %v5685, %v6453
    %v6646 = vadd.f32 %v5686, %v6454
    %v6647 = vadd.f32 %v5687, %v6455
    %v6648 = vadd.f32 %v5688, %v6456
    %v6649 = vadd.f32 %v5689, %v6457
    %v6650 = vadd.f32 %v5690, %v6458
    %v6651 = vadd.f32 %v5691, %v6459
    %v6652 = vadd.f32 %v5692, %v6460
    %v6653 = vadd.f32 %v5693, %v6461
    %v6654 = vadd.f32 %v5694, %v6462
    %v6655 = vadd.f32 %v5695, %v6463
    %v6656 = vadd.f32 %v5696, %v6464
    %v6657 = vadd.f32 %v5697, %v6465
    %v6658 = vadd.f32 %v5698, %v6466
    %v6659 = vadd.f32 %v5699, %v6467
    %v6660 = vadd.f32 %v5700, %v6468
    %v6661 = vadd.f32 %v5701, %v6469
    %v6662 = vadd.f32 %v5702, %v6470
    %v6663 = vadd.f32 %v5703, %v6471
    %v6664 = vadd.f32 %v5704, %v6472
    %v6665 = vadd.f32 %v5705, %v6473
    %v6666 = vadd.f32 %v5706, %v6474
    %v6667 = vadd.f32 %v5707, %v6475
    %v6668 = vadd.f32 %v5708, %v6476
    %v6669 = vadd.f32 %v5709, %v6477
    %v6670 = vadd.f32 %v5710, %v6478
    %v6671 = vadd.f32 %v5711, %v6479
    %v6672 = vadd.f32 %v5712, %v6480
    %v6673 = vadd.f32 %v5713, %v6481
    %v6674 = vadd.f32 %v5714, %v6482
    %v6675 = vadd.f32 %v5715, %v6483
    %v6676 = vadd.f32 %v5716, %v6484
    %v6677 = vadd.f32 %v5717, %v6485
    %v6678 = vadd.f32 %v5718, %v6486
    %v6679 = vadd.f32 %v5719, %v6487
    %v6680 = vadd.f32 %v5720, %v6488
    %v6681 = vadd.f32 %v5721, %v6489
    %v6682 = vadd.f32 %v5722, %v6490
    %v6683 = vadd.f32 %v5723, %v6491
    %v6684 = vadd.f32 %v5724, %v6492
    %v6685 = vadd.f32 %v5725, %v6493
    %v6686 = vadd.f32 %v5726, %v6494
    %v6687 = vadd.f32 %v5727, %v6495
    %v6688 = vadd.f32 %v5728, %v6496
    %v6689 = vadd.f32 %v5729, %v6497
    %v6690 = vadd.f32 %v5730, %v6498
    %v6691 = vadd.f32 %v5731, %v6499
    %v6692 = vadd.f32 %v5732, %v6500
    %v6693 = vadd.f32 %v5733, %v6501
    %v6694 = vadd.f32 %v5734, %v6502
    %v6695 = vadd.f32 %v5735, %v6503
    %v6696 = vadd.f32 %v5736, %v6504
    %v6697 = vadd.f32 %v5737, %v6505
    %v6698 = vadd.f32 %v5738, %v6506
    %v6699 = vadd.f32 %v5739, %v6507
    %v6700 = vadd.f32 %v5740, %v6508
    %v6701 = vadd.f32 %v5741, %v6509
    %v6702 = vadd.f32 %v5742, %v6510
    %v6703 = vadd.f32 %v5743, %v6511
    %v6704 = vadd.f32 %v5744, %v6512
    %v6705 = vadd.f32 %v5745, %v6513
    %v6706 = vadd.f32 %v5746, %v6514
    %v6707 = vadd.f32 %v5747, %v6515
    %v6708 = vadd.f32 %v5748, %v6516
    %v6709 = vadd.f32 %v5749, %v6517
    %v6710 = vadd.f32 %v5750, %v6518
    %v6711 = vadd.f32 %v5751, %v6519
    %v6712 = vadd.f32 %v5752, %v6520
    %v6713 = vadd.f32 %v5753, %v6521
    %v6714 = vadd.f32 %v5754, %v6522
    %v6715 = vadd.f32 %v5755, %v6523
    %v6716 = vadd.f32 %v5756, %v6524
    %v6717 = vadd.f32 %v5757, %v6525
    %v6718 = vadd.f32 %v5758, %v6526
    %v6719 = vadd.f32 %v5759, %v6527
    %v6720 = vadd.f32 %v5760, %v6528
    %v6721 = vadd.f32 %v5761, %v6529
    %v6722 = vadd.f32 %v5762, %v6530
    %v6723 = vadd.f32 %v5763, %v6531
    %v6724 = vadd.f32 %v5764, %v6532
    %v6725 = vadd.f32 %v5765, %v6533
    %v6726 = vadd.f32 %v5766, %v6534
    %v6727 = vadd.f32 %v5767, %v6535
    %v6728 = vadd.f32 %v5768, %v6536
    %v6729 = vadd.f32 %v5769, %v6537
    %v6730 = vadd.f32 %v5770, %v6538
    %v6731 = vadd.f32 %v5771, %v6539
    %v6732 = vadd.f32 %v5772, %v6540
    %v6733 = vadd.f32 %v5773, %v6541
    %v6734 = vadd.f32 %v5774, %v6542
    %v6735 = vadd.f32 %v5775, %v6543
    %v6736 = vadd.f32 %v5776, %v6544
    %v6737 = vadd.f32 %v5777, %v6545
    %v6738 = vadd.f32 %v5778, %v6546
    %v6739 = vadd.f32 %v5779, %v6547
    %v6740 = vadd.f32 %v5780, %v6548
    %v6741 = vadd.f32 %v5781, %v6549
    %v6742 = vadd.f32 %v5782, %v6550
    %v6743 = vadd.f32 %v5783, %v6551
    %v6744 = vadd.f32 %v5784, %v6552
    %v6745 = vadd.f32 %v5785, %v6553
    %v6746 = vadd.f32 %v5786, %v6554
    %v6747 = vadd.f32 %v5787, %v6555
    %v6748 = vadd.f32 %v5788, %v6556
    %v6749 = vadd.f32 %v5789, %v6557
    %v6750 = vadd.f32 %v5790, %v6558
    %v6751 = vadd.f32 %v5791, %v6559
    %v6752 = vadd.f32 %v5792, %v6560
    %v6753 = vadd.f32 %v5793, %v6561
    %v6754 = vadd.f32 %v5794, %v6562
    %v6755 = vadd.f32 %v5795, %v6563
    %v6756 = vadd.f32 %v5796, %v6564
    %v6757 = vadd.f32 %v5797, %v6565
    %v6758 = vadd.f32 %v5798, %v6566
    %v6759 = vadd.f32 %v5799, %v6567
    %v6760 = vadd.s32 %v35, 448
    %v6761 = vadd.s32 %v36, 448
    %v6762 = vadd.s32 %v37, 448
    %v6763 = vadd.s32 %v38, 448
    %v6764 = vadd.s32 %v39, 448
    %v6765 = vadd.s32 %v40, 448
    %v6766 = vadd.s32 %v41, 448
    %v6767 = vadd.s32 %v42, 448
    %v6768 = vadd.s32 %v43, 448
    %v6769 = vadd.s32 %v44, 448
    %v6770 = vadd.s32 %v45, 448
    %v6771 = vadd.s32 %v46, 448
    %v6772 = vadd.s32 %v47, 448
    %v6773 = vadd.s32 %v48, 448
    %v6774 = vadd.s32 %v49, 448
    %v6775 = vadd.s32 %v50, 448
    %v6776 = vadd.s32 %v51, 448
    %v6777 = vadd.s32 %v52, 448
    %v6778 = vadd.s32 %v53, 448
    %v6779 = vadd.s32 %v54, 448
    %v6780 = vadd.s32 %v55, 448
    %v6781 = vadd.s32 %v56, 448
    %v6782 = vadd.s32 %v57, 448
    %v6783 = vadd.s32 %v58, 448
    %v6784 = vadd.s32 %v59, 448
    %v6785 = vadd.s32 %v60, 448
    %v6786 = vadd.s32 %v61, 448
    %v6787 = vadd.s32 %v62, 448
    %v6788 = vadd.s32 %v63, 448
    %v6789 = vadd.s32 %v64, 448
    %v6790 = vadd.s32 %v65, 448
    %v6791 = vadd.s32 %v66, 448
    %v6792 = vadd.s32 %v67, 448
    %v6793 = vadd.s32 %v68, 448
    %v6794 = vadd.s32 %v69, 448
    %v6795 = vadd.s32 %v70, 448
    %v6796 = vadd.s32 %v71, 448
    %v6797 = vadd.s32 %v72, 448
    %v6798 = vadd.s32 %v73, 448
    %v6799 = vadd.s32 %v74, 448
    %v6800 = vadd.s32 %v75, 448
    %v6801 = vadd.s32 %v76, 448
    %v6802 = vadd.s32 %v77, 448
    %v6803 = vadd.s32 %v78, 448
    %v6804 = vadd.s32 %v79, 448
    %v6805 = vadd.s32 %v80, 448
    %v6806 = vadd.s32 %v81, 448
    %v6807 = vadd.s32 %v82, 448
    %6808 = vset.pattern.permute.xlu0 7
    %6809 = vperm.xlu0 %6808, %v6760
    %v6810 = vpop.permute.xlu0 %6809
    %6811 = vset.pattern.permute.xlu0 7
    %6812 = vperm.xlu0 %6811, %v6761
    %v6813 = vpop.permute.xlu0 %6812
    %6814 = vset.pattern.permute.xlu0 7
    %6815 = vperm.xlu0 %6814, %v6762
    %v6816 = vpop.permute.xlu0 %6815
    %6817 = vset.pattern.permute.xlu0 7
    %6818 = vperm.xlu0 %6817, %v6763
    %v6819 = vpop.permute.xlu0 %6818
    %6820 = vset.pattern.permute.xlu0 7
    %6821 = vperm.xlu0 %6820, %v6764
    %v6822 = vpop.permute.xlu0 %6821
    %6823 = vset.pattern.permute.xlu0 7
    %6824 = vperm.xlu0 %6823, %v6765
    %v6825 = vpop.permute.xlu0 %6824
    %6826 = vset.pattern.permute.xlu0 7
    %6827 = vperm.xlu0 %6826, %v6766
    %v6828 = vpop.permute.xlu0 %6827
    %6829 = vset.pattern.permute.xlu0 7
    %6830 = vperm.xlu0 %6829, %v6767
    %v6831 = vpop.permute.xlu0 %6830
    %6832 = vset.pattern.permute.xlu0 7
    %6833 = vperm.xlu0 %6832, %v6768
    %v6834 = vpop.permute.xlu0 %6833
    %6835 = vset.pattern.permute.xlu0 7
    %6836 = vperm.xlu0 %6835, %v6769
    %v6837 = vpop.permute.xlu0 %6836
    %6838 = vset.pattern.permute.xlu0 7
    %6839 = vperm.xlu0 %6838, %v6770
    %v6840 = vpop.permute.xlu0 %6839
    %6841 = vset.pattern.permute.xlu0 7
    %6842 = vperm.xlu0 %6841, %v6771
    %v6843 = vpop.permute.xlu0 %6842
    %6844 = vset.pattern.permute.xlu0 7
    %6845 = vperm.xlu0 %6844, %v6772
    %v6846 = vpop.permute.xlu0 %6845
    %6847 = vset.pattern.permute.xlu0 7
    %6848 = vperm.xlu0 %6847, %v6773
    %v6849 = vpop.permute.xlu0 %6848
    %6850 = vset.pattern.permute.xlu0 7
    %6851 = vperm.xlu0 %6850, %v6774
    %v6852 = vpop.permute.xlu0 %6851
    %6853 = vset.pattern.permute.xlu0 7
    %6854 = vperm.xlu0 %6853, %v6775
    %v6855 = vpop.permute.xlu0 %6854
    %6856 = vset.pattern.permute.xlu0 7
    %6857 = vperm.xlu0 %6856, %v6776
    %v6858 = vpop.permute.xlu0 %6857
    %6859 = vset.pattern.permute.xlu0 7
    %6860 = vperm.xlu0 %6859, %v6777
    %v6861 = vpop.permute.xlu0 %6860
    %6862 = vset.pattern.permute.xlu0 7
    %6863 = vperm.xlu0 %6862, %v6778
    %v6864 = vpop.permute.xlu0 %6863
    %6865 = vset.pattern.permute.xlu0 7
    %6866 = vperm.xlu0 %6865, %v6779
    %v6867 = vpop.permute.xlu0 %6866
    %6868 = vset.pattern.permute.xlu0 7
    %6869 = vperm.xlu0 %6868, %v6780
    %v6870 = vpop.permute.xlu0 %6869
    %6871 = vset.pattern.permute.xlu0 7
    %6872 = vperm.xlu0 %6871, %v6781
    %v6873 = vpop.permute.xlu0 %6872
    %6874 = vset.pattern.permute.xlu0 7
    %6875 = vperm.xlu0 %6874, %v6782
    %v6876 = vpop.permute.xlu0 %6875
    %6877 = vset.pattern.permute.xlu0 7
    %6878 = vperm.xlu0 %6877, %v6783
    %v6879 = vpop.permute.xlu0 %6878
    %6880 = vset.pattern.permute.xlu0 7
    %6881 = vperm.xlu0 %6880, %v6784
    %v6882 = vpop.permute.xlu0 %6881
    %6883 = vset.pattern.permute.xlu0 7
    %6884 = vperm.xlu0 %6883, %v6785
    %v6885 = vpop.permute.xlu0 %6884
    %6886 = vset.pattern.permute.xlu0 7
    %6887 = vperm.xlu0 %6886, %v6786
    %v6888 = vpop.permute.xlu0 %6887
    %6889 = vset.pattern.permute.xlu0 7
    %6890 = vperm.xlu0 %6889, %v6787
    %v6891 = vpop.permute.xlu0 %6890
    %6892 = vset.pattern.permute.xlu0 7
    %6893 = vperm.xlu0 %6892, %v6788
    %v6894 = vpop.permute.xlu0 %6893
    %6895 = vset.pattern.permute.xlu0 7
    %6896 = vperm.xlu0 %6895, %v6789
    %v6897 = vpop.permute.xlu0 %6896
    %6898 = vset.pattern.permute.xlu0 7
    %6899 = vperm.xlu0 %6898, %v6790
    %v6900 = vpop.permute.xlu0 %6899
    %6901 = vset.pattern.permute.xlu0 7
    %6902 = vperm.xlu0 %6901, %v6791
    %v6903 = vpop.permute.xlu0 %6902
    %6904 = vset.pattern.permute.xlu0 7
    %6905 = vperm.xlu0 %6904, %v6792
    %v6906 = vpop.permute.xlu0 %6905
    %6907 = vset.pattern.permute.xlu0 7
    %6908 = vperm.xlu0 %6907, %v6793
    %v6909 = vpop.permute.xlu0 %6908
    %6910 = vset.pattern.permute.xlu0 7
    %6911 = vperm.xlu0 %6910, %v6794
    %v6912 = vpop.permute.xlu0 %6911
    %6913 = vset.pattern.permute.xlu0 7
    %6914 = vperm.xlu0 %6913, %v6795
    %v6915 = vpop.permute.xlu0 %6914
    %6916 = vset.pattern.permute.xlu0 7
    %6917 = vperm.xlu0 %6916, %v6796
    %v6918 = vpop.permute.xlu0 %6917
    %6919 = vset.pattern.permute.xlu0 7
    %6920 = vperm.xlu0 %6919, %v6797
    %v6921 = vpop.permute.xlu0 %6920
    %6922 = vset.pattern.permute.xlu0 7
    %6923 = vperm.xlu0 %6922, %v6798
    %v6924 = vpop.permute.xlu0 %6923
    %6925 = vset.pattern.permute.xlu0 7
    %6926 = vperm.xlu0 %6925, %v6799
    %v6927 = vpop.permute.xlu0 %6926
    %6928 = vset.pattern.permute.xlu0 7
    %6929 = vperm.xlu0 %6928, %v6800
    %v6930 = vpop.permute.xlu0 %6929
    %6931 = vset.pattern.permute.xlu0 7
    %6932 = vperm.xlu0 %6931, %v6801
    %v6933 = vpop.permute.xlu0 %6932
    %6934 = vset.pattern.permute.xlu0 7
    %6935 = vperm.xlu0 %6934, %v6802
    %v6936 = vpop.permute.xlu0 %6935
    %6937 = vset.pattern.permute.xlu0 7
    %6938 = vperm.xlu0 %6937, %v6803
    %v6939 = vpop.permute.xlu0 %6938
    %6940 = vset.pattern.permute.xlu0 7
    %6941 = vperm.xlu0 %6940, %v6804
    %v6942 = vpop.permute.xlu0 %6941
    %6943 = vset.pattern.permute.xlu0 7
    %6944 = vperm.xlu0 %6943, %v6805
    %v6945 = vpop.permute.xlu0 %6944
    %6946 = vset.pattern.permute.xlu0 7
    %6947 = vperm.xlu0 %6946, %v6806
    %v6948 = vpop.permute.xlu0 %6947
    %6949 = vset.pattern.permute.xlu0 7
    %6950 = vperm.xlu0 %6949, %v6807
    %v6951 = vpop.permute.xlu0 %6950
    %vm6952 = vcmp.eq.s32.totalorder %v6810, %v84
    %vm6953 = vcmp.eq.s32.totalorder %v6810, %v85
    %vm6954 = vcmp.eq.s32.totalorder %v6810, %v86
    %vm6955 = vcmp.eq.s32.totalorder %v6810, %v87
    %vm6956 = vcmp.eq.s32.totalorder %v6813, %v84
    %vm6957 = vcmp.eq.s32.totalorder %v6813, %v85
    %vm6958 = vcmp.eq.s32.totalorder %v6813, %v86
    %vm6959 = vcmp.eq.s32.totalorder %v6813, %v87
    %vm6960 = vcmp.eq.s32.totalorder %v6816, %v84
    %vm6961 = vcmp.eq.s32.totalorder %v6816, %v85
    %vm6962 = vcmp.eq.s32.totalorder %v6816, %v86
    %vm6963 = vcmp.eq.s32.totalorder %v6816, %v87
    %vm6964 = vcmp.eq.s32.totalorder %v6819, %v84
    %vm6965 = vcmp.eq.s32.totalorder %v6819, %v85
    %vm6966 = vcmp.eq.s32.totalorder %v6819, %v86
    %vm6967 = vcmp.eq.s32.totalorder %v6819, %v87
    %vm6968 = vcmp.eq.s32.totalorder %v6822, %v84
    %vm6969 = vcmp.eq.s32.totalorder %v6822, %v85
    %vm6970 = vcmp.eq.s32.totalorder %v6822, %v86
    %vm6971 = vcmp.eq.s32.totalorder %v6822, %v87
    %vm6972 = vcmp.eq.s32.totalorder %v6825, %v84
    %vm6973 = vcmp.eq.s32.totalorder %v6825, %v85
    %vm6974 = vcmp.eq.s32.totalorder %v6825, %v86
    %vm6975 = vcmp.eq.s32.totalorder %v6825, %v87
    %vm6976 = vcmp.eq.s32.totalorder %v6828, %v84
    %vm6977 = vcmp.eq.s32.totalorder %v6828, %v85
    %vm6978 = vcmp.eq.s32.totalorder %v6828, %v86
    %vm6979 = vcmp.eq.s32.totalorder %v6828, %v87
    %vm6980 = vcmp.eq.s32.totalorder %v6831, %v84
    %vm6981 = vcmp.eq.s32.totalorder %v6831, %v85
    %vm6982 = vcmp.eq.s32.totalorder %v6831, %v86
    %vm6983 = vcmp.eq.s32.totalorder %v6831, %v87
    %vm6984 = vcmp.eq.s32.totalorder %v6834, %v84
    %vm6985 = vcmp.eq.s32.totalorder %v6834, %v85
    %vm6986 = vcmp.eq.s32.totalorder %v6834, %v86
    %vm6987 = vcmp.eq.s32.totalorder %v6834, %v87
    %vm6988 = vcmp.eq.s32.totalorder %v6837, %v84
    %vm6989 = vcmp.eq.s32.totalorder %v6837, %v85
    %vm6990 = vcmp.eq.s32.totalorder %v6837, %v86
    %vm6991 = vcmp.eq.s32.totalorder %v6837, %v87
    %vm6992 = vcmp.eq.s32.totalorder %v6840, %v84
    %vm6993 = vcmp.eq.s32.totalorder %v6840, %v85
    %vm6994 = vcmp.eq.s32.totalorder %v6840, %v86
    %vm6995 = vcmp.eq.s32.totalorder %v6840, %v87
    %vm6996 = vcmp.eq.s32.totalorder %v6843, %v84
    %vm6997 = vcmp.eq.s32.totalorder %v6843, %v85
    %vm6998 = vcmp.eq.s32.totalorder %v6843, %v86
    %vm6999 = vcmp.eq.s32.totalorder %v6843, %v87
    %vm7000 = vcmp.eq.s32.totalorder %v6846, %v84
    %vm7001 = vcmp.eq.s32.totalorder %v6846, %v85
    %vm7002 = vcmp.eq.s32.totalorder %v6846, %v86
    %vm7003 = vcmp.eq.s32.totalorder %v6846, %v87
    %vm7004 = vcmp.eq.s32.totalorder %v6849, %v84
    %vm7005 = vcmp.eq.s32.totalorder %v6849, %v85
    %vm7006 = vcmp.eq.s32.totalorder %v6849, %v86
    %vm7007 = vcmp.eq.s32.totalorder %v6849, %v87
    %vm7008 = vcmp.eq.s32.totalorder %v6852, %v84
    %vm7009 = vcmp.eq.s32.totalorder %v6852, %v85
    %vm7010 = vcmp.eq.s32.totalorder %v6852, %v86
    %vm7011 = vcmp.eq.s32.totalorder %v6852, %v87
    %vm7012 = vcmp.eq.s32.totalorder %v6855, %v84
    %vm7013 = vcmp.eq.s32.totalorder %v6855, %v85
    %vm7014 = vcmp.eq.s32.totalorder %v6855, %v86
    %vm7015 = vcmp.eq.s32.totalorder %v6855, %v87
    %vm7016 = vcmp.eq.s32.totalorder %v6858, %v84
    %vm7017 = vcmp.eq.s32.totalorder %v6858, %v85
    %vm7018 = vcmp.eq.s32.totalorder %v6858, %v86
    %vm7019 = vcmp.eq.s32.totalorder %v6858, %v87
    %vm7020 = vcmp.eq.s32.totalorder %v6861, %v84
    %vm7021 = vcmp.eq.s32.totalorder %v6861, %v85
    %vm7022 = vcmp.eq.s32.totalorder %v6861, %v86
    %vm7023 = vcmp.eq.s32.totalorder %v6861, %v87
    %vm7024 = vcmp.eq.s32.totalorder %v6864, %v84
    %vm7025 = vcmp.eq.s32.totalorder %v6864, %v85
    %vm7026 = vcmp.eq.s32.totalorder %v6864, %v86
    %vm7027 = vcmp.eq.s32.totalorder %v6864, %v87
    %vm7028 = vcmp.eq.s32.totalorder %v6867, %v84
    %vm7029 = vcmp.eq.s32.totalorder %v6867, %v85
    %vm7030 = vcmp.eq.s32.totalorder %v6867, %v86
    %vm7031 = vcmp.eq.s32.totalorder %v6867, %v87
    %vm7032 = vcmp.eq.s32.totalorder %v6870, %v84
    %vm7033 = vcmp.eq.s32.totalorder %v6870, %v85
    %vm7034 = vcmp.eq.s32.totalorder %v6870, %v86
    %vm7035 = vcmp.eq.s32.totalorder %v6870, %v87
    %vm7036 = vcmp.eq.s32.totalorder %v6873, %v84
    %vm7037 = vcmp.eq.s32.totalorder %v6873, %v85
    %vm7038 = vcmp.eq.s32.totalorder %v6873, %v86
    %vm7039 = vcmp.eq.s32.totalorder %v6873, %v87
    %vm7040 = vcmp.eq.s32.totalorder %v6876, %v84
    %vm7041 = vcmp.eq.s32.totalorder %v6876, %v85
    %vm7042 = vcmp.eq.s32.totalorder %v6876, %v86
    %vm7043 = vcmp.eq.s32.totalorder %v6876, %v87
    %vm7044 = vcmp.eq.s32.totalorder %v6879, %v84
    %vm7045 = vcmp.eq.s32.totalorder %v6879, %v85
    %vm7046 = vcmp.eq.s32.totalorder %v6879, %v86
    %vm7047 = vcmp.eq.s32.totalorder %v6879, %v87
    %vm7048 = vcmp.eq.s32.totalorder %v6882, %v84
    %vm7049 = vcmp.eq.s32.totalorder %v6882, %v85
    %vm7050 = vcmp.eq.s32.totalorder %v6882, %v86
    %vm7051 = vcmp.eq.s32.totalorder %v6882, %v87
    %vm7052 = vcmp.eq.s32.totalorder %v6885, %v84
    %vm7053 = vcmp.eq.s32.totalorder %v6885, %v85
    %vm7054 = vcmp.eq.s32.totalorder %v6885, %v86
    %vm7055 = vcmp.eq.s32.totalorder %v6885, %v87
    %vm7056 = vcmp.eq.s32.totalorder %v6888, %v84
    %vm7057 = vcmp.eq.s32.totalorder %v6888, %v85
    %vm7058 = vcmp.eq.s32.totalorder %v6888, %v86
    %vm7059 = vcmp.eq.s32.totalorder %v6888, %v87
    %vm7060 = vcmp.eq.s32.totalorder %v6891, %v84
    %vm7061 = vcmp.eq.s32.totalorder %v6891, %v85
    %vm7062 = vcmp.eq.s32.totalorder %v6891, %v86
    %vm7063 = vcmp.eq.s32.totalorder %v6891, %v87
    %vm7064 = vcmp.eq.s32.totalorder %v6894, %v84
    %vm7065 = vcmp.eq.s32.totalorder %v6894, %v85
    %vm7066 = vcmp.eq.s32.totalorder %v6894, %v86
    %vm7067 = vcmp.eq.s32.totalorder %v6894, %v87
    %vm7068 = vcmp.eq.s32.totalorder %v6897, %v84
    %vm7069 = vcmp.eq.s32.totalorder %v6897, %v85
    %vm7070 = vcmp.eq.s32.totalorder %v6897, %v86
    %vm7071 = vcmp.eq.s32.totalorder %v6897, %v87
    %vm7072 = vcmp.eq.s32.totalorder %v6900, %v84
    %vm7073 = vcmp.eq.s32.totalorder %v6900, %v85
    %vm7074 = vcmp.eq.s32.totalorder %v6900, %v86
    %vm7075 = vcmp.eq.s32.totalorder %v6900, %v87
    %vm7076 = vcmp.eq.s32.totalorder %v6903, %v84
    %vm7077 = vcmp.eq.s32.totalorder %v6903, %v85
    %vm7078 = vcmp.eq.s32.totalorder %v6903, %v86
    %vm7079 = vcmp.eq.s32.totalorder %v6903, %v87
    %vm7080 = vcmp.eq.s32.totalorder %v6906, %v84
    %vm7081 = vcmp.eq.s32.totalorder %v6906, %v85
    %vm7082 = vcmp.eq.s32.totalorder %v6906, %v86
    %vm7083 = vcmp.eq.s32.totalorder %v6906, %v87
    %vm7084 = vcmp.eq.s32.totalorder %v6909, %v84
    %vm7085 = vcmp.eq.s32.totalorder %v6909, %v85
    %vm7086 = vcmp.eq.s32.totalorder %v6909, %v86
    %vm7087 = vcmp.eq.s32.totalorder %v6909, %v87
    %vm7088 = vcmp.eq.s32.totalorder %v6912, %v84
    %vm7089 = vcmp.eq.s32.totalorder %v6912, %v85
    %vm7090 = vcmp.eq.s32.totalorder %v6912, %v86
    %vm7091 = vcmp.eq.s32.totalorder %v6912, %v87
    %vm7092 = vcmp.eq.s32.totalorder %v6915, %v84
    %vm7093 = vcmp.eq.s32.totalorder %v6915, %v85
    %vm7094 = vcmp.eq.s32.totalorder %v6915, %v86
    %vm7095 = vcmp.eq.s32.totalorder %v6915, %v87
    %vm7096 = vcmp.eq.s32.totalorder %v6918, %v84
    %vm7097 = vcmp.eq.s32.totalorder %v6918, %v85
    %vm7098 = vcmp.eq.s32.totalorder %v6918, %v86
    %vm7099 = vcmp.eq.s32.totalorder %v6918, %v87
    %vm7100 = vcmp.eq.s32.totalorder %v6921, %v84
    %vm7101 = vcmp.eq.s32.totalorder %v6921, %v85
    %vm7102 = vcmp.eq.s32.totalorder %v6921, %v86
    %vm7103 = vcmp.eq.s32.totalorder %v6921, %v87
    %vm7104 = vcmp.eq.s32.totalorder %v6924, %v84
    %vm7105 = vcmp.eq.s32.totalorder %v6924, %v85
    %vm7106 = vcmp.eq.s32.totalorder %v6924, %v86
    %vm7107 = vcmp.eq.s32.totalorder %v6924, %v87
    %vm7108 = vcmp.eq.s32.totalorder %v6927, %v84
    %vm7109 = vcmp.eq.s32.totalorder %v6927, %v85
    %vm7110 = vcmp.eq.s32.totalorder %v6927, %v86
    %vm7111 = vcmp.eq.s32.totalorder %v6927, %v87
    %vm7112 = vcmp.eq.s32.totalorder %v6930, %v84
    %vm7113 = vcmp.eq.s32.totalorder %v6930, %v85
    %vm7114 = vcmp.eq.s32.totalorder %v6930, %v86
    %vm7115 = vcmp.eq.s32.totalorder %v6930, %v87
    %vm7116 = vcmp.eq.s32.totalorder %v6933, %v84
    %vm7117 = vcmp.eq.s32.totalorder %v6933, %v85
    %vm7118 = vcmp.eq.s32.totalorder %v6933, %v86
    %vm7119 = vcmp.eq.s32.totalorder %v6933, %v87
    %vm7120 = vcmp.eq.s32.totalorder %v6936, %v84
    %vm7121 = vcmp.eq.s32.totalorder %v6936, %v85
    %vm7122 = vcmp.eq.s32.totalorder %v6936, %v86
    %vm7123 = vcmp.eq.s32.totalorder %v6936, %v87
    %vm7124 = vcmp.eq.s32.totalorder %v6939, %v84
    %vm7125 = vcmp.eq.s32.totalorder %v6939, %v85
    %vm7126 = vcmp.eq.s32.totalorder %v6939, %v86
    %vm7127 = vcmp.eq.s32.totalorder %v6939, %v87
    %vm7128 = vcmp.eq.s32.totalorder %v6942, %v84
    %vm7129 = vcmp.eq.s32.totalorder %v6942, %v85
    %vm7130 = vcmp.eq.s32.totalorder %v6942, %v86
    %vm7131 = vcmp.eq.s32.totalorder %v6942, %v87
    %vm7132 = vcmp.eq.s32.totalorder %v6945, %v84
    %vm7133 = vcmp.eq.s32.totalorder %v6945, %v85
    %vm7134 = vcmp.eq.s32.totalorder %v6945, %v86
    %vm7135 = vcmp.eq.s32.totalorder %v6945, %v87
    %vm7136 = vcmp.eq.s32.totalorder %v6948, %v84
    %vm7137 = vcmp.eq.s32.totalorder %v6948, %v85
    %vm7138 = vcmp.eq.s32.totalorder %v6948, %v86
    %vm7139 = vcmp.eq.s32.totalorder %v6948, %v87
    %vm7140 = vcmp.eq.s32.totalorder %v6951, %v84
    %vm7141 = vcmp.eq.s32.totalorder %v6951, %v85
    %vm7142 = vcmp.eq.s32.totalorder %v6951, %v86
    %vm7143 = vcmp.eq.s32.totalorder %v6951, %v87
    %v7144 = vsel %vm6952, 1, 0
    %v7145 = vsel %vm6953, 1, 0
    %v7146 = vsel %vm6954, 1, 0
    %v7147 = vsel %vm6955, 1, 0
    %v7148 = vsel %vm6956, 1, 0
    %v7149 = vsel %vm6957, 1, 0
    %v7150 = vsel %vm6958, 1, 0
    %v7151 = vsel %vm6959, 1, 0
    %v7152 = vsel %vm6960, 1, 0
    %v7153 = vsel %vm6961, 1, 0
    %v7154 = vsel %vm6962, 1, 0
    %v7155 = vsel %vm6963, 1, 0
    %v7156 = vsel %vm6964, 1, 0
    %v7157 = vsel %vm6965, 1, 0
    %v7158 = vsel %vm6966, 1, 0
    %v7159 = vsel %vm6967, 1, 0
    %v7160 = vsel %vm6968, 1, 0
    %v7161 = vsel %vm6969, 1, 0
    %v7162 = vsel %vm6970, 1, 0
    %v7163 = vsel %vm6971, 1, 0
    %v7164 = vsel %vm6972, 1, 0
    %v7165 = vsel %vm6973, 1, 0
    %v7166 = vsel %vm6974, 1, 0
    %v7167 = vsel %vm6975, 1, 0
    %v7168 = vsel %vm6976, 1, 0
    %v7169 = vsel %vm6977, 1, 0
    %v7170 = vsel %vm6978, 1, 0
    %v7171 = vsel %vm6979, 1, 0
    %v7172 = vsel %vm6980, 1, 0
    %v7173 = vsel %vm6981, 1, 0
    %v7174 = vsel %vm6982, 1, 0
    %v7175 = vsel %vm6983, 1, 0
    %v7176 = vsel %vm6984, 1, 0
    %v7177 = vsel %vm6985, 1, 0
    %v7178 = vsel %vm6986, 1, 0
    %v7179 = vsel %vm6987, 1, 0
    %v7180 = vsel %vm6988, 1, 0
    %v7181 = vsel %vm6989, 1, 0
    %v7182 = vsel %vm6990, 1, 0
    %v7183 = vsel %vm6991, 1, 0
    %v7184 = vsel %vm6992, 1, 0
    %v7185 = vsel %vm6993, 1, 0
    %v7186 = vsel %vm6994, 1, 0
    %v7187 = vsel %vm6995, 1, 0
    %v7188 = vsel %vm6996, 1, 0
    %v7189 = vsel %vm6997, 1, 0
    %v7190 = vsel %vm6998, 1, 0
    %v7191 = vsel %vm6999, 1, 0
    %v7192 = vsel %vm7000, 1, 0
    %v7193 = vsel %vm7001, 1, 0
    %v7194 = vsel %vm7002, 1, 0
    %v7195 = vsel %vm7003, 1, 0
    %v7196 = vsel %vm7004, 1, 0
    %v7197 = vsel %vm7005, 1, 0
    %v7198 = vsel %vm7006, 1, 0
    %v7199 = vsel %vm7007, 1, 0
    %v7200 = vsel %vm7008, 1, 0
    %v7201 = vsel %vm7009, 1, 0
    %v7202 = vsel %vm7010, 1, 0
    %v7203 = vsel %vm7011, 1, 0
    %v7204 = vsel %vm7012, 1, 0
    %v7205 = vsel %vm7013, 1, 0
    %v7206 = vsel %vm7014, 1, 0
    %v7207 = vsel %vm7015, 1, 0
    %v7208 = vsel %vm7016, 1, 0
    %v7209 = vsel %vm7017, 1, 0
    %v7210 = vsel %vm7018, 1, 0
    %v7211 = vsel %vm7019, 1, 0
    %v7212 = vsel %vm7020, 1, 0
    %v7213 = vsel %vm7021, 1, 0
    %v7214 = vsel %vm7022, 1, 0
    %v7215 = vsel %vm7023, 1, 0
    %v7216 = vsel %vm7024, 1, 0
    %v7217 = vsel %vm7025, 1, 0
    %v7218 = vsel %vm7026, 1, 0
    %v7219 = vsel %vm7027, 1, 0
    %v7220 = vsel %vm7028, 1, 0
    %v7221 = vsel %vm7029, 1, 0
    %v7222 = vsel %vm7030, 1, 0
    %v7223 = vsel %vm7031, 1, 0
    %v7224 = vsel %vm7032, 1, 0
    %v7225 = vsel %vm7033, 1, 0
    %v7226 = vsel %vm7034, 1, 0
    %v7227 = vsel %vm7035, 1, 0
    %v7228 = vsel %vm7036, 1, 0
    %v7229 = vsel %vm7037, 1, 0
    %v7230 = vsel %vm7038, 1, 0
    %v7231 = vsel %vm7039, 1, 0
    %v7232 = vsel %vm7040, 1, 0
    %v7233 = vsel %vm7041, 1, 0
    %v7234 = vsel %vm7042, 1, 0
    %v7235 = vsel %vm7043, 1, 0
    %v7236 = vsel %vm7044, 1, 0
    %v7237 = vsel %vm7045, 1, 0
    %v7238 = vsel %vm7046, 1, 0
    %v7239 = vsel %vm7047, 1, 0
    %v7240 = vsel %vm7048, 1, 0
    %v7241 = vsel %vm7049, 1, 0
    %v7242 = vsel %vm7050, 1, 0
    %v7243 = vsel %vm7051, 1, 0
    %v7244 = vsel %vm7052, 1, 0
    %v7245 = vsel %vm7053, 1, 0
    %v7246 = vsel %vm7054, 1, 0
    %v7247 = vsel %vm7055, 1, 0
    %v7248 = vsel %vm7056, 1, 0
    %v7249 = vsel %vm7057, 1, 0
    %v7250 = vsel %vm7058, 1, 0
    %v7251 = vsel %vm7059, 1, 0
    %v7252 = vsel %vm7060, 1, 0
    %v7253 = vsel %vm7061, 1, 0
    %v7254 = vsel %vm7062, 1, 0
    %v7255 = vsel %vm7063, 1, 0
    %v7256 = vsel %vm7064, 1, 0
    %v7257 = vsel %vm7065, 1, 0
    %v7258 = vsel %vm7066, 1, 0
    %v7259 = vsel %vm7067, 1, 0
    %v7260 = vsel %vm7068, 1, 0
    %v7261 = vsel %vm7069, 1, 0
    %v7262 = vsel %vm7070, 1, 0
    %v7263 = vsel %vm7071, 1, 0
    %v7264 = vsel %vm7072, 1, 0
    %v7265 = vsel %vm7073, 1, 0
    %v7266 = vsel %vm7074, 1, 0
    %v7267 = vsel %vm7075, 1, 0
    %v7268 = vsel %vm7076, 1, 0
    %v7269 = vsel %vm7077, 1, 0
    %v7270 = vsel %vm7078, 1, 0
    %v7271 = vsel %vm7079, 1, 0
    %v7272 = vsel %vm7080, 1, 0
    %v7273 = vsel %vm7081, 1, 0
    %v7274 = vsel %vm7082, 1, 0
    %v7275 = vsel %vm7083, 1, 0
    %v7276 = vsel %vm7084, 1, 0
    %v7277 = vsel %vm7085, 1, 0
    %v7278 = vsel %vm7086, 1, 0
    %v7279 = vsel %vm7087, 1, 0
    %v7280 = vsel %vm7088, 1, 0
    %v7281 = vsel %vm7089, 1, 0
    %v7282 = vsel %vm7090, 1, 0
    %v7283 = vsel %vm7091, 1, 0
    %v7284 = vsel %vm7092, 1, 0
    %v7285 = vsel %vm7093, 1, 0
    %v7286 = vsel %vm7094, 1, 0
    %v7287 = vsel %vm7095, 1, 0
    %v7288 = vsel %vm7096, 1, 0
    %v7289 = vsel %vm7097, 1, 0
    %v7290 = vsel %vm7098, 1, 0
    %v7291 = vsel %vm7099, 1, 0
    %v7292 = vsel %vm7100, 1, 0
    %v7293 = vsel %vm7101, 1, 0
    %v7294 = vsel %vm7102, 1, 0
    %v7295 = vsel %vm7103, 1, 0
    %v7296 = vsel %vm7104, 1, 0
    %v7297 = vsel %vm7105, 1, 0
    %v7298 = vsel %vm7106, 1, 0
    %v7299 = vsel %vm7107, 1, 0
    %v7300 = vsel %vm7108, 1, 0
    %v7301 = vsel %vm7109, 1, 0
    %v7302 = vsel %vm7110, 1, 0
    %v7303 = vsel %vm7111, 1, 0
    %v7304 = vsel %vm7112, 1, 0
    %v7305 = vsel %vm7113, 1, 0
    %v7306 = vsel %vm7114, 1, 0
    %v7307 = vsel %vm7115, 1, 0
    %v7308 = vsel %vm7116, 1, 0
    %v7309 = vsel %vm7117, 1, 0
    %v7310 = vsel %vm7118, 1, 0
    %v7311 = vsel %vm7119, 1, 0
    %v7312 = vsel %vm7120, 1, 0
    %v7313 = vsel %vm7121, 1, 0
    %v7314 = vsel %vm7122, 1, 0
    %v7315 = vsel %vm7123, 1, 0
    %v7316 = vsel %vm7124, 1, 0
    %v7317 = vsel %vm7125, 1, 0
    %v7318 = vsel %vm7126, 1, 0
    %v7319 = vsel %vm7127, 1, 0
    %v7320 = vsel %vm7128, 1, 0
    %v7321 = vsel %vm7129, 1, 0
    %v7322 = vsel %vm7130, 1, 0
    %v7323 = vsel %vm7131, 1, 0
    %v7324 = vsel %vm7132, 1, 0
    %v7325 = vsel %vm7133, 1, 0
    %v7326 = vsel %vm7134, 1, 0
    %v7327 = vsel %vm7135, 1, 0
    %v7328 = vsel %vm7136, 1, 0
    %v7329 = vsel %vm7137, 1, 0
    %v7330 = vsel %vm7138, 1, 0
    %v7331 = vsel %vm7139, 1, 0
    %v7332 = vsel %vm7140, 1, 0
    %v7333 = vsel %vm7141, 1, 0
    %v7334 = vsel %vm7142, 1, 0
    %v7335 = vsel %vm7143, 1, 0
    %v7336 = vcvt.s32.f32 %v7144
    %v7337 = vcvt.s32.f32 %v7145
    %v7338 = vcvt.s32.f32 %v7146
    %v7339 = vcvt.s32.f32 %v7147
    %v7340 = vcvt.s32.f32 %v7148
    %v7341 = vcvt.s32.f32 %v7149
    %v7342 = vcvt.s32.f32 %v7150
    %v7343 = vcvt.s32.f32 %v7151
    %v7344 = vcvt.s32.f32 %v7152
    %v7345 = vcvt.s32.f32 %v7153
    %v7346 = vcvt.s32.f32 %v7154
    %v7347 = vcvt.s32.f32 %v7155
    %v7348 = vcvt.s32.f32 %v7156
    %v7349 = vcvt.s32.f32 %v7157
    %v7350 = vcvt.s32.f32 %v7158
    %v7351 = vcvt.s32.f32 %v7159
    %v7352 = vcvt.s32.f32 %v7160
    %v7353 = vcvt.s32.f32 %v7161
    %v7354 = vcvt.s32.f32 %v7162
    %v7355 = vcvt.s32.f32 %v7163
    %v7356 = vcvt.s32.f32 %v7164
    %v7357 = vcvt.s32.f32 %v7165
    %v7358 = vcvt.s32.f32 %v7166
    %v7359 = vcvt.s32.f32 %v7167
    %v7360 = vcvt.s32.f32 %v7168
    %v7361 = vcvt.s32.f32 %v7169
    %v7362 = vcvt.s32.f32 %v7170
    %v7363 = vcvt.s32.f32 %v7171
    %v7364 = vcvt.s32.f32 %v7172
    %v7365 = vcvt.s32.f32 %v7173
    %v7366 = vcvt.s32.f32 %v7174
    %v7367 = vcvt.s32.f32 %v7175
    %v7368 = vcvt.s32.f32 %v7176
    %v7369 = vcvt.s32.f32 %v7177
    %v7370 = vcvt.s32.f32 %v7178
    %v7371 = vcvt.s32.f32 %v7179
    %v7372 = vcvt.s32.f32 %v7180
    %v7373 = vcvt.s32.f32 %v7181
    %v7374 = vcvt.s32.f32 %v7182
    %v7375 = vcvt.s32.f32 %v7183
    %v7376 = vcvt.s32.f32 %v7184
    %v7377 = vcvt.s32.f32 %v7185
    %v7378 = vcvt.s32.f32 %v7186
    %v7379 = vcvt.s32.f32 %v7187
    %v7380 = vcvt.s32.f32 %v7188
    %v7381 = vcvt.s32.f32 %v7189
    %v7382 = vcvt.s32.f32 %v7190
    %v7383 = vcvt.s32.f32 %v7191
    %v7384 = vcvt.s32.f32 %v7192
    %v7385 = vcvt.s32.f32 %v7193
    %v7386 = vcvt.s32.f32 %v7194
    %v7387 = vcvt.s32.f32 %v7195
    %v7388 = vcvt.s32.f32 %v7196
    %v7389 = vcvt.s32.f32 %v7197
    %v7390 = vcvt.s32.f32 %v7198
    %v7391 = vcvt.s32.f32 %v7199
    %v7392 = vcvt.s32.f32 %v7200
    %v7393 = vcvt.s32.f32 %v7201
    %v7394 = vcvt.s32.f32 %v7202
    %v7395 = vcvt.s32.f32 %v7203
    %v7396 = vcvt.s32.f32 %v7204
    %v7397 = vcvt.s32.f32 %v7205
    %v7398 = vcvt.s32.f32 %v7206
    %v7399 = vcvt.s32.f32 %v7207
    %v7400 = vcvt.s32.f32 %v7208
    %v7401 = vcvt.s32.f32 %v7209
    %v7402 = vcvt.s32.f32 %v7210
    %v7403 = vcvt.s32.f32 %v7211
    %v7404 = vcvt.s32.f32 %v7212
    %v7405 = vcvt.s32.f32 %v7213
    %v7406 = vcvt.s32.f32 %v7214
    %v7407 = vcvt.s32.f32 %v7215
    %v7408 = vcvt.s32.f32 %v7216
    %v7409 = vcvt.s32.f32 %v7217
    %v7410 = vcvt.s32.f32 %v7218
    %v7411 = vcvt.s32.f32 %v7219
    %v7412 = vcvt.s32.f32 %v7220
    %v7413 = vcvt.s32.f32 %v7221
    %v7414 = vcvt.s32.f32 %v7222
    %v7415 = vcvt.s32.f32 %v7223
    %v7416 = vcvt.s32.f32 %v7224
    %v7417 = vcvt.s32.f32 %v7225
    %v7418 = vcvt.s32.f32 %v7226
    %v7419 = vcvt.s32.f32 %v7227
    %v7420 = vcvt.s32.f32 %v7228
    %v7421 = vcvt.s32.f32 %v7229
    %v7422 = vcvt.s32.f32 %v7230
    %v7423 = vcvt.s32.f32 %v7231
    %v7424 = vcvt.s32.f32 %v7232
    %v7425 = vcvt.s32.f32 %v7233
    %v7426 = vcvt.s32.f32 %v7234
    %v7427 = vcvt.s32.f32 %v7235
    %v7428 = vcvt.s32.f32 %v7236
    %v7429 = vcvt.s32.f32 %v7237
    %v7430 = vcvt.s32.f32 %v7238
    %v7431 = vcvt.s32.f32 %v7239
    %v7432 = vcvt.s32.f32 %v7240
    %v7433 = vcvt.s32.f32 %v7241
    %v7434 = vcvt.s32.f32 %v7242
    %v7435 = vcvt.s32.f32 %v7243
    %v7436 = vcvt.s32.f32 %v7244
    %v7437 = vcvt.s32.f32 %v7245
    %v7438 = vcvt.s32.f32 %v7246
    %v7439 = vcvt.s32.f32 %v7247
    %v7440 = vcvt.s32.f32 %v7248
    %v7441 = vcvt.s32.f32 %v7249
    %v7442 = vcvt.s32.f32 %v7250
    %v7443 = vcvt.s32.f32 %v7251
    %v7444 = vcvt.s32.f32 %v7252
    %v7445 = vcvt.s32.f32 %v7253
    %v7446 = vcvt.s32.f32 %v7254
    %v7447 = vcvt.s32.f32 %v7255
    %v7448 = vcvt.s32.f32 %v7256
    %v7449 = vcvt.s32.f32 %v7257
    %v7450 = vcvt.s32.f32 %v7258
    %v7451 = vcvt.s32.f32 %v7259
    %v7452 = vcvt.s32.f32 %v7260
    %v7453 = vcvt.s32.f32 %v7261
    %v7454 = vcvt.s32.f32 %v7262
    %v7455 = vcvt.s32.f32 %v7263
    %v7456 = vcvt.s32.f32 %v7264
    %v7457 = vcvt.s32.f32 %v7265
    %v7458 = vcvt.s32.f32 %v7266
    %v7459 = vcvt.s32.f32 %v7267
    %v7460 = vcvt.s32.f32 %v7268
    %v7461 = vcvt.s32.f32 %v7269
    %v7462 = vcvt.s32.f32 %v7270
    %v7463 = vcvt.s32.f32 %v7271
    %v7464 = vcvt.s32.f32 %v7272
    %v7465 = vcvt.s32.f32 %v7273
    %v7466 = vcvt.s32.f32 %v7274
    %v7467 = vcvt.s32.f32 %v7275
    %v7468 = vcvt.s32.f32 %v7276
    %v7469 = vcvt.s32.f32 %v7277
    %v7470 = vcvt.s32.f32 %v7278
    %v7471 = vcvt.s32.f32 %v7279
    %v7472 = vcvt.s32.f32 %v7280
    %v7473 = vcvt.s32.f32 %v7281
    %v7474 = vcvt.s32.f32 %v7282
    %v7475 = vcvt.s32.f32 %v7283
    %v7476 = vcvt.s32.f32 %v7284
    %v7477 = vcvt.s32.f32 %v7285
    %v7478 = vcvt.s32.f32 %v7286
    %v7479 = vcvt.s32.f32 %v7287
    %v7480 = vcvt.s32.f32 %v7288
    %v7481 = vcvt.s32.f32 %v7289
    %v7482 = vcvt.s32.f32 %v7290
    %v7483 = vcvt.s32.f32 %v7291
    %v7484 = vcvt.s32.f32 %v7292
    %v7485 = vcvt.s32.f32 %v7293
    %v7486 = vcvt.s32.f32 %v7294
    %v7487 = vcvt.s32.f32 %v7295
    %v7488 = vcvt.s32.f32 %v7296
    %v7489 = vcvt.s32.f32 %v7297
    %v7490 = vcvt.s32.f32 %v7298
    %v7491 = vcvt.s32.f32 %v7299
    %v7492 = vcvt.s32.f32 %v7300
    %v7493 = vcvt.s32.f32 %v7301
    %v7494 = vcvt.s32.f32 %v7302
    %v7495 = vcvt.s32.f32 %v7303
    %v7496 = vcvt.s32.f32 %v7304
    %v7497 = vcvt.s32.f32 %v7305
    %v7498 = vcvt.s32.f32 %v7306
    %v7499 = vcvt.s32.f32 %v7307
    %v7500 = vcvt.s32.f32 %v7308
    %v7501 = vcvt.s32.f32 %v7309
    %v7502 = vcvt.s32.f32 %v7310
    %v7503 = vcvt.s32.f32 %v7311
    %v7504 = vcvt.s32.f32 %v7312
    %v7505 = vcvt.s32.f32 %v7313
    %v7506 = vcvt.s32.f32 %v7314
    %v7507 = vcvt.s32.f32 %v7315
    %v7508 = vcvt.s32.f32 %v7316
    %v7509 = vcvt.s32.f32 %v7317
    %v7510 = vcvt.s32.f32 %v7318
    %v7511 = vcvt.s32.f32 %v7319
    %v7512 = vcvt.s32.f32 %v7320
    %v7513 = vcvt.s32.f32 %v7321
    %v7514 = vcvt.s32.f32 %v7322
    %v7515 = vcvt.s32.f32 %v7323
    %v7516 = vcvt.s32.f32 %v7324
    %v7517 = vcvt.s32.f32 %v7325
    %v7518 = vcvt.s32.f32 %v7326
    %v7519 = vcvt.s32.f32 %v7327
    %v7520 = vcvt.s32.f32 %v7328
    %v7521 = vcvt.s32.f32 %v7329
    %v7522 = vcvt.s32.f32 %v7330
    %v7523 = vcvt.s32.f32 %v7331
    %v7524 = vcvt.s32.f32 %v7332
    %v7525 = vcvt.s32.f32 %v7333
    %v7526 = vcvt.s32.f32 %v7334
    %v7527 = vcvt.s32.f32 %v7335
    %v7528 = vadd.f32 %v6568, %v7336
    %v7529 = vadd.f32 %v6569, %v7337
    %v7530 = vadd.f32 %v6570, %v7338
    %v7531 = vadd.f32 %v6571, %v7339
    %v7532 = vadd.f32 %v6572, %v7340
    %v7533 = vadd.f32 %v6573, %v7341
    %v7534 = vadd.f32 %v6574, %v7342
    %v7535 = vadd.f32 %v6575, %v7343
    %v7536 = vadd.f32 %v6576, %v7344
    %v7537 = vadd.f32 %v6577, %v7345
    %v7538 = vadd.f32 %v6578, %v7346
    %v7539 = vadd.f32 %v6579, %v7347
    %v7540 = vadd.f32 %v6580, %v7348
    %v7541 = vadd.f32 %v6581, %v7349
    %v7542 = vadd.f32 %v6582, %v7350
    %v7543 = vadd.f32 %v6583, %v7351
    %v7544 = vadd.f32 %v6584, %v7352
    %v7545 = vadd.f32 %v6585, %v7353
    %v7546 = vadd.f32 %v6586, %v7354
    %v7547 = vadd.f32 %v6587, %v7355
    %v7548 = vadd.f32 %v6588, %v7356
    %v7549 = vadd.f32 %v6589, %v7357
    %v7550 = vadd.f32 %v6590, %v7358
    %v7551 = vadd.f32 %v6591, %v7359
    %v7552 = vadd.f32 %v6592, %v7360
    %v7553 = vadd.f32 %v6593, %v7361
    %v7554 = vadd.f32 %v6594, %v7362
    %v7555 = vadd.f32 %v6595, %v7363
    %v7556 = vadd.f32 %v6596, %v7364
    %v7557 = vadd.f32 %v6597, %v7365
    %v7558 = vadd.f32 %v6598, %v7366
    %v7559 = vadd.f32 %v6599, %v7367
    %v7560 = vadd.f32 %v6600, %v7368
    %v7561 = vadd.f32 %v6601, %v7369
    %v7562 = vadd.f32 %v6602, %v7370
    %v7563 = vadd.f32 %v6603, %v7371
    %v7564 = vadd.f32 %v6604, %v7372
    %v7565 = vadd.f32 %v6605, %v7373
    %v7566 = vadd.f32 %v6606, %v7374
    %v7567 = vadd.f32 %v6607, %v7375
    %v7568 = vadd.f32 %v6608, %v7376
    %v7569 = vadd.f32 %v6609, %v7377
    %v7570 = vadd.f32 %v6610, %v7378
    %v7571 = vadd.f32 %v6611, %v7379
    %v7572 = vadd.f32 %v6612, %v7380
    %v7573 = vadd.f32 %v6613, %v7381
    %v7574 = vadd.f32 %v6614, %v7382
    %v7575 = vadd.f32 %v6615, %v7383
    %v7576 = vadd.f32 %v6616, %v7384
    %v7577 = vadd.f32 %v6617, %v7385
    %v7578 = vadd.f32 %v6618, %v7386
    %v7579 = vadd.f32 %v6619, %v7387
    %v7580 = vadd.f32 %v6620, %v7388
    %v7581 = vadd.f32 %v6621, %v7389
    %v7582 = vadd.f32 %v6622, %v7390
    %v7583 = vadd.f32 %v6623, %v7391
    %v7584 = vadd.f32 %v6624, %v7392
    %v7585 = vadd.f32 %v6625, %v7393
    %v7586 = vadd.f32 %v6626, %v7394
    %v7587 = vadd.f32 %v6627, %v7395
    %v7588 = vadd.f32 %v6628, %v7396
    %v7589 = vadd.f32 %v6629, %v7397
    %v7590 = vadd.f32 %v6630, %v7398
    %v7591 = vadd.f32 %v6631, %v7399
    %v7592 = vadd.f32 %v6632, %v7400
    %v7593 = vadd.f32 %v6633, %v7401
    %v7594 = vadd.f32 %v6634, %v7402
    %v7595 = vadd.f32 %v6635, %v7403
    %v7596 = vadd.f32 %v6636, %v7404
    %v7597 = vadd.f32 %v6637, %v7405
    %v7598 = vadd.f32 %v6638, %v7406
    %v7599 = vadd.f32 %v6639, %v7407
    %v7600 = vadd.f32 %v6640, %v7408
    %v7601 = vadd.f32 %v6641, %v7409
    %v7602 = vadd.f32 %v6642, %v7410
    %v7603 = vadd.f32 %v6643, %v7411
    %v7604 = vadd.f32 %v6644, %v7412
    %v7605 = vadd.f32 %v6645, %v7413
    %v7606 = vadd.f32 %v6646, %v7414
    %v7607 = vadd.f32 %v6647, %v7415
    %v7608 = vadd.f32 %v6648, %v7416
    %v7609 = vadd.f32 %v6649, %v7417
    %v7610 = vadd.f32 %v6650, %v7418
    %v7611 = vadd.f32 %v6651, %v7419
    %v7612 = vadd.f32 %v6652, %v7420
    %v7613 = vadd.f32 %v6653, %v7421
    %v7614 = vadd.f32 %v6654, %v7422
    %v7615 = vadd.f32 %v6655, %v7423
    %v7616 = vadd.f32 %v6656, %v7424
    %v7617 = vadd.f32 %v6657, %v7425
    %v7618 = vadd.f32 %v6658, %v7426
    %v7619 = vadd.f32 %v6659, %v7427
    %v7620 = vadd.f32 %v6660, %v7428
    %v7621 = vadd.f32 %v6661, %v7429
    %v7622 = vadd.f32 %v6662, %v7430
    %v7623 = vadd.f32 %v6663, %v7431
    %v7624 = vadd.f32 %v6664, %v7432
    %v7625 = vadd.f32 %v6665, %v7433
    %v7626 = vadd.f32 %v6666, %v7434
    %v7627 = vadd.f32 %v6667, %v7435
    %v7628 = vadd.f32 %v6668, %v7436
    %v7629 = vadd.f32 %v6669, %v7437
    %v7630 = vadd.f32 %v6670, %v7438
    %v7631 = vadd.f32 %v6671, %v7439
    %v7632 = vadd.f32 %v6672, %v7440
    %v7633 = vadd.f32 %v6673, %v7441
    %v7634 = vadd.f32 %v6674, %v7442
    %v7635 = vadd.f32 %v6675, %v7443
    %v7636 = vadd.f32 %v6676, %v7444
    %v7637 = vadd.f32 %v6677, %v7445
    %v7638 = vadd.f32 %v6678, %v7446
    %v7639 = vadd.f32 %v6679, %v7447
    %v7640 = vadd.f32 %v6680, %v7448
    %v7641 = vadd.f32 %v6681, %v7449
    %v7642 = vadd.f32 %v6682, %v7450
    %v7643 = vadd.f32 %v6683, %v7451
    %v7644 = vadd.f32 %v6684, %v7452
    %v7645 = vadd.f32 %v6685, %v7453
    %v7646 = vadd.f32 %v6686, %v7454
    %v7647 = vadd.f32 %v6687, %v7455
    %v7648 = vadd.f32 %v6688, %v7456
    %v7649 = vadd.f32 %v6689, %v7457
    %v7650 = vadd.f32 %v6690, %v7458
    %v7651 = vadd.f32 %v6691, %v7459
    %v7652 = vadd.f32 %v6692, %v7460
    %v7653 = vadd.f32 %v6693, %v7461
    %v7654 = vadd.f32 %v6694, %v7462
    %v7655 = vadd.f32 %v6695, %v7463
    %v7656 = vadd.f32 %v6696, %v7464
    %v7657 = vadd.f32 %v6697, %v7465
    %v7658 = vadd.f32 %v6698, %v7466
    %v7659 = vadd.f32 %v6699, %v7467
    %v7660 = vadd.f32 %v6700, %v7468
    %v7661 = vadd.f32 %v6701, %v7469
    %v7662 = vadd.f32 %v6702, %v7470
    %v7663 = vadd.f32 %v6703, %v7471
    %v7664 = vadd.f32 %v6704, %v7472
    %v7665 = vadd.f32 %v6705, %v7473
    %v7666 = vadd.f32 %v6706, %v7474
    %v7667 = vadd.f32 %v6707, %v7475
    %v7668 = vadd.f32 %v6708, %v7476
    %v7669 = vadd.f32 %v6709, %v7477
    %v7670 = vadd.f32 %v6710, %v7478
    %v7671 = vadd.f32 %v6711, %v7479
    %v7672 = vadd.f32 %v6712, %v7480
    %v7673 = vadd.f32 %v6713, %v7481
    %v7674 = vadd.f32 %v6714, %v7482
    %v7675 = vadd.f32 %v6715, %v7483
    %v7676 = vadd.f32 %v6716, %v7484
    %v7677 = vadd.f32 %v6717, %v7485
    %v7678 = vadd.f32 %v6718, %v7486
    %v7679 = vadd.f32 %v6719, %v7487
    %v7680 = vadd.f32 %v6720, %v7488
    %v7681 = vadd.f32 %v6721, %v7489
    %v7682 = vadd.f32 %v6722, %v7490
    %v7683 = vadd.f32 %v6723, %v7491
    %v7684 = vadd.f32 %v6724, %v7492
    %v7685 = vadd.f32 %v6725, %v7493
    %v7686 = vadd.f32 %v6726, %v7494
    %v7687 = vadd.f32 %v6727, %v7495
    %v7688 = vadd.f32 %v6728, %v7496
    %v7689 = vadd.f32 %v6729, %v7497
    %v7690 = vadd.f32 %v6730, %v7498
    %v7691 = vadd.f32 %v6731, %v7499
    %v7692 = vadd.f32 %v6732, %v7500
    %v7693 = vadd.f32 %v6733, %v7501
    %v7694 = vadd.f32 %v6734, %v7502
    %v7695 = vadd.f32 %v6735, %v7503
    %v7696 = vadd.f32 %v6736, %v7504
    %v7697 = vadd.f32 %v6737, %v7505
    %v7698 = vadd.f32 %v6738, %v7506
    %v7699 = vadd.f32 %v6739, %v7507
    %v7700 = vadd.f32 %v6740, %v7508
    %v7701 = vadd.f32 %v6741, %v7509
    %v7702 = vadd.f32 %v6742, %v7510
    %v7703 = vadd.f32 %v6743, %v7511
    %v7704 = vadd.f32 %v6744, %v7512
    %v7705 = vadd.f32 %v6745, %v7513
    %v7706 = vadd.f32 %v6746, %v7514
    %v7707 = vadd.f32 %v6747, %v7515
    %v7708 = vadd.f32 %v6748, %v7516
    %v7709 = vadd.f32 %v6749, %v7517
    %v7710 = vadd.f32 %v6750, %v7518
    %v7711 = vadd.f32 %v6751, %v7519
    %v7712 = vadd.f32 %v6752, %v7520
    %v7713 = vadd.f32 %v6753, %v7521
    %v7714 = vadd.f32 %v6754, %v7522
    %v7715 = vadd.f32 %v6755, %v7523
    %v7716 = vadd.f32 %v6756, %v7524
    %v7717 = vadd.f32 %v6757, %v7525
    %v7718 = vadd.f32 %v6758, %v7526
    %v7719 = vadd.f32 %v6759, %v7527
    %v7720 = vld [vmem:[#allocation2] sm:$0xff]
    %v7721 = vld [vmem:[#allocation2 + $0x8] sm:$0xff]
    %v7722 = vld [vmem:[#allocation2 + $0x10] sm:$0xff]
    %v7723 = vld [vmem:[#allocation2 + $0x18] sm:$0xff]
    %v7724 = vld [vmem:[#allocation2 + $0x20] sm:$0xff]
    %v7725 = vld [vmem:[#allocation2 + $0x28] sm:$0xff]
    %v7726 = vld [vmem:[#allocation2 + $0x30] sm:$0xff]
    %v7727 = vld [vmem:[#allocation2 + $0x38] sm:$0xff]
    %v7728 = vld [vmem:[#allocation2 + $0x40] sm:$0xff]
    %v7729 = vld [vmem:[#allocation2 + $0x48] sm:$0xff]
    %v7730 = vld [vmem:[#allocation2 + $0x50] sm:$0xff]
    %v7731 = vld [vmem:[#allocation2 + $0x58] sm:$0xff]
    %v7732 = vld [vmem:[#allocation2 + $0x60] sm:$0xff]
    %v7733 = vld [vmem:[#allocation2 + $0x68] sm:$0xff]
    %v7734 = vld [vmem:[#allocation2 + $0x70] sm:$0xff]
    %v7735 = vld [vmem:[#allocation2 + $0x78] sm:$0xff]
    %v7736 = vld [vmem:[#allocation2 + $0x80] sm:$0xff]
    %v7737 = vld [vmem:[#allocation2 + $0x88] sm:$0xff]
    %v7738 = vld [vmem:[#allocation2 + $0x90] sm:$0xff]
    %v7739 = vld [vmem:[#allocation2 + $0x98] sm:$0xff]
    %v7740 = vld [vmem:[#allocation2 + $0xa0] sm:$0xff]
    %v7741 = vld [vmem:[#allocation2 + $0xa8] sm:$0xff]
    %v7742 = vld [vmem:[#allocation2 + $0xb0] sm:$0xff]
    %v7743 = vld [vmem:[#allocation2 + $0xb8] sm:$0xff]
    %v7744 = vld [vmem:[#allocation2 + $0xc0] sm:$0xff]
    %v7745 = vld [vmem:[#allocation2 + $0xc8] sm:$0xff]
    %v7746 = vld [vmem:[#allocation2 + $0xd0] sm:$0xff]
    %v7747 = vld [vmem:[#allocation2 + $0xd8] sm:$0xff]
    %v7748 = vld [vmem:[#allocation2 + $0xe0] sm:$0xff]
    %v7749 = vld [vmem:[#allocation2 + $0xe8] sm:$0xff]
    %v7750 = vld [vmem:[#allocation2 + $0xf0] sm:$0xff]
    %v7751 = vld [vmem:[#allocation2 + $0xf8] sm:$0xff]
    %v7752 = vld [vmem:[#allocation2 + $0x100] sm:$0xff]
    %v7753 = vld [vmem:[#allocation2 + $0x108] sm:$0xff]
    %v7754 = vld [vmem:[#allocation2 + $0x110] sm:$0xff]
    %v7755 = vld [vmem:[#allocation2 + $0x118] sm:$0xff]
    %v7756 = vld [vmem:[#allocation2 + $0x120] sm:$0xff]
    %v7757 = vld [vmem:[#allocation2 + $0x128] sm:$0xff]
    %v7758 = vld [vmem:[#allocation2 + $0x130] sm:$0xff]
    %v7759 = vld [vmem:[#allocation2 + $0x138] sm:$0xff]
    %v7760 = vld [vmem:[#allocation2 + $0x140] sm:$0xff]
    %v7761 = vld [vmem:[#allocation2 + $0x148] sm:$0xff]
    %v7762 = vld [vmem:[#allocation2 + $0x150] sm:$0xff]
    %v7763 = vld [vmem:[#allocation2 + $0x158] sm:$0xff]
    %v7764 = vld [vmem:[#allocation2 + $0x160] sm:$0xff]
    %v7765 = vld [vmem:[#allocation2 + $0x168] sm:$0xff]
    %v7766 = vld [vmem:[#allocation2 + $0x170] sm:$0xff]
    %v7767 = vld [vmem:[#allocation2 + $0x178] sm:$0xff]
    %v7768 = vld [vmem:[#allocation2 + $0x180] sm:$0xff]
    %v7769 = vld [vmem:[#allocation2 + $0x188] sm:$0xff]
    %v7770 = vld [vmem:[#allocation2 + $0x190] sm:$0xff]
    %v7771 = vld [vmem:[#allocation2 + $0x198] sm:$0xff]
    %v7772 = vld [vmem:[#allocation2 + $0x1a0] sm:$0xff]
    %v7773 = vld [vmem:[#allocation2 + $0x1a8] sm:$0xff]
    %v7774 = vld [vmem:[#allocation2 + $0x1b0] sm:$0xff]
    %v7775 = vld [vmem:[#allocation2 + $0x1b8] sm:$0xff]
    %v7776 = vld [vmem:[#allocation2 + $0x1c0] sm:$0xff]
    %v7777 = vld [vmem:[#allocation2 + $0x1c8] sm:$0xff]
    %v7778 = vld [vmem:[#allocation2 + $0x1d0] sm:$0xff]
    %v7779 = vld [vmem:[#allocation2 + $0x1d8] sm:$0xff]
    %v7780 = vld [vmem:[#allocation2 + $0x1e0] sm:$0xff]
    %v7781 = vld [vmem:[#allocation2 + $0x1e8] sm:$0xff]
    %v7782 = vld [vmem:[#allocation2 + $0x1f0] sm:$0xff]
    %v7783 = vld [vmem:[#allocation2 + $0x1f8] sm:$0xff]
    %v7784 = vld [vmem:[%s2] sm:$0x1]
    %v7786 = vlaneseq
    %v7787 = vshrl.u32 %v7786, 7
    %v7788 = vsub.s32 0, %v7787
    %v7789 = vrot.slane %v7784, %v7788
    %7791 = vmatprep.subr.mxu0 0.0
    %7792 = vmatpush1.msra.mxu0 %v7720
    %7793 = vmatprep.subr.mxu0 0.0
    %7794 = vmatpush1.msra.mxu0 %v7721
    %7795 = vmatprep.subr.mxu0 0.0
    %7796 = vmatpush1.msra.mxu0 %v7722
    %7797 = vmatprep.subr.mxu0 0.0
    %7798 = vmatpush1.msra.mxu0 %v7723
    %7799 = vmatprep.subr.mxu0 0.0
    %7800 = vmatpush1.msra.mxu0 %v7724
    %7801 = vmatprep.subr.mxu0 0.0
    %7802 = vmatpush1.msra.mxu0 %v7725
    %7803 = vmatprep.subr.mxu0 0.0
    %7804 = vmatpush1.msra.mxu0 %v7726
    %7805 = vmatprep.subr.mxu0 0.0
    %7806 = vmatpush1.msra.mxu0 %v7727
    %7807 = vmatprep.subr.mxu0 0.0
    %7808 = vmatpush1.msra.mxu0 %v7728
    %7809 = vmatprep.subr.mxu0 0.0
    %7810 = vmatpush1.msra.mxu0 %v7729
    %7811 = vmatprep.subr.mxu0 0.0
    %7812 = vmatpush1.msra.mxu0 %v7730
    %7813 = vmatprep.subr.mxu0 0.0
    %7814 = vmatpush1.msra.mxu0 %v7731
    %7815 = vmatprep.subr.mxu0 0.0
    %7816 = vmatpush1.msra.mxu0 %v7732
    %7817 = vmatprep.subr.mxu0 0.0
    %7818 = vmatpush1.msra.mxu0 %v7733
    %7819 = vmatprep.subr.mxu0 0.0
    %7820 = vmatpush1.msra.mxu0 %v7734
    %7821 = vmatprep.subr.mxu0 0.0
    %7822 = vmatpush1.msra.mxu0 %v7735
    %7823 = vmatprep.subr.mxu0 0.0
    %7824 = vmatpush1.msra.mxu0 %v7736
    %7825 = vmatprep.subr.mxu0 0.0
    %7826 = vmatpush1.msra.mxu0 %v7737
    %7827 = vmatprep.subr.mxu0 0.0
    %7828 = vmatpush1.msra.mxu0 %v7738
    %7829 = vmatprep.subr.mxu0 0.0
    %7830 = vmatpush1.msra.mxu0 %v7739
    %7831 = vmatprep.subr.mxu0 0.0
    %7832 = vmatpush1.msra.mxu0 %v7740
    %7833 = vmatprep.subr.mxu0 0.0
    %7834 = vmatpush1.msra.mxu0 %v7741
    %7835 = vmatprep.subr.mxu0 0.0
    %7836 = vmatpush1.msra.mxu0 %v7742
    %7837 = vmatprep.subr.mxu0 0.0
    %7838 = vmatpush1.msra.mxu0 %v7743
    %7839 = vmatprep.subr.mxu0 0.0
    %7840 = vmatpush1.msra.mxu0 %v7744
    %7841 = vmatprep.subr.mxu0 0.0
    %7842 = vmatpush1.msra.mxu0 %v7745
    %7843 = vmatprep.subr.mxu0 0.0
    %7844 = vmatpush1.msra.mxu0 %v7746
    %7845 = vmatprep.subr.mxu0 0.0
    %7846 = vmatpush1.msra.mxu0 %v7747
    %7847 = vmatprep.subr.mxu0 0.0
    %7848 = vmatpush1.msra.mxu0 %v7748
    %7849 = vmatprep.subr.mxu0 0.0
    %7850 = vmatpush1.msra.mxu0 %v7749
    %7851 = vmatprep.subr.mxu0 0.0
    %7852 = vmatpush1.msra.mxu0 %v7750
    %7853 = vmatprep.subr.mxu0 0.0
    %7854 = vmatpush1.msra.mxu0 %v7751
    %7855 = vmatprep.mubr.f32.mxu0 %v7529
    %7856 = vmatmul.mubr.f32.gmra.mrb[0].mxu0 %v7528
    %v7857 = vpop.f32.mrb[0].mxu0
    %v7858 = vadd.f32 %v7789, %v7857
    %v7859 = vpop.f32.mrb[0].mxu0
    %7860 = vmatprep.mubr.f32.mxu0 %v7533
    %7861 = vmatmul.mubr.f32.gmra.mrb[0].mxu0 %v7532
    %v7862 = vpop.f32.mrb[0].mxu0
    %v7863 = vadd.f32 %v7789, %v7862
    %v7864 = vpop.f32.mrb[0].mxu0
    %7865 = vmatprep.mubr.f32.mxu0 %v7537
    %7866 = vmatmul.mubr.f32.gmra.mrb[0].mxu0 %v7536
    %v7867 = vpop.f32.mrb[0].mxu0
    %v7868 = vadd.f32 %v7789, %v7867
    %v7869 = vpop.f32.mrb[0].mxu0
    %7870 = vmatprep.mubr.f32.mxu0 %v7541
    %7871 = vmatmul.mubr.f32.gmra.mrb[0].mxu0 %v7540
    %v7872 = vpop.f32.mrb[0].mxu0
    %v7873 = vadd.f32 %v7789, %v7872
    %v7874 = vpop.f32.mrb[0].mxu0
    %7875 = vmatprep.mubr.f32.mxu0 %v7545
    %7876 = vmatmul.mubr.f32.gmra.mrb[0].mxu0 %v7544
    %v7877 = vpop.f32.mrb[0].mxu0
    %v7878 = vadd.f32 %v7789, %v7877
    %v7879 = vpop.f32.mrb[0].mxu0
    %7880 = vmatprep.mubr.f32.mxu0 %v7549
    %7881 = vmatmul.mubr.f32.gmra.mrb[0].mxu0 %v7548
    %v7882 = vpop.f32.mrb[0].mxu0
    %v7883 = vadd.f32 %v7789, %v7882
    %v7884 = vpop.f32.mrb[0].mxu0
    %7885 = vmatprep.mubr.f32.mxu0 %v7553
    %7886 = vmatmul.mubr.f32.gmra.mrb[0].mxu0 %v7552
    %v7887 = vpop.f32.mrb[0].mxu0
    %v7888 = vadd.f32 %v7789, %v7887
    %v7889 = vpop.f32.mrb[0].mxu0
    %7890 = vmatprep.mubr.f32.mxu0 %v7557
    %7891 = vmatmul.mubr.f32.gmra.mrb[0].mxu0 %v7556
    %v7892 = vpop.f32.mrb[0].mxu0
    %v7893 = vadd.f32 %v7789, %v7892
    %v7894 = vpop.f32.mrb[0].mxu0
    %7895 = vmatprep.mubr.f32.mxu0 %v7561
    %7896 = vmatmul.mubr.f32.gmra.mrb[0].mxu0 %v7560
    %v7897 = vpop.f32.mrb[0].mxu0
    %v7898 = vadd.f32 %v7789, %v7897
    %v7899 = vpop.f32.mrb[0].mxu0
    %7900 = vmatprep.mubr.f32.mxu0 %v7565
    %7901 = vmatmul.mubr.f32.gmra.mrb[0].mxu0 %v7564
    %v7902 = vpop.f32.mrb[0].mxu0
    %v7903 = vadd.f32 %v7789, %v7902
    %v7904 = vpop.f32.mrb[0].mxu0
    %7905 = vmatprep.mubr.f32.mxu0 %v7569
    %7906 = vmatmul.mubr.f32.gmra.mrb[0].mxu0 %v7568
    %v7907 = vpop.f32.mrb[0].mxu0
    %v7908 = vadd.f32 %v7789, %v7907
    %v7909 = vpop.f32.mrb[0].mxu0
    %7910 = vmatprep.mubr.f32.mxu0 %v7573
    %7911 = vmatmul.mubr.f32.gmra.mrb[0].mxu0 %v7572
    %v7912 = vpop.f32.mrb[0].mxu0
    %v7913 = vadd.f32 %v7789, %v7912
    %v7914 = vpop.f32.mrb[0].mxu0
    %7915 = vmatprep.mubr.f32.mxu0 %v7577
    %7916 = vmatmul.mubr.f32.gmra.mrb[0].mxu0 %v7576
    %v7917 = vpop.f32.mrb[0].mxu0
    %v7918 = vadd.f32 %v7789, %v7917
    %v7919 = vpop.f32.mrb[0].mxu0
    %7920 = vmatprep.mubr.f32.mxu0 %v7581
    %7921 = vmatmul.mubr.f32.gmra.mrb[0].mxu0 %v7580
    %v7922 = vpop.f32.mrb[0].mxu0
    %v7923 = vadd.f32 %v7789, %v7922
    %v7924 = vpop.f32.mrb[0].mxu0
    %7925 = vmatprep.mubr.f32.mxu0 %v7585
    %7926 = vmatmul.mubr.f32.gmra.mrb[0].mxu0 %v7584
    %v7927 = vpop.f32.mrb[0].mxu0
    %v7928 = vadd.f32 %v7789, %v7927
    %v7929 = vpop.f32.mrb[0].mxu0
    %7930 = vmatprep.mubr.f32.mxu0 %v7589
    %7931 = vmatmul.mubr.f32.gmra.mrb[0].mxu0 %v7588
    %v7932 = vpop.f32.mrb[0].mxu0
    %v7933 = vadd.f32 %v7789, %v7932
    %v7934 = vpop.f32.mrb[0].mxu0
    %7935 = vmatprep.mubr.f32.mxu0 %v7593
    %7936 = vmatmul.mubr.f32.gmra.mrb[0].mxu0 %v7592
    %v7937 = vpop.f32.mrb[0].mxu0
    %v7938 = vadd.f32 %v7789, %v7937
    %v7939 = vpop.f32.mrb[0].mxu0
    %7940 = vmatprep.mubr.f32.mxu0 %v7597
    %7941 = vmatmul.mubr.f32.gmra.mrb[0].mxu0 %v7596
    %v7942 = vpop.f32.mrb[0].mxu0
    %v7943 = vadd.f32 %v7789, %v7942
    %v7944 = vpop.f32.mrb[0].mxu0
    %7945 = vmatprep.mubr.f32.mxu0 %v7601
    %7946 = vmatmul.mubr.f32.gmra.mrb[0].mxu0 %v7600
    %v7947 = vpop.f32.mrb[0].mxu0
    %v7948 = vadd.f32 %v7789, %v7947
    %v7949 = vpop.f32.mrb[0].mxu0
    %7950 = vmatprep.mubr.f32.mxu0 %v7605
    %7951 = vmatmul.mubr.f32.gmra.mrb[0].mxu0 %v7604
    %v7952 = vpop.f32.mrb[0].mxu0
    %v7953 = vadd.f32 %v7789, %v7952
    %v7954 = vpop.f32.mrb[0].mxu0
    %7955 = vmatprep.mubr.f32.mxu0 %v7609
    %7956 = vmatmul.mubr.f32.gmra.mrb[0].mxu0 %v7608
    %v7957 = vpop.f32.mrb[0].mxu0
    %v7958 = vadd.f32 %v7789, %v7957
    %v7959 = vpop.f32.mrb[0].mxu0
    %7960 = vmatprep.mubr.f32.mxu0 %v7613
    %7961 = vmatmul.mubr.f32.gmra.mrb[0].mxu0 %v7612
    %v7962 = vpop.f32.mrb[0].mxu0
    %v7963 = vadd.f32 %v7789, %v7962
    %v7964 = vpop.f32.mrb[0].mxu0
    %7965 = vmatprep.mubr.f32.mxu0 %v7617
    %7966 = vmatmul.mubr.f32.gmra.mrb[0].mxu0 %v7616
    %v7967 = vpop.f32.mrb[0].mxu0
    %v7968 = vadd.f32 %v7789, %v7967
    %v7969 = vpop.f32.mrb[0].mxu0
    %7970 = vmatprep.mubr.f32.mxu0 %v7621
    %7971 = vmatmul.mubr.f32.gmra.mrb[0].mxu0 %v7620
    %v7972 = vpop.f32.mrb[0].mxu0
    %v7973 = vadd.f32 %v7789, %v7972
    %v7974 = vpop.f32.mrb[0].mxu0
    %7975 = vmatprep.mubr.f32.mxu0 %v7625
    %7976 = vmatmul.mubr.f32.gmra.mrb[0].mxu0 %v7624
    %v7977 = vpop.f32.mrb[0].mxu0
    %v7978 = vadd.f32 %v7789, %v7977
    %v7979 = vpop.f32.mrb[0].mxu0
    %7980 = vmatprep.mubr.f32.mxu0 %v7629
    %7981 = vmatmul.mubr.f32.gmra.mrb[0].mxu0 %v7628
    %v7982 = vpop.f32.mrb[0].mxu0
    %v7983 = vadd.f32 %v7789, %v7982
    %v7984 = vpop.f32.mrb[0].mxu0
    %7985 = vmatprep.mubr.f32.mxu0 %v7633
    %7986 = vmatmul.mubr.f32.gmra.mrb[0].mxu0 %v7632
    %v7987 = vpop.f32.mrb[0].mxu0
    %v7988 = vadd.f32 %v7789, %v7987
    %v7989 = vpop.f32.mrb[0].mxu0
    %7990 = vmatprep.mubr.f32.mxu0 %v7637
    %7991 = vmatmul.mubr.f32.gmra.mrb[0].mxu0 %v7636
    %v7992 = vpop.f32.mrb[0].mxu0
    %v7993 = vadd.f32 %v7789, %v7992
    %v7994 = vpop.f32.mrb[0].mxu0
    %7995 = vmatprep.mubr.f32.mxu0 %v7641
    %7996 = vmatmul.mubr.f32.gmra.mrb[0].mxu0 %v7640
    %v7997 = vpop.f32.mrb[0].mxu0
    %v7998 = vadd.f32 %v7789, %v7997
    %v7999 = vpop.f32.mrb[0].mxu0
    %8000 = vmatprep.mubr.f32.mxu0 %v7645
    %8001 = vmatmul.mubr.f32.gmra.mrb[0].mxu0 %v7644
    %v8002 = vpop.f32.mrb[0].mxu0
    %v8003 = vadd.f32 %v7789, %v8002
    %v8004 = vpop.f32.mrb[0].mxu0
    %8005 = vmatprep.mubr.f32.mxu0 %v7649
    %8006 = vmatmul.mubr.f32.gmra.mrb[0].mxu0 %v7648
    %v8007 = vpop.f32.mrb[0].mxu0
    %v8008 = vadd.f32 %v7789, %v8007
    %v8009 = vpop.f32.mrb[0].mxu0
    %8010 = vmatprep.mubr.f32.mxu0 %v7653
    %8011 = vmatmul.mubr.f32.gmra.mrb[0].mxu0 %v7652
    %v8012 = vpop.f32.mrb[0].mxu0
    %v8013 = vadd.f32 %v7789, %v8012
    %v8014 = vpop.f32.mrb[0].mxu0
    %8015 = vmatprep.mubr.f32.mxu0 %v7657
    %8016 = vmatmul.mubr.f32.gmra.mrb[0].mxu0 %v7656
    %v8017 = vpop.f32.mrb[0].mxu0
    %v8018 = vadd.f32 %v7789, %v8017
    %v8019 = vpop.f32.mrb[0].mxu0
    %8020 = vmatprep.mubr.f32.mxu0 %v7661
    %8021 = vmatmul.mubr.f32.gmra.mrb[0].mxu0 %v7660
    %v8022 = vpop.f32.mrb[0].mxu0
    %v8023 = vadd.f32 %v7789, %v8022
    %v8024 = vpop.f32.mrb[0].mxu0
    %8025 = vmatprep.mubr.f32.mxu0 %v7665
    %8026 = vmatmul.mubr.f32.gmra.mrb[0].mxu0 %v7664
    %v8027 = vpop.f32.mrb[0].mxu0
    %v8028 = vadd.f32 %v7789, %v8027
    %v8029 = vpop.f32.mrb[0].mxu0
    %8030 = vmatprep.mubr.f32.mxu0 %v7669
    %8031 = vmatmul.mubr.f32.gmra.mrb[0].mxu0 %v7668
    %v8032 = vpop.f32.mrb[0].mxu0
    %v8033 = vadd.f32 %v7789, %v8032
    %v8034 = vpop.f32.mrb[0].mxu0
    %8035 = vmatprep.mubr.f32.mxu0 %v7673
    %8036 = vmatmul.mubr.f32.gmra.mrb[0].mxu0 %v7672
    %v8037 = vpop.f32.mrb[0].mxu0
    %v8038 = vadd.f32 %v7789, %v8037
    %v8039 = vpop.f32.mrb[0].mxu0
    %8040 = vmatprep.mubr.f32.mxu0 %v7677
    %8041 = vmatmul.mubr.f32.gmra.mrb[0].mxu0 %v7676
    %v8042 = vpop.f32.mrb[0].mxu0
    %v8043 = vadd.f32 %v7789, %v8042
    %v8044 = vpop.f32.mrb[0].mxu0
    %8045 = vmatprep.mubr.f32.mxu0 %v7681
    %8046 = vmatmul.mubr.f32.gmra.mrb[0].mxu0 %v7680
    %v8047 = vpop.f32.mrb[0].mxu0
    %v8048 = vadd.f32 %v7789, %v8047
    %v8049 = vpop.f32.mrb[0].mxu0
    %8050 = vmatprep.mubr.f32.mxu0 %v7685
    %8051 = vmatmul.mubr.f32.gmra.mrb[0].mxu0 %v7684
    %v8052 = vpop.f32.mrb[0].mxu0
    %v8053 = vadd.f32 %v7789, %v8052
    %v8054 = vpop.f32.mrb[0].mxu0
    %8055 = vmatprep.mubr.f32.mxu0 %v7689
    %8056 = vmatmul.mubr.f32.gmra.mrb[0].mxu0 %v7688
    %v8057 = vpop.f32.mrb[0].mxu0
    %v8058 = vadd.f32 %v7789, %v8057
    %v8059 = vpop.f32.mrb[0].mxu0
    %8060 = vmatprep.mubr.f32.mxu0 %v7693
    %8061 = vmatmul.mubr.f32.gmra.mrb[0].mxu0 %v7692
    %v8062 = vpop.f32.mrb[0].mxu0
    %v8063 = vadd.f32 %v7789, %v8062
    %v8064 = vpop.f32.mrb[0].mxu0
    %8065 = vmatprep.mubr.f32.mxu0 %v7697
    %8066 = vmatmul.mubr.f32.gmra.mrb[0].mxu0 %v7696
    %v8067 = vpop.f32.mrb[0].mxu0
    %v8068 = vadd.f32 %v7789, %v8067
    %v8069 = vpop.f32.mrb[0].mxu0
    %8070 = vmatprep.mubr.f32.mxu0 %v7701
    %8071 = vmatmul.mubr.f32.gmra.mrb[0].mxu0 %v7700
    %v8072 = vpop.f32.mrb[0].mxu0
    %v8073 = vadd.f32 %v7789, %v8072
    %v8074 = vpop.f32.mrb[0].mxu0
    %8075 = vmatprep.mubr.f32.mxu0 %v7705
    %8076 = vmatmul.mubr.f32.gmra.mrb[0].mxu0 %v7704
    %v8077 = vpop.f32.mrb[0].mxu0
    %v8078 = vadd.f32 %v7789, %v8077
    %v8079 = vpop.f32.mrb[0].mxu0
    %8080 = vmatprep.mubr.f32.mxu0 %v7709
    %8081 = vmatmul.mubr.f32.gmra.mrb[0].mxu0 %v7708
    %v8082 = vpop.f32.mrb[0].mxu0
    %v8083 = vadd.f32 %v7789, %v8082
    %v8084 = vpop.f32.mrb[0].mxu0
    %8085 = vmatprep.mubr.f32.mxu0 %v7713
    %8086 = vmatmul.mubr.f32.gmra.mrb[0].mxu0 %v7712
    %v8087 = vpop.f32.mrb[0].mxu0
    %v8088 = vadd.f32 %v7789, %v8087
    %v8089 = vpop.f32.mrb[0].mxu0
    %8090 = vmatprep.mubr.f32.mxu0 %v7717
    %8091 = vmatmul.mubr.f32.gmra.mrb[0].mxu0 %v7716
    %v8092 = vpop.f32.mrb[0].mxu0
    %v8093 = vadd.f32 %v7789, %v8092
    %v8094 = vpop.f32.mrb[0].mxu0
    %8095 = vdwg.mxu0
    %8096 = vmatprep.subr.mxu0 0.0
    %8097 = vmatpush1.msra.mxu0 %v7752
    %8098 = vmatprep.subr.mxu0 0.0
    %8099 = vmatpush1.msra.mxu0 %v7753
    %8100 = vmatprep.subr.mxu0 0.0
    %8101 = vmatpush1.msra.mxu0 %v7754
    %8102 = vmatprep.subr.mxu0 0.0
    %8103 = vmatpush1.msra.mxu0 %v7755
    %8104 = vmatprep.subr.mxu0 0.0
    %8105 = vmatpush1.msra.mxu0 %v7756
    %8106 = vmatprep.subr.mxu0 0.0
    %8107 = vmatpush1.msra.mxu0 %v7757
    %8108 = vmatprep.subr.mxu0 0.0
    %8109 = vmatpush1.msra.mxu0 %v7758
    %8110 = vmatprep.subr.mxu0 0.0
    %8111 = vmatpush1.msra.mxu0 %v7759
    %8112 = vmatprep.subr.mxu0 0.0
    %8113 = vmatpush1.msra.mxu0 %v7760
    %8114 = vmatprep.subr.mxu0 0.0
    %8115 = vmatpush1.msra.mxu0 %v7761
    %8116 = vmatprep.subr.mxu0 0.0
    %8117 = vmatpush1.msra.mxu0 %v7762
    %8118 = vmatprep.subr.mxu0 0.0
    %8119 = vmatpush1.msra.mxu0 %v7763
    %8120 = vmatprep.subr.mxu0 0.0
    %8121 = vmatpush1.msra.mxu0 %v7764
    %8122 = vmatprep.subr.mxu0 0.0
    %8123 = vmatpush1.msra.mxu0 %v7765
    %8124 = vmatprep.subr.mxu0 0.0
    %8125 = vmatpush1.msra.mxu0 %v7766
    %8126 = vmatprep.subr.mxu0 0.0
    %8127 = vmatpush1.msra.mxu0 %v7767
    %8128 = vmatprep.subr.mxu0 0.0
    %8129 = vmatpush1.msra.mxu0 %v7768
    %8130 = vmatprep.subr.mxu0 0.0
    %8131 = vmatpush1.msra.mxu0 %v7769
    %8132 = vmatprep.subr.mxu0 0.0
    %8133 = vmatpush1.msra.mxu0 %v7770
    %8134 = vmatprep.subr.mxu0 0.0
    %8135 = vmatpush1.msra.mxu0 %v7771
    %8136 = vmatprep.subr.mxu0 0.0
    %8137 = vmatpush1.msra.mxu0 %v7772
    %8138 = vmatprep.subr.mxu0 0.0
    %8139 = vmatpush1.msra.mxu0 %v7773
    %8140 = vmatprep.subr.mxu0 0.0
    %8141 = vmatpush1.msra.mxu0 %v7774
    %8142 = vmatprep.subr.mxu0 0.0
    %8143 = vmatpush1.msra.mxu0 %v7775
    %8144 = vmatprep.subr.mxu0 0.0
    %8145 = vmatpush1.msra.mxu0 %v7776
    %8146 = vmatprep.subr.mxu0 0.0
    %8147 = vmatpush1.msra.mxu0 %v7777
    %8148 = vmatprep.subr.mxu0 0.0
    %8149 = vmatpush1.msra.mxu0 %v7778
    %8150 = vmatprep.subr.mxu0 0.0
    %8151 = vmatpush1.msra.mxu0 %v7779
    %8152 = vmatprep.subr.mxu0 0.0
    %8153 = vmatpush1.msra.mxu0 %v7780
    %8154 = vmatprep.subr.mxu0 0.0
    %8155 = vmatpush1.msra.mxu0 %v7781
    %8156 = vmatprep.subr.mxu0 0.0
    %8157 = vmatpush1.msra.mxu0 %v7782
    %8158 = vmatprep.subr.mxu0 0.0
    %8159 = vmatpush1.msra.mxu0 %v7783
    %8160 = vmatprep.mubr.f32.mxu0 %v7531
    %8161 = vmatmul.mubr.f32.gmra.mrb[0].mxu0 %v7530
    %v8162 = vpop.f32.mrb[0].mxu0
    %v8163 = vadd.f32 %v7858, %v8162
    %v8164 = vpop.f32.mrb[0].mxu0
    %8165 = vmatprep.mubr.f32.mxu0 %v7535
    %8166 = vmatmul.mubr.f32.gmra.mrb[0].mxu0 %v7534
    %v8167 = vpop.f32.mrb[0].mxu0
    %v8168 = vadd.f32 %v7863, %v8167
    %v8169 = vpop.f32.mrb[0].mxu0
    %8170 = vmatprep.mubr.f32.mxu0 %v7539
    %8171 = vmatmul.mubr.f32.gmra.mrb[0].mxu0 %v7538
    %v8172 = vpop.f32.mrb[0].mxu0
    %v8173 = vadd.f32 %v7868, %v8172
    %v8174 = vpop.f32.mrb[0].mxu0
    %8175 = vmatprep.mubr.f32.mxu0 %v7543
    %8176 = vmatmul.mubr.f32.gmra.mrb[0].mxu0 %v7542
    %v8177 = vpop.f32.mrb[0].mxu0
    %v8178 = vadd.f32 %v7873, %v8177
    %v8179 = vpop.f32.mrb[0].mxu0
    %8180 = vmatprep.mubr.f32.mxu0 %v7547
    %8181 = vmatmul.mubr.f32.gmra.mrb[0].mxu0 %v7546
    %v8182 = vpop.f32.mrb[0].mxu0
    %v8183 = vadd.f32 %v7878, %v8182
    %v8184 = vpop.f32.mrb[0].mxu0
    %8185 = vmatprep.mubr.f32.mxu0 %v7551
    %8186 = vmatmul.mubr.f32.gmra.mrb[0].mxu0 %v7550
    %v8187 = vpop.f32.mrb[0].mxu0
    %v8188 = vadd.f32 %v7883, %v8187
    %v8189 = vpop.f32.mrb[0].mxu0
    %8190 = vmatprep.mubr.f32.mxu0 %v7555
    %8191 = vmatmul.mubr.f32.gmra.mrb[0].mxu0 %v7554
    %v8192 = vpop.f32.mrb[0].mxu0
    %v8193 = vadd.f32 %v7888, %v8192
    %v8194 = vpop.f32.mrb[0].mxu0
    %8195 = vmatprep.mubr.f32.mxu0 %v7559
    %8196 = vmatmul.mubr.f32.gmra.mrb[0].mxu0 %v7558
    %v8197 = vpop.f32.mrb[0].mxu0
    %v8198 = vadd.f32 %v7893, %v8197
    %v8199 = vpop.f32.mrb[0].mxu0
    %8200 = vmatprep.mubr.f32.mxu0 %v7563
    %8201 = vmatmul.mubr.f32.gmra.mrb[0].mxu0 %v7562
    %v8202 = vpop.f32.mrb[0].mxu0
    %v8203 = vadd.f32 %v7898, %v8202
    %v8204 = vpop.f32.mrb[0].mxu0
    %8205 = vmatprep.mubr.f32.mxu0 %v7567
    %8206 = vmatmul.mubr.f32.gmra.mrb[0].mxu0 %v7566
    %v8207 = vpop.f32.mrb[0].mxu0
    %v8208 = vadd.f32 %v7903, %v8207
    %v8209 = vpop.f32.mrb[0].mxu0
    %8210 = vmatprep.mubr.f32.mxu0 %v7571
    %8211 = vmatmul.mubr.f32.gmra.mrb[0].mxu0 %v7570
    %v8212 = vpop.f32.mrb[0].mxu0
    %v8213 = vadd.f32 %v7908, %v8212
    %v8214 = vpop.f32.mrb[0].mxu0
    %8215 = vmatprep.mubr.f32.mxu0 %v7575
    %8216 = vmatmul.mubr.f32.gmra.mrb[0].mxu0 %v7574
    %v8217 = vpop.f32.mrb[0].mxu0
    %v8218 = vadd.f32 %v7913, %v8217
    %v8219 = vpop.f32.mrb[0].mxu0
    %8220 = vmatprep.mubr.f32.mxu0 %v7579
    %8221 = vmatmul.mubr.f32.gmra.mrb[0].mxu0 %v7578
    %v8222 = vpop.f32.mrb[0].mxu0
    %v8223 = vadd.f32 %v7918, %v8222
    %v8224 = vpop.f32.mrb[0].mxu0
    %8225 = vmatprep.mubr.f32.mxu0 %v7583
    %8226 = vmatmul.mubr.f32.gmra.mrb[0].mxu0 %v7582
    %v8227 = vpop.f32.mrb[0].mxu0
    %v8228 = vadd.f32 %v7923, %v8227
    %v8229 = vpop.f32.mrb[0].mxu0
    %8230 = vmatprep.mubr.f32.mxu0 %v7587
    %8231 = vmatmul.mubr.f32.gmra.mrb[0].mxu0 %v7586
    %v8232 = vpop.f32.mrb[0].mxu0
    %v8233 = vadd.f32 %v7928, %v8232
    %v8234 = vpop.f32.mrb[0].mxu0
    %8235 = vmatprep.mubr.f32.mxu0 %v7591
    %8236 = vmatmul.mubr.f32.gmra.mrb[0].mxu0 %v7590
    %v8237 = vpop.f32.mrb[0].mxu0
    %v8238 = vadd.f32 %v7933, %v8237
    %v8239 = vpop.f32.mrb[0].mxu0
    %8240 = vmatprep.mubr.f32.mxu0 %v7595
    %8241 = vmatmul.mubr.f32.gmra.mrb[0].mxu0 %v7594
    %v8242 = vpop.f32.mrb[0].mxu0
    %v8243 = vadd.f32 %v7938, %v8242
    %v8244 = vpop.f32.mrb[0].mxu0
    %8245 = vmatprep.mubr.f32.mxu0 %v7599
    %8246 = vmatmul.mubr.f32.gmra.mrb[0].mxu0 %v7598
    %v8247 = vpop.f32.mrb[0].mxu0
    %v8248 = vadd.f32 %v7943, %v8247
    %v8249 = vpop.f32.mrb[0].mxu0
    %8250 = vmatprep.mubr.f32.mxu0 %v7603
    %8251 = vmatmul.mubr.f32.gmra.mrb[0].mxu0 %v7602
    %v8252 = vpop.f32.mrb[0].mxu0
    %v8253 = vadd.f32 %v7948, %v8252
    %v8254 = vpop.f32.mrb[0].mxu0
    %8255 = vmatprep.mubr.f32.mxu0 %v7607
    %8256 = vmatmul.mubr.f32.gmra.mrb[0].mxu0 %v7606
    %v8257 = vpop.f32.mrb[0].mxu0
    %v8258 = vadd.f32 %v7953, %v8257
    %v8259 = vpop.f32.mrb[0].mxu0
    %8260 = vmatprep.mubr.f32.mxu0 %v7611
    %8261 = vmatmul.mubr.f32.gmra.mrb[0].mxu0 %v7610
    %v8262 = vpop.f32.mrb[0].mxu0
    %v8263 = vadd.f32 %v7958, %v8262
    %v8264 = vpop.f32.mrb[0].mxu0
    %8265 = vmatprep.mubr.f32.mxu0 %v7615
    %8266 = vmatmul.mubr.f32.gmra.mrb[0].mxu0 %v7614
    %v8267 = vpop.f32.mrb[0].mxu0
    %v8268 = vadd.f32 %v7963, %v8267
    %v8269 = vpop.f32.mrb[0].mxu0
    %8270 = vmatprep.mubr.f32.mxu0 %v7619
    %8271 = vmatmul.mubr.f32.gmra.mrb[0].mxu0 %v7618
    %v8272 = vpop.f32.mrb[0].mxu0
    %v8273 = vadd.f32 %v7968, %v8272
    %v8274 = vpop.f32.mrb[0].mxu0
    %8275 = vmatprep.mubr.f32.mxu0 %v7623
    %8276 = vmatmul.mubr.f32.gmra.mrb[0].mxu0 %v7622
    %v8277 = vpop.f32.mrb[0].mxu0
    %v8278 = vadd.f32 %v7973, %v8277
    %v8279 = vpop.f32.mrb[0].mxu0
    %8280 = vmatprep.mubr.f32.mxu0 %v7627
    %8281 = vmatmul.mubr.f32.gmra.mrb[0].mxu0 %v7626
    %v8282 = vpop.f32.mrb[0].mxu0
    %v8283 = vadd.f32 %v7978, %v8282
    %v8284 = vpop.f32.mrb[0].mxu0
    %8285 = vmatprep.mubr.f32.mxu0 %v7631
    %8286 = vmatmul.mubr.f32.gmra.mrb[0].mxu0 %v7630
    %v8287 = vpop.f32.mrb[0].mxu0
    %v8288 = vadd.f32 %v7983, %v8287
    %v8289 = vpop.f32.mrb[0].mxu0
    %8290 = vmatprep.mubr.f32.mxu0 %v7635
    %8291 = vmatmul.mubr.f32.gmra.mrb[0].mxu0 %v7634
    %v8292 = vpop.f32.mrb[0].mxu0
    %v8293 = vadd.f32 %v7988, %v8292
    %v8294 = vpop.f32.mrb[0].mxu0
    %8295 = vmatprep.mubr.f32.mxu0 %v7639
    %8296 = vmatmul.mubr.f32.gmra.mrb[0].mxu0 %v7638
    %v8297 = vpop.f32.mrb[0].mxu0
    %v8298 = vadd.f32 %v7993, %v8297
    %v8299 = vpop.f32.mrb[0].mxu0
    %8300 = vmatprep.mubr.f32.mxu0 %v7643
    %8301 = vmatmul.mubr.f32.gmra.mrb[0].mxu0 %v7642
    %v8302 = vpop.f32.mrb[0].mxu0
    %v8303 = vadd.f32 %v7998, %v8302
    %v8304 = vpop.f32.mrb[0].mxu0
    %8305 = vmatprep.mubr.f32.mxu0 %v7647
    %8306 = vmatmul.mubr.f32.gmra.mrb[0].mxu0 %v7646
    %v8307 = vpop.f32.mrb[0].mxu0
    %v8308 = vadd.f32 %v8003, %v8307
    %v8309 = vpop.f32.mrb[0].mxu0
    %8310 = vmatprep.mubr.f32.mxu0 %v7651
    %8311 = vmatmul.mubr.f32.gmra.mrb[0].mxu0 %v7650
    %v8312 = vpop.f32.mrb[0].mxu0
    %v8313 = vadd.f32 %v8008, %v8312
    %v8314 = vpop.f32.mrb[0].mxu0
    %8315 = vmatprep.mubr.f32.mxu0 %v7655
    %8316 = vmatmul.mubr.f32.gmra.mrb[0].mxu0 %v7654
    %v8317 = vpop.f32.mrb[0].mxu0
    %v8318 = vadd.f32 %v8013, %v8317
    %v8319 = vpop.f32.mrb[0].mxu0
    %8320 = vmatprep.mubr.f32.mxu0 %v7659
    %8321 = vmatmul.mubr.f32.gmra.mrb[0].mxu0 %v7658
    %v8322 = vpop.f32.mrb[0].mxu0
    %v8323 = vadd.f32 %v8018, %v8322
    %v8324 = vpop.f32.mrb[0].mxu0
    %8325 = vmatprep.mubr.f32.mxu0 %v7663
    %8326 = vmatmul.mubr.f32.gmra.mrb[0].mxu0 %v7662
    %v8327 = vpop.f32.mrb[0].mxu0
    %v8328 = vadd.f32 %v8023, %v8327
    %v8329 = vpop.f32.mrb[0].mxu0
    %8330 = vmatprep.mubr.f32.mxu0 %v7667
    %8331 = vmatmul.mubr.f32.gmra.mrb[0].mxu0 %v7666
    %v8332 = vpop.f32.mrb[0].mxu0
    %v8333 = vadd.f32 %v8028, %v8332
    %v8334 = vpop.f32.mrb[0].mxu0
    %8335 = vmatprep.mubr.f32.mxu0 %v7671
    %8336 = vmatmul.mubr.f32.gmra.mrb[0].mxu0 %v7670
    %v8337 = vpop.f32.mrb[0].mxu0
    %v8338 = vadd.f32 %v8033, %v8337
    %v8339 = vpop.f32.mrb[0].mxu0
    %8340 = vmatprep.mubr.f32.mxu0 %v7675
    %8341 = vmatmul.mubr.f32.gmra.mrb[0].mxu0 %v7674
    %v8342 = vpop.f32.mrb[0].mxu0
    %v8343 = vadd.f32 %v8038, %v8342
    %v8344 = vpop.f32.mrb[0].mxu0
    %8345 = vmatprep.mubr.f32.mxu0 %v7679
    %8346 = vmatmul.mubr.f32.gmra.mrb[0].mxu0 %v7678
    %v8347 = vpop.f32.mrb[0].mxu0
    %v8348 = vadd.f32 %v8043, %v8347
    %v8349 = vpop.f32.mrb[0].mxu0
    %8350 = vmatprep.mubr.f32.mxu0 %v7683
    %8351 = vmatmul.mubr.f32.gmra.mrb[0].mxu0 %v7682
    %v8352 = vpop.f32.mrb[0].mxu0
    %v8353 = vadd.f32 %v8048, %v8352
    %v8354 = vpop.f32.mrb[0].mxu0
    %8355 = vmatprep.mubr.f32.mxu0 %v7687
    %8356 = vmatmul.mubr.f32.gmra.mrb[0].mxu0 %v7686
    %v8357 = vpop.f32.mrb[0].mxu0
    %v8358 = vadd.f32 %v8053, %v8357
    %v8359 = vpop.f32.mrb[0].mxu0
    %8360 = vmatprep.mubr.f32.mxu0 %v7691
    %8361 = vmatmul.mubr.f32.gmra.mrb[0].mxu0 %v7690
    %v8362 = vpop.f32.mrb[0].mxu0
    %v8363 = vadd.f32 %v8058, %v8362
    %v8364 = vpop.f32.mrb[0].mxu0
    %8365 = vmatprep.mubr.f32.mxu0 %v7695
    %8366 = vmatmul.mubr.f32.gmra.mrb[0].mxu0 %v7694
    %v8367 = vpop.f32.mrb[0].mxu0
    %v8368 = vadd.f32 %v8063, %v8367
    %v8369 = vpop.f32.mrb[0].mxu0
    %8370 = vmatprep.mubr.f32.mxu0 %v7699
    %8371 = vmatmul.mubr.f32.gmra.mrb[0].mxu0 %v7698
    %v8372 = vpop.f32.mrb[0].mxu0
    %v8373 = vadd.f32 %v8068, %v8372
    %v8374 = vpop.f32.mrb[0].mxu0
    %8375 = vmatprep.mubr.f32.mxu0 %v7703
    %8376 = vmatmul.mubr.f32.gmra.mrb[0].mxu0 %v7702
    %v8377 = vpop.f32.mrb[0].mxu0
    %v8378 = vadd.f32 %v8073, %v8377
    %v8379 = vpop.f32.mrb[0].mxu0
    %8380 = vmatprep.mubr.f32.mxu0 %v7707
    %8381 = vmatmul.mubr.f32.gmra.mrb[0].mxu0 %v7706
    %v8382 = vpop.f32.mrb[0].mxu0
    %v8383 = vadd.f32 %v8078, %v8382
    %v8384 = vpop.f32.mrb[0].mxu0
    %8385 = vmatprep.mubr.f32.mxu0 %v7711
    %8386 = vmatmul.mubr.f32.gmra.mrb[0].mxu0 %v7710
    %v8387 = vpop.f32.mrb[0].mxu0
    %v8388 = vadd.f32 %v8083, %v8387
    %v8389 = vpop.f32.mrb[0].mxu0
    %8390 = vmatprep.mubr.f32.mxu0 %v7715
    %8391 = vmatmul.mubr.f32.gmra.mrb[0].mxu0 %v7714
    %v8392 = vpop.f32.mrb[0].mxu0
    %v8393 = vadd.f32 %v8088, %v8392
    %v8394 = vpop.f32.mrb[0].mxu0
    %8395 = vmatprep.mubr.f32.mxu0 %v7719
    %8396 = vmatmul.mubr.f32.gmra.mrb[0].mxu0 %v7718
    %v8397 = vpop.f32.mrb[0].mxu0
    %v8398 = vadd.f32 %v8093, %v8397
    %v8399 = vpop.f32.mrb[0].mxu0
    %8400 = vdwg.mxu0
    %v8401 = vmax.f32 %v8163, 0.0
    %v8402 = vmax.f32 %v8168, 0.0
    %v8403 = vmax.f32 %v8173, 0.0
    %v8404 = vmax.f32 %v8178, 0.0
    %v8405 = vmax.f32 %v8183, 0.0
    %v8406 = vmax.f32 %v8188, 0.0
    %v8407 = vmax.f32 %v8193, 0.0
    %v8408 = vmax.f32 %v8198, 0.0
    %v8409 = vmax.f32 %v8203, 0.0
    %v8410 = vmax.f32 %v8208, 0.0
    %v8411 = vmax.f32 %v8213, 0.0
    %v8412 = vmax.f32 %v8218, 0.0
    %v8413 = vmax.f32 %v8223, 0.0
    %v8414 = vmax.f32 %v8228, 0.0
    %v8415 = vmax.f32 %v8233, 0.0
    %v8416 = vmax.f32 %v8238, 0.0
    %v8417 = vmax.f32 %v8243, 0.0
    %v8418 = vmax.f32 %v8248, 0.0
    %v8419 = vmax.f32 %v8253, 0.0
    %v8420 = vmax.f32 %v8258, 0.0
    %v8421 = vmax.f32 %v8263, 0.0
    %v8422 = vmax.f32 %v8268, 0.0
    %v8423 = vmax.f32 %v8273, 0.0
    %v8424 = vmax.f32 %v8278, 0.0
    %v8425 = vmax.f32 %v8283, 0.0
    %v8426 = vmax.f32 %v8288, 0.0
    %v8427 = vmax.f32 %v8293, 0.0
    %v8428 = vmax.f32 %v8298, 0.0
    %v8429 = vmax.f32 %v8303, 0.0
    %v8430 = vmax.f32 %v8308, 0.0
    %v8431 = vmax.f32 %v8313, 0.0
    %v8432 = vmax.f32 %v8318, 0.0
    %v8433 = vmax.f32 %v8323, 0.0
    %v8434 = vmax.f32 %v8328, 0.0
    %v8435 = vmax.f32 %v8333, 0.0
    %v8436 = vmax.f32 %v8338, 0.0
    %v8437 = vmax.f32 %v8343, 0.0
    %v8438 = vmax.f32 %v8348, 0.0
    %v8439 = vmax.f32 %v8353, 0.0
    %v8440 = vmax.f32 %v8358, 0.0
    %v8441 = vmax.f32 %v8363, 0.0
    %v8442 = vmax.f32 %v8368, 0.0
    %v8443 = vmax.f32 %v8373, 0.0
    %v8444 = vmax.f32 %v8378, 0.0
    %v8445 = vmax.f32 %v8383, 0.0
    %v8446 = vmax.f32 %v8388, 0.0
    %v8447 = vmax.f32 %v8393, 0.0
    %v8448 = vmax.f32 %v8398, 0.0
    %v8449 = vld [vmem:[%s3] sm:$0xff]
    %v8450 = vld [vmem:[%s3 + $0x8] sm:$0xff]
    %v8451 = vld [vmem:[%s3 + $0x10] sm:$0xff]
    %v8452 = vld [vmem:[%s3 + $0x18] sm:$0xff]
    %v8453 = vld [vmem:[%s3 + $0x20] sm:$0xff]
    %v8454 = vld [vmem:[%s3 + $0x28] sm:$0xff]
    %v8455 = vld [vmem:[%s3 + $0x30] sm:$0xff]
    %v8456 = vld [vmem:[%s3 + $0x38] sm:$0xff]
    %v8457 = vld [vmem:[%s3 + $0x40] sm:$0xff]
    %v8458 = vld [vmem:[%s3 + $0x48] sm:$0xff]
    %v8459 = vld [vmem:[%s3 + $0x50] sm:$0xff]
    %v8460 = vld [vmem:[%s3 + $0x58] sm:$0xff]
    %v8461 = vld [vmem:[%s3 + $0x60] sm:$0xff]
    %v8462 = vld [vmem:[%s3 + $0x68] sm:$0xff]
    %v8463 = vld [vmem:[%s3 + $0x70] sm:$0xff]
    %v8464 = vld [vmem:[%s3 + $0x78] sm:$0xff]
    %v8465 = vld [vmem:[%s4] sm:$0x1]
    %v8467 = vlaneseq
    %v8468 = vshrl.u32 %v8467, 7
    %v8469 = vsub.s32 0, %v8468
    %v8470 = vrot.slane %v8465, %v8469
    %8472 = vmatprep.subr.mxu0 0.0
    %8473 = vmatpush1.msra.mxu0 %v8449
    %8474 = vmatprep.subr.mxu0 0.0
    %8475 = vmatpush1.msra.mxu0 %v8450
    %8476 = vmatprep.subr.mxu0 0.0
    %8477 = vmatpush1.msra.mxu0 %v8451
    %8478 = vmatprep.subr.mxu0 0.0
    %8479 = vmatpush1.msra.mxu0 %v8452
    %8480 = vmatprep.subr.mxu0 0.0
    %8481 = vmatpush1.msra.mxu0 %v8453
    %8482 = vmatprep.subr.mxu0 0.0
    %8483 = vmatpush1.msra.mxu0 %v8454
    %8484 = vmatprep.subr.mxu0 0.0
    %8485 = vmatpush1.msra.mxu0 %v8455
    %8486 = vmatprep.subr.mxu0 0.0
    %8487 = vmatpush1.msra.mxu0 %v8456
    %8488 = vmatprep.subr.mxu0 0.0
    %8489 = vmatpush1.msra.mxu0 %v8457
    %8490 = vmatprep.subr.mxu0 0.0
    %8491 = vmatpush1.msra.mxu0 %v8458
    %8492 = vmatprep.subr.mxu0 0.0
    %8493 = vmatpush1.msra.mxu0 %v8459
    %8494 = vmatprep.subr.mxu0 0.0
    %8495 = vmatpush1.msra.mxu0 %v8460
    %8496 = vmatprep.subr.mxu0 0.0
    %8497 = vmatpush1.msra.mxu0 %v8461
    %8498 = vmatprep.subr.mxu0 0.0
    %8499 = vmatpush1.msra.mxu0 %v8462
    %8500 = vmatprep.subr.mxu0 0.0
    %8501 = vmatpush1.msra.mxu0 %v8463
    %8502 = vmatprep.subr.mxu0 0.0
    %8503 = vmatpush1.msra.mxu0 %v8464
    %8504 = vmatprep.subr.mxu0 0.0
    %8505 = vmatpush1.msra.mxu0 0.0
    %8506 = vmatprep.subr.mxu0 0.0
    %8507 = vmatpush1.msra.mxu0 0.0
    %8508 = vmatprep.subr.mxu0 0.0
    %8509 = vmatpush1.msra.mxu0 0.0
    %8510 = vmatprep.subr.mxu0 0.0
    %8511 = vmatpush1.msra.mxu0 0.0
    %8512 = vmatprep.subr.mxu0 0.0
    %8513 = vmatpush1.msra.mxu0 0.0
    %8514 = vmatprep.subr.mxu0 0.0
    %8515 = vmatpush1.msra.mxu0 0.0
    %8516 = vmatprep.subr.mxu0 0.0
    %8517 = vmatpush1.msra.mxu0 0.0
    %8518 = vmatprep.subr.mxu0 0.0
    %8519 = vmatpush1.msra.mxu0 0.0
    %8520 = vmatprep.subr.mxu0 0.0
    %8521 = vmatpush1.msra.mxu0 0.0
    %8522 = vmatprep.subr.mxu0 0.0
    %8523 = vmatpush1.msra.mxu0 0.0
    %8524 = vmatprep.subr.mxu0 0.0
    %8525 = vmatpush1.msra.mxu0 0.0
    %8526 = vmatprep.subr.mxu0 0.0
    %8527 = vmatpush1.msra.mxu0 0.0
    %8528 = vmatprep.subr.mxu0 0.0
    %8529 = vmatpush1.msra.mxu0 0.0
    %8530 = vmatprep.subr.mxu0 0.0
    %8531 = vmatpush1.msra.mxu0 0.0
    %8532 = vmatprep.subr.mxu0 0.0
    %8533 = vmatpush1.msra.mxu0 0.0
    %8534 = vmatprep.subr.mxu0 0.0
    %8535 = vmatpush1.msra.mxu0 0.0
    %8536 = vmatprep.mubr.f32.mxu0 0.0
    %8537 = vmatmul.mubr.f32.gmra.mrb[0].mxu0 %v8401
    %v8538 = vpop.f32.mrb[0].mxu0
    %v8539 = vadd.f32 %v8470, %v8538
    %v8540 = vpop.f32.mrb[0].mxu0
    %8541 = vmatprep.mubr.f32.mxu0 0.0
    %8542 = vmatmul.mubr.f32.gmra.mrb[0].mxu0 %v8402
    %v8543 = vpop.f32.mrb[0].mxu0
    %v8544 = vadd.f32 %v8470, %v8543
    %v8545 = vpop.f32.mrb[0].mxu0
    %8546 = vmatprep.mubr.f32.mxu0 0.0
    %8547 = vmatmul.mubr.f32.gmra.mrb[0].mxu0 %v8403
    %v8548 = vpop.f32.mrb[0].mxu0
    %v8549 = vadd.f32 %v8470, %v8548
    %v8550 = vpop.f32.mrb[0].mxu0
    %8551 = vmatprep.mubr.f32.mxu0 0.0
    %8552 = vmatmul.mubr.f32.gmra.mrb[0].mxu0 %v8404
    %v8553 = vpop.f32.mrb[0].mxu0
    %v8554 = vadd.f32 %v8470, %v8553
    %v8555 = vpop.f32.mrb[0].mxu0
    %8556 = vmatprep.mubr.f32.mxu0 0.0
    %8557 = vmatmul.mubr.f32.gmra.mrb[0].mxu0 %v8405
    %v8558 = vpop.f32.mrb[0].mxu0
    %v8559 = vadd.f32 %v8470, %v8558
    %v8560 = vpop.f32.mrb[0].mxu0
    %8561 = vmatprep.mubr.f32.mxu0 0.0
    %8562 = vmatmul.mubr.f32.gmra.mrb[0].mxu0 %v8406
    %v8563 = vpop.f32.mrb[0].mxu0
    %v8564 = vadd.f32 %v8470, %v8563
    %v8565 = vpop.f32.mrb[0].mxu0
    %8566 = vmatprep.mubr.f32.mxu0 0.0
    %8567 = vmatmul.mubr.f32.gmra.mrb[0].mxu0 %v8407
    %v8568 = vpop.f32.mrb[0].mxu0
    %v8569 = vadd.f32 %v8470, %v8568
    %v8570 = vpop.f32.mrb[0].mxu0
    %8571 = vmatprep.mubr.f32.mxu0 0.0
    %8572 = vmatmul.mubr.f32.gmra.mrb[0].mxu0 %v8408
    %v8573 = vpop.f32.mrb[0].mxu0
    %v8574 = vadd.f32 %v8470, %v8573
    %v8575 = vpop.f32.mrb[0].mxu0
    %8576 = vmatprep.mubr.f32.mxu0 0.0
    %8577 = vmatmul.mubr.f32.gmra.mrb[0].mxu0 %v8409
    %v8578 = vpop.f32.mrb[0].mxu0
    %v8579 = vadd.f32 %v8470, %v8578
    %v8580 = vpop.f32.mrb[0].mxu0
    %8581 = vmatprep.mubr.f32.mxu0 0.0
    %8582 = vmatmul.mubr.f32.gmra.mrb[0].mxu0 %v8410
    %v8583 = vpop.f32.mrb[0].mxu0
    %v8584 = vadd.f32 %v8470, %v8583
    %v8585 = vpop.f32.mrb[0].mxu0
    %8586 = vmatprep.mubr.f32.mxu0 0.0
    %8587 = vmatmul.mubr.f32.gmra.mrb[0].mxu0 %v8411
    %v8588 = vpop.f32.mrb[0].mxu0
    %v8589 = vadd.f32 %v8470, %v8588
    %v8590 = vpop.f32.mrb[0].mxu0
    %8591 = vmatprep.mubr.f32.mxu0 0.0
    %8592 = vmatmul.mubr.f32.gmra.mrb[0].mxu0 %v8412
    %v8593 = vpop.f32.mrb[0].mxu0
    %v8594 = vadd.f32 %v8470, %v8593
    %v8595 = vpop.f32.mrb[0].mxu0
    %8596 = vmatprep.mubr.f32.mxu0 0.0
    %8597 = vmatmul.mubr.f32.gmra.mrb[0].mxu0 %v8413
    %v8598 = vpop.f32.mrb[0].mxu0
    %v8599 = vadd.f32 %v8470, %v8598
    %v8600 = vpop.f32.mrb[0].mxu0
    %8601 = vmatprep.mubr.f32.mxu0 0.0
    %8602 = vmatmul.mubr.f32.gmra.mrb[0].mxu0 %v8414
    %v8603 = vpop.f32.mrb[0].mxu0
    %v8604 = vadd.f32 %v8470, %v8603
    %v8605 = vpop.f32.mrb[0].mxu0
    %8606 = vmatprep.mubr.f32.mxu0 0.0
    %8607 = vmatmul.mubr.f32.gmra.mrb[0].mxu0 %v8415
    %v8608 = vpop.f32.mrb[0].mxu0
    %v8609 = vadd.f32 %v8470, %v8608
    %v8610 = vpop.f32.mrb[0].mxu0
    %8611 = vmatprep.mubr.f32.mxu0 0.0
    %8612 = vmatmul.mubr.f32.gmra.mrb[0].mxu0 %v8416
    %v8613 = vpop.f32.mrb[0].mxu0
    %v8614 = vadd.f32 %v8470, %v8613
    %v8615 = vpop.f32.mrb[0].mxu0
    %8616 = vmatprep.mubr.f32.mxu0 0.0
    %8617 = vmatmul.mubr.f32.gmra.mrb[0].mxu0 %v8417
    %v8618 = vpop.f32.mrb[0].mxu0
    %v8619 = vadd.f32 %v8470, %v8618
    %v8620 = vpop.f32.mrb[0].mxu0
    %8621 = vmatprep.mubr.f32.mxu0 0.0
    %8622 = vmatmul.mubr.f32.gmra.mrb[0].mxu0 %v8418
    %v8623 = vpop.f32.mrb[0].mxu0
    %v8624 = vadd.f32 %v8470, %v8623
    %v8625 = vpop.f32.mrb[0].mxu0
    %8626 = vmatprep.mubr.f32.mxu0 0.0
    %8627 = vmatmul.mubr.f32.gmra.mrb[0].mxu0 %v8419
    %v8628 = vpop.f32.mrb[0].mxu0
    %v8629 = vadd.f32 %v8470, %v8628
    %v8630 = vpop.f32.mrb[0].mxu0
    %8631 = vmatprep.mubr.f32.mxu0 0.0
    %8632 = vmatmul.mubr.f32.gmra.mrb[0].mxu0 %v8420
    %v8633 = vpop.f32.mrb[0].mxu0
    %v8634 = vadd.f32 %v8470, %v8633
    %v8635 = vpop.f32.mrb[0].mxu0
    %8636 = vmatprep.mubr.f32.mxu0 0.0
    %8637 = vmatmul.mubr.f32.gmra.mrb[0].mxu0 %v8421
    %v8638 = vpop.f32.mrb[0].mxu0
    %v8639 = vadd.f32 %v8470, %v8638
    %v8640 = vpop.f32.mrb[0].mxu0
    %8641 = vmatprep.mubr.f32.mxu0 0.0
    %8642 = vmatmul.mubr.f32.gmra.mrb[0].mxu0 %v8422
    %v8643 = vpop.f32.mrb[0].mxu0
    %v8644 = vadd.f32 %v8470, %v8643
    %v8645 = vpop.f32.mrb[0].mxu0
    %8646 = vmatprep.mubr.f32.mxu0 0.0
    %8647 = vmatmul.mubr.f32.gmra.mrb[0].mxu0 %v8423
    %v8648 = vpop.f32.mrb[0].mxu0
    %v8649 = vadd.f32 %v8470, %v8648
    %v8650 = vpop.f32.mrb[0].mxu0
    %8651 = vmatprep.mubr.f32.mxu0 0.0
    %8652 = vmatmul.mubr.f32.gmra.mrb[0].mxu0 %v8424
    %v8653 = vpop.f32.mrb[0].mxu0
    %v8654 = vadd.f32 %v8470, %v8653
    %v8655 = vpop.f32.mrb[0].mxu0
    %8656 = vmatprep.mubr.f32.mxu0 0.0
    %8657 = vmatmul.mubr.f32.gmra.mrb[0].mxu0 %v8425
    %v8658 = vpop.f32.mrb[0].mxu0
    %v8659 = vadd.f32 %v8470, %v8658
    %v8660 = vpop.f32.mrb[0].mxu0
    %8661 = vmatprep.mubr.f32.mxu0 0.0
    %8662 = vmatmul.mubr.f32.gmra.mrb[0].mxu0 %v8426
    %v8663 = vpop.f32.mrb[0].mxu0
    %v8664 = vadd.f32 %v8470, %v8663
    %v8665 = vpop.f32.mrb[0].mxu0
    %8666 = vmatprep.mubr.f32.mxu0 0.0
    %8667 = vmatmul.mubr.f32.gmra.mrb[0].mxu0 %v8427
    %v8668 = vpop.f32.mrb[0].mxu0
    %v8669 = vadd.f32 %v8470, %v8668
    %v8670 = vpop.f32.mrb[0].mxu0
    %8671 = vmatprep.mubr.f32.mxu0 0.0
    %8672 = vmatmul.mubr.f32.gmra.mrb[0].mxu0 %v8428
    %v8673 = vpop.f32.mrb[0].mxu0
    %v8674 = vadd.f32 %v8470, %v8673
    %v8675 = vpop.f32.mrb[0].mxu0
    %8676 = vmatprep.mubr.f32.mxu0 0.0
    %8677 = vmatmul.mubr.f32.gmra.mrb[0].mxu0 %v8429
    %v8678 = vpop.f32.mrb[0].mxu0
    %v8679 = vadd.f32 %v8470, %v8678
    %v8680 = vpop.f32.mrb[0].mxu0
    %8681 = vmatprep.mubr.f32.mxu0 0.0
    %8682 = vmatmul.mubr.f32.gmra.mrb[0].mxu0 %v8430
    %v8683 = vpop.f32.mrb[0].mxu0
    %v8684 = vadd.f32 %v8470, %v8683
    %v8685 = vpop.f32.mrb[0].mxu0
    %8686 = vmatprep.mubr.f32.mxu0 0.0
    %8687 = vmatmul.mubr.f32.gmra.mrb[0].mxu0 %v8431
    %v8688 = vpop.f32.mrb[0].mxu0
    %v8689 = vadd.f32 %v8470, %v8688
    %v8690 = vpop.f32.mrb[0].mxu0
    %8691 = vmatprep.mubr.f32.mxu0 0.0
    %8692 = vmatmul.mubr.f32.gmra.mrb[0].mxu0 %v8432
    %v8693 = vpop.f32.mrb[0].mxu0
    %v8694 = vadd.f32 %v8470, %v8693
    %v8695 = vpop.f32.mrb[0].mxu0
    %8696 = vmatprep.mubr.f32.mxu0 0.0
    %8697 = vmatmul.mubr.f32.gmra.mrb[0].mxu0 %v8433
    %v8698 = vpop.f32.mrb[0].mxu0
    %v8699 = vadd.f32 %v8470, %v8698
    %v8700 = vpop.f32.mrb[0].mxu0
    %8701 = vmatprep.mubr.f32.mxu0 0.0
    %8702 = vmatmul.mubr.f32.gmra.mrb[0].mxu0 %v8434
    %v8703 = vpop.f32.mrb[0].mxu0
    %v8704 = vadd.f32 %v8470, %v8703
    %v8705 = vpop.f32.mrb[0].mxu0
    %8706 = vmatprep.mubr.f32.mxu0 0.0
    %8707 = vmatmul.mubr.f32.gmra.mrb[0].mxu0 %v8435
    %v8708 = vpop.f32.mrb[0].mxu0
    %v8709 = vadd.f32 %v8470, %v8708
    %v8710 = vpop.f32.mrb[0].mxu0
    %8711 = vmatprep.mubr.f32.mxu0 0.0
    %8712 = vmatmul.mubr.f32.gmra.mrb[0].mxu0 %v8436
    %v8713 = vpop.f32.mrb[0].mxu0
    %v8714 = vadd.f32 %v8470, %v8713
    %v8715 = vpop.f32.mrb[0].mxu0
    %8716 = vmatprep.mubr.f32.mxu0 0.0
    %8717 = vmatmul.mubr.f32.gmra.mrb[0].mxu0 %v8437
    %v8718 = vpop.f32.mrb[0].mxu0
    %v8719 = vadd.f32 %v8470, %v8718
    %v8720 = vpop.f32.mrb[0].mxu0
    %8721 = vmatprep.mubr.f32.mxu0 0.0
    %8722 = vmatmul.mubr.f32.gmra.mrb[0].mxu0 %v8438
    %v8723 = vpop.f32.mrb[0].mxu0
    %v8724 = vadd.f32 %v8470, %v8723
    %v8725 = vpop.f32.mrb[0].mxu0
    %8726 = vmatprep.mubr.f32.mxu0 0.0
    %8727 = vmatmul.mubr.f32.gmra.mrb[0].mxu0 %v8439
    %v8728 = vpop.f32.mrb[0].mxu0
    %v8729 = vadd.f32 %v8470, %v8728
    %v8730 = vpop.f32.mrb[0].mxu0
    %8731 = vmatprep.mubr.f32.mxu0 0.0
    %8732 = vmatmul.mubr.f32.gmra.mrb[0].mxu0 %v8440
    %v8733 = vpop.f32.mrb[0].mxu0
    %v8734 = vadd.f32 %v8470, %v8733
    %v8735 = vpop.f32.mrb[0].mxu0
    %8736 = vmatprep.mubr.f32.mxu0 0.0
    %8737 = vmatmul.mubr.f32.gmra.mrb[0].mxu0 %v8441
    %v8738 = vpop.f32.mrb[0].mxu0
    %v8739 = vadd.f32 %v8470, %v8738
    %v8740 = vpop.f32.mrb[0].mxu0
    %8741 = vmatprep.mubr.f32.mxu0 0.0
    %8742 = vmatmul.mubr.f32.gmra.mrb[0].mxu0 %v8442
    %v8743 = vpop.f32.mrb[0].mxu0
    %v8744 = vadd.f32 %v8470, %v8743
    %v8745 = vpop.f32.mrb[0].mxu0
    %8746 = vmatprep.mubr.f32.mxu0 0.0
    %8747 = vmatmul.mubr.f32.gmra.mrb[0].mxu0 %v8443
    %v8748 = vpop.f32.mrb[0].mxu0
    %v8749 = vadd.f32 %v8470, %v8748
    %v8750 = vpop.f32.mrb[0].mxu0
    %8751 = vmatprep.mubr.f32.mxu0 0.0
    %8752 = vmatmul.mubr.f32.gmra.mrb[0].mxu0 %v8444
    %v8753 = vpop.f32.mrb[0].mxu0
    %v8754 = vadd.f32 %v8470, %v8753
    %v8755 = vpop.f32.mrb[0].mxu0
    %8756 = vmatprep.mubr.f32.mxu0 0.0
    %8757 = vmatmul.mubr.f32.gmra.mrb[0].mxu0 %v8445
    %v8758 = vpop.f32.mrb[0].mxu0
    %v8759 = vadd.f32 %v8470, %v8758
    %v8760 = vpop.f32.mrb[0].mxu0
    %8761 = vmatprep.mubr.f32.mxu0 0.0
    %8762 = vmatmul.mubr.f32.gmra.mrb[0].mxu0 %v8446
    %v8763 = vpop.f32.mrb[0].mxu0
    %v8764 = vadd.f32 %v8470, %v8763
    %v8765 = vpop.f32.mrb[0].mxu0
    %8766 = vmatprep.mubr.f32.mxu0 0.0
    %8767 = vmatmul.mubr.f32.gmra.mrb[0].mxu0 %v8447
    %v8768 = vpop.f32.mrb[0].mxu0
    %v8769 = vadd.f32 %v8470, %v8768
    %v8770 = vpop.f32.mrb[0].mxu0
    %8771 = vmatprep.mubr.f32.mxu0 0.0
    %8772 = vmatmul.mubr.f32.gmra.mrb[0].mxu0 %v8448
    %v8773 = vpop.f32.mrb[0].mxu0
    %v8774 = vadd.f32 %v8470, %v8773
    %v8775 = vpop.f32.mrb[0].mxu0
    %8776 = vdwg.mxu0
    %8777 = vmax.xlane.f32.xlu0 %v8539
    %v8778 = vpop.xlane.xlu0 %8777
    %8779 = vmax.xlane.f32.xlu0 %v8544
    %v8780 = vpop.xlane.xlu0 %8779
    %8781 = vmax.xlane.f32.xlu0 %v8549
    %v8782 = vpop.xlane.xlu0 %8781
    %8783 = vmax.xlane.f32.xlu0 %v8554
    %v8784 = vpop.xlane.xlu0 %8783
    %8785 = vmax.xlane.f32.xlu0 %v8559
    %v8786 = vpop.xlane.xlu0 %8785
    %8787 = vmax.xlane.f32.xlu0 %v8564
    %v8788 = vpop.xlane.xlu0 %8787
    %8789 = vmax.xlane.f32.xlu0 %v8569
    %v8790 = vpop.xlane.xlu0 %8789
    %8791 = vmax.xlane.f32.xlu0 %v8574
    %v8792 = vpop.xlane.xlu0 %8791
    %8793 = vmax.xlane.f32.xlu0 %v8579
    %v8794 = vpop.xlane.xlu0 %8793
    %8795 = vmax.xlane.f32.xlu0 %v8584
    %v8796 = vpop.xlane.xlu0 %8795
    %8797 = vmax.xlane.f32.xlu0 %v8589
    %v8798 = vpop.xlane.xlu0 %8797
    %8799 = vmax.xlane.f32.xlu0 %v8594
    %v8800 = vpop.xlane.xlu0 %8799
    %8801 = vmax.xlane.f32.xlu0 %v8599
    %v8802 = vpop.xlane.xlu0 %8801
    %8803 = vmax.xlane.f32.xlu0 %v8604
    %v8804 = vpop.xlane.xlu0 %8803
    %8805 = vmax.xlane.f32.xlu0 %v8609
    %v8806 = vpop.xlane.xlu0 %8805
    %8807 = vmax.xlane.f32.xlu0 %v8614
    %v8808 = vpop.xlane.xlu0 %8807
    %8809 = vmax.xlane.f32.xlu0 %v8619
    %v8810 = vpop.xlane.xlu0 %8809
    %8811 = vmax.xlane.f32.xlu0 %v8624
    %v8812 = vpop.xlane.xlu0 %8811
    %8813 = vmax.xlane.f32.xlu0 %v8629
    %v8814 = vpop.xlane.xlu0 %8813
    %8815 = vmax.xlane.f32.xlu0 %v8634
    %v8816 = vpop.xlane.xlu0 %8815
    %8817 = vmax.xlane.f32.xlu0 %v8639
    %v8818 = vpop.xlane.xlu0 %8817
    %8819 = vmax.xlane.f32.xlu0 %v8644
    %v8820 = vpop.xlane.xlu0 %8819
    %8821 = vmax.xlane.f32.xlu0 %v8649
    %v8822 = vpop.xlane.xlu0 %8821
    %8823 = vmax.xlane.f32.xlu0 %v8654
    %v8824 = vpop.xlane.xlu0 %8823
    %8825 = vmax.xlane.f32.xlu0 %v8659
    %v8826 = vpop.xlane.xlu0 %8825
    %8827 = vmax.xlane.f32.xlu0 %v8664
    %v8828 = vpop.xlane.xlu0 %8827
    %8829 = vmax.xlane.f32.xlu0 %v8669
    %v8830 = vpop.xlane.xlu0 %8829
    %8831 = vmax.xlane.f32.xlu0 %v8674
    %v8832 = vpop.xlane.xlu0 %8831
    %8833 = vmax.xlane.f32.xlu0 %v8679
    %v8834 = vpop.xlane.xlu0 %8833
    %8835 = vmax.xlane.f32.xlu0 %v8684
    %v8836 = vpop.xlane.xlu0 %8835
    %8837 = vmax.xlane.f32.xlu0 %v8689
    %v8838 = vpop.xlane.xlu0 %8837
    %8839 = vmax.xlane.f32.xlu0 %v8694
    %v8840 = vpop.xlane.xlu0 %8839
    %8841 = vmax.xlane.f32.xlu0 %v8699
    %v8842 = vpop.xlane.xlu0 %8841
    %8843 = vmax.xlane.f32.xlu0 %v8704
    %v8844 = vpop.xlane.xlu0 %8843
    %8845 = vmax.xlane.f32.xlu0 %v8709
    %v8846 = vpop.xlane.xlu0 %8845
    %8847 = vmax.xlane.f32.xlu0 %v8714
    %v8848 = vpop.xlane.xlu0 %8847
    %8849 = vmax.xlane.f32.xlu0 %v8719
    %v8850 = vpop.xlane.xlu0 %8849
    %8851 = vmax.xlane.f32.xlu0 %v8724
    %v8852 = vpop.xlane.xlu0 %8851
    %8853 = vmax.xlane.f32.xlu0 %v8729
    %v8854 = vpop.xlane.xlu0 %8853
    %8855 = vmax.xlane.f32.xlu0 %v8734
    %v8856 = vpop.xlane.xlu0 %8855
    %8857 = vmax.xlane.f32.xlu0 %v8739
    %v8858 = vpop.xlane.xlu0 %8857
    %8859 = vmax.xlane.f32.xlu0 %v8744
    %v8860 = vpop.xlane.xlu0 %8859
    %8861 = vmax.xlane.f32.xlu0 %v8749
    %v8862 = vpop.xlane.xlu0 %8861
    %8863 = vmax.xlane.f32.xlu0 %v8754
    %v8864 = vpop.xlane.xlu0 %8863
    %8865 = vmax.xlane.f32.xlu0 %v8759
    %v8866 = vpop.xlane.xlu0 %8865
    %8867 = vmax.xlane.f32.xlu0 %v8764
    %v8868 = vpop.xlane.xlu0 %8867
    %8869 = vmax.xlane.f32.xlu0 %v8769
    %v8870 = vpop.xlane.xlu0 %8869
    %8871 = vmax.xlane.f32.xlu0 %v8774
    %v8872 = vpop.xlane.xlu0 %8871
    %v8873 = vsub.f32 %v8539, %v8778
    %v8874 = vsub.f32 %v8544, %v8780
    %v8875 = vsub.f32 %v8549, %v8782
    %v8876 = vsub.f32 %v8554, %v8784
    %v8877 = vsub.f32 %v8559, %v8786
    %v8878 = vsub.f32 %v8564, %v8788
    %v8879 = vsub.f32 %v8569, %v8790
    %v8880 = vsub.f32 %v8574, %v8792
    %v8881 = vsub.f32 %v8579, %v8794
    %v8882 = vsub.f32 %v8584, %v8796
    %v8883 = vsub.f32 %v8589, %v8798
    %v8884 = vsub.f32 %v8594, %v8800
    %v8885 = vsub.f32 %v8599, %v8802
    %v8886 = vsub.f32 %v8604, %v8804
    %v8887 = vsub.f32 %v8609, %v8806
    %v8888 = vsub.f32 %v8614, %v8808
    %v8889 = vsub.f32 %v8619, %v8810
    %v8890 = vsub.f32 %v8624, %v8812
    %v8891 = vsub.f32 %v8629, %v8814
    %v8892 = vsub.f32 %v8634, %v8816
    %v8893 = vsub.f32 %v8639, %v8818
    %v8894 = vsub.f32 %v8644, %v8820
    %v8895 = vsub.f32 %v8649, %v8822
    %v8896 = vsub.f32 %v8654, %v8824
    %v8897 = vsub.f32 %v8659, %v8826
    %v8898 = vsub.f32 %v8664, %v8828
    %v8899 = vsub.f32 %v8669, %v8830
    %v8900 = vsub.f32 %v8674, %v8832
    %v8901 = vsub.f32 %v8679, %v8834
    %v8902 = vsub.f32 %v8684, %v8836
    %v8903 = vsub.f32 %v8689, %v8838
    %v8904 = vsub.f32 %v8694, %v8840
    %v8905 = vsub.f32 %v8699, %v8842
    %v8906 = vsub.f32 %v8704, %v8844
    %v8907 = vsub.f32 %v8709, %v8846
    %v8908 = vsub.f32 %v8714, %v8848
    %v8909 = vsub.f32 %v8719, %v8850
    %v8910 = vsub.f32 %v8724, %v8852
    %v8911 = vsub.f32 %v8729, %v8854
    %v8912 = vsub.f32 %v8734, %v8856
    %v8913 = vsub.f32 %v8739, %v8858
    %v8914 = vsub.f32 %v8744, %v8860
    %v8915 = vsub.f32 %v8749, %v8862
    %v8916 = vsub.f32 %v8754, %v8864
    %v8917 = vsub.f32 %v8759, %v8866
    %v8918 = vsub.f32 %v8764, %v8868
    %v8919 = vsub.f32 %v8769, %v8870
    %v8920 = vsub.f32 %v8774, %v8872
    %v8921 = vmul.f32 %v8873, 1.442695
    %v8922 = vpow.pop %v8921
    %v8923 = vmul.f32 %v8874, 1.442695
    %v8924 = vpow.pop %v8923
    %v8925 = vmul.f32 %v8875, 1.442695
    %v8926 = vpow.pop %v8925
    %v8927 = vmul.f32 %v8876, 1.442695
    %v8928 = vpow.pop %v8927
    %v8929 = vmul.f32 %v8877, 1.442695
    %v8930 = vpow.pop %v8929
    %v8931 = vmul.f32 %v8878, 1.442695
    %v8932 = vpow.pop %v8931
    %v8933 = vmul.f32 %v8879, 1.442695
    %v8934 = vpow.pop %v8933
    %v8935 = vmul.f32 %v8880, 1.442695
    %v8936 = vpow.pop %v8935
    %v8937 = vmul.f32 %v8881, 1.442695
    %v8938 = vpow.pop %v8937
    %v8939 = vmul.f32 %v8882, 1.442695
    %v8940 = vpow.pop %v8939
    %v8941 = vmul.f32 %v8883, 1.442695
    %v8942 = vpow.pop %v8941
    %v8943 = vmul.f32 %v8884, 1.442695
    %v8944 = vpow.pop %v8943
    %v8945 = vmul.f32 %v8885, 1.442695
    %v8946 = vpow.pop %v8945
    %v8947 = vmul.f32 %v8886, 1.442695
    %v8948 = vpow.pop %v8947
    %v8949 = vmul.f32 %v8887, 1.442695
    %v8950 = vpow.pop %v8949
    %v8951 = vmul.f32 %v8888, 1.442695
    %v8952 = vpow.pop %v8951
    %v8953 = vmul.f32 %v8889, 1.442695
    %v8954 = vpow.pop %v8953
    %v8955 = vmul.f32 %v8890, 1.442695
    %v8956 = vpow.pop %v8955
    %v8957 = vmul.f32 %v8891, 1.442695
    %v8958 = vpow.pop %v8957
    %v8959 = vmul.f32 %v8892, 1.442695
    %v8960 = vpow.pop %v8959
    %v8961 = vmul.f32 %v8893, 1.442695
    %v8962 = vpow.pop %v8961
    %v8963 = vmul.f32 %v8894, 1.442695
    %v8964 = vpow.pop %v8963
    %v8965 = vmul.f32 %v8895, 1.442695
    %v8966 = vpow.pop %v8965
    %v8967 = vmul.f32 %v8896, 1.442695
    %v8968 = vpow.pop %v8967
    %v8969 = vmul.f32 %v8897, 1.442695
    %v8970 = vpow.pop %v8969
    %v8971 = vmul.f32 %v8898, 1.442695
    %v8972 = vpow.pop %v8971
    %v8973 = vmul.f32 %v8899, 1.442695
    %v8974 = vpow.pop %v8973
    %v8975 = vmul.f32 %v8900, 1.442695
    %v8976 = vpow.pop %v8975
    %v8977 = vmul.f32 %v8901, 1.442695
    %v8978 = vpow.pop %v8977
    %v8979 = vmul.f32 %v8902, 1.442695
    %v8980 = vpow.pop %v8979
    %v8981 = vmul.f32 %v8903, 1.442695
    %v8982 = vpow.pop %v8981
    %v8983 = vmul.f32 %v8904, 1.442695
    %v8984 = vpow.pop %v8983
    %v8985 = vmul.f32 %v8905, 1.442695
    %v8986 = vpow.pop %v8985
    %v8987 = vmul.f32 %v8906, 1.442695
    %v8988 = vpow.pop %v8987
    %v8989 = vmul.f32 %v8907, 1.442695
    %v8990 = vpow.pop %v8989
    %v8991 = vmul.f32 %v8908, 1.442695
    %v8992 = vpow.pop %v8991
    %v8993 = vmul.f32 %v8909, 1.442695
    %v8994 = vpow.pop %v8993
    %v8995 = vmul.f32 %v8910, 1.442695
    %v8996 = vpow.pop %v8995
    %v8997 = vmul.f32 %v8911, 1.442695
    %v8998 = vpow.pop %v8997
    %v8999 = vmul.f32 %v8912, 1.442695
    %v9000 = vpow.pop %v8999
    %v9001 = vmul.f32 %v8913, 1.442695
    %v9002 = vpow.pop %v9001
    %v9003 = vmul.f32 %v8914, 1.442695
    %v9004 = vpow.pop %v9003
    %v9005 = vmul.f32 %v8915, 1.442695
    %v9006 = vpow.pop %v9005
    %v9007 = vmul.f32 %v8916, 1.442695
    %v9008 = vpow.pop %v9007
    %v9009 = vmul.f32 %v8917, 1.442695
    %v9010 = vpow.pop %v9009
    %v9011 = vmul.f32 %v8918, 1.442695
    %v9012 = vpow.pop %v9011
    %v9013 = vmul.f32 %v8919, 1.442695
    %v9014 = vpow.pop %v9013
    %v9015 = vmul.f32 %v8920, 1.442695
    %v9016 = vpow.pop %v9015
    %9017 = vadd.xlane.f32.xlu0 %v8922
    %v9018 = vpop.xlane.xlu0 %9017
    %9019 = vadd.xlane.f32.xlu0 %v8924
    %v9020 = vpop.xlane.xlu0 %9019
    %9021 = vadd.xlane.f32.xlu0 %v8926
    %v9022 = vpop.xlane.xlu0 %9021
    %9023 = vadd.xlane.f32.xlu0 %v8928
    %v9024 = vpop.xlane.xlu0 %9023
    %9025 = vadd.xlane.f32.xlu0 %v8930
    %v9026 = vpop.xlane.xlu0 %9025
    %9027 = vadd.xlane.f32.xlu0 %v8932
    %v9028 = vpop.xlane.xlu0 %9027
    %9029 = vadd.xlane.f32.xlu0 %v8934
    %v9030 = vpop.xlane.xlu0 %9029
    %9031 = vadd.xlane.f32.xlu0 %v8936
    %v9032 = vpop.xlane.xlu0 %9031
    %9033 = vadd.xlane.f32.xlu0 %v8938
    %v9034 = vpop.xlane.xlu0 %9033
    %9035 = vadd.xlane.f32.xlu0 %v8940
    %v9036 = vpop.xlane.xlu0 %9035
    %9037 = vadd.xlane.f32.xlu0 %v8942
    %v9038 = vpop.xlane.xlu0 %9037
    %9039 = vadd.xlane.f32.xlu0 %v8944
    %v9040 = vpop.xlane.xlu0 %9039
    %9041 = vadd.xlane.f32.xlu0 %v8946
    %v9042 = vpop.xlane.xlu0 %9041
    %9043 = vadd.xlane.f32.xlu0 %v8948
    %v9044 = vpop.xlane.xlu0 %9043
    %9045 = vadd.xlane.f32.xlu0 %v8950
    %v9046 = vpop.xlane.xlu0 %9045
    %9047 = vadd.xlane.f32.xlu0 %v8952
    %v9048 = vpop.xlane.xlu0 %9047
    %9049 = vadd.xlane.f32.xlu0 %v8954
    %v9050 = vpop.xlane.xlu0 %9049
    %9051 = vadd.xlane.f32.xlu0 %v8956
    %v9052 = vpop.xlane.xlu0 %9051
    %9053 = vadd.xlane.f32.xlu0 %v8958
    %v9054 = vpop.xlane.xlu0 %9053
    %9055 = vadd.xlane.f32.xlu0 %v8960
    %v9056 = vpop.xlane.xlu0 %9055
    %9057 = vadd.xlane.f32.xlu0 %v8962
    %v9058 = vpop.xlane.xlu0 %9057
    %9059 = vadd.xlane.f32.xlu0 %v8964
    %v9060 = vpop.xlane.xlu0 %9059
    %9061 = vadd.xlane.f32.xlu0 %v8966
    %v9062 = vpop.xlane.xlu0 %9061
    %9063 = vadd.xlane.f32.xlu0 %v8968
    %v9064 = vpop.xlane.xlu0 %9063
    %9065 = vadd.xlane.f32.xlu0 %v8970
    %v9066 = vpop.xlane.xlu0 %9065
    %9067 = vadd.xlane.f32.xlu0 %v8972
    %v9068 = vpop.xlane.xlu0 %9067
    %9069 = vadd.xlane.f32.xlu0 %v8974
    %v9070 = vpop.xlane.xlu0 %9069
    %9071 = vadd.xlane.f32.xlu0 %v8976
    %v9072 = vpop.xlane.xlu0 %9071
    %9073 = vadd.xlane.f32.xlu0 %v8978
    %v9074 = vpop.xlane.xlu0 %9073
    %9075 = vadd.xlane.f32.xlu0 %v8980
    %v9076 = vpop.xlane.xlu0 %9075
    %9077 = vadd.xlane.f32.xlu0 %v8982
    %v9078 = vpop.xlane.xlu0 %9077
    %9079 = vadd.xlane.f32.xlu0 %v8984
    %v9080 = vpop.xlane.xlu0 %9079
    %9081 = vadd.xlane.f32.xlu0 %v8986
    %v9082 = vpop.xlane.xlu0 %9081
    %9083 = vadd.xlane.f32.xlu0 %v8988
    %v9084 = vpop.xlane.xlu0 %9083
    %9085 = vadd.xlane.f32.xlu0 %v8990
    %v9086 = vpop.xlane.xlu0 %9085
    %9087 = vadd.xlane.f32.xlu0 %v8992
    %v9088 = vpop.xlane.xlu0 %9087
    %9089 = vadd.xlane.f32.xlu0 %v8994
    %v9090 = vpop.xlane.xlu0 %9089
    %9091 = vadd.xlane.f32.xlu0 %v8996
    %v9092 = vpop.xlane.xlu0 %9091
    %9093 = vadd.xlane.f32.xlu0 %v8998
    %v9094 = vpop.xlane.xlu0 %9093
    %9095 = vadd.xlane.f32.xlu0 %v9000
    %v9096 = vpop.xlane.xlu0 %9095
    %9097 = vadd.xlane.f32.xlu0 %v9002
    %v9098 = vpop.xlane.xlu0 %9097
    %9099 = vadd.xlane.f32.xlu0 %v9004
    %v9100 = vpop.xlane.xlu0 %9099
    %9101 = vadd.xlane.f32.xlu0 %v9006
    %v9102 = vpop.xlane.xlu0 %9101
    %9103 = vadd.xlane.f32.xlu0 %v9008
    %v9104 = vpop.xlane.xlu0 %9103
    %9105 = vadd.xlane.f32.xlu0 %v9010
    %v9106 = vpop.xlane.xlu0 %9105
    %9107 = vadd.xlane.f32.xlu0 %v9012
    %v9108 = vpop.xlane.xlu0 %9107
    %9109 = vadd.xlane.f32.xlu0 %v9014
    %v9110 = vpop.xlane.xlu0 %9109
    %9111 = vadd.xlane.f32.xlu0 %v9016
    %v9112 = vpop.xlane.xlu0 %9111
    %v9113 = vlog2.pop %v9018
    %v9114 = vmul.f32 %v9113, 0.6931472
    %v9115 = vlog2.pop %v9020
    %v9116 = vmul.f32 %v9115, 0.6931472
    %v9117 = vlog2.pop %v9022
    %v9118 = vmul.f32 %v9117, 0.6931472
    %v9119 = vlog2.pop %v9024
    %v9120 = vmul.f32 %v9119, 0.6931472
    %v9121 = vlog2.pop %v9026
    %v9122 = vmul.f32 %v9121, 0.6931472
    %v9123 = vlog2.pop %v9028
    %v9124 = vmul.f32 %v9123, 0.6931472
    %v9125 = vlog2.pop %v9030
    %v9126 = vmul.f32 %v9125, 0.6931472
    %v9127 = vlog2.pop %v9032
    %v9128 = vmul.f32 %v9127, 0.6931472
    %v9129 = vlog2.pop %v9034
    %v9130 = vmul.f32 %v9129, 0.6931472
    %v9131 = vlog2.pop %v9036
    %v9132 = vmul.f32 %v9131, 0.6931472
    %v9133 = vlog2.pop %v9038
    %v9134 = vmul.f32 %v9133, 0.6931472
    %v9135 = vlog2.pop %v9040
    %v9136 = vmul.f32 %v9135, 0.6931472
    %v9137 = vlog2.pop %v9042
    %v9138 = vmul.f32 %v9137, 0.6931472
    %v9139 = vlog2.pop %v9044
    %v9140 = vmul.f32 %v9139, 0.6931472
    %v9141 = vlog2.pop %v9046
    %v9142 = vmul.f32 %v9141, 0.6931472
    %v9143 = vlog2.pop %v9048
    %v9144 = vmul.f32 %v9143, 0.6931472
    %v9145 = vlog2.pop %v9050
    %v9146 = vmul.f32 %v9145, 0.6931472
    %v9147 = vlog2.pop %v9052
    %v9148 = vmul.f32 %v9147, 0.6931472
    %v9149 = vlog2.pop %v9054
    %v9150 = vmul.f32 %v9149, 0.6931472
    %v9151 = vlog2.pop %v9056
    %v9152 = vmul.f32 %v9151, 0.6931472
    %v9153 = vlog2.pop %v9058
    %v9154 = vmul.f32 %v9153, 0.6931472
    %v9155 = vlog2.pop %v9060
    %v9156 = vmul.f32 %v9155, 0.6931472
    %v9157 = vlog2.pop %v9062
    %v9158 = vmul.f32 %v9157, 0.6931472
    %v9159 = vlog2.pop %v9064
    %v9160 = vmul.f32 %v9159, 0.6931472
    %v9161 = vlog2.pop %v9066
    %v9162 = vmul.f32 %v9161, 0.6931472
    %v9163 = vlog2.pop %v9068
    %v9164 = vmul.f32 %v9163, 0.6931472
    %v9165 = vlog2.pop %v9070
    %v9166 = vmul.f32 %v9165, 0.6931472
    %v9167 = vlog2.pop %v9072
    %v9168 = vmul.f32 %v9167, 0.6931472
    %v9169 = vlog2.pop %v9074
    %v9170 = vmul.f32 %v9169, 0.6931472
    %v9171 = vlog2.pop %v9076
    %v9172 = vmul.f32 %v9171, 0.6931472
    %v9173 = vlog2.pop %v9078
    %v9174 = vmul.f32 %v9173, 0.6931472
    %v9175 = vlog2.pop %v9080
    %v9176 = vmul.f32 %v9175, 0.6931472
    %v9177 = vlog2.pop %v9082
    %v9178 = vmul.f32 %v9177, 0.6931472
    %v9179 = vlog2.pop %v9084
    %v9180 = vmul.f32 %v9179, 0.6931472
    %v9181 = vlog2.pop %v9086
    %v9182 = vmul.f32 %v9181, 0.6931472
    %v9183 = vlog2.pop %v9088
    %v9184 = vmul.f32 %v9183, 0.6931472
    %v9185 = vlog2.pop %v9090
    %v9186 = vmul.f32 %v9185, 0.6931472
    %v9187 = vlog2.pop %v9092
    %v9188 = vmul.f32 %v9187, 0.6931472
    %v9189 = vlog2.pop %v9094
    %v9190 = vmul.f32 %v9189, 0.6931472
    %v9191 = vlog2.pop %v9096
    %v9192 = vmul.f32 %v9191, 0.6931472
    %v9193 = vlog2.pop %v9098
    %v9194 = vmul.f32 %v9193, 0.6931472
    %v9195 = vlog2.pop %v9100
    %v9196 = vmul.f32 %v9195, 0.6931472
    %v9197 = vlog2.pop %v9102
    %v9198 = vmul.f32 %v9197, 0.6931472
    %v9199 = vlog2.pop %v9104
    %v9200 = vmul.f32 %v9199, 0.6931472
    %v9201 = vlog2.pop %v9106
    %v9202 = vmul.f32 %v9201, 0.6931472
    %v9203 = vlog2.pop %v9108
    %v9204 = vmul.f32 %v9203, 0.6931472
    %v9205 = vlog2.pop %v9110
    %v9206 = vmul.f32 %v9205, 0.6931472
    %v9207 = vlog2.pop %v9112
    %v9208 = vmul.f32 %v9207, 0.6931472
    %v9209 = vsub.f32 %v8873, %v9114
    %v9210 = vsub.f32 %v8874, %v9116
    %v9211 = vsub.f32 %v8875, %v9118
    %v9212 = vsub.f32 %v8876, %v9120
    %v9213 = vsub.f32 %v8877, %v9122
    %v9214 = vsub.f32 %v8878, %v9124
    %v9215 = vsub.f32 %v8879, %v9126
    %v9216 = vsub.f32 %v8880, %v9128
    %v9217 = vsub.f32 %v8881, %v9130
    %v9218 = vsub.f32 %v8882, %v9132
    %v9219 = vsub.f32 %v8883, %v9134
    %v9220 = vsub.f32 %v8884, %v9136
    %v9221 = vsub.f32 %v8885, %v9138
    %v9222 = vsub.f32 %v8886, %v9140
    %v9223 = vsub.f32 %v8887, %v9142
    %v9224 = vsub.f32 %v8888, %v9144
    %v9225 = vsub.f32 %v8889, %v9146
    %v9226 = vsub.f32 %v8890, %v9148
    %v9227 = vsub.f32 %v8891, %v9150
    %v9228 = vsub.f32 %v8892, %v9152
    %v9229 = vsub.f32 %v8893, %v9154
    %v9230 = vsub.f32 %v8894, %v9156
    %v9231 = vsub.f32 %v8895, %v9158
    %v9232 = vsub.f32 %v8896, %v9160
    %v9233 = vsub.f32 %v8897, %v9162
    %v9234 = vsub.f32 %v8898, %v9164
    %v9235 = vsub.f32 %v8899, %v9166
    %v9236 = vsub.f32 %v8900, %v9168
    %v9237 = vsub.f32 %v8901, %v9170
    %v9238 = vsub.f32 %v8902, %v9172
    %v9239 = vsub.f32 %v8903, %v9174
    %v9240 = vsub.f32 %v8904, %v9176
    %v9241 = vsub.f32 %v8905, %v9178
    %v9242 = vsub.f32 %v8906, %v9180
    %v9243 = vsub.f32 %v8907, %v9182
    %v9244 = vsub.f32 %v8908, %v9184
    %v9245 = vsub.f32 %v8909, %v9186
    %v9246 = vsub.f32 %v8910, %v9188
    %v9247 = vsub.f32 %v8911, %v9190
    %v9248 = vsub.f32 %v8912, %v9192
    %v9249 = vsub.f32 %v8913, %v9194
    %v9250 = vsub.f32 %v8914, %v9196
    %v9251 = vsub.f32 %v8915, %v9198
    %v9252 = vsub.f32 %v8916, %v9200
    %v9253 = vsub.f32 %v8917, %v9202
    %v9254 = vsub.f32 %v8918, %v9204
    %v9255 = vsub.f32 %v8919, %v9206
    %v9256 = vsub.f32 %v8920, %v9208
    %9257 = vst [vmem:[#allocation5] sm:$0xff] %v9209
    %9258 = vst [vmem:[#allocation5 + $0x8] sm:$0xff] %v9210
    %9259 = vst [vmem:[#allocation5 + $0x10] sm:$0xff] %v9211
    %9260 = vst [vmem:[#allocation5 + $0x18] sm:$0xff] %v9212
    %9261 = vst [vmem:[#allocation5 + $0x20] sm:$0xff] %v9213
    %9262 = vst [vmem:[#allocation5 + $0x28] sm:$0xff] %v9214
    %9263 = vst [vmem:[#allocation5 + $0x30] sm:$0xff] %v9215
    %9264 = vst [vmem:[#allocation5 + $0x38] sm:$0xff] %v9216
    %9265 = vst [vmem:[#allocation5 + $0x40] sm:$0xff] %v9217
    %9266 = vst [vmem:[#allocation5 + $0x48] sm:$0xff] %v9218
    %9267 = vst [vmem:[#allocation5 + $0x50] sm:$0xff] %v9219
    %9268 = vst [vmem:[#allocation5 + $0x58] sm:$0xff] %v9220
    %9269 = vst [vmem:[#allocation5 + $0x60] sm:$0xff] %v9221
    %9270 = vst [vmem:[#allocation5 + $0x68] sm:$0xff] %v9222
    %9271 = vst [vmem:[#allocation5 + $0x70] sm:$0xff] %v9223
    %9272 = vst [vmem:[#allocation5 + $0x78] sm:$0xff] %v9224
    %9273 = vst [vmem:[#allocation5 + $0x80] sm:$0xff] %v9225
    %9274 = vst [vmem:[#allocation5 + $0x88] sm:$0xff] %v9226
    %9275 = vst [vmem:[#allocation5 + $0x90] sm:$0xff] %v9227
    %9276 = vst [vmem:[#allocation5 + $0x98] sm:$0xff] %v9228
    %9277 = vst [vmem:[#allocation5 + $0xa0] sm:$0xff] %v9229
    %9278 = vst [vmem:[#allocation5 + $0xa8] sm:$0xff] %v9230
    %9279 = vst [vmem:[#allocation5 + $0xb0] sm:$0xff] %v9231
    %9280 = vst [vmem:[#allocation5 + $0xb8] sm:$0xff] %v9232
    %9281 = vst [vmem:[#allocation5 + $0xc0] sm:$0xff] %v9233
    %9282 = vst [vmem:[#allocation5 + $0xc8] sm:$0xff] %v9234
    %9283 = vst [vmem:[#allocation5 + $0xd0] sm:$0xff] %v9235
    %9284 = vst [vmem:[#allocation5 + $0xd8] sm:$0xff] %v9236
    %9285 = vst [vmem:[#allocation5 + $0xe0] sm:$0xff] %v9237
    %9286 = vst [vmem:[#allocation5 + $0xe8] sm:$0xff] %v9238
    %9287 = vst [vmem:[#allocation5 + $0xf0] sm:$0xff] %v9239
    %9288 = vst [vmem:[#allocation5 + $0xf8] sm:$0xff] %v9240
    %9289 = vst [vmem:[#allocation5 + $0x100] sm:$0xff] %v9241
    %9290 = vst [vmem:[#allocation5 + $0x108] sm:$0xff] %v9242
    %9291 = vst [vmem:[#allocation5 + $0x110] sm:$0xff] %v9243
    %9292 = vst [vmem:[#allocation5 + $0x118] sm:$0xff] %v9244
    %9293 = vst [vmem:[#allocation5 + $0x120] sm:$0xff] %v9245
    %9294 = vst [vmem:[#allocation5 + $0x128] sm:$0xff] %v9246
    %9295 = vst [vmem:[#allocation5 + $0x130] sm:$0xff] %v9247
    %9296 = vst [vmem:[#allocation5 + $0x138] sm:$0xff] %v9248
    %9297 = vst [vmem:[#allocation5 + $0x140] sm:$0xff] %v9249
    %9298 = vst [vmem:[#allocation5 + $0x148] sm:$0xff] %v9250
    %9299 = vst [vmem:[#allocation5 + $0x150] sm:$0xff] %v9251
    %9300 = vst [vmem:[#allocation5 + $0x158] sm:$0xff] %v9252
    %9301 = vst [vmem:[#allocation5 + $0x160] sm:$0xff] %v9253
    %9302 = vst [vmem:[#allocation5 + $0x168] sm:$0xff] %v9254
    %9303 = vst [vmem:[#allocation5 + $0x170] sm:$0xff] %v9255
    %9304 = vst [vmem:[#allocation5 + $0x178] sm:$0xff] %v9256
    // Predicated region
    $region26: #{tpu_custom_call.1} parent=1 // pred_check
      _
    $region27: #{tpu_custom_call.1} parent=1 // pred_check_branch
      %9306 = sbr.rel (0) target = $region29
    $region28: #{tpu_custom_call.1} parent=1 // pred_region
      %s9308 = ssub.s32 6144, 6144
      %9309 = vsyncadd [#allocation4], %s9308
      %s9310 = sshll.u32 [#allocation5], 4
      %s9311 = int_to_ptr.vmem [resolvable:$true] %s9310
      %9316 = dma.vmem_to_hbm [thread:$0]  %s9311, 6144, %s5, [#allocation4], 128, 128, 8
    $region29: #{tpu_custom_call.1} parent=1 // pred_fallthru
      _
    // Predicated region
    $region30: #{tpu_custom_call.1} parent=1 // pred_check
      _
    $region31: #{tpu_custom_call.1} parent=1 // pred_check_branch
      %9318 = sbr.rel (0) target = $region33
    $region32: #{tpu_custom_call.1} parent=1 // pred_region
      %9319 = dma.done [#allocation4], 6144
    $region33: #{tpu_custom_call.1} parent=1 // pred_fallthru
      _
    %9320 = vsyncpa [#allocation3], 1
    %9321 = vsyncpa [#allocation4], 1

</llo_original>
